<compile_context>
chip_gen: v6e
topology: v6e:2x2x1
jax: 0.10.0
libtpu: 0.0.40
codegen_flags: <defaults>
</compile_context>

<pallas_src>
import functools
import math

import jax
import jax.numpy as jnp
from jax.experimental import pallas as pl
from jax.experimental.pallas import tpu as pltpu

# Scoped-VMEM cap: leaves headroom on v7x's 64 MiB physical VMEM
# (v5e/v6e have 128 MiB and are far from the cap with these band budgets).
_VMEM_LIMIT_BYTES = 48 * 1024 * 1024


def _round_up(x, m):
    return (x + m - 1) // m * m


# ---------------------------------------------------------------------------
# Kernel 1: fused (X @ W_folded) + shift, optional ReLU.   (conv1x1 + BN)
# ---------------------------------------------------------------------------
def _mm_bn_act_kernel(x_ref, w_ref, shift_ref, o_ref, *, relu):
    acc = jnp.dot(x_ref[...], w_ref[...], preferred_element_type=jnp.float32)
    y = acc + shift_ref[...]
    if relu:
        y = jnp.maximum(y, 0.0)
    o_ref[...] = y.astype(o_ref.dtype)


def matmul_bn_act(x, w, shift, *, relu, out_dtype=jnp.bfloat16):
    """act((x @ w) + shift); x:(M,K) bf16, w:(K,Cout) bf16 (BN scale pre-folded).

    No explicit pad/slice of M: a cdiv grid lets Pallas mask the ragged last
    block (its garbage rows are never consumed).  The whole weight stays
    VMEM-resident so it is DMA'd exactly once.
    """
    M, K = x.shape
    K2, Cout = w.shape
    assert K == K2
    tm = min(_round_up(M, 8), 1024)
    grid = (pl.cdiv(M, tm),)

    cost = pl.CostEstimate(
        flops=2 * M * K * Cout,
        transcendentals=0,
        bytes_accessed=int(M * K * x.dtype.itemsize
                           + K * Cout * w.dtype.itemsize
                           + M * Cout * jnp.dtype(out_dtype).itemsize),
    )
    return pl.pallas_call(
        functools.partial(_mm_bn_act_kernel, relu=relu),
        out_shape=jax.ShapeDtypeStruct((M, Cout), out_dtype),
        grid=grid,
        in_specs=[
            pl.BlockSpec((tm, K), lambda i: (i, 0)),
            pl.BlockSpec((K, Cout), lambda i: (0, 0)),     # whole weight resident
            pl.BlockSpec((1, Cout), lambda i: (0, 0)),
        ],
        out_specs=pl.BlockSpec((tm, Cout), lambda i: (i, 0)),
        compiler_params=pltpu.CompilerParams(
            dimension_semantics=("parallel",),
            vmem_limit_bytes=_VMEM_LIMIT_BYTES),
        cost_estimate=cost,
    )(x, w, shift)


# ---------------------------------------------------------------------------
# Kernel 2: 3x3 conv (stride 1, pad 1) + BN2 + ReLU  +  fused 1x1 conv3 + BN3.
#
# Input: h1 zero-padded by (1,1) rows and (1, Wp-W-1) cols (Wp = round_up(W+2,8))
# and flattened to (N, (H+2)*Wp, Cmid).  Output keeps the "padded-row" layout
# (N, H*Wp, Cout): each image row keeps Wp-W junk columns, so every kh tap is a
# single 8-aligned contiguous window
#     win_kh[j] = X[band_start + kh*Wp + j]
# and the +/-1 kw shifts are applied to the f32 tap outputs with pltpu.roll
# (the wrapped row lands only in a discarded junk column).  After the 9-tap
# accumulate the epilogue applies relu(acc+shift2), casts to bf16 and runs the
# conv3 matmul (+shift3) so h2 never hits HBM.
# ---------------------------------------------------------------------------
def _conv3x3_conv1x1_bn_kernel(x_ref, w2_ref, shift2_ref, w3_ref, shift3_ref,
                               o_ref, acc_ref, *, wp):
    rows = acc_ref.shape[0]                      # = band_rows * Wp, multiple of 8
    base = pl.program_id(1) * rows
    for kh in range(3):
        start = pl.multiple_of(base + kh * wp, 8)        # wp % 8 == 0
        win = x_ref[pl.ds(start, rows), :]               # aligned bf16 load
        c0 = jnp.dot(win, w2_ref[kh * 3 + 0], preferred_element_type=jnp.float32)
        c1 = jnp.dot(win, w2_ref[kh * 3 + 1], preferred_element_type=jnp.float32)
        c2 = jnp.dot(win, w2_ref[kh * 3 + 2], preferred_element_type=jnp.float32)
        # kw = 0 needs C[p-1] -> roll(+1); kw = 2 needs C[p+1] -> roll(rows-1).
        # The single wrapped position of each roll maps to a junk pad column.
        contrib = (pltpu.roll(c0, 1, axis=0) + c1
                   + pltpu.roll(c2, rows - 1, axis=0))
        if kh == 0:
            acc_ref[...] = contrib
        else:
            acc_ref[...] += contrib
    h2 = jnp.maximum(acc_ref[...] + shift2_ref[...], 0.0).astype(jnp.bfloat16)
    h3 = jnp.dot(h2, w3_ref[...], preferred_element_type=jnp.float32)
    o_ref[...] = (h3 + shift3_ref[...]).astype(o_ref.dtype)


def _pick_row_band(H, Wp, cmid, cout, budget=6 * 1024 * 1024):
    # per band-row bytes: f32 acc + double-buffered bf16 output band.
    per_row = Wp * (4 * cmid + 4 * cout)
    cands = [d for d in range(1, H + 1) if H % d == 0]
    fitting = [d for d in cands if d * per_row <= budget]
    return max(fitting) if fitting else 1


def conv3x3_bn_relu_conv1x1_bn(h1, w2_taps, shift2, w3, shift3,
                               *, out_dtype=jnp.bfloat16):
    N, H, W, Cmid = h1.shape
    Cout = w3.shape[1]
    Wp = _round_up(W + 2, 8)      # 1 left conv-pad col, >=1 right pad col, 8-aligned
    Hg = H + 2                    # 1 zero-pad row top and bottom
    # TODO(synk): conv1 could write directly into this padded layout
    # (pre-zeroed buffer + input_output_aliases + Element-offset out index_map)
    # to remove this last XLA-side pad copy of h1.
    hg = jnp.pad(h1, ((0, 0), (1, 1), (1, Wp - W - 1), (0, 0)))
    hg = hg.reshape(N, Hg * Wp, Cmid)

    trb = _pick_row_band(H, Wp, Cmid, Cout)
    rows = trb * Wp
    grid = (N, H // trb)

    cost = pl.CostEstimate(
        flops=2 * N * H * Wp * Cmid * (9 * Cmid + Cout),
        transcendentals=0,
        bytes_accessed=int(N * Hg * Wp * Cmid * hg.dtype.itemsize
                           + (9 * Cmid * Cmid + Cmid * Cout) * w2_taps.dtype.itemsize
                           + N * H * Wp * Cout * jnp.dtype(out_dtype).itemsize),
    )
    # NOTE(v7x): the whole-image and weight blocks have constant index per n;
    # pipeline_mode=pl.Buffered(1) on them would save VMEM on the 64 MiB chip.
    out = pl.pallas_call(
        functools.partial(_conv3x3_conv1x1_bn_kernel, wp=Wp),
        out_shape=jax.ShapeDtypeStruct((N, H * Wp, Cout), out_dtype),
        grid=grid,
        in_specs=[
            pl.BlockSpec((None, Hg * Wp, Cmid), lambda n, b: (n, 0, 0)),  # padded image
            pl.BlockSpec((9, Cmid, Cmid), lambda n, b: (0, 0, 0)),        # conv2 taps
            pl.BlockSpec((1, Cmid), lambda n, b: (0, 0)),                 # bn2 shift
            pl.BlockSpec((Cmid, Cout), lambda n, b: (0, 0)),              # conv3 weight
            pl.BlockSpec((1, Cout), lambda n, b: (0, 0)),                 # bn3 shift
        ],
        out_specs=pl.BlockSpec((None, rows, Cout), lambda n, b: (n, b, 0)),
        scratch_shapes=[pltpu.VMEM((rows, Cmid), jnp.float32)],
        compiler_params=pltpu.CompilerParams(
            dimension_semantics=("parallel", "parallel"),   # bands are independent
            vmem_limit_bytes=_VMEM_LIMIT_BYTES),
        cost_estimate=cost,
    )(hg, w2_taps, shift2, w3, shift3)
    return out, Wp


# ---------------------------------------------------------------------------
# Kernel 3: per-image SE gate * h3 + identity, final ReLU.  h3 arrives in the
# padded-row layout; the junk columns are dropped in-kernel so no extra HBM
# round trip is needed.  Identity and output are bf16 (mem-bound stage).
# The gate itself (global avg pool + two tiny FC layers, ~N*C values) stays in
# plain JAX -- a dedicated Pallas call there would be pure launch overhead.
# ---------------------------------------------------------------------------
def _se_gate_residual_kernel(x3_ref, idn_ref, gate_ref, o_ref, *, w):
    x = x3_ref[:, 1:w + 1, :].astype(jnp.float32)      # drop junk pad columns
    y = x * gate_ref[...] + idn_ref[...].astype(jnp.float32)
    o_ref[...] = jnp.maximum(y, 0.0).astype(o_ref.dtype)


def _pick_row_tile(H, row_bytes, budget=6 * 1024 * 1024):
    cands = [d for d in range(1, H + 1) if H % d == 0]
    fitting = [d for d in cands if d * row_bytes <= budget]
    return max(fitting) if fitting else 1


def se_gate_residual_relu(h3p, identity, gate, W, *, out_dtype=jnp.bfloat16):
    N, H, Wp, Cout = h3p.shape
    Ni, Hi, Wi, Cin = identity.shape
    assert (Ni, Hi, Wi) == (N, H, W) and Cin == Cout
    row_bytes = 2 * (Wp * Cout + W * Cin + W * Cout) * 2     # dbl-buffered bf16
    th = _pick_row_tile(H, row_bytes)
    grid = (N, H // th)
    return pl.pallas_call(
        functools.partial(_se_gate_residual_kernel, w=W),
        out_shape=jax.ShapeDtypeStruct((N, H, W, Cout), out_dtype),
        grid=grid,
        in_specs=[
            pl.BlockSpec((None, th, Wp, Cout), lambda n, t: (n, t, 0, 0)),
            pl.BlockSpec((None, th, W, Cin), lambda n, t: (n, t, 0, 0)),
            pl.BlockSpec((None, 1, 1, Cout), lambda n, t: (n, 0, 0, 0)),
        ],
        out_specs=pl.BlockSpec((None, th, W, Cout), lambda n, t: (n, t, 0, 0)),
        compiler_params=pltpu.CompilerParams(
            dimension_semantics=("parallel", "parallel"),
            vmem_limit_bytes=_VMEM_LIMIT_BYTES),
    )(h3p, identity, gate)


# ---------------------------------------------------------------------------
# Parameters (deterministic, matching the PyTorch init: N(0, sqrt(2/n)))
# ---------------------------------------------------------------------------
def init_params(key, cin, cmid, cout, r):
    eps = 1e-5
    keys = jax.random.split(key, 5)

    def conv_w(k, co, ci, ks):
        n = ks * ks * co
        return jax.random.normal(k, (co, ci, ks, ks), jnp.float32) * math.sqrt(2.0 / n)

    w1 = conv_w(keys[0], cmid, cin, 1)          # conv1: (Cmid, Cin, 1, 1)
    w2 = conv_w(keys[1], cmid, cmid, 3)         # conv2: (Cmid, Cmid, 3, 3)
    w3 = conv_w(keys[2], cout, cmid, 1)         # conv3: (Cout, Cmid, 1, 1)
    se1 = conv_w(keys[3], cout // r, cout, 1)   # SE fc1
    se2 = conv_w(keys[4], cout, cout // r, 1)   # SE fc2

    def bn_fold(c):
        gamma = jnp.ones((c,), jnp.float32)
        beta = jnp.zeros((c,), jnp.float32)
        mean = jnp.zeros((c,), jnp.float32)
        var = jnp.ones((c,), jnp.float32)
        scale = gamma / jnp.sqrt(var + eps)
        shift = beta - mean * scale
        return scale, shift.reshape(1, c)

    s1, shift1 = bn_fold(cmid)
    s2, shift2 = bn_fold(cmid)
    s3, shift3 = bn_fold(cout)

    # BN scale folded into the conv weights; conv weights stored bf16
    # (MXU-native), shifts stay f32.
    w1m = (jnp.transpose(w1[:, :, 0, 0], (1, 0)) * s1[None, :]).astype(jnp.bfloat16)
    w2m = (jnp.transpose(w2, (2, 3, 1, 0)).reshape(9, cmid, cmid)
           * s2[None, None, :]).astype(jnp.bfloat16)               # (9, Ci, Co)
    w3m = (jnp.transpose(w3[:, :, 0, 0], (1, 0)) * s3[None, :]).astype(jnp.bfloat16)

    return dict(
        w1=w1m, w2=w2m, w3=w3m,
        se_w1=jnp.transpose(se1[:, :, 0, 0], (1, 0)),   # (Cout, Cout//r) f32
        se_w2=jnp.transpose(se2[:, :, 0, 0], (1, 0)),   # (Cout//r, Cout) f32
        bn1_shift=shift1, bn2_shift=shift2, bn3_shift=shift3,
    )


# ---------------------------------------------------------------------------
# Forward pass (stride=1, downsample=None -> identity residual)
# ---------------------------------------------------------------------------
def se_bottleneck_forward(x_nchw, params):
    N, Cin, H, W = x_nchw.shape
    Cmid = params["w1"].shape[1]
    Cout = params["w3"].shape[1]
    assert Cin == Cout, "identity residual requires in_channels == out_channels"

    # NCHW -> NHWC once, directly in bf16 (no extra f32 NHWC copy); this buffer
    # is both the conv1 input and the residual identity.
    xb = jnp.transpose(x_nchw, (0, 2, 3, 1)).astype(jnp.bfloat16)

    # conv1 (1x1) + bn1 + relu
    h1 = matmul_bn_act(xb.reshape(N * H * W, Cin), params["w1"],
                       params["bn1_shift"], relu=True)
    h1 = h1.reshape(N, H, W, Cmid)

    # conv2 (3x3, stride 1, pad 1) + bn2 + relu + conv3 (1x1) + bn3, all fused.
    # Output layout: (N, H*Wp, Cout) with Wp-W junk columns per image row.
    h3p, Wp = conv3x3_bn_relu_conv1x1_bn(h1, params["w2"], params["bn2_shift"],
                                         params["w3"], params["bn3_shift"])
    h3p4 = h3p.reshape(N, H, Wp, Cout)

    # SE gate: global average pool + fc/relu/fc/sigmoid (tiny, plain-JAX glue).
    # The junk-column slice fuses into the reduction -> no materialization.
    pooled = jnp.mean(h3p4[:, :, 1:W + 1, :].astype(jnp.float32), axis=(1, 2))
    gate = jax.nn.sigmoid(
        jnp.maximum(pooled @ params["se_w1"], 0.0) @ params["se_w2"])  # (N, Cout)
    gate4 = gate.reshape(N, 1, 1, Cout)

    # gate * h3 + identity, final ReLU; junk columns dropped in-kernel.
    out = se_gate_residual_relu(h3p4, xb, gate4, W)          # (N,H,W,Cout) bf16
    return jnp.transpose(out, (0, 3, 1, 2))                  # -> NCHW (bf16)


# ---------------------------------------------------------------------------
# Pure-JAX f32 reference (same folded weights), used as a sanity check.
# ---------------------------------------------------------------------------
def _reference_forward(x_nchw, params):
    x = jnp.transpose(x_nchw, (0, 2, 3, 1)).astype(jnp.float32)
    w1 = params["w1"].astype(jnp.float32)
    w2 = params["w2"].astype(jnp.float32)
    w3 = params["w3"].astype(jnp.float32)
    cmid = w1.shape[1]
    h1 = jnp.maximum(x @ w1 + params["bn1_shift"][0], 0.0)
    h2 = jax.lax.conv_general_dilated(
        h1, w2.reshape(3, 3, cmid, cmid), window_strides=(1, 1), padding="SAME",
        dimension_numbers=("NHWC", "HWIO", "NHWC"))
    h2 = jnp.maximum(h2 + params["bn2_shift"][0], 0.0)
    h3 = h2 @ w3 + params["bn3_shift"][0]
    pooled = jnp.mean(h3, axis=(1, 2))
    gate = jax.nn.sigmoid(
        jnp.maximum(pooled @ params["se_w1"], 0.0) @ params["se_w2"])
    out = jnp.maximum(h3 * gate[:, None, None, :] + x, 0.0)
    return jnp.transpose(out, (0, 3, 1, 2))


if __name__ == "__main__":
    key = jax.random.PRNGKey(0)
    in_channels, mid_channels, out_channels, reduction = 8, 4, 8, 2
    params = init_params(key, in_channels, mid_channels, out_channels, reduction)

    x = jax.random.normal(jax.random.fold_in(key, 123),
                          (2, in_channels, 16, 16), dtype=jnp.float32)

    fwd = jax.jit(se_bottleneck_forward)
    out = jax.block_until_ready(fwd(x, params))

    assert out.shape == (2, out_channels, 16, 16)
    assert bool(jnp.all(jnp.isfinite(out)))
    assert bool(jnp.all(out >= 0.0))            # final ReLU

    # bf16 kernels vs f32 reference: loose tolerance, catches structural bugs.
    ref = _reference_forward(x, params)
    rel_err = float(jnp.max(jnp.abs(out.astype(jnp.float32) - ref))
                    / (jnp.max(jnp.abs(ref)) + 1e-6))
    assert rel_err < 1e-1, f"mismatch vs reference: rel_err={rel_err}"

    print("KERNEL_OK")
</pallas_src>

<mosaic_0001>
module attributes {stable_mosaic.version = 11 : i64} {
  func.func @_mm_bn_act_kernel(%arg0: i32, %arg1: memref<512x8xbf16, #tpu.memory_space<vmem>>, %arg2: memref<8x4xbf16, #tpu.memory_space<vmem>>, %arg3: memref<1x4xf32, #tpu.memory_space<vmem>>, %arg4: memref<512x4xbf16, #tpu.memory_space<vmem>>) attributes {dimension_semantics = [#tpu.dimension_semantics<parallel>], iteration_bounds = array<i64: 1>, scalar_prefetch = 0 : i64, scratch_operands = 0 : i64, tpu.core_type = #tpu.core_type<tc>, window_params = [{transform_indices = @transform_0, window_bounds = array<i64: 512, 8>}, {pipeline_mode = #tpu.pipeline_mode<synchronous>, transform_indices = @transform_1, window_bounds = array<i64: 8, 4>}, {pipeline_mode = #tpu.pipeline_mode<synchronous>, transform_indices = @transform_2, window_bounds = array<i64: 1, 4>}, {transform_indices = @transform_3, window_bounds = array<i64: 512, 4>}]} {
    %c0 = arith.constant 0 : index
    %c0_0 = arith.constant 0 : index
    %0 = vector.load %arg1[%c0, %c0_0] : memref<512x8xbf16, #tpu.memory_space<vmem>>, vector<512x8xbf16>
    %c0_1 = arith.constant 0 : index
    %c0_2 = arith.constant 0 : index
    %1 = vector.load %arg2[%c0_1, %c0_2] : memref<8x4xbf16, #tpu.memory_space<vmem>>, vector<8x4xbf16>
    %cst = arith.constant dense<0.000000e+00> : vector<512x4xf32>
    %2 = tpu.matmul %0, %1, %cst {dimension_numbers = #tpu.dot_dimension_numbers<[1], [0], [0], [1], [0, 0, 1, 1], [], []>} : vector<512x8xbf16>, vector<8x4xbf16>, vector<512x4xf32> -> vector<512x4xf32>
    %c0_3 = arith.constant 0 : index
    %c0_4 = arith.constant 0 : index
    %3 = vector.load %arg3[%c0_3, %c0_4] : memref<1x4xf32, #tpu.memory_space<vmem>>, vector<1x4xf32>
    %4 = vector.broadcast %3 : vector<1x4xf32> to vector<512x4xf32>
    %5 = arith.addf %2, %4 : vector<512x4xf32>
    %cst_5 = arith.constant 0.000000e+00 : f32
    %6 = vector.broadcast %cst_5 : f32 to vector<512x4xf32>
    %7 = arith.maximumf %5, %6 : vector<512x4xf32>
    %8 = arith.truncf %7 : vector<512x4xf32> to vector<512x4xbf16>
    %c0_6 = arith.constant 0 : index
    %c0_7 = arith.constant 0 : index
    %9 = vector.load %arg4[%c0_6, %c0_7] : memref<512x4xbf16, #tpu.memory_space<vmem>>, vector<512x4xbf16>
    tpu.vector_store %arg4[%c0_6, %c0_7], %8 {strides = array<i32>} : memref<512x4xbf16, #tpu.memory_space<vmem>>, vector<512x4xbf16>,
    return
  }
  func.func @transform_0(%arg0: i32) -> (i32, i32) {
    %c0_i32 = arith.constant 0 : i32
    %c0_i32_0 = arith.constant 0 : i32
    return %arg0, %c0_i32 : i32, i32
  }
  func.func @transform_1(%arg0: i32) -> (i32, i32) {
    %c0_i32 = arith.constant 0 : i32
    %c0_i32_0 = arith.constant 0 : i32
    %c0_i32_1 = arith.constant 0 : i32
    return %c0_i32, %c0_i32_0 : i32, i32
  }
  func.func @transform_2(%arg0: i32) -> (i32, i32) {
    %c0_i32 = arith.constant 0 : i32
    %c0_i32_0 = arith.constant 0 : i32
    %c0_i32_1 = arith.constant 0 : i32
    return %c0_i32, %c0_i32_0 : i32, i32
  }
  func.func @transform_3(%arg0: i32) -> (i32, i32) {
    %c0_i32 = arith.constant 0 : i32
    %c0_i32_0 = arith.constant 0 : i32
    return %arg0, %c0_i32 : i32, i32
  }
}

module attributes {stable_mosaic.version = 11 : i64} {
  func.func @_conv3x3_conv1x1_bn_kernel(%arg0: i32, %arg1: i32, %arg2: memref<1x432x4xbf16, #tpu.memory_space<vmem>>, %arg3: memref<9x4x4xbf16, #tpu.memory_space<vmem>>, %arg4: memref<1x4xf32, #tpu.memory_space<vmem>>, %arg5: memref<4x8xbf16, #tpu.memory_space<vmem>>, %arg6: memref<1x8xf32, #tpu.memory_space<vmem>>, %arg7: memref<1x384x8xbf16, #tpu.memory_space<vmem>>, %arg8: memref<384x4xf32, #tpu.memory_space<vmem>>) attributes {dimension_semantics = [#tpu.dimension_semantics<parallel>, #tpu.dimension_semantics<parallel>], iteration_bounds = array<i64: 2, 1>, scalar_prefetch = 0 : i64, scratch_operands = 1 : i64, tpu.core_type = #tpu.core_type<tc>, window_params = [{transform_indices = @transform_0, window_bounds = array<i64: 1, 432, 4>}, {pipeline_mode = #tpu.pipeline_mode<synchronous>, transform_indices = @transform_1, window_bounds = array<i64: 9, 4, 4>}, {pipeline_mode = #tpu.pipeline_mode<synchronous>, transform_indices = @transform_2, window_bounds = array<i64: 1, 4>}, {pipeline_mode = #tpu.pipeline_mode<synchronous>, transform_indices = @transform_3, window_bounds = array<i64: 4, 8>}, {pipeline_mode = #tpu.pipeline_mode<synchronous>, transform_indices = @transform_4, window_bounds = array<i64: 1, 8>}, {transform_indices = @transform_5, window_bounds = array<i64: 1, 384, 8>}]} {
    %c384_i32 = arith.constant 384 : i32
    %0 = arith.muli %arg1, %c384_i32 : i32
    %c0_i32 = arith.constant 0 : i32
    %1 = arith.addi %0, %c0_i32 : i32
    %2 = tpu.assume_multiple %1, 8 : i32
    %c0 = arith.constant 0 : index
    %3 = arith.index_cast %2 : i32 to index
    %c0_0 = arith.constant 0 : index
    %4 = vector.load %arg2[%c0, %3, %c0_0] : memref<1x432x4xbf16, #tpu.memory_space<vmem>>, vector<1x384x4xbf16>
    %5 = vector.shape_cast %4 : vector<1x384x4xbf16> to vector<384x4xbf16>
    %c0_1 = arith.constant 0 : index
    %c0_2 = arith.constant 0 : index
    %c0_3 = arith.constant 0 : index
    %6 = vector.load %arg3[%c0_1, %c0_2, %c0_3] : memref<9x4x4xbf16, #tpu.memory_space<vmem>>, vector<1x4x4xbf16>
    %7 = vector.shape_cast %6 : vector<1x4x4xbf16> to vector<4x4xbf16>
    %cst = arith.constant dense<0.000000e+00> : vector<384x4xf32>
    %8 = tpu.matmul %5, %7, %cst {dimension_numbers = #tpu.dot_dimension_numbers<[1], [0], [0], [1], [0, 0, 1, 1], [], []>} : vector<384x4xbf16>, vector<4x4xbf16>, vector<384x4xf32> -> vector<384x4xf32>
    %c1 = arith.constant 1 : index
    %c0_4 = arith.constant 0 : index
    %c0_5 = arith.constant 0 : index
    %9 = vector.load %arg3[%c1, %c0_4, %c0_5] : memref<9x4x4xbf16, #tpu.memory_space<vmem>>, vector<1x4x4xbf16>
    %10 = vector.shape_cast %9 : vector<1x4x4xbf16> to vector<4x4xbf16>
    %cst_6 = arith.constant dense<0.000000e+00> : vector<384x4xf32>
    %11 = tpu.matmul %5, %10, %cst_6 {dimension_numbers = #tpu.dot_dimension_numbers<[1], [0], [0], [1], [0, 0, 1, 1], [], []>} : vector<384x4xbf16>, vector<4x4xbf16>, vector<384x4xf32> -> vector<384x4xf32>
    %c2 = arith.constant 2 : index
    %c0_7 = arith.constant 0 : index
    %c0_8 = arith.constant 0 : index
    %12 = vector.load %arg3[%c2, %c0_7, %c0_8] : memref<9x4x4xbf16, #tpu.memory_space<vmem>>, vector<1x4x4xbf16>
    %13 = vector.shape_cast %12 : vector<1x4x4xbf16> to vector<4x4xbf16>
    %cst_9 = arith.constant dense<0.000000e+00> : vector<384x4xf32>
    %14 = tpu.matmul %5, %13, %cst_9 {dimension_numbers = #tpu.dot_dimension_numbers<[1], [0], [0], [1], [0, 0, 1, 1], [], []>} : vector<384x4xbf16>, vector<4x4xbf16>, vector<384x4xf32> -> vector<384x4xf32>
    %c1_i32 = arith.constant 1 : i32
    %15 = tpu.dynamic_rotate %8 by %c1_i32 dim 0 : vector<384x4xf32>, i32 -> vector<384x4xf32>
    %16 = arith.addf %15, %11 : vector<384x4xf32>
    %c383_i32 = arith.constant 383 : i32
    %17 = tpu.dynamic_rotate %14 by %c383_i32 dim 0 : vector<384x4xf32>, i32 -> vector<384x4xf32>
    %18 = arith.addf %16, %17 : vector<384x4xf32>
    %c0_10 = arith.constant 0 : index
    %c0_11 = arith.constant 0 : index
    %19 = vector.load %arg8[%c0_10, %c0_11] : memref<384x4xf32, #tpu.memory_space<vmem>>, vector<384x4xf32>
    tpu.vector_store %arg8[%c0_10, %c0_11], %18 {strides = array<i32>} : memref<384x4xf32, #tpu.memory_space<vmem>>, vector<384x4xf32>,
    %c24_i32 = arith.constant 24 : i32
    %20 = arith.addi %0, %c24_i32 : i32
    %21 = tpu.assume_multiple %20, 8 : i32
    %c0_12 = arith.constant 0 : index
    %22 = arith.index_cast %21 : i32 to index
    %c0_13 = arith.constant 0 : index
    %23 = vector.load %arg2[%c0_12, %22, %c0_13] : memref<1x432x4xbf16, #tpu.memory_space<vmem>>, vector<1x384x4xbf16>
    %24 = vector.shape_cast %23 : vector<1x384x4xbf16> to vector<384x4xbf16>
    %c3 = arith.constant 3 : index
    %c0_14 = arith.constant 0 : index
    %c0_15 = arith.constant 0 : index
    %25 = vector.load %arg3[%c3, %c0_14, %c0_15] : memref<9x4x4xbf16, #tpu.memory_space<vmem>>, vector<1x4x4xbf16>
    %26 = vector.shape_cast %25 : vector<1x4x4xbf16> to vector<4x4xbf16>
    %cst_16 = arith.constant dense<0.000000e+00> : vector<384x4xf32>
    %27 = tpu.matmul %24, %26, %cst_16 {dimension_numbers = #tpu.dot_dimension_numbers<[1], [0], [0], [1], [0, 0, 1, 1], [], []>} : vector<384x4xbf16>, vector<4x4xbf16>, vector<384x4xf32> -> vector<384x4xf32>
    %c4 = arith.constant 4 : index
    %c0_17 = arith.constant 0 : index
    %c0_18 = arith.constant 0 : index
    %28 = vector.load %arg3[%c4, %c0_17, %c0_18] : memref<9x4x4xbf16, #tpu.memory_space<vmem>>, vector<1x4x4xbf16>
    %29 = vector.shape_cast %28 : vector<1x4x4xbf16> to vector<4x4xbf16>
    %cst_19 = arith.constant dense<0.000000e+00> : vector<384x4xf32>
    %30 = tpu.matmul %24, %29, %cst_19 {dimension_numbers = #tpu.dot_dimension_numbers<[1], [0], [0], [1], [0, 0, 1, 1], [], []>} : vector<384x4xbf16>, vector<4x4xbf16>, vector<384x4xf32> -> vector<384x4xf32>
    %c5 = arith.constant 5 : index
    %c0_20 = arith.constant 0 : index
    %c0_21 = arith.constant 0 : index
    %31 = vector.load %arg3[%c5, %c0_20, %c0_21] : memref<9x4x4xbf16, #tpu.memory_space<vmem>>, vector<1x4x4xbf16>
    %32 = vector.shape_cast %31 : vector<1x4x4xbf16> to vector<4x4xbf16>
    %cst_22 = arith.constant dense<0.000000e+00> : vector<384x4xf32>
    %33 = tpu.matmul %24, %32, %cst_22 {dimension_numbers = #tpu.dot_dimension_numbers<[1], [0], [0], [1], [0, 0, 1, 1], [], []>} : vector<384x4xbf16>, vector<4x4xbf16>, vector<384x4xf32> -> vector<384x4xf32>
    %c1_i32_23 = arith.constant 1 : i32
    %34 = tpu.dynamic_rotate %27 by %c1_i32_23 dim 0 : vector<384x4xf32>, i32 -> vector<384x4xf32>
    %35 = arith.addf %34, %30 : vector<384x4xf32>
    %c383_i32_24 = arith.constant 383 : i32
    %36 = tpu.dynamic_rotate %33 by %c383_i32_24 dim 0 : vector<384x4xf32>, i32 -> vector<384x4xf32>
    %37 = arith.addf %35, %36 : vector<384x4xf32>
    %c0_25 = arith.constant 0 : index
    %c0_26 = arith.constant 0 : index
    %38 = vector.load %arg8[%c0_25, %c0_26] : memref<384x4xf32, #tpu.memory_space<vmem>>, vector<384x4xf32>
    %39 = arith.addf %38, %37 : vector<384x4xf32>
    %c0_27 = arith.constant 0 : index
    %c0_28 = arith.constant 0 : index
    %40 = vector.load %arg8[%c0_27, %c0_28] : memref<384x4xf32, #tpu.memory_space<vmem>>, vector<384x4xf32>
    tpu.vector_store %arg8[%c0_27, %c0_28], %39 {strides = array<i32>} : memref<384x4xf32, #tpu.memory_space<vmem>>, vector<384x4xf32>,
    %c48_i32 = arith.constant 48 : i32
    %41 = arith.addi %0, %c48_i32 : i32
    %42 = tpu.assume_multiple %41, 8 : i32
    %c0_29 = arith.constant 0 : index
    %43 = arith.index_cast %42 : i32 to index
    %c0_30 = arith.constant 0 : index
    %44 = vector.load %arg2[%c0_29, %43, %c0_30] : memref<1x432x4xbf16, #tpu.memory_space<vmem>>, vector<1x384x4xbf16>
    %45 = vector.shape_cast %44 : vector<1x384x4xbf16> to vector<384x4xbf16>
    %c6 = arith.constant 6 : index
    %c0_31 = arith.constant 0 : index
    %c0_32 = arith.constant 0 : index
    %46 = vector.load %arg3[%c6, %c0_31, %c0_32] : memref<9x4x4xbf16, #tpu.memory_space<vmem>>, vector<1x4x4xbf16>
    %47 = vector.shape_cast %46 : vector<1x4x4xbf16> to vector<4x4xbf16>
    %cst_33 = arith.constant dense<0.000000e+00> : vector<384x4xf32>
    %48 = tpu.matmul %45, %47, %cst_33 {dimension_numbers = #tpu.dot_dimension_numbers<[1], [0], [0], [1], [0, 0, 1, 1], [], []>} : vector<384x4xbf16>, vector<4x4xbf16>, vector<384x4xf32> -> vector<384x4xf32>
    %c7 = arith.constant 7 : index
    %c0_34 = arith.constant 0 : index
    %c0_35 = arith.constant 0 : index
    %49 = vector.load %arg3[%c7, %c0_34, %c0_35] : memref<9x4x4xbf16, #tpu.memory_space<vmem>>, vector<1x4x4xbf16>
    %50 = vector.shape_cast %49 : vector<1x4x4xbf16> to vector<4x4xbf16>
    %cst_36 = arith.constant dense<0.000000e+00> : vector<384x4xf32>
    %51 = tpu.matmul %45, %50, %cst_36 {dimension_numbers = #tpu.dot_dimension_numbers<[1], [0], [0], [1], [0, 0, 1, 1], [], []>} : vector<384x4xbf16>, vector<4x4xbf16>, vector<384x4xf32> -> vector<384x4xf32>
    %c8 = arith.constant 8 : index
    %c0_37 = arith.constant 0 : index
    %c0_38 = arith.constant 0 : index
    %52 = vector.load %arg3[%c8, %c0_37, %c0_38] : memref<9x4x4xbf16, #tpu.memory_space<vmem>>, vector<1x4x4xbf16>
    %53 = vector.shape_cast %52 : vector<1x4x4xbf16> to vector<4x4xbf16>
    %cst_39 = arith.constant dense<0.000000e+00> : vector<384x4xf32>
    %54 = tpu.matmul %45, %53, %cst_39 {dimension_numbers = #tpu.dot_dimension_numbers<[1], [0], [0], [1], [0, 0, 1, 1], [], []>} : vector<384x4xbf16>, vector<4x4xbf16>, vector<384x4xf32> -> vector<384x4xf32>
    %c1_i32_40 = arith.constant 1 : i32
    %55 = tpu.dynamic_rotate %48 by %c1_i32_40 dim 0 : vector<384x4xf32>, i32 -> vector<384x4xf32>
    %56 = arith.addf %55, %51 : vector<384x4xf32>
    %c383_i32_41 = arith.constant 383 : i32
    %57 = tpu.dynamic_rotate %54 by %c383_i32_41 dim 0 : vector<384x4xf32>, i32 -> vector<384x4xf32>
    %58 = arith.addf %56, %57 : vector<384x4xf32>
    %c0_42 = arith.constant 0 : index
    %c0_43 = arith.constant 0 : index
    %59 = vector.load %arg8[%c0_42, %c0_43] : memref<384x4xf32, #tpu.memory_space<vmem>>, vector<384x4xf32>
    %60 = arith.addf %59, %58 : vector<384x4xf32>
    %c0_44 = arith.constant 0 : index
    %c0_45 = arith.constant 0 : index
    %61 = vector.load %arg8[%c0_44, %c0_45] : memref<384x4xf32, #tpu.memory_space<vmem>>, vector<384x4xf32>
    tpu.vector_store %arg8[%c0_44, %c0_45], %60 {strides = array<i32>} : memref<384x4xf32, #tpu.memory_space<vmem>>, vector<384x4xf32>,
    %c0_46 = arith.constant 0 : index
    %c0_47 = arith.constant 0 : index
    %62 = vector.load %arg8[%c0_46, %c0_47] : memref<384x4xf32, #tpu.memory_space<vmem>>, vector<384x4xf32>
    %c0_48 = arith.constant 0 : index
    %c0_49 = arith.constant 0 : index
    %63 = vector.load %arg4[%c0_48, %c0_49] : memref<1x4xf32, #tpu.memory_space<vmem>>, vector<1x4xf32>
    %64 = vector.broadcast %63 : vector<1x4xf32> to vector<384x4xf32>
    %65 = arith.addf %62, %64 : vector<384x4xf32>
    %cst_50 = arith.constant 0.000000e+00 : f32
    %66 = vector.broadcast %cst_50 : f32 to vector<384x4xf32>
    %67 = arith.maximumf %65, %66 : vector<384x4xf32>
    %68 = arith.truncf %67 : vector<384x4xf32> to vector<384x4xbf16>
    %c0_51 = arith.constant 0 : index
    %c0_52 = arith.constant 0 : index
    %69 = vector.load %arg5[%c0_51, %c0_52] : memref<4x8xbf16, #tpu.memory_space<vmem>>, vector<4x8xbf16>
    %cst_53 = arith.constant dense<0.000000e+00> : vector<384x8xf32>
    %70 = tpu.matmul %68, %69, %cst_53 {dimension_numbers = #tpu.dot_dimension_numbers<[1], [0], [0], [1], [0, 0, 1, 1], [], []>} : vector<384x4xbf16>, vector<4x8xbf16>, vector<384x8xf32> -> vector<384x8xf32>
    %c0_54 = arith.constant 0 : index
    %c0_55 = arith.constant 0 : index
    %71 = vector.load %arg6[%c0_54, %c0_55] : memref<1x8xf32, #tpu.memory_space<vmem>>, vector<1x8xf32>
    %72 = vector.broadcast %71 : vector<1x8xf32> to vector<384x8xf32>
    %73 = arith.addf %70, %72 : vector<384x8xf32>
    %74 = arith.truncf %73 : vector<384x8xf32> to vector<384x8xbf16>
    %c0_56 = arith.constant 0 : index
    %c0_57 = arith.constant 0 : index
    %c0_58 = arith.constant 0 : index
    %75 = vector.load %arg7[%c0_56, %c0_57, %c0_58] : memref<1x384x8xbf16, #tpu.memory_space<vmem>>, vector<1x384x8xbf16>
    %76 = vector.shape_cast %75 : vector<1x384x8xbf16> to vector<384x8xbf16>
    %77 = vector.shape_cast %74 : vector<384x8xbf16> to vector<1x384x8xbf16>
    tpu.vector_store %arg7[%c0_56, %c0_57, %c0_58], %77 {strides = array<i32>} : memref<1x384x8xbf16, #tpu.memory_space<vmem>>, vector<1x384x8xbf16>,
    return
  }
  func.func @transform_0(%arg0: i32, %arg1: i32) -> (i32, i32, i32) {
    %c0_i32 = arith.constant 0 : i32
    %c0_i32_0 = arith.constant 0 : i32
    %c0_i32_1 = arith.constant 0 : i32
    return %arg0, %c0_i32, %c0_i32_0 : i32, i32, i32
  }
  func.func @transform_1(%arg0: i32, %arg1: i32) -> (i32, i32, i32) {
    %c0_i32 = arith.constant 0 : i32
    %c0_i32_0 = arith.constant 0 : i32
    %c0_i32_1 = arith.constant 0 : i32
    %c0_i32_2 = arith.constant 0 : i32
    return %c0_i32, %c0_i32_0, %c0_i32_1 : i32, i32, i32
  }
  func.func @transform_2(%arg0: i32, %arg1: i32) -> (i32, i32) {
    %c0_i32 = arith.constant 0 : i32
    %c0_i32_0 = arith.constant 0 : i32
    %c0_i32_1 = arith.constant 0 : i32
    return %c0_i32, %c0_i32_0 : i32, i32
  }
  func.func @transform_3(%arg0: i32, %arg1: i32) -> (i32, i32) {
    %c0_i32 = arith.constant 0 : i32
    %c0_i32_0 = arith.constant 0 : i32
    %c0_i32_1 = arith.constant 0 : i32
    return %c0_i32, %c0_i32_0 : i32, i32
  }
  func.func @transform_4(%arg0: i32, %arg1: i32) -> (i32, i32) {
    %c0_i32 = arith.constant 0 : i32
    %c0_i32_0 = arith.constant 0 : i32
    %c0_i32_1 = arith.constant 0 : i32
    return %c0_i32, %c0_i32_0 : i32, i32
  }
  func.func @transform_5(%arg0: i32, %arg1: i32) -> (i32, i32, i32) {
    %c0_i32 = arith.constant 0 : i32
    %c0_i32_0 = arith.constant 0 : i32
    return %arg0, %arg1, %c0_i32 : i32, i32, i32
  }
}

module attributes {stable_mosaic.version = 11 : i64} {
  func.func @_se_gate_residual_kernel(%arg0: i32, %arg1: i32, %arg2: memref<1x16x24x8xbf16, #tpu.memory_space<vmem>>, %arg3: memref<1x16x16x8xbf16, #tpu.memory_space<vmem>>, %arg4: memref<1x1x1x8xf32, #tpu.memory_space<vmem>>, %arg5: memref<1x16x16x8xbf16, #tpu.memory_space<vmem>>) attributes {dimension_semantics = [#tpu.dimension_semantics<parallel>, #tpu.dimension_semantics<parallel>], iteration_bounds = array<i64: 2, 1>, scalar_prefetch = 0 : i64, scratch_operands = 0 : i64, tpu.core_type = #tpu.core_type<tc>, window_params = [{transform_indices = @transform_0, window_bounds = array<i64: 1, 16, 24, 8>}, {transform_indices = @transform_1, window_bounds = array<i64: 1, 16, 16, 8>}, {transform_indices = @transform_2, window_bounds = array<i64: 1, 1, 1, 8>}, {transform_indices = @transform_3, window_bounds = array<i64: 1, 16, 16, 8>}]} {
    %c0 = arith.constant 0 : index
    %c0_0 = arith.constant 0 : index
    %c1 = arith.constant 1 : index
    %c0_1 = arith.constant 0 : index
    %0 = vector.load %arg2[%c0, %c0_0, %c1, %c0_1] : memref<1x16x24x8xbf16, #tpu.memory_space<vmem>>, vector<1x16x16x8xbf16>
    %1 = vector.shape_cast %0 : vector<1x16x16x8xbf16> to vector<16x16x8xbf16>
    %2 = arith.extf %1 : vector<16x16x8xbf16> to vector<16x16x8xf32>
    %c0_2 = arith.constant 0 : index
    %c0_3 = arith.constant 0 : index
    %c0_4 = arith.constant 0 : index
    %c0_5 = arith.constant 0 : index
    %3 = vector.load %arg4[%c0_2, %c0_3, %c0_4, %c0_5] : memref<1x1x1x8xf32, #tpu.memory_space<vmem>>, vector<1x1x1x8xf32>
    %4 = vector.shape_cast %3 : vector<1x1x1x8xf32> to vector<1x1x8xf32>
    %5 = vector.broadcast %4 : vector<1x1x8xf32> to vector<16x16x8xf32>
    %6 = arith.mulf %2, %5 : vector<16x16x8xf32>
    %c0_6 = arith.constant 0 : index
    %c0_7 = arith.constant 0 : index
    %c0_8 = arith.constant 0 : index
    %c0_9 = arith.constant 0 : index
    %7 = vector.load %arg3[%c0_6, %c0_7, %c0_8, %c0_9] : memref<1x16x16x8xbf16, #tpu.memory_space<vmem>>, vector<1x16x16x8xbf16>
    %8 = vector.shape_cast %7 : vector<1x16x16x8xbf16> to vector<16x16x8xbf16>
    %9 = arith.extf %8 : vector<16x16x8xbf16> to vector<16x16x8xf32>
    %10 = arith.addf %6, %9 : vector<16x16x8xf32>
    %cst = arith.constant 0.000000e+00 : f32
    %11 = vector.broadcast %cst : f32 to vector<16x16x8xf32>
    %12 = arith.maximumf %10, %11 : vector<16x16x8xf32>
    %13 = arith.truncf %12 : vector<16x16x8xf32> to vector<16x16x8xbf16>
    %c0_10 = arith.constant 0 : index
    %c0_11 = arith.constant 0 : index
    %c0_12 = arith.constant 0 : index
    %c0_13 = arith.constant 0 : index
    %14 = vector.load %arg5[%c0_10, %c0_11, %c0_12, %c0_13] : memref<1x16x16x8xbf16, #tpu.memory_space<vmem>>, vector<1x16x16x8xbf16>
    %15 = vector.shape_cast %14 : vector<1x16x16x8xbf16> to vector<16x16x8xbf16>
    %16 = vector.shape_cast %13 : vector<16x16x8xbf16> to vector<1x16x16x8xbf16>
    tpu.vector_store %arg5[%c0_10, %c0_11, %c0_12, %c0_13], %16 {strides = array<i32>} : memref<1x16x16x8xbf16, #tpu.memory_space<vmem>>, vector<1x16x16x8xbf16>,
    return
  }
  func.func @transform_0(%arg0: i32, %arg1: i32) -> (i32, i32, i32, i32) {
    %c0_i32 = arith.constant 0 : i32
    %c0_i32_0 = arith.constant 0 : i32
    %c0_i32_1 = arith.constant 0 : i32
    return %arg0, %arg1, %c0_i32, %c0_i32_0 : i32, i32, i32, i32
  }
  func.func @transform_1(%arg0: i32, %arg1: i32) -> (i32, i32, i32, i32) {
    %c0_i32 = arith.constant 0 : i32
    %c0_i32_0 = arith.constant 0 : i32
    %c0_i32_1 = arith.constant 0 : i32
    return %arg0, %arg1, %c0_i32, %c0_i32_0 : i32, i32, i32, i32
  }
  func.func @transform_2(%arg0: i32, %arg1: i32) -> (i32, i32, i32, i32) {
    %c0_i32 = arith.constant 0 : i32
    %c0_i32_0 = arith.constant 0 : i32
    %c0_i32_1 = arith.constant 0 : i32
    %c0_i32_2 = arith.constant 0 : i32
    return %arg0, %c0_i32, %c0_i32_0, %c0_i32_1 : i32, i32, i32, i32
  }
  func.func @transform_3(%arg0: i32, %arg1: i32) -> (i32, i32, i32, i32) {
    %c0_i32 = arith.constant 0 : i32
    %c0_i32_0 = arith.constant 0 : i32
    %c0_i32_1 = arith.constant 0 : i32
    return %arg0, %arg1, %c0_i32, %c0_i32_0 : i32, i32, i32, i32
  }
}

</mosaic_0001>

<llo_original>
// kernel: se_bottleneck_forward.3
$region0: #{se_bottleneck_forward.3}
  #allocation0 [shape = 'u32[]', space=smem, size = 0x4, offset = 0x4, fixed_abs, tag = 'smem constant byte address 0x4 - core index']
  #allocation1 [shape = 'u32[144,128]{1,0:T(1,128)}', space=vmem, size = 0x12000, scoped, tag = 'internal scratch']
  %s0 = inlined_call_operand.vmem [shape: bf16[512,8], index: 0, kind: input, shape index: {}]
  %s1 = inlined_call_operand.vmem [shape: bf16[8,4], index: 1, kind: input, shape index: {}]
  %s2 = inlined_call_operand.vmem [shape: f32[1,4], index: 2, kind: input, shape index: {}]
  %s3 = inlined_call_operand.vmem [shape: bf16[512,4], index: 3, kind: output, shape index: {}]
  %s4 = sld [smem:[#allocation0]]
  $region22: #{se_bottleneck_forward.3} parent=0
    _
  %s6 = ssub.s32 1, %s4
  %s7 = scalar_select 0, %s6, %s4
  // Predicated region
  $region2: #{se_bottleneck_forward.3} parent=0 // pred_check
    _
  $region3: #{se_bottleneck_forward.3} parent=0 // pred_check_branch
    %9 = sbr.rel (0) target = $region5
  $region4: #{se_bottleneck_forward.3} parent=0 // pred_region
    _
  $region5: #{se_bottleneck_forward.3} parent=0 // pred_fallthru
    _
  // Predicated region
  $region6: #{se_bottleneck_forward.3} parent=0 // pred_check
    _
  $region7: #{se_bottleneck_forward.3} parent=0 // pred_check_branch
    %11 = sbr.rel (0) target = $region9
  $region8: #{se_bottleneck_forward.3} parent=0 // pred_region
    _
  $region9: #{se_bottleneck_forward.3} parent=0 // pred_fallthru
    _
  // Predicated region
  $region10: #{se_bottleneck_forward.3} parent=0 // pred_check
    _
  $region11: #{se_bottleneck_forward.3} parent=0 // pred_check_branch
    %13 = sbr.rel (0) target = $region13
  $region12: #{se_bottleneck_forward.3} parent=0 // pred_region
    _
  $region13: #{se_bottleneck_forward.3} parent=0 // pred_fallthru
    _
  %v15 = vld [vmem:[%s0] sm:$0xf]
  %v16 = vld [vmem:[%s0 + $0x4] sm:$0xf]
  %v17 = vld [vmem:[%s0 + $0x8] sm:$0xf]
  %v18 = vld [vmem:[%s0 + $0xc] sm:$0xf]
  %v19 = vld [vmem:[%s0 + $0x10] sm:$0xf]
  %v20 = vld [vmem:[%s0 + $0x14] sm:$0xf]
  %v21 = vld [vmem:[%s0 + $0x18] sm:$0xf]
  %v22 = vld [vmem:[%s0 + $0x1c] sm:$0xf]
  %v23 = vld [vmem:[%s0 + $0x20] sm:$0xf]
  %v24 = vld [vmem:[%s0 + $0x24] sm:$0xf]
  %v25 = vld [vmem:[%s0 + $0x28] sm:$0xf]
  %v26 = vld [vmem:[%s0 + $0x2c] sm:$0xf]
  %v27 = vld [vmem:[%s0 + $0x30] sm:$0xf]
  %v28 = vld [vmem:[%s0 + $0x34] sm:$0xf]
  %v29 = vld [vmem:[%s0 + $0x38] sm:$0xf]
  %v30 = vld [vmem:[%s0 + $0x3c] sm:$0xf]
  %v31 = vld [vmem:[%s0 + $0x40] sm:$0xf]
  %v32 = vld [vmem:[%s0 + $0x44] sm:$0xf]
  %v33 = vld [vmem:[%s0 + $0x48] sm:$0xf]
  %v34 = vld [vmem:[%s0 + $0x4c] sm:$0xf]
  %v35 = vld [vmem:[%s0 + $0x50] sm:$0xf]
  %v36 = vld [vmem:[%s0 + $0x54] sm:$0xf]
  %v37 = vld [vmem:[%s0 + $0x58] sm:$0xf]
  %v38 = vld [vmem:[%s0 + $0x5c] sm:$0xf]
  %v39 = vld [vmem:[%s0 + $0x60] sm:$0xf]
  %v40 = vld [vmem:[%s0 + $0x64] sm:$0xf]
  %v41 = vld [vmem:[%s0 + $0x68] sm:$0xf]
  %v42 = vld [vmem:[%s0 + $0x6c] sm:$0xf]
  %v43 = vld [vmem:[%s0 + $0x70] sm:$0xf]
  %v44 = vld [vmem:[%s0 + $0x74] sm:$0xf]
  %v45 = vld [vmem:[%s0 + $0x78] sm:$0xf]
  %v46 = vld [vmem:[%s0 + $0x7c] sm:$0xf]
  %v47 = vld [vmem:[%s0 + $0x80] sm:$0xf]
  %v48 = vld [vmem:[%s0 + $0x84] sm:$0xf]
  %v49 = vld [vmem:[%s0 + $0x88] sm:$0xf]
  %v50 = vld [vmem:[%s0 + $0x8c] sm:$0xf]
  %v51 = vld [vmem:[%s0 + $0x90] sm:$0xf]
  %v52 = vld [vmem:[%s0 + $0x94] sm:$0xf]
  %v53 = vld [vmem:[%s0 + $0x98] sm:$0xf]
  %v54 = vld [vmem:[%s0 + $0x9c] sm:$0xf]
  %v55 = vld [vmem:[%s0 + $0xa0] sm:$0xf]
  %v56 = vld [vmem:[%s0 + $0xa4] sm:$0xf]
  %v57 = vld [vmem:[%s0 + $0xa8] sm:$0xf]
  %v58 = vld [vmem:[%s0 + $0xac] sm:$0xf]
  %v59 = vld [vmem:[%s0 + $0xb0] sm:$0xf]
  %v60 = vld [vmem:[%s0 + $0xb4] sm:$0xf]
  %v61 = vld [vmem:[%s0 + $0xb8] sm:$0xf]
  %v62 = vld [vmem:[%s0 + $0xbc] sm:$0xf]
  %v63 = vld [vmem:[%s0 + $0xc0] sm:$0xf]
  %v64 = vld [vmem:[%s0 + $0xc4] sm:$0xf]
  %v65 = vld [vmem:[%s0 + $0xc8] sm:$0xf]
  %v66 = vld [vmem:[%s0 + $0xcc] sm:$0xf]
  %v67 = vld [vmem:[%s0 + $0xd0] sm:$0xf]
  %v68 = vld [vmem:[%s0 + $0xd4] sm:$0xf]
  %v69 = vld [vmem:[%s0 + $0xd8] sm:$0xf]
  %v70 = vld [vmem:[%s0 + $0xdc] sm:$0xf]
  %v71 = vld [vmem:[%s0 + $0xe0] sm:$0xf]
  %v72 = vld [vmem:[%s0 + $0xe4] sm:$0xf]
  %v73 = vld [vmem:[%s0 + $0xe8] sm:$0xf]
  %v74 = vld [vmem:[%s0 + $0xec] sm:$0xf]
  %v75 = vld [vmem:[%s0 + $0xf0] sm:$0xf]
  %v76 = vld [vmem:[%s0 + $0xf4] sm:$0xf]
  %v77 = vld [vmem:[%s0 + $0xf8] sm:$0xf]
  %v78 = vld [vmem:[%s0 + $0xfc] sm:$0xf]
  %v79 = vld [vmem:[%s1] sm:$0xf]
  %v80 = vld [vmem:[%s2] sm:$0x1]
  %v82 = vlaneseq
  %v83 = vshrl.u32 %v82, 7
  %v84 = vsub.s32 0, %v83
  %v85 = vrot.slane %v80, %v84
  %v151 = vunpack.c.l.b16 %v15
  %v152 = vunpack.c.l.b16 %v16
  %v153 = vunpack.c.l.b16 %v17
  %v154 = vunpack.c.l.b16 %v18
  %v155 = vunpack.c.l.b16 %v19
  %v156 = vunpack.c.l.b16 %v20
  %v157 = vunpack.c.l.b16 %v21
  %v158 = vunpack.c.l.b16 %v22
  %v159 = vunpack.c.l.b16 %v23
  %v160 = vunpack.c.l.b16 %v24
  %v161 = vunpack.c.l.b16 %v25
  %v162 = vunpack.c.l.b16 %v26
  %v163 = vunpack.c.l.b16 %v27
  %v164 = vunpack.c.l.b16 %v28
  %v165 = vunpack.c.l.b16 %v29
  %v166 = vunpack.c.l.b16 %v30
  %v167 = vunpack.c.l.b16 %v31
  %v168 = vunpack.c.l.b16 %v32
  %v169 = vunpack.c.l.b16 %v33
  %v170 = vunpack.c.l.b16 %v34
  %v171 = vunpack.c.l.b16 %v35
  %v172 = vunpack.c.l.b16 %v36
  %v173 = vunpack.c.l.b16 %v37
  %v174 = vunpack.c.l.b16 %v38
  %v175 = vunpack.c.l.b16 %v39
  %v176 = vunpack.c.l.b16 %v40
  %v177 = vunpack.c.l.b16 %v41
  %v178 = vunpack.c.l.b16 %v42
  %v179 = vunpack.c.l.b16 %v43
  %v180 = vunpack.c.l.b16 %v44
  %v181 = vunpack.c.l.b16 %v45
  %v182 = vunpack.c.l.b16 %v46
  %v183 = vunpack.c.l.b16 %v47
  %v184 = vunpack.c.l.b16 %v48
  %v185 = vunpack.c.l.b16 %v49
  %v186 = vunpack.c.l.b16 %v50
  %v187 = vunpack.c.l.b16 %v51
  %v188 = vunpack.c.l.b16 %v52
  %v189 = vunpack.c.l.b16 %v53
  %v190 = vunpack.c.l.b16 %v54
  %v191 = vunpack.c.l.b16 %v55
  %v192 = vunpack.c.l.b16 %v56
  %v193 = vunpack.c.l.b16 %v57
  %v194 = vunpack.c.l.b16 %v58
  %v195 = vunpack.c.l.b16 %v59
  %v196 = vunpack.c.l.b16 %v60
  %v197 = vunpack.c.l.b16 %v61
  %v198 = vunpack.c.l.b16 %v62
  %v199 = vunpack.c.l.b16 %v63
  %v200 = vunpack.c.l.b16 %v64
  %v201 = vunpack.c.l.b16 %v65
  %v202 = vunpack.c.l.b16 %v66
  %v203 = vunpack.c.l.b16 %v67
  %v204 = vunpack.c.l.b16 %v68
  %v205 = vunpack.c.l.b16 %v69
  %v206 = vunpack.c.l.b16 %v70
  %v207 = vunpack.c.l.b16 %v71
  %v208 = vunpack.c.l.b16 %v72
  %v209 = vunpack.c.l.b16 %v73
  %v210 = vunpack.c.l.b16 %v74
  %v211 = vunpack.c.l.b16 %v75
  %v212 = vunpack.c.l.b16 %v76
  %v213 = vunpack.c.l.b16 %v77
  %v214 = vunpack.c.l.b16 %v78
  %v215 = vpack.c.b16 %v152, %v151
  %v216 = vpack.c.b16 %v154, %v153
  %v217 = vpack.c.b16 %v156, %v155
  %v218 = vpack.c.b16 %v158, %v157
  %v219 = vpack.c.b16 %v160, %v159
  %v220 = vpack.c.b16 %v162, %v161
  %v221 = vpack.c.b16 %v164, %v163
  %v222 = vpack.c.b16 %v166, %v165
  %v223 = vpack.c.b16 %v168, %v167
  %v224 = vpack.c.b16 %v170, %v169
  %v225 = vpack.c.b16 %v172, %v171
  %v226 = vpack.c.b16 %v174, %v173
  %v227 = vpack.c.b16 %v176, %v175
  %v228 = vpack.c.b16 %v178, %v177
  %v229 = vpack.c.b16 %v180, %v179
  %v230 = vpack.c.b16 %v182, %v181
  %v231 = vpack.c.b16 %v184, %v183
  %v232 = vpack.c.b16 %v186, %v185
  %v233 = vpack.c.b16 %v188, %v187
  %v234 = vpack.c.b16 %v190, %v189
  %v235 = vpack.c.b16 %v192, %v191
  %v236 = vpack.c.b16 %v194, %v193
  %v237 = vpack.c.b16 %v196, %v195
  %v238 = vpack.c.b16 %v198, %v197
  %v239 = vpack.c.b16 %v200, %v199
  %v240 = vpack.c.b16 %v202, %v201
  %v241 = vpack.c.b16 %v204, %v203
  %v242 = vpack.c.b16 %v206, %v205
  %v243 = vpack.c.b16 %v208, %v207
  %v244 = vpack.c.b16 %v210, %v209
  %v245 = vpack.c.b16 %v212, %v211
  %v246 = vpack.c.b16 %v214, %v213
  %vm247 = vcmask 64512
  %v249 = vsel %vm247, %v215, 0
  %v252 = vsel %vm247, %v216, 0
  %v255 = vsel %vm247, %v217, 0
  %v258 = vsel %vm247, %v218, 0
  %v261 = vsel %vm247, %v219, 0
  %v264 = vsel %vm247, %v220, 0
  %v267 = vsel %vm247, %v221, 0
  %v270 = vsel %vm247, %v222, 0
  %v273 = vsel %vm247, %v223, 0
  %v276 = vsel %vm247, %v224, 0
  %v279 = vsel %vm247, %v225, 0
  %v282 = vsel %vm247, %v226, 0
  %v285 = vsel %vm247, %v227, 0
  %v288 = vsel %vm247, %v228, 0
  %v291 = vsel %vm247, %v229, 0
  %v294 = vsel %vm247, %v230, 0
  %v297 = vsel %vm247, %v231, 0
  %v300 = vsel %vm247, %v232, 0
  %v303 = vsel %vm247, %v233, 0
  %v306 = vsel %vm247, %v234, 0
  %v309 = vsel %vm247, %v235, 0
  %v312 = vsel %vm247, %v236, 0
  %v315 = vsel %vm247, %v237, 0
  %v318 = vsel %vm247, %v238, 0
  %v321 = vsel %vm247, %v239, 0
  %v324 = vsel %vm247, %v240, 0
  %v327 = vsel %vm247, %v241, 0
  %v330 = vsel %vm247, %v242, 0
  %v333 = vsel %vm247, %v243, 0
  %v336 = vsel %vm247, %v244, 0
  %v339 = vsel %vm247, %v245, 0
  %v342 = vsel %vm247, %v246, 0
  %vm344 = vcmask 1043456
  %v346 = vsel %vm344, %v79, 0
  %348 = vmatprep.subr.bf16.mxu0 0
  %349 = vmatpush1.bf16.msra.mxu0 0
  %350 = vmatprep.subr.bf16.mxu0 0
  %351 = vmatpush1.bf16.msra.mxu0 0
  %352 = vmatprep.subr.bf16.mxu0 0
  %353 = vmatpush1.bf16.msra.mxu0 0
  %354 = vmatprep.subr.bf16.mxu0 0
  %355 = vmatpush1.bf16.msra.mxu0 0
  %356 = vmatprep.subr.bf16.mxu0 0
  %357 = vmatpush1.bf16.msra.mxu0 0
  %358 = vmatprep.subr.bf16.mxu0 0
  %359 = vmatpush1.bf16.msra.mxu0 0
  %360 = vmatprep.subr.bf16.mxu0 0
  %361 = vmatpush1.bf16.msra.mxu0 0
  %362 = vmatprep.subr.bf16.mxu0 0
  %363 = vmatpush1.bf16.msra.mxu0 %v346
  %364 = vmatprep.subr.bf16.mxu0 0
  %365 = vmatpush2.bf16.msra.mxu0 0
  %366 = vmatprep.subr.bf16.mxu0 0
  %367 = vmatpush2.bf16.msra.mxu0 0
  %368 = vmatprep.subr.bf16.mxu0 0
  %369 = vmatpush2.bf16.msra.mxu0 0
  %370 = vmatprep.subr.bf16.mxu0 0
  %371 = vmatpush2.bf16.msra.mxu0 0
  %372 = vmatprep.subr.bf16.mxu0 0
  %373 = vmatpush2.bf16.msra.mxu0 0
  %374 = vmatprep.subr.bf16.mxu0 0
  %375 = vmatpush2.bf16.msra.mxu0 0
  %376 = vmatprep.subr.bf16.mxu0 0
  %377 = vmatpush2.bf16.msra.mxu0 0
  %378 = vmatprep.subr.bf16.mxu0 0
  %379 = vmatpush2.bf16.msra.mxu0 0
  %380 = vmatprep.mubr.bf16.mxu0 0
  %381 = vmatmul.mubr.bf16.gmra.mxu0 %v249
  %v382 = vpop.f32.mrf.mxu0
  %v383 = vadd.f32 %v85, %v382
  %v384 = vpop.f32.mrf.mxu0
  %v385 = vpop.f32.mrf.mxu0
  %v386 = vadd.f32 %v85, %v385
  %v387 = vpop.f32.mrf.mxu0
  %388 = vmatprep.mubr.bf16.mxu0 0
  %389 = vmatmul.mubr.bf16.gmra.mxu0 %v252
  %v390 = vpop.f32.mrf.mxu0
  %v391 = vadd.f32 %v85, %v390
  %v392 = vpop.f32.mrf.mxu0
  %v393 = vpop.f32.mrf.mxu0
  %v394 = vadd.f32 %v85, %v393
  %v395 = vpop.f32.mrf.mxu0
  %396 = vmatprep.mubr.bf16.mxu0 0
  %397 = vmatmul.mubr.bf16.gmra.mxu0 %v255
  %v398 = vpop.f32.mrf.mxu0
  %v399 = vadd.f32 %v85, %v398
  %v400 = vpop.f32.mrf.mxu0
  %v401 = vpop.f32.mrf.mxu0
  %v402 = vadd.f32 %v85, %v401
  %v403 = vpop.f32.mrf.mxu0
  %404 = vmatprep.mubr.bf16.mxu0 0
  %405 = vmatmul.mubr.bf16.gmra.mxu0 %v258
  %v406 = vpop.f32.mrf.mxu0
  %v407 = vadd.f32 %v85, %v406
  %v408 = vpop.f32.mrf.mxu0
  %v409 = vpop.f32.mrf.mxu0
  %v410 = vadd.f32 %v85, %v409
  %v411 = vpop.f32.mrf.mxu0
  %412 = vmatprep.mubr.bf16.mxu0 0
  %413 = vmatmul.mubr.bf16.gmra.mxu0 %v261
  %v414 = vpop.f32.mrf.mxu0
  %v415 = vadd.f32 %v85, %v414
  %v416 = vpop.f32.mrf.mxu0
  %v417 = vpop.f32.mrf.mxu0
  %v418 = vadd.f32 %v85, %v417
  %v419 = vpop.f32.mrf.mxu0
  %420 = vmatprep.mubr.bf16.mxu0 0
  %421 = vmatmul.mubr.bf16.gmra.mxu0 %v264
  %v422 = vpop.f32.mrf.mxu0
  %v423 = vadd.f32 %v85, %v422
  %v424 = vpop.f32.mrf.mxu0
  %v425 = vpop.f32.mrf.mxu0
  %v426 = vadd.f32 %v85, %v425
  %v427 = vpop.f32.mrf.mxu0
  %428 = vmatprep.mubr.bf16.mxu0 0
  %429 = vmatmul.mubr.bf16.gmra.mxu0 %v267
  %v430 = vpop.f32.mrf.mxu0
  %v431 = vadd.f32 %v85, %v430
  %v432 = vpop.f32.mrf.mxu0
  %v433 = vpop.f32.mrf.mxu0
  %v434 = vadd.f32 %v85, %v433
  %v435 = vpop.f32.mrf.mxu0
  %436 = vmatprep.mubr.bf16.mxu0 0
  %437 = vmatmul.mubr.bf16.gmra.mxu0 %v270
  %v438 = vpop.f32.mrf.mxu0
  %v439 = vadd.f32 %v85, %v438
  %v440 = vpop.f32.mrf.mxu0
  %v441 = vpop.f32.mrf.mxu0
  %v442 = vadd.f32 %v85, %v441
  %v443 = vpop.f32.mrf.mxu0
  %444 = vmatprep.mubr.bf16.mxu0 0
  %445 = vmatmul.mubr.bf16.gmra.mxu0 %v273
  %v446 = vpop.f32.mrf.mxu0
  %v447 = vadd.f32 %v85, %v446
  %v448 = vpop.f32.mrf.mxu0
  %v449 = vpop.f32.mrf.mxu0
  %v450 = vadd.f32 %v85, %v449
  %v451 = vpop.f32.mrf.mxu0
  %452 = vmatprep.mubr.bf16.mxu0 0
  %453 = vmatmul.mubr.bf16.gmra.mxu0 %v276
  %v454 = vpop.f32.mrf.mxu0
  %v455 = vadd.f32 %v85, %v454
  %v456 = vpop.f32.mrf.mxu0
  %v457 = vpop.f32.mrf.mxu0
  %v458 = vadd.f32 %v85, %v457
  %v459 = vpop.f32.mrf.mxu0
  %460 = vmatprep.mubr.bf16.mxu0 0
  %461 = vmatmul.mubr.bf16.gmra.mxu0 %v279
  %v462 = vpop.f32.mrf.mxu0
  %v463 = vadd.f32 %v85, %v462
  %v464 = vpop.f32.mrf.mxu0
  %v465 = vpop.f32.mrf.mxu0
  %v466 = vadd.f32 %v85, %v465
  %v467 = vpop.f32.mrf.mxu0
  %468 = vmatprep.mubr.bf16.mxu0 0
  %469 = vmatmul.mubr.bf16.gmra.mxu0 %v282
  %v470 = vpop.f32.mrf.mxu0
  %v471 = vadd.f32 %v85, %v470
  %v472 = vpop.f32.mrf.mxu0
  %v473 = vpop.f32.mrf.mxu0
  %v474 = vadd.f32 %v85, %v473
  %v475 = vpop.f32.mrf.mxu0
  %476 = vmatprep.mubr.bf16.mxu0 0
  %477 = vmatmul.mubr.bf16.gmra.mxu0 %v285
  %v478 = vpop.f32.mrf.mxu0
  %v479 = vadd.f32 %v85, %v478
  %v480 = vpop.f32.mrf.mxu0
  %v481 = vpop.f32.mrf.mxu0
  %v482 = vadd.f32 %v85, %v481
  %v483 = vpop.f32.mrf.mxu0
  %484 = vmatprep.mubr.bf16.mxu0 0
  %485 = vmatmul.mubr.bf16.gmra.mxu0 %v288
  %v486 = vpop.f32.mrf.mxu0
  %v487 = vadd.f32 %v85, %v486
  %v488 = vpop.f32.mrf.mxu0
  %v489 = vpop.f32.mrf.mxu0
  %v490 = vadd.f32 %v85, %v489
  %v491 = vpop.f32.mrf.mxu0
  %492 = vmatprep.mubr.bf16.mxu0 0
  %493 = vmatmul.mubr.bf16.gmra.mxu0 %v291
  %v494 = vpop.f32.mrf.mxu0
  %v495 = vadd.f32 %v85, %v494
  %v496 = vpop.f32.mrf.mxu0
  %v497 = vpop.f32.mrf.mxu0
  %v498 = vadd.f32 %v85, %v497
  %v499 = vpop.f32.mrf.mxu0
  %500 = vmatprep.mubr.bf16.mxu0 0
  %501 = vmatmul.mubr.bf16.gmra.mxu0 %v294
  %v502 = vpop.f32.mrf.mxu0
  %v503 = vadd.f32 %v85, %v502
  %v504 = vpop.f32.mrf.mxu0
  %v505 = vpop.f32.mrf.mxu0
  %v506 = vadd.f32 %v85, %v505
  %v507 = vpop.f32.mrf.mxu0
  %508 = vmatprep.mubr.bf16.mxu0 0
  %509 = vmatmul.mubr.bf16.gmra.mxu0 %v297
  %v510 = vpop.f32.mrf.mxu0
  %v511 = vadd.f32 %v85, %v510
  %v512 = vpop.f32.mrf.mxu0
  %v513 = vpop.f32.mrf.mxu0
  %v514 = vadd.f32 %v85, %v513
  %v515 = vpop.f32.mrf.mxu0
  %516 = vmatprep.mubr.bf16.mxu0 0
  %517 = vmatmul.mubr.bf16.gmra.mxu0 %v300
  %v518 = vpop.f32.mrf.mxu0
  %v519 = vadd.f32 %v85, %v518
  %v520 = vpop.f32.mrf.mxu0
  %v521 = vpop.f32.mrf.mxu0
  %v522 = vadd.f32 %v85, %v521
  %v523 = vpop.f32.mrf.mxu0
  %524 = vmatprep.mubr.bf16.mxu0 0
  %525 = vmatmul.mubr.bf16.gmra.mxu0 %v303
  %v526 = vpop.f32.mrf.mxu0
  %v527 = vadd.f32 %v85, %v526
  %v528 = vpop.f32.mrf.mxu0
  %v529 = vpop.f32.mrf.mxu0
  %v530 = vadd.f32 %v85, %v529
  %v531 = vpop.f32.mrf.mxu0
  %532 = vmatprep.mubr.bf16.mxu0 0
  %533 = vmatmul.mubr.bf16.gmra.mxu0 %v306
  %v534 = vpop.f32.mrf.mxu0
  %v535 = vadd.f32 %v85, %v534
  %v536 = vpop.f32.mrf.mxu0
  %v537 = vpop.f32.mrf.mxu0
  %v538 = vadd.f32 %v85, %v537
  %v539 = vpop.f32.mrf.mxu0
  %540 = vmatprep.mubr.bf16.mxu0 0
  %541 = vmatmul.mubr.bf16.gmra.mxu0 %v309
  %v542 = vpop.f32.mrf.mxu0
  %v543 = vadd.f32 %v85, %v542
  %v544 = vpop.f32.mrf.mxu0
  %v545 = vpop.f32.mrf.mxu0
  %v546 = vadd.f32 %v85, %v545
  %v547 = vpop.f32.mrf.mxu0
  %548 = vmatprep.mubr.bf16.mxu0 0
  %549 = vmatmul.mubr.bf16.gmra.mxu0 %v312
  %v550 = vpop.f32.mrf.mxu0
  %v551 = vadd.f32 %v85, %v550
  %v552 = vpop.f32.mrf.mxu0
  %v553 = vpop.f32.mrf.mxu0
  %v554 = vadd.f32 %v85, %v553
  %v555 = vpop.f32.mrf.mxu0
  %556 = vmatprep.mubr.bf16.mxu0 0
  %557 = vmatmul.mubr.bf16.gmra.mxu0 %v315
  %v558 = vpop.f32.mrf.mxu0
  %v559 = vadd.f32 %v85, %v558
  %v560 = vpop.f32.mrf.mxu0
  %v561 = vpop.f32.mrf.mxu0
  %v562 = vadd.f32 %v85, %v561
  %v563 = vpop.f32.mrf.mxu0
  %564 = vmatprep.mubr.bf16.mxu0 0
  %565 = vmatmul.mubr.bf16.gmra.mxu0 %v318
  %v566 = vpop.f32.mrf.mxu0
  %v567 = vadd.f32 %v85, %v566
  %v568 = vpop.f32.mrf.mxu0
  %v569 = vpop.f32.mrf.mxu0
  %v570 = vadd.f32 %v85, %v569
  %v571 = vpop.f32.mrf.mxu0
  %572 = vmatprep.mubr.bf16.mxu0 0
  %573 = vmatmul.mubr.bf16.gmra.mxu0 %v321
  %v574 = vpop.f32.mrf.mxu0
  %v575 = vadd.f32 %v85, %v574
  %v576 = vpop.f32.mrf.mxu0
  %v577 = vpop.f32.mrf.mxu0
  %v578 = vadd.f32 %v85, %v577
  %v579 = vpop.f32.mrf.mxu0
  %580 = vmatprep.mubr.bf16.mxu0 0
  %581 = vmatmul.mubr.bf16.gmra.mxu0 %v324
  %v582 = vpop.f32.mrf.mxu0
  %v583 = vadd.f32 %v85, %v582
  %v584 = vpop.f32.mrf.mxu0
  %v585 = vpop.f32.mrf.mxu0
  %v586 = vadd.f32 %v85, %v585
  %v587 = vpop.f32.mrf.mxu0
  %588 = vmatprep.mubr.bf16.mxu0 0
  %589 = vmatmul.mubr.bf16.gmra.mxu0 %v327
  %v590 = vpop.f32.mrf.mxu0
  %v591 = vadd.f32 %v85, %v590
  %v592 = vpop.f32.mrf.mxu0
  %v593 = vpop.f32.mrf.mxu0
  %v594 = vadd.f32 %v85, %v593
  %v595 = vpop.f32.mrf.mxu0
  %596 = vmatprep.mubr.bf16.mxu0 0
  %597 = vmatmul.mubr.bf16.gmra.mxu0 %v330
  %v598 = vpop.f32.mrf.mxu0
  %v599 = vadd.f32 %v85, %v598
  %v600 = vpop.f32.mrf.mxu0
  %v601 = vpop.f32.mrf.mxu0
  %v602 = vadd.f32 %v85, %v601
  %v603 = vpop.f32.mrf.mxu0
  %604 = vmatprep.mubr.bf16.mxu0 0
  %605 = vmatmul.mubr.bf16.gmra.mxu0 %v333
  %v606 = vpop.f32.mrf.mxu0
  %v607 = vadd.f32 %v85, %v606
  %v608 = vpop.f32.mrf.mxu0
  %v609 = vpop.f32.mrf.mxu0
  %v610 = vadd.f32 %v85, %v609
  %v611 = vpop.f32.mrf.mxu0
  %612 = vmatprep.mubr.bf16.mxu0 0
  %613 = vmatmul.mubr.bf16.gmra.mxu0 %v336
  %v614 = vpop.f32.mrf.mxu0
  %v615 = vadd.f32 %v85, %v614
  %v616 = vpop.f32.mrf.mxu0
  %v617 = vpop.f32.mrf.mxu0
  %v618 = vadd.f32 %v85, %v617
  %v619 = vpop.f32.mrf.mxu0
  %620 = vmatprep.mubr.bf16.mxu0 0
  %621 = vmatmul.mubr.bf16.gmra.mxu0 %v339
  %v622 = vpop.f32.mrf.mxu0
  %v623 = vadd.f32 %v85, %v622
  %v624 = vpop.f32.mrf.mxu0
  %v625 = vpop.f32.mrf.mxu0
  %v626 = vadd.f32 %v85, %v625
  %v627 = vpop.f32.mrf.mxu0
  %628 = vmatprep.mubr.bf16.mxu0 0
  %629 = vmatmul.mubr.bf16.gmra.mxu0 %v342
  %v630 = vpop.f32.mrf.mxu0
  %v631 = vadd.f32 %v85, %v630
  %v632 = vpop.f32.mrf.mxu0
  %v633 = vpop.f32.mrf.mxu0
  %v634 = vadd.f32 %v85, %v633
  %v635 = vpop.f32.mrf.mxu0
  %636 = vdwg.mxu0
  %v637 = vmax.f32 %v383, 0.0
  %v638 = vmax.f32 %v386, 0.0
  %v639 = vmax.f32 %v391, 0.0
  %v640 = vmax.f32 %v394, 0.0
  %v641 = vmax.f32 %v399, 0.0
  %v642 = vmax.f32 %v402, 0.0
  %v643 = vmax.f32 %v407, 0.0
  %v644 = vmax.f32 %v410, 0.0
  %v645 = vmax.f32 %v415, 0.0
  %v646 = vmax.f32 %v418, 0.0
  %v647 = vmax.f32 %v423, 0.0
  %v648 = vmax.f32 %v426, 0.0
  %v649 = vmax.f32 %v431, 0.0
  %v650 = vmax.f32 %v434, 0.0
  %v651 = vmax.f32 %v439, 0.0
  %v652 = vmax.f32 %v442, 0.0
  %v653 = vmax.f32 %v447, 0.0
  %v654 = vmax.f32 %v450, 0.0
  %v655 = vmax.f32 %v455, 0.0
  %v656 = vmax.f32 %v458, 0.0
  %v657 = vmax.f32 %v463, 0.0
  %v658 = vmax.f32 %v466, 0.0
  %v659 = vmax.f32 %v471, 0.0
  %v660 = vmax.f32 %v474, 0.0
  %v661 = vmax.f32 %v479, 0.0
  %v662 = vmax.f32 %v482, 0.0
  %v663 = vmax.f32 %v487, 0.0
  %v664 = vmax.f32 %v490, 0.0
  %v665 = vmax.f32 %v495, 0.0
  %v666 = vmax.f32 %v498, 0.0
  %v667 = vmax.f32 %v503, 0.0
  %v668 = vmax.f32 %v506, 0.0
  %v669 = vmax.f32 %v511, 0.0
  %v670 = vmax.f32 %v514, 0.0
  %v671 = vmax.f32 %v519, 0.0
  %v672 = vmax.f32 %v522, 0.0
  %v673 = vmax.f32 %v527, 0.0
  %v674 = vmax.f32 %v530, 0.0
  %v675 = vmax.f32 %v535, 0.0
  %v676 = vmax.f32 %v538, 0.0
  %v677 = vmax.f32 %v543, 0.0
  %v678 = vmax.f32 %v546, 0.0
  %v679 = vmax.f32 %v551, 0.0
  %v680 = vmax.f32 %v554, 0.0
  %v681 = vmax.f32 %v559, 0.0
  %v682 = vmax.f32 %v562, 0.0
  %v683 = vmax.f32 %v567, 0.0
  %v684 = vmax.f32 %v570, 0.0
  %v685 = vmax.f32 %v575, 0.0
  %v686 = vmax.f32 %v578, 0.0
  %v687 = vmax.f32 %v583, 0.0
  %v688 = vmax.f32 %v586, 0.0
  %v689 = vmax.f32 %v591, 0.0
  %v690 = vmax.f32 %v594, 0.0
  %v691 = vmax.f32 %v599, 0.0
  %v692 = vmax.f32 %v602, 0.0
  %v693 = vmax.f32 %v607, 0.0
  %v694 = vmax.f32 %v610, 0.0
  %v695 = vmax.f32 %v615, 0.0
  %v696 = vmax.f32 %v618, 0.0
  %v697 = vmax.f32 %v623, 0.0
  %v698 = vmax.f32 %v626, 0.0
  %v699 = vmax.f32 %v631, 0.0
  %v700 = vmax.f32 %v634, 0.0
  %v701 = vpack.c.bf16 %v638, %v637
  %v702 = vpack.c.bf16 %v640, %v639
  %v703 = vpack.c.bf16 %v642, %v641
  %v704 = vpack.c.bf16 %v644, %v643
  %v705 = vpack.c.bf16 %v646, %v645
  %v706 = vpack.c.bf16 %v648, %v647
  %v707 = vpack.c.bf16 %v650, %v649
  %v708 = vpack.c.bf16 %v652, %v651
  %v709 = vpack.c.bf16 %v654, %v653
  %v710 = vpack.c.bf16 %v656, %v655
  %v711 = vpack.c.bf16 %v658, %v657
  %v712 = vpack.c.bf16 %v660, %v659
  %v713 = vpack.c.bf16 %v662, %v661
  %v714 = vpack.c.bf16 %v664, %v663
  %v715 = vpack.c.bf16 %v666, %v665
  %v716 = vpack.c.bf16 %v668, %v667
  %v717 = vpack.c.bf16 %v670, %v669
  %v718 = vpack.c.bf16 %v672, %v671
  %v719 = vpack.c.bf16 %v674, %v673
  %v720 = vpack.c.bf16 %v676, %v675
  %v721 = vpack.c.bf16 %v678, %v677
  %v722 = vpack.c.bf16 %v680, %v679
  %v723 = vpack.c.bf16 %v682, %v681
  %v724 = vpack.c.bf16 %v684, %v683
  %v725 = vpack.c.bf16 %v686, %v685
  %v726 = vpack.c.bf16 %v688, %v687
  %v727 = vpack.c.bf16 %v690, %v689
  %v728 = vpack.c.bf16 %v692, %v691
  %v729 = vpack.c.bf16 %v694, %v693
  %v730 = vpack.c.bf16 %v696, %v695
  %v731 = vpack.c.bf16 %v698, %v697
  %v732 = vpack.c.bf16 %v700, %v699
  %v765 = vunpack.c.l.b16 %v701
  %v766 = vunpack.c.h.b16 %v701
  %v767 = vunpack.c.l.b16 %v702
  %v768 = vunpack.c.h.b16 %v702
  %v769 = vunpack.c.l.b16 %v703
  %v770 = vunpack.c.h.b16 %v703
  %v771 = vunpack.c.l.b16 %v704
  %v772 = vunpack.c.h.b16 %v704
  %v773 = vunpack.c.l.b16 %v705
  %v774 = vunpack.c.h.b16 %v705
  %v775 = vunpack.c.l.b16 %v706
  %v776 = vunpack.c.h.b16 %v706
  %v777 = vunpack.c.l.b16 %v707
  %v778 = vunpack.c.h.b16 %v707
  %v779 = vunpack.c.l.b16 %v708
  %v780 = vunpack.c.h.b16 %v708
  %v781 = vunpack.c.l.b16 %v709
  %v782 = vunpack.c.h.b16 %v709
  %v783 = vunpack.c.l.b16 %v710
  %v784 = vunpack.c.h.b16 %v710
  %v785 = vunpack.c.l.b16 %v711
  %v786 = vunpack.c.h.b16 %v711
  %v787 = vunpack.c.l.b16 %v712
  %v788 = vunpack.c.h.b16 %v712
  %v789 = vunpack.c.l.b16 %v713
  %v790 = vunpack.c.h.b16 %v713
  %v791 = vunpack.c.l.b16 %v714
  %v792 = vunpack.c.h.b16 %v714
  %v793 = vunpack.c.l.b16 %v715
  %v794 = vunpack.c.h.b16 %v715
  %v795 = vunpack.c.l.b16 %v716
  %v796 = vunpack.c.h.b16 %v716
  %v797 = vunpack.c.l.b16 %v717
  %v798 = vunpack.c.h.b16 %v717
  %v799 = vunpack.c.l.b16 %v718
  %v800 = vunpack.c.h.b16 %v718
  %v801 = vunpack.c.l.b16 %v719
  %v802 = vunpack.c.h.b16 %v719
  %v803 = vunpack.c.l.b16 %v720
  %v804 = vunpack.c.h.b16 %v720
  %v805 = vunpack.c.l.b16 %v721
  %v806 = vunpack.c.h.b16 %v721
  %v807 = vunpack.c.l.b16 %v722
  %v808 = vunpack.c.h.b16 %v722
  %v809 = vunpack.c.l.b16 %v723
  %v810 = vunpack.c.h.b16 %v723
  %v811 = vunpack.c.l.b16 %v724
  %v812 = vunpack.c.h.b16 %v724
  %v813 = vunpack.c.l.b16 %v725
  %v814 = vunpack.c.h.b16 %v725
  %v815 = vunpack.c.l.b16 %v726
  %v816 = vunpack.c.h.b16 %v726
  %v817 = vunpack.c.l.b16 %v727
  %v818 = vunpack.c.h.b16 %v727
  %v819 = vunpack.c.l.b16 %v728
  %v820 = vunpack.c.h.b16 %v728
  %v821 = vunpack.c.l.b16 %v729
  %v822 = vunpack.c.h.b16 %v729
  %v823 = vunpack.c.l.b16 %v730
  %v824 = vunpack.c.h.b16 %v730
  %v825 = vunpack.c.l.b16 %v731
  %v826 = vunpack.c.h.b16 %v731
  %v827 = vunpack.c.l.b16 %v732
  %v828 = vunpack.c.h.b16 %v732
  %v829 = vpack.c.b16 %v765, %v765
  %v830 = vpack.c.b16 %v766, %v766
  %v831 = vpack.c.b16 %v767, %v767
  %v832 = vpack.c.b16 %v768, %v768
  %v833 = vpack.c.b16 %v769, %v769
  %v834 = vpack.c.b16 %v770, %v770
  %v835 = vpack.c.b16 %v771, %v771
  %v836 = vpack.c.b16 %v772, %v772
  %v837 = vpack.c.b16 %v773, %v773
  %v838 = vpack.c.b16 %v774, %v774
  %v839 = vpack.c.b16 %v775, %v775
  %v840 = vpack.c.b16 %v776, %v776
  %v841 = vpack.c.b16 %v777, %v777
  %v842 = vpack.c.b16 %v778, %v778
  %v843 = vpack.c.b16 %v779, %v779
  %v844 = vpack.c.b16 %v780, %v780
  %v845 = vpack.c.b16 %v781, %v781
  %v846 = vpack.c.b16 %v782, %v782
  %v847 = vpack.c.b16 %v783, %v783
  %v848 = vpack.c.b16 %v784, %v784
  %v849 = vpack.c.b16 %v785, %v785
  %v850 = vpack.c.b16 %v786, %v786
  %v851 = vpack.c.b16 %v787, %v787
  %v852 = vpack.c.b16 %v788, %v788
  %v853 = vpack.c.b16 %v789, %v789
  %v854 = vpack.c.b16 %v790, %v790
  %v855 = vpack.c.b16 %v791, %v791
  %v856 = vpack.c.b16 %v792, %v792
  %v857 = vpack.c.b16 %v793, %v793
  %v858 = vpack.c.b16 %v794, %v794
  %v859 = vpack.c.b16 %v795, %v795
  %v860 = vpack.c.b16 %v796, %v796
  %v861 = vpack.c.b16 %v797, %v797
  %v862 = vpack.c.b16 %v798, %v798
  %v863 = vpack.c.b16 %v799, %v799
  %v864 = vpack.c.b16 %v800, %v800
  %v865 = vpack.c.b16 %v801, %v801
  %v866 = vpack.c.b16 %v802, %v802
  %v867 = vpack.c.b16 %v803, %v803
  %v868 = vpack.c.b16 %v804, %v804
  %v869 = vpack.c.b16 %v805, %v805
  %v870 = vpack.c.b16 %v806, %v806
  %v871 = vpack.c.b16 %v807, %v807
  %v872 = vpack.c.b16 %v808, %v808
  %v873 = vpack.c.b16 %v809, %v809
  %v874 = vpack.c.b16 %v810, %v810
  %v875 = vpack.c.b16 %v811, %v811
  %v876 = vpack.c.b16 %v812, %v812
  %v877 = vpack.c.b16 %v813, %v813
  %v878 = vpack.c.b16 %v814, %v814
  %v879 = vpack.c.b16 %v815, %v815
  %v880 = vpack.c.b16 %v816, %v816
  %v881 = vpack.c.b16 %v817, %v817
  %v882 = vpack.c.b16 %v818, %v818
  %v883 = vpack.c.b16 %v819, %v819
  %v884 = vpack.c.b16 %v820, %v820
  %v885 = vpack.c.b16 %v821, %v821
  %v886 = vpack.c.b16 %v822, %v822
  %v887 = vpack.c.b16 %v823, %v823
  %v888 = vpack.c.b16 %v824, %v824
  %v889 = vpack.c.b16 %v825, %v825
  %v890 = vpack.c.b16 %v826, %v826
  %v891 = vpack.c.b16 %v827, %v827
  %v892 = vpack.c.b16 %v828, %v828
  %vm957 = vcmask 27648
  %958 = vst.msk [vmem:[%s3] sm:$0xf] %vm957, %v829
  %959 = vst.msk [vmem:[%s3 + $0x4] sm:$0xf] %vm957, %v830
  %960 = vst.msk [vmem:[%s3 + $0x8] sm:$0xf] %vm957, %v831
  %961 = vst.msk [vmem:[%s3 + $0xc] sm:$0xf] %vm957, %v832
  %962 = vst.msk [vmem:[%s3 + $0x10] sm:$0xf] %vm957, %v833
  %963 = vst.msk [vmem:[%s3 + $0x14] sm:$0xf] %vm957, %v834
  %964 = vst.msk [vmem:[%s3 + $0x18] sm:$0xf] %vm957, %v835
  %965 = vst.msk [vmem:[%s3 + $0x1c] sm:$0xf] %vm957, %v836
  %966 = vst.msk [vmem:[%s3 + $0x20] sm:$0xf] %vm957, %v837
  %967 = vst.msk [vmem:[%s3 + $0x24] sm:$0xf] %vm957, %v838
  %968 = vst.msk [vmem:[%s3 + $0x28] sm:$0xf] %vm957, %v839
  %969 = vst.msk [vmem:[%s3 + $0x2c] sm:$0xf] %vm957, %v840
  %970 = vst.msk [vmem:[%s3 + $0x30] sm:$0xf] %vm957, %v841
  %971 = vst.msk [vmem:[%s3 + $0x34] sm:$0xf] %vm957, %v842
  %972 = vst.msk [vmem:[%s3 + $0x38] sm:$0xf] %vm957, %v843
  %973 = vst.msk [vmem:[%s3 + $0x3c] sm:$0xf] %vm957, %v844
  %974 = vst.msk [vmem:[%s3 + $0x40] sm:$0xf] %vm957, %v845
  %975 = vst.msk [vmem:[%s3 + $0x44] sm:$0xf] %vm957, %v846
  %976 = vst.msk [vmem:[%s3 + $0x48] sm:$0xf] %vm957, %v847
  %977 = vst.msk [vmem:[%s3 + $0x4c] sm:$0xf] %vm957, %v848
  %978 = vst.msk [vmem:[%s3 + $0x50] sm:$0xf] %vm957, %v849
  %979 = vst.msk [vmem:[%s3 + $0x54] sm:$0xf] %vm957, %v850
  %980 = vst.msk [vmem:[%s3 + $0x58] sm:$0xf] %vm957, %v851
  %981 = vst.msk [vmem:[%s3 + $0x5c] sm:$0xf] %vm957, %v852
  %982 = vst.msk [vmem:[%s3 + $0x60] sm:$0xf] %vm957, %v853
  %983 = vst.msk [vmem:[%s3 + $0x64] sm:$0xf] %vm957, %v854
  %984 = vst.msk [vmem:[%s3 + $0x68] sm:$0xf] %vm957, %v855
  %985 = vst.msk [vmem:[%s3 + $0x6c] sm:$0xf] %vm957, %v856
  %986 = vst.msk [vmem:[%s3 + $0x70] sm:$0xf] %vm957, %v857
  %987 = vst.msk [vmem:[%s3 + $0x74] sm:$0xf] %vm957, %v858
  %988 = vst.msk [vmem:[%s3 + $0x78] sm:$0xf] %vm957, %v859
  %989 = vst.msk [vmem:[%s3 + $0x7c] sm:$0xf] %vm957, %v860
  %990 = vst.msk [vmem:[%s3 + $0x80] sm:$0xf] %vm957, %v861
  %991 = vst.msk [vmem:[%s3 + $0x84] sm:$0xf] %vm957, %v862
  %992 = vst.msk [vmem:[%s3 + $0x88] sm:$0xf] %vm957, %v863
  %993 = vst.msk [vmem:[%s3 + $0x8c] sm:$0xf] %vm957, %v864
  %994 = vst.msk [vmem:[%s3 + $0x90] sm:$0xf] %vm957, %v865
  %995 = vst.msk [vmem:[%s3 + $0x94] sm:$0xf] %vm957, %v866
  %996 = vst.msk [vmem:[%s3 + $0x98] sm:$0xf] %vm957, %v867
  %997 = vst.msk [vmem:[%s3 + $0x9c] sm:$0xf] %vm957, %v868
  %998 = vst.msk [vmem:[%s3 + $0xa0] sm:$0xf] %vm957, %v869
  %999 = vst.msk [vmem:[%s3 + $0xa4] sm:$0xf] %vm957, %v870
  %1000 = vst.msk [vmem:[%s3 + $0xa8] sm:$0xf] %vm957, %v871
  %1001 = vst.msk [vmem:[%s3 + $0xac] sm:$0xf] %vm957, %v872
  %1002 = vst.msk [vmem:[%s3 + $0xb0] sm:$0xf] %vm957, %v873
  %1003 = vst.msk [vmem:[%s3 + $0xb4] sm:$0xf] %vm957, %v874
  %1004 = vst.msk [vmem:[%s3 + $0xb8] sm:$0xf] %vm957, %v875
  %1005 = vst.msk [vmem:[%s3 + $0xbc] sm:$0xf] %vm957, %v876
  %1006 = vst.msk [vmem:[%s3 + $0xc0] sm:$0xf] %vm957, %v877
  %1007 = vst.msk [vmem:[%s3 + $0xc4] sm:$0xf] %vm957, %v878
  %1008 = vst.msk [vmem:[%s3 + $0xc8] sm:$0xf] %vm957, %v879
  %1009 = vst.msk [vmem:[%s3 + $0xcc] sm:$0xf] %vm957, %v880
  %1010 = vst.msk [vmem:[%s3 + $0xd0] sm:$0xf] %vm957, %v881
  %1011 = vst.msk [vmem:[%s3 + $0xd4] sm:$0xf] %vm957, %v882
  %1012 = vst.msk [vmem:[%s3 + $0xd8] sm:$0xf] %vm957, %v883
  %1013 = vst.msk [vmem:[%s3 + $0xdc] sm:$0xf] %vm957, %v884
  %1014 = vst.msk [vmem:[%s3 + $0xe0] sm:$0xf] %vm957, %v885
  %1015 = vst.msk [vmem:[%s3 + $0xe4] sm:$0xf] %vm957, %v886
  %1016 = vst.msk [vmem:[%s3 + $0xe8] sm:$0xf] %vm957, %v887
  %1017 = vst.msk [vmem:[%s3 + $0xec] sm:$0xf] %vm957, %v888
  %1018 = vst.msk [vmem:[%s3 + $0xf0] sm:$0xf] %vm957, %v889
  %1019 = vst.msk [vmem:[%s3 + $0xf4] sm:$0xf] %vm957, %v890
  %1020 = vst.msk [vmem:[%s3 + $0xf8] sm:$0xf] %vm957, %v891
  %1021 = vst.msk [vmem:[%s3 + $0xfc] sm:$0xf] %vm957, %v892
  // Predicated region
  $region14: #{se_bottleneck_forward.3} parent=0 // pred_check
    _
  $region15: #{se_bottleneck_forward.3} parent=0 // pred_check_branch
    %1023 = sbr.rel (0) target = $region17
  $region16: #{se_bottleneck_forward.3} parent=0 // pred_region
    _
  $region17: #{se_bottleneck_forward.3} parent=0 // pred_fallthru
    _
  // Predicated region
  $region18: #{se_bottleneck_forward.3} parent=0 // pred_check
    _
  $region19: #{se_bottleneck_forward.3} parent=0 // pred_check_branch
    %1025 = sbr.rel (0) target = $region21
  $region20: #{se_bottleneck_forward.3} parent=0 // pred_region
    _
  $region21: #{se_bottleneck_forward.3} parent=0 // pred_fallthru
    _

// kernel: se_bottleneck_forward.5
$region0: #{se_bottleneck_forward.5}
  #allocation0 [shape = 'u32[]', space=smem, size = 0x4, offset = 0x4, fixed_abs, tag = 'smem constant byte address 0x4 - core index']
  #allocation1 [shape = 'u32[144,128]{1,0:T(1,128)}', space=vmem, size = 0x12000, scoped, tag = 'internal scratch']
  %s0 = inlined_call_operand.vmem [shape: bf16[2,16,24,8], index: 0, kind: input, shape index: {}]
  %s1 = inlined_call_operand.vmem [shape: bf16[2,16,16,8], index: 1, kind: input, shape index: {}]
  %s2 = inlined_call_operand.vmem [shape: f32[2,1,1,8], index: 2, kind: input, shape index: {}]
  %s3 = inlined_call_operand.vmem [shape: bf16[2,16,16,8], index: 3, kind: output, shape index: {}]
  %s4 = sld [smem:[#allocation0]]
  $region45: #{se_bottleneck_forward.5} parent=0
    _
  %s6 = ssub.s32 1, %s4
  %s7 = scalar_select 0, %s6, %s4
  loop: start=0, step=1, limit=4
  $region2: #{se_bottleneck_forward.5} parent=0 // loop_pre_header
    _
  $region3: #{se_bottleneck_forward.5} parent=0 // loop_header
    %s9 = sphi 0, %s13
    %p10 = scmp.ge.s32.totalorder %s9, 4
    %s16 = sphi 0, %s28
    %s17 = sphi 0, %s24
    %s18 = sphi 0, %s16
    %s19 = sphi 0, %s17
    %s20 = sphi 0, %s18
    %s21 = sphi 0, %s19
    %s33 = sphi 0, %s35
    %s36 = sphi 0, %s33
    %s37 = sphi 0, %s36
    %s53 = sphi 0, %s37
    %s61 = sphi 0, %s63
    %s64 = sphi 0, %s61
    %s65 = sphi 0, %s64
    %s81 = sphi 0, %s65
    %s87 = sphi 0, %s89
    %s90 = sphi 0, %s87
    %s91 = sphi 0, %s90
    %s107 = sphi 0, %s91
    %s115 = sphi 0, %s117
    %s118 = sphi 0, %s115
    %s119 = sphi 0, %s118
    %s135 = sphi 0, %s119
  $region4: #{se_bottleneck_forward.5} parent=0 // loop_header_branch
    %12 = sbr.rel (%p10) target = $region8
  $region5: #{se_bottleneck_forward.5} parent=0 // loop_body
    %s14 = ssub.s32 %s9, 1
    %s15 = ssub.s32 %s9, 2
    %s22 = sadd.s32 1, %s17
    %p23 = scmp.ge.s32.totalorder %s22, 1
    %s24 = scalar_select %p23, 0, %s22
    %s25 = sadd.s32 1, %s16
    %s26 = scalar_select %p23, %s25, %s16
    %p27 = scmp.ge.s32.totalorder %s26, 2
    %s28 = scalar_select %p27, 0, %s26
    %s29 = ssub.s32 %s16, %s28
    %s30 = ssub.s32 %s17, %s24
    %s31 = sor.u32 %s29, %s30
    %p32 = scmp.eq.s32.totalorder %s31, 0
    %s34 = sadd.s32 %s33, 1
    %s35 = scalar_select %p32, %s33, %s34
    %p38 = pneg %p32
    %p39 = scmp.eq.s32.totalorder %s9, 1
    %p40 = por %p38, %p39
    %p41 = scmp.ne.s32.totalorder %s33, %s36
    %p42 = scmp.eq.s32.totalorder %s9, 0
    %p43 = por %p41, %p42
    %p44 = scmp.ne.s32.totalorder %s33, %s36
    %p45 = scmp.eq.s32.totalorder %s14, 1
    %p46 = por %p44, %p45
    %p47 = scmp.ne.s32.totalorder %s36, %s37
    %p48 = scmp.eq.s32.totalorder %s14, 0
    %p49 = por %p47, %p48
    %p50 = scmp.ne.s32.totalorder %s36, %s37
    %p51 = scmp.eq.s32.totalorder %s15, 1
    %p52 = por %p50, %p51
    %p54 = scmp.ne.s32.totalorder %s37, %s53
    %p55 = scmp.eq.s32.totalorder %s15, 0
    %p56 = por %p54, %p55
    %s57 = ssub.s32 %s16, %s28
    %s58 = ssub.s32 %s17, %s24
    %s59 = sor.u32 %s57, %s58
    %p60 = scmp.eq.s32.totalorder %s59, 0
    %s62 = sadd.s32 %s61, 1
    %s63 = scalar_select %p60, %s61, %s62
    %p66 = pneg %p60
    %p67 = scmp.eq.s32.totalorder %s9, 1
    %p68 = por %p66, %p67
    %p69 = scmp.ne.s32.totalorder %s61, %s64
    %p70 = scmp.eq.s32.totalorder %s9, 0
    %p71 = por %p69, %p70
    %p72 = scmp.ne.s32.totalorder %s61, %s64
    %p73 = scmp.eq.s32.totalorder %s14, 1
    %p74 = por %p72, %p73
    %p75 = scmp.ne.s32.totalorder %s64, %s65
    %p76 = scmp.eq.s32.totalorder %s14, 0
    %p77 = por %p75, %p76
    %p78 = scmp.ne.s32.totalorder %s64, %s65
    %p79 = scmp.eq.s32.totalorder %s15, 1
    %p80 = por %p78, %p79
    %p82 = scmp.ne.s32.totalorder %s65, %s81
    %p83 = scmp.eq.s32.totalorder %s15, 0
    %p84 = por %p82, %p83
    %s85 = ssub.s32 %s16, %s28
    %p86 = scmp.eq.s32.totalorder %s85, 0
    %s88 = sadd.s32 %s87, 1
    %s89 = scalar_select %p86, %s87, %s88
    %p92 = pneg %p86
    %p93 = scmp.eq.s32.totalorder %s9, 1
    %p94 = por %p92, %p93
    %p95 = scmp.ne.s32.totalorder %s87, %s90
    %p96 = scmp.eq.s32.totalorder %s9, 0
    %p97 = por %p95, %p96
    %p98 = scmp.ne.s32.totalorder %s87, %s90
    %p99 = scmp.eq.s32.totalorder %s14, 1
    %p100 = por %p98, %p99
    %p101 = scmp.ne.s32.totalorder %s90, %s91
    %p102 = scmp.eq.s32.totalorder %s14, 0
    %p103 = por %p101, %p102
    %p104 = scmp.ne.s32.totalorder %s90, %s91
    %p105 = scmp.eq.s32.totalorder %s15, 1
    %p106 = por %p104, %p105
    %p108 = scmp.ne.s32.totalorder %s91, %s107
    %p109 = scmp.eq.s32.totalorder %s15, 0
    %p110 = por %p108, %p109
    %s111 = ssub.s32 %s16, %s28
    %s112 = ssub.s32 %s17, %s24
    %s113 = sor.u32 %s111, %s112
    %p114 = scmp.eq.s32.totalorder %s113, 0
    %s116 = sadd.s32 %s115, 1
    %s117 = scalar_select %p114, %s115, %s116
    %p120 = pneg %p114
    %p121 = scmp.eq.s32.totalorder %s9, 1
    %p122 = por %p120, %p121
    %p123 = scmp.ne.s32.totalorder %s115, %s118
    %p124 = scmp.eq.s32.totalorder %s9, 0
    %p125 = por %p123, %p124
    %p126 = scmp.ne.s32.totalorder %s115, %s118
    %p127 = scmp.eq.s32.totalorder %s14, 1
    %p128 = por %p126, %p127
    %p129 = scmp.ne.s32.totalorder %s118, %s119
    %p130 = scmp.eq.s32.totalorder %s14, 0
    %p131 = por %p129, %p130
    %p132 = scmp.ne.s32.totalorder %s118, %s119
    %p133 = scmp.eq.s32.totalorder %s15, 1
    %p134 = por %p132, %p133
    %p136 = scmp.ne.s32.totalorder %s119, %s135
    %p137 = scmp.eq.s32.totalorder %s15, 0
    %p138 = por %p136, %p137
    %p139 = scmp.le.s32.totalorder 1, %s9
    %p140 = scmp.lt.s32.totalorder %s9, 3
    %p141 = pnand %p139, %p140
    %p142 = pneg %p141
    // Predicated region
    $region9: #{se_bottleneck_forward.5} parent=5 // pred_check
      _
    $region10: #{se_bottleneck_forward.5} parent=5 // pred_check_branch
      %144 = sbr.rel (%p141) target = $region12
    $region11: #{se_bottleneck_forward.5} parent=5 // pred_region
      %s145 = ssub.s32 %s9, 1
    $region12: #{se_bottleneck_forward.5} parent=5 // pred_fallthru
      _
    %p146 = scmp.lt.s32.totalorder %s9, 2
    // Predicated region
    $region13: #{se_bottleneck_forward.5} parent=5 // pred_check
      %p147 = pneg %p146
    $region14: #{se_bottleneck_forward.5} parent=5 // pred_check_branch
      %149 = sbr.rel (%p147) target = $region16
    $region15: #{se_bottleneck_forward.5} parent=5 // pred_region
      // Predicated region
      $region17: #{se_bottleneck_forward.5} parent=15 // pred_check
        %p150 = pneg %p43
      $region18: #{se_bottleneck_forward.5} parent=15 // pred_check_branch
        %152 = sbr.rel (%p150) target = $region20
      $region19: #{se_bottleneck_forward.5} parent=15 // pred_region
        %s153 = smul.u32 16, %s17
        %p154 = scmp.lt.s32.totalorder %s16, 1
        %s155 = scalar_select %p154, %s16, 1
        %p156 = scmp.lt.s32.totalorder %s153, 15
        %s157 = scalar_select %p156, %s153, 15
        %s158 = smul.addr %s157, 3
        %s159 = smul.addr %s155, 48
        %s160 = sadd.s32 %s158, %s159
        %s161 = smul.addr %s160, 4
        %s162 = scalar_lea.vmem %s0, %s161
        %s163 = smul.u32 16, %s17
      $region20: #{se_bottleneck_forward.5} parent=15 // pred_fallthru
        _
      // Predicated region
      $region21: #{se_bottleneck_forward.5} parent=15 // pred_check
        %p164 = pneg %p71
      $region22: #{se_bottleneck_forward.5} parent=15 // pred_check_branch
        %166 = sbr.rel (%p164) target = $region24
      $region23: #{se_bottleneck_forward.5} parent=15 // pred_region
        %s167 = smul.u32 16, %s17
        %p168 = scmp.lt.s32.totalorder %s16, 1
        %s169 = scalar_select %p168, %s16, 1
        %p170 = scmp.lt.s32.totalorder %s167, 15
        %s171 = scalar_select %p170, %s167, 15
        %s172 = smul.addr %s171, 2
        %s173 = smul.addr %s169, 32
        %s174 = sadd.s32 %s172, %s173
        %s175 = smul.addr %s174, 4
        %s176 = scalar_lea.vmem %s1, %s175
        %s177 = smul.u32 16, %s17
      $region24: #{se_bottleneck_forward.5} parent=15 // pred_fallthru
        _
      // Predicated region
      $region25: #{se_bottleneck_forward.5} parent=15 // pred_check
        %p178 = pneg %p97
      $region26: #{se_bottleneck_forward.5} parent=15 // pred_check_branch
        %180 = sbr.rel (%p178) target = $region28
      $region27: #{se_bottleneck_forward.5} parent=15 // pred_region
        %p181 = scmp.lt.s32.totalorder %s16, 1
        %s182 = scalar_select %p181, %s16, 1
        %s183 = scalar_lea.vmem %s2, %s182
      $region28: #{se_bottleneck_forward.5} parent=15 // pred_fallthru
        _
    $region16: #{se_bottleneck_forward.5} parent=5 // pred_fallthru
      _
    %p184 = scmp.le.s32.totalorder 1, %s9
    %p185 = scmp.lt.s32.totalorder %s9, 3
    %p186 = pnand %p184, %p185
    %p187 = pneg %p186
    // Predicated region
    $region29: #{se_bottleneck_forward.5} parent=5 // pred_check
      _
    $region30: #{se_bottleneck_forward.5} parent=5 // pred_check_branch
      %189 = sbr.rel (%p186) target = $region32
    $region31: #{se_bottleneck_forward.5} parent=5 // pred_region
      %s190 = ssub.s32 %s9, 1
      %s191 = smul.u32 16, %s19
      %p192 = scmp.lt.s32.totalorder %s18, 1
      %s193 = scalar_select %p192, %s18, 1
      %p194 = scmp.lt.s32.totalorder %s191, 15
      %s195 = scalar_select %p194, %s191, 15
      %s196 = smul.addr %s195, 3
      %s197 = smul.addr %s193, 48
      %s198 = sadd.s32 %s196, %s197
      %s199 = smul.addr %s198, 4
      %s200 = scalar_lea.vmem %s0, %s199
      %p201 = pneg %p49
      %p202 = pneg %p46
      %s203 = smul.u32 16, %s19
      %p204 = scmp.lt.s32.totalorder %s18, 1
      %s205 = scalar_select %p204, %s18, 1
      %p206 = scmp.lt.s32.totalorder %s203, 15
      %s207 = scalar_select %p206, %s203, 15
      %s208 = smul.addr %s207, 2
      %s209 = smul.addr %s205, 32
      %s210 = sadd.s32 %s208, %s209
      %s211 = smul.addr %s210, 4
      %s212 = scalar_lea.vmem %s1, %s211
      %p213 = pneg %p77
      %p214 = pneg %p74
      %p215 = scmp.lt.s32.totalorder %s18, 1
      %s216 = scalar_select %p215, %s18, 1
      %s217 = scalar_lea.vmem %s2, %s216
      %p218 = pneg %p103
      %p219 = pneg %p100
      %p220 = pneg %p131
      %p221 = pneg %p128
      %s222 = smul.u32 16, %s19
      %p223 = scmp.lt.s32.totalorder %s18, 1
      %s224 = scalar_select %p223, %s18, 1
      %p225 = scmp.lt.s32.totalorder %s222, 15
      %s226 = scalar_select %p225, %s222, 15
      %s227 = smul.addr %s226, 2
      %s228 = smul.addr %s224, 32
      %s229 = sadd.s32 %s227, %s228
      %s230 = smul.addr %s229, 4
      %s231 = scalar_lea.vmem %s3, %s230
      %s232 = smul.u32 16, %s19
      %p233 = scmp.lt.s32.totalorder %s18, 1
      %s234 = scalar_select %p233, %s18, 1
      %p235 = scmp.lt.s32.totalorder %s232, 15
      %s236 = scalar_select %p235, %s232, 15
      %s237 = smul.addr %s236, 3
      %s238 = smul.addr %s234, 48
      %s239 = sadd.s32 %s237, %s238
      %s240 = smul.addr %s239, 4
      %s241 = scalar_lea.vmem %s0, %s240
      %s242 = smul.u32 16, %s19
      %s243 = smul.u32 16, %s19
      %p244 = scmp.lt.s32.totalorder %s18, 1
      %s245 = scalar_select %p244, %s18, 1
      %p246 = scmp.lt.s32.totalorder %s243, 15
      %s247 = scalar_select %p246, %s243, 15
      %s248 = smul.addr %s247, 2
      %s249 = smul.addr %s245, 32
      %s250 = sadd.s32 %s248, %s249
      %s251 = smul.addr %s250, 4
      %s252 = scalar_lea.vmem %s1, %s251
      %s253 = smul.u32 16, %s19
      %p254 = scmp.lt.s32.totalorder %s18, 1
      %s255 = scalar_select %p254, %s18, 1
      %s256 = scalar_lea.vmem %s2, %s255
      %s257 = smul.u32 16, %s19
      %p258 = scmp.lt.s32.totalorder %s18, 1
      %s259 = scalar_select %p258, %s18, 1
      %p260 = scmp.lt.s32.totalorder %s257, 15
      %s261 = scalar_select %p260, %s257, 15
      %s262 = smul.addr %s261, 2
      %s263 = smul.addr %s259, 32
      %s264 = sadd.s32 %s262, %s263
      %s265 = smul.addr %s264, 4
      %s266 = scalar_lea.vmem %s3, %s265
      %s267 = smul.u32 16, %s19
      %v268 = vld [vmem:[%s241] sm:$0xf]
      %v269 = vld [vmem:[%s241 + $0x4] sm:$0xf]
      %v270 = vld [vmem:[%s241 + $0x8] sm:$0x1]
      %v271 = vld [vmem:[%s241 + $0xc] sm:$0xf]
      %v272 = vld [vmem:[%s241 + $0x10] sm:$0xf]
      %v273 = vld [vmem:[%s241 + $0x14] sm:$0x1]
      %v274 = vld [vmem:[%s241 + $0x18] sm:$0xf]
      %v275 = vld [vmem:[%s241 + $0x1c] sm:$0xf]
      %v276 = vld [vmem:[%s241 + $0x20] sm:$0x1]
      %v277 = vld [vmem:[%s241 + $0x24] sm:$0xf]
      %v278 = vld [vmem:[%s241 + $0x28] sm:$0xf]
      %v279 = vld [vmem:[%s241 + $0x2c] sm:$0x1]
      %v280 = vld [vmem:[%s241 + $0x30] sm:$0xf]
      %v281 = vld [vmem:[%s241 + $0x34] sm:$0xf]
      %v282 = vld [vmem:[%s241 + $0x38] sm:$0x1]
      %v283 = vld [vmem:[%s241 + $0x3c] sm:$0xf]
      %v284 = vld [vmem:[%s241 + $0x40] sm:$0xf]
      %v285 = vld [vmem:[%s241 + $0x44] sm:$0x1]
      %v286 = vld [vmem:[%s241 + $0x48] sm:$0xf]
      %v287 = vld [vmem:[%s241 + $0x4c] sm:$0xf]
      %v288 = vld [vmem:[%s241 + $0x50] sm:$0x1]
      %v289 = vld [vmem:[%s241 + $0x54] sm:$0xf]
      %v290 = vld [vmem:[%s241 + $0x58] sm:$0xf]
      %v291 = vld [vmem:[%s241 + $0x5c] sm:$0x1]
      %v292 = vld [vmem:[%s241 + $0x60] sm:$0xf]
      %v293 = vld [vmem:[%s241 + $0x64] sm:$0xf]
      %v294 = vld [vmem:[%s241 + $0x68] sm:$0x1]
      %v295 = vld [vmem:[%s241 + $0x6c] sm:$0xf]
      %v296 = vld [vmem:[%s241 + $0x70] sm:$0xf]
      %v297 = vld [vmem:[%s241 + $0x74] sm:$0x1]
      %v298 = vld [vmem:[%s241 + $0x78] sm:$0xf]
      %v299 = vld [vmem:[%s241 + $0x7c] sm:$0xf]
      %v300 = vld [vmem:[%s241 + $0x80] sm:$0x1]
      %v301 = vld [vmem:[%s241 + $0x84] sm:$0xf]
      %v302 = vld [vmem:[%s241 + $0x88] sm:$0xf]
      %v303 = vld [vmem:[%s241 + $0x8c] sm:$0x1]
      %v304 = vld [vmem:[%s241 + $0x90] sm:$0xf]
      %v305 = vld [vmem:[%s241 + $0x94] sm:$0xf]
      %v306 = vld [vmem:[%s241 + $0x98] sm:$0x1]
      %v307 = vld [vmem:[%s241 + $0x9c] sm:$0xf]
      %v308 = vld [vmem:[%s241 + $0xa0] sm:$0xf]
      %v309 = vld [vmem:[%s241 + $0xa4] sm:$0x1]
      %v310 = vld [vmem:[%s241 + $0xa8] sm:$0xf]
      %v311 = vld [vmem:[%s241 + $0xac] sm:$0xf]
      %v312 = vld [vmem:[%s241 + $0xb0] sm:$0x1]
      %v313 = vld [vmem:[%s241 + $0xb4] sm:$0xf]
      %v314 = vld [vmem:[%s241 + $0xb8] sm:$0xf]
      %v315 = vld [vmem:[%s241 + $0xbc] sm:$0x1]
      %v316 = vunpack.c.l.bf16 %v268
      %v317 = vunpack.c.l.bf16 %v269
      %v318 = vunpack.c.l.bf16 %v270
      %v319 = vunpack.c.l.bf16 %v271
      %v320 = vunpack.c.l.bf16 %v272
      %v321 = vunpack.c.l.bf16 %v273
      %v322 = vunpack.c.l.bf16 %v274
      %v323 = vunpack.c.l.bf16 %v275
      %v324 = vunpack.c.l.bf16 %v276
      %v325 = vunpack.c.l.bf16 %v277
      %v326 = vunpack.c.l.bf16 %v278
      %v327 = vunpack.c.l.bf16 %v279
      %v328 = vunpack.c.l.bf16 %v280
      %v329 = vunpack.c.l.bf16 %v281
      %v330 = vunpack.c.l.bf16 %v282
      %v331 = vunpack.c.l.bf16 %v283
      %v332 = vunpack.c.l.bf16 %v284
      %v333 = vunpack.c.l.bf16 %v285
      %v334 = vunpack.c.l.bf16 %v286
      %v335 = vunpack.c.l.bf16 %v287
      %v336 = vunpack.c.l.bf16 %v288
      %v337 = vunpack.c.l.bf16 %v289
      %v338 = vunpack.c.l.bf16 %v290
      %v339 = vunpack.c.l.bf16 %v291
      %v340 = vunpack.c.l.bf16 %v292
      %v341 = vunpack.c.l.bf16 %v293
      %v342 = vunpack.c.l.bf16 %v294
      %v343 = vunpack.c.l.bf16 %v295
      %v344 = vunpack.c.l.bf16 %v296
      %v345 = vunpack.c.l.bf16 %v297
      %v346 = vunpack.c.l.bf16 %v298
      %v347 = vunpack.c.l.bf16 %v299
      %v348 = vunpack.c.l.bf16 %v300
      %v349 = vunpack.c.l.bf16 %v301
      %v350 = vunpack.c.l.bf16 %v302
      %v351 = vunpack.c.l.bf16 %v303
      %v352 = vunpack.c.l.bf16 %v304
      %v353 = vunpack.c.l.bf16 %v305
      %v354 = vunpack.c.l.bf16 %v306
      %v355 = vunpack.c.l.bf16 %v307
      %v356 = vunpack.c.l.bf16 %v308
      %v357 = vunpack.c.l.bf16 %v309
      %v358 = vunpack.c.l.bf16 %v310
      %v359 = vunpack.c.l.bf16 %v311
      %v360 = vunpack.c.l.bf16 %v312
      %v361 = vunpack.c.l.bf16 %v313
      %v362 = vunpack.c.l.bf16 %v314
      %v363 = vunpack.c.l.bf16 %v315
      %v364 = vld [vmem:[%s256] sm:$0x1]
      %v366 = vlaneseq
      %v367 = vshrl.u32 %v366, 7
      %v368 = vsub.s32 0, %v367
      %v369 = vrot.slane %v364, %v368
      %v371 = vmul.f32 %v316, %v369
      %v372 = vmul.f32 %v317, %v369
      %v373 = vmul.f32 %v318, %v369
      %v374 = vmul.f32 %v319, %v369
      %v375 = vmul.f32 %v320, %v369
      %v376 = vmul.f32 %v321, %v369
      %v377 = vmul.f32 %v322, %v369
      %v378 = vmul.f32 %v323, %v369
      %v379 = vmul.f32 %v324, %v369
      %v380 = vmul.f32 %v325, %v369
      %v381 = vmul.f32 %v326, %v369
      %v382 = vmul.f32 %v327, %v369
      %v383 = vmul.f32 %v328, %v369
      %v384 = vmul.f32 %v329, %v369
      %v385 = vmul.f32 %v330, %v369
      %v386 = vmul.f32 %v331, %v369
      %v387 = vmul.f32 %v332, %v369
      %v388 = vmul.f32 %v333, %v369
      %v389 = vmul.f32 %v334, %v369
      %v390 = vmul.f32 %v335, %v369
      %v391 = vmul.f32 %v336, %v369
      %v392 = vmul.f32 %v337, %v369
      %v393 = vmul.f32 %v338, %v369
      %v394 = vmul.f32 %v339, %v369
      %v395 = vmul.f32 %v340, %v369
      %v396 = vmul.f32 %v341, %v369
      %v397 = vmul.f32 %v342, %v369
      %v398 = vmul.f32 %v343, %v369
      %v399 = vmul.f32 %v344, %v369
      %v400 = vmul.f32 %v345, %v369
      %v401 = vmul.f32 %v346, %v369
      %v402 = vmul.f32 %v347, %v369
      %v403 = vmul.f32 %v348, %v369
      %v404 = vmul.f32 %v349, %v369
      %v405 = vmul.f32 %v350, %v369
      %v406 = vmul.f32 %v351, %v369
      %v407 = vmul.f32 %v352, %v369
      %v408 = vmul.f32 %v353, %v369
      %v409 = vmul.f32 %v354, %v369
      %v410 = vmul.f32 %v355, %v369
      %v411 = vmul.f32 %v356, %v369
      %v412 = vmul.f32 %v357, %v369
      %v413 = vmul.f32 %v358, %v369
      %v414 = vmul.f32 %v359, %v369
      %v415 = vmul.f32 %v360, %v369
      %v416 = vmul.f32 %v361, %v369
      %v417 = vmul.f32 %v362, %v369
      %v418 = vmul.f32 %v363, %v369
      %v419 = vld [vmem:[%s252] sm:$0xf]
      %v420 = vld [vmem:[%s252 + $0x4] sm:$0xf]
      %v421 = vld [vmem:[%s252 + $0x8] sm:$0xf]
      %v422 = vld [vmem:[%s252 + $0xc] sm:$0xf]
      %v423 = vld [vmem:[%s252 + $0x10] sm:$0xf]
      %v424 = vld [vmem:[%s252 + $0x14] sm:$0xf]
      %v425 = vld [vmem:[%s252 + $0x18] sm:$0xf]
      %v426 = vld [vmem:[%s252 + $0x1c] sm:$0xf]
      %v427 = vld [vmem:[%s252 + $0x20] sm:$0xf]
      %v428 = vld [vmem:[%s252 + $0x24] sm:$0xf]
      %v429 = vld [vmem:[%s252 + $0x28] sm:$0xf]
      %v430 = vld [vmem:[%s252 + $0x2c] sm:$0xf]
      %v431 = vld [vmem:[%s252 + $0x30] sm:$0xf]
      %v432 = vld [vmem:[%s252 + $0x34] sm:$0xf]
      %v433 = vld [vmem:[%s252 + $0x38] sm:$0xf]
      %v434 = vld [vmem:[%s252 + $0x3c] sm:$0xf]
      %v435 = vld [vmem:[%s252 + $0x40] sm:$0xf]
      %v436 = vld [vmem:[%s252 + $0x44] sm:$0xf]
      %v437 = vld [vmem:[%s252 + $0x48] sm:$0xf]
      %v438 = vld [vmem:[%s252 + $0x4c] sm:$0xf]
      %v439 = vld [vmem:[%s252 + $0x50] sm:$0xf]
      %v440 = vld [vmem:[%s252 + $0x54] sm:$0xf]
      %v441 = vld [vmem:[%s252 + $0x58] sm:$0xf]
      %v442 = vld [vmem:[%s252 + $0x5c] sm:$0xf]
      %v443 = vld [vmem:[%s252 + $0x60] sm:$0xf]
      %v444 = vld [vmem:[%s252 + $0x64] sm:$0xf]
      %v445 = vld [vmem:[%s252 + $0x68] sm:$0xf]
      %v446 = vld [vmem:[%s252 + $0x6c] sm:$0xf]
      %v447 = vld [vmem:[%s252 + $0x70] sm:$0xf]
      %v448 = vld [vmem:[%s252 + $0x74] sm:$0xf]
      %v449 = vld [vmem:[%s252 + $0x78] sm:$0xf]
      %v450 = vld [vmem:[%s252 + $0x7c] sm:$0xf]
      %v451 = vunpack.c.l.bf16 %v419
      %v452 = vunpack.c.l.bf16 %v420
      %v453 = vunpack.c.l.bf16 %v421
      %v454 = vunpack.c.l.bf16 %v422
      %v455 = vunpack.c.l.bf16 %v423
      %v456 = vunpack.c.l.bf16 %v424
      %v457 = vunpack.c.l.bf16 %v425
      %v458 = vunpack.c.l.bf16 %v426
      %v459 = vunpack.c.l.bf16 %v427
      %v460 = vunpack.c.l.bf16 %v428
      %v461 = vunpack.c.l.bf16 %v429
      %v462 = vunpack.c.l.bf16 %v430
      %v463 = vunpack.c.l.bf16 %v431
      %v464 = vunpack.c.l.bf16 %v432
      %v465 = vunpack.c.l.bf16 %v433
      %v466 = vunpack.c.l.bf16 %v434
      %v467 = vunpack.c.l.bf16 %v435
      %v468 = vunpack.c.l.bf16 %v436
      %v469 = vunpack.c.l.bf16 %v437
      %v470 = vunpack.c.l.bf16 %v438
      %v471 = vunpack.c.l.bf16 %v439
      %v472 = vunpack.c.l.bf16 %v440
      %v473 = vunpack.c.l.bf16 %v441
      %v474 = vunpack.c.l.bf16 %v442
      %v475 = vunpack.c.l.bf16 %v443
      %v476 = vunpack.c.l.bf16 %v444
      %v477 = vunpack.c.l.bf16 %v445
      %v478 = vunpack.c.l.bf16 %v446
      %v479 = vunpack.c.l.bf16 %v447
      %v480 = vunpack.c.l.bf16 %v448
      %v481 = vunpack.c.l.bf16 %v449
      %v482 = vunpack.c.l.bf16 %v450
      %vm515 = vcmask 1040384
      %v516 = vrot.slane %v451, 7
      %v517 = vrot.slane %v452, 7
      %v518 = vsel %vm515, %v516, %v517
      %v519 = vrot.slane %v453, 7
      %v520 = vrot.slane %v454, 7
      %v521 = vsel %vm515, %v519, %v520
      %v522 = vrot.slane %v455, 7
      %v523 = vrot.slane %v456, 7
      %v524 = vsel %vm515, %v522, %v523
      %v525 = vrot.slane %v457, 7
      %v526 = vrot.slane %v458, 7
      %v527 = vsel %vm515, %v525, %v526
      %v528 = vrot.slane %v459, 7
      %v529 = vrot.slane %v460, 7
      %v530 = vsel %vm515, %v528, %v529
      %v531 = vrot.slane %v461, 7
      %v532 = vrot.slane %v462, 7
      %v533 = vsel %vm515, %v531, %v532
      %v534 = vrot.slane %v463, 7
      %v535 = vrot.slane %v464, 7
      %v536 = vsel %vm515, %v534, %v535
      %v537 = vrot.slane %v465, 7
      %v538 = vrot.slane %v466, 7
      %v539 = vsel %vm515, %v537, %v538
      %v540 = vrot.slane %v467, 7
      %v541 = vrot.slane %v468, 7
      %v542 = vsel %vm515, %v540, %v541
      %v543 = vrot.slane %v469, 7
      %v544 = vrot.slane %v470, 7
      %v545 = vsel %vm515, %v543, %v544
      %v546 = vrot.slane %v471, 7
      %v547 = vrot.slane %v472, 7
      %v548 = vsel %vm515, %v546, %v547
      %v549 = vrot.slane %v473, 7
      %v550 = vrot.slane %v474, 7
      %v551 = vsel %vm515, %v549, %v550
      %v552 = vrot.slane %v475, 7
      %v553 = vrot.slane %v476, 7
      %v554 = vsel %vm515, %v552, %v553
      %v555 = vrot.slane %v477, 7
      %v556 = vrot.slane %v478, 7
      %v557 = vsel %vm515, %v555, %v556
      %v558 = vrot.slane %v479, 7
      %v559 = vrot.slane %v480, 7
      %v560 = vsel %vm515, %v558, %v559
      %v561 = vrot.slane %v481, 7
      %v562 = vrot.slane %v482, 7
      %v563 = vsel %vm515, %v561, %v562
      %v612 = vadd.f32 %v371, %v516
      %v613 = vadd.f32 %v372, %v518
      %v614 = vadd.f32 %v373, %v517
      %v615 = vadd.f32 %v374, %v519
      %v616 = vadd.f32 %v375, %v521
      %v617 = vadd.f32 %v376, %v520
      %v618 = vadd.f32 %v377, %v522
      %v619 = vadd.f32 %v378, %v524
      %v620 = vadd.f32 %v379, %v523
      %v621 = vadd.f32 %v380, %v525
      %v622 = vadd.f32 %v381, %v527
      %v623 = vadd.f32 %v382, %v526
      %v624 = vadd.f32 %v383, %v528
      %v625 = vadd.f32 %v384, %v530
      %v626 = vadd.f32 %v385, %v529
      %v627 = vadd.f32 %v386, %v531
      %v628 = vadd.f32 %v387, %v533
      %v629 = vadd.f32 %v388, %v532
      %v630 = vadd.f32 %v389, %v534
      %v631 = vadd.f32 %v390, %v536
      %v632 = vadd.f32 %v391, %v535
      %v633 = vadd.f32 %v392, %v537
      %v634 = vadd.f32 %v393, %v539
      %v635 = vadd.f32 %v394, %v538
      %v636 = vadd.f32 %v395, %v540
      %v637 = vadd.f32 %v396, %v542
      %v638 = vadd.f32 %v397, %v541
      %v639 = vadd.f32 %v398, %v543
      %v640 = vadd.f32 %v399, %v545
      %v641 = vadd.f32 %v400, %v544
      %v642 = vadd.f32 %v401, %v546
      %v643 = vadd.f32 %v402, %v548
      %v644 = vadd.f32 %v403, %v547
      %v645 = vadd.f32 %v404, %v549
      %v646 = vadd.f32 %v405, %v551
      %v647 = vadd.f32 %v406, %v550
      %v648 = vadd.f32 %v407, %v552
      %v649 = vadd.f32 %v408, %v554
      %v650 = vadd.f32 %v409, %v553
      %v651 = vadd.f32 %v410, %v555
      %v652 = vadd.f32 %v411, %v557
      %v653 = vadd.f32 %v412, %v556
      %v654 = vadd.f32 %v413, %v558
      %v655 = vadd.f32 %v414, %v560
      %v656 = vadd.f32 %v415, %v559
      %v657 = vadd.f32 %v416, %v561
      %v658 = vadd.f32 %v417, %v563
      %v659 = vadd.f32 %v418, %v562
      %v660 = vmax.f32 %v612, 0.0
      %v661 = vmax.f32 %v613, 0.0
      %v662 = vmax.f32 %v614, 0.0
      %v663 = vmax.f32 %v615, 0.0
      %v664 = vmax.f32 %v616, 0.0
      %v665 = vmax.f32 %v617, 0.0
      %v666 = vmax.f32 %v618, 0.0
      %v667 = vmax.f32 %v619, 0.0
      %v668 = vmax.f32 %v620, 0.0
      %v669 = vmax.f32 %v621, 0.0
      %v670 = vmax.f32 %v622, 0.0
      %v671 = vmax.f32 %v623, 0.0
      %v672 = vmax.f32 %v624, 0.0
      %v673 = vmax.f32 %v625, 0.0
      %v674 = vmax.f32 %v626, 0.0
      %v675 = vmax.f32 %v627, 0.0
      %v676 = vmax.f32 %v628, 0.0
      %v677 = vmax.f32 %v629, 0.0
      %v678 = vmax.f32 %v630, 0.0
      %v679 = vmax.f32 %v631, 0.0
      %v680 = vmax.f32 %v632, 0.0
      %v681 = vmax.f32 %v633, 0.0
      %v682 = vmax.f32 %v634, 0.0
      %v683 = vmax.f32 %v635, 0.0
      %v684 = vmax.f32 %v636, 0.0
      %v685 = vmax.f32 %v637, 0.0
      %v686 = vmax.f32 %v638, 0.0
      %v687 = vmax.f32 %v639, 0.0
      %v688 = vmax.f32 %v640, 0.0
      %v689 = vmax.f32 %v641, 0.0
      %v690 = vmax.f32 %v642, 0.0
      %v691 = vmax.f32 %v643, 0.0
      %v692 = vmax.f32 %v644, 0.0
      %v693 = vmax.f32 %v645, 0.0
      %v694 = vmax.f32 %v646, 0.0
      %v695 = vmax.f32 %v647, 0.0
      %v696 = vmax.f32 %v648, 0.0
      %v697 = vmax.f32 %v649, 0.0
      %v698 = vmax.f32 %v650, 0.0
      %v699 = vmax.f32 %v651, 0.0
      %v700 = vmax.f32 %v652, 0.0
      %v701 = vmax.f32 %v653, 0.0
      %v702 = vmax.f32 %v654, 0.0
      %v703 = vmax.f32 %v655, 0.0
      %v704 = vmax.f32 %v656, 0.0
      %v705 = vmax.f32 %v657, 0.0
      %v706 = vmax.f32 %v658, 0.0
      %v707 = vmax.f32 %v659, 0.0
      %v708 = vpack.c.bf16 %v661, %v660
      %v709 = vpack.c.bf16 %v662, %v662
      %v710 = vpack.c.bf16 %v664, %v663
      %v711 = vpack.c.bf16 %v665, %v665
      %v712 = vpack.c.bf16 %v667, %v666
      %v713 = vpack.c.bf16 %v668, %v668
      %v714 = vpack.c.bf16 %v670, %v669
      %v715 = vpack.c.bf16 %v671, %v671
      %v716 = vpack.c.bf16 %v673, %v672
      %v717 = vpack.c.bf16 %v674, %v674
      %v718 = vpack.c.bf16 %v676, %v675
      %v719 = vpack.c.bf16 %v677, %v677
      %v720 = vpack.c.bf16 %v679, %v678
      %v721 = vpack.c.bf16 %v680, %v680
      %v722 = vpack.c.bf16 %v682, %v681
      %v723 = vpack.c.bf16 %v683, %v683
      %v724 = vpack.c.bf16 %v685, %v684
      %v725 = vpack.c.bf16 %v686, %v686
      %v726 = vpack.c.bf16 %v688, %v687
      %v727 = vpack.c.bf16 %v689, %v689
      %v728 = vpack.c.bf16 %v691, %v690
      %v729 = vpack.c.bf16 %v692, %v692
      %v730 = vpack.c.bf16 %v694, %v693
      %v731 = vpack.c.bf16 %v695, %v695
      %v732 = vpack.c.bf16 %v697, %v696
      %v733 = vpack.c.bf16 %v698, %v698
      %v734 = vpack.c.bf16 %v700, %v699
      %v735 = vpack.c.bf16 %v701, %v701
      %v736 = vpack.c.bf16 %v703, %v702
      %v737 = vpack.c.bf16 %v704, %v704
      %v738 = vpack.c.bf16 %v706, %v705
      %v739 = vpack.c.bf16 %v707, %v707
      %v772 = vunpack.c.l.b16 %v708
      %v773 = vunpack.c.h.b16 %v708
      %v774 = vunpack.c.l.b16 %v709
      %v775 = vunpack.c.l.b16 %v710
      %v776 = vunpack.c.h.b16 %v710
      %v777 = vunpack.c.l.b16 %v711
      %v778 = vunpack.c.l.b16 %v712
      %v779 = vunpack.c.h.b16 %v712
      %v780 = vunpack.c.l.b16 %v713
      %v781 = vunpack.c.l.b16 %v714
      %v782 = vunpack.c.h.b16 %v714
      %v783 = vunpack.c.l.b16 %v715
      %v784 = vunpack.c.l.b16 %v716
      %v785 = vunpack.c.h.b16 %v716
      %v786 = vunpack.c.l.b16 %v717
      %v787 = vunpack.c.l.b16 %v718
      %v788 = vunpack.c.h.b16 %v718
      %v789 = vunpack.c.l.b16 %v719
      %v790 = vunpack.c.l.b16 %v720
      %v791 = vunpack.c.h.b16 %v720
      %v792 = vunpack.c.l.b16 %v721
      %v793 = vunpack.c.l.b16 %v722
      %v794 = vunpack.c.h.b16 %v722
      %v795 = vunpack.c.l.b16 %v723
      %v796 = vunpack.c.l.b16 %v724
      %v797 = vunpack.c.h.b16 %v724
      %v798 = vunpack.c.l.b16 %v725
      %v799 = vunpack.c.l.b16 %v726
      %v800 = vunpack.c.h.b16 %v726
      %v801 = vunpack.c.l.b16 %v727
      %v802 = vunpack.c.l.b16 %v728
      %v803 = vunpack.c.h.b16 %v728
      %v804 = vunpack.c.l.b16 %v729
      %v805 = vunpack.c.l.b16 %v730
      %v806 = vunpack.c.h.b16 %v730
      %v807 = vunpack.c.l.b16 %v731
      %v808 = vunpack.c.l.b16 %v732
      %v809 = vunpack.c.h.b16 %v732
      %v810 = vunpack.c.l.b16 %v733
      %v811 = vunpack.c.l.b16 %v734
      %v812 = vunpack.c.h.b16 %v734
      %v813 = vunpack.c.l.b16 %v735
      %v814 = vunpack.c.l.b16 %v736
      %v815 = vunpack.c.h.b16 %v736
      %v816 = vunpack.c.l.b16 %v737
      %v817 = vunpack.c.l.b16 %v738
      %v818 = vunpack.c.h.b16 %v738
      %v819 = vunpack.c.l.b16 %v739
      %v820 = vpack.c.b16 %v772, %v772
      %v821 = vpack.c.b16 %v773, %v773
      %v822 = vpack.c.b16 %v774, %v774
      %v823 = vpack.c.b16 %v775, %v775
      %v824 = vpack.c.b16 %v776, %v776
      %v825 = vpack.c.b16 %v777, %v777
      %v826 = vpack.c.b16 %v778, %v778
      %v827 = vpack.c.b16 %v779, %v779
      %v828 = vpack.c.b16 %v780, %v780
      %v829 = vpack.c.b16 %v781, %v781
      %v830 = vpack.c.b16 %v782, %v782
      %v831 = vpack.c.b16 %v783, %v783
      %v832 = vpack.c.b16 %v784, %v784
      %v833 = vpack.c.b16 %v785, %v785
      %v834 = vpack.c.b16 %v786, %v786
      %v835 = vpack.c.b16 %v787, %v787
      %v836 = vpack.c.b16 %v788, %v788
      %v837 = vpack.c.b16 %v789, %v789
      %v838 = vpack.c.b16 %v790, %v790
      %v839 = vpack.c.b16 %v791, %v791
      %v840 = vpack.c.b16 %v792, %v792
      %v841 = vpack.c.b16 %v793, %v793
      %v842 = vpack.c.b16 %v794, %v794
      %v843 = vpack.c.b16 %v795, %v795
      %v844 = vpack.c.b16 %v796, %v796
      %v845 = vpack.c.b16 %v797, %v797
      %v846 = vpack.c.b16 %v798, %v798
      %v847 = vpack.c.b16 %v799, %v799
      %v848 = vpack.c.b16 %v800, %v800
      %v849 = vpack.c.b16 %v801, %v801
      %v850 = vpack.c.b16 %v802, %v802
      %v851 = vpack.c.b16 %v803, %v803
      %v852 = vpack.c.b16 %v804, %v804
      %v853 = vpack.c.b16 %v805, %v805
      %v854 = vpack.c.b16 %v806, %v806
      %v855 = vpack.c.b16 %v807, %v807
      %v856 = vpack.c.b16 %v808, %v808
      %v857 = vpack.c.b16 %v809, %v809
      %v858 = vpack.c.b16 %v810, %v810
      %v859 = vpack.c.b16 %v811, %v811
      %v860 = vpack.c.b16 %v812, %v812
      %v861 = vpack.c.b16 %v813, %v813
      %v862 = vpack.c.b16 %v814, %v814
      %v863 = vpack.c.b16 %v815, %v815
      %v864 = vpack.c.b16 %v816, %v816
      %v865 = vpack.c.b16 %v817, %v817
      %v866 = vpack.c.b16 %v818, %v818
      %v867 = vpack.c.b16 %v819, %v819
      %vm868 = vsmask.f32 3328
      %vm869 = vsmask.f32 7440
      %vm870 = vmor %vm868, %vm869
      %v872 = vshrl.u32 %v820, 16
      %v874 = vrot.slane %v872, 4
      %v875 = vshll.u32 %v820, 16
      %v877 = vrot.slane %v875, 5
      %v878 = vor.u32 %v874, %v877
      %v879 = vrot.slane %v878, 4
      %v881 = vshll.u32 %v821, 16
      %v883 = vrot.slane %v881, 5
      %v884 = vsel %vm870, %v879, %v883
      %v885 = vshrl.u32 %v821, 16
      %v887 = vrot.slane %v885, 4
      %v888 = vor.u32 %v887, %v883
      %v889 = vrot.slane %v888, 4
      %v891 = vshll.u32 %v822, 16
      %v893 = vrot.slane %v891, 5
      %v894 = vsel %vm870, %v889, %v893
      %v896 = vshrl.u32 %v823, 16
      %v898 = vrot.slane %v896, 4
      %v899 = vshll.u32 %v823, 16
      %v901 = vrot.slane %v899, 5
      %v902 = vor.u32 %v898, %v901
      %v903 = vrot.slane %v902, 4
      %v905 = vshll.u32 %v824, 16
      %v907 = vrot.slane %v905, 5
      %v908 = vsel %vm870, %v903, %v907
      %v909 = vshrl.u32 %v824, 16
      %v911 = vrot.slane %v909, 4
      %v912 = vor.u32 %v911, %v907
      %v913 = vrot.slane %v912, 4
      %v915 = vshll.u32 %v825, 16
      %v917 = vrot.slane %v915, 5
      %v918 = vsel %vm870, %v913, %v917
      %v920 = vshrl.u32 %v826, 16
      %v922 = vrot.slane %v920, 4
      %v923 = vshll.u32 %v826, 16
      %v925 = vrot.slane %v923, 5
      %v926 = vor.u32 %v922, %v925
      %v927 = vrot.slane %v926, 4
      %v929 = vshll.u32 %v827, 16
      %v931 = vrot.slane %v929, 5
      %v932 = vsel %vm870, %v927, %v931
      %v933 = vshrl.u32 %v827, 16
      %v935 = vrot.slane %v933, 4
      %v936 = vor.u32 %v935, %v931
      %v937 = vrot.slane %v936, 4
      %v939 = vshll.u32 %v828, 16
      %v941 = vrot.slane %v939, 5
      %v942 = vsel %vm870, %v937, %v941
      %v944 = vshrl.u32 %v829, 16
      %v946 = vrot.slane %v944, 4
      %v947 = vshll.u32 %v829, 16
      %v949 = vrot.slane %v947, 5
      %v950 = vor.u32 %v946, %v949
      %v951 = vrot.slane %v950, 4
      %v953 = vshll.u32 %v830, 16
      %v955 = vrot.slane %v953, 5
      %v956 = vsel %vm870, %v951, %v955
      %v957 = vshrl.u32 %v830, 16
      %v959 = vrot.slane %v957, 4
      %v960 = vor.u32 %v959, %v955
      %v961 = vrot.slane %v960, 4
      %v963 = vshll.u32 %v831, 16
      %v965 = vrot.slane %v963, 5
      %v966 = vsel %vm870, %v961, %v965
      %v968 = vshrl.u32 %v832, 16
      %v970 = vrot.slane %v968, 4
      %v971 = vshll.u32 %v832, 16
      %v973 = vrot.slane %v971, 5
      %v974 = vor.u32 %v970, %v973
      %v975 = vrot.slane %v974, 4
      %v977 = vshll.u32 %v833, 16
      %v979 = vrot.slane %v977, 5
      %v980 = vsel %vm870, %v975, %v979
      %v981 = vshrl.u32 %v833, 16
      %v983 = vrot.slane %v981, 4
      %v984 = vor.u32 %v983, %v979
      %v985 = vrot.slane %v984, 4
      %v987 = vshll.u32 %v834, 16
      %v989 = vrot.slane %v987, 5
      %v990 = vsel %vm870, %v985, %v989
      %v992 = vshrl.u32 %v835, 16
      %v994 = vrot.slane %v992, 4
      %v995 = vshll.u32 %v835, 16
      %v997 = vrot.slane %v995, 5
      %v998 = vor.u32 %v994, %v997
      %v999 = vrot.slane %v998, 4
      %v1001 = vshll.u32 %v836, 16
      %v1003 = vrot.slane %v1001, 5
      %v1004 = vsel %vm870, %v999, %v1003
      %v1005 = vshrl.u32 %v836, 16
      %v1007 = vrot.slane %v1005, 4
      %v1008 = vor.u32 %v1007, %v1003
      %v1009 = vrot.slane %v1008, 4
      %v1011 = vshll.u32 %v837, 16
      %v1013 = vrot.slane %v1011, 5
      %v1014 = vsel %vm870, %v1009, %v1013
      %v1016 = vshrl.u32 %v838, 16
      %v1018 = vrot.slane %v1016, 4
      %v1019 = vshll.u32 %v838, 16
      %v1021 = vrot.slane %v1019, 5
      %v1022 = vor.u32 %v1018, %v1021
      %v1023 = vrot.slane %v1022, 4
      %v1025 = vshll.u32 %v839, 16
      %v1027 = vrot.slane %v1025, 5
      %v1028 = vsel %vm870, %v1023, %v1027
      %v1029 = vshrl.u32 %v839, 16
      %v1031 = vrot.slane %v1029, 4
      %v1032 = vor.u32 %v1031, %v1027
      %v1033 = vrot.slane %v1032, 4
      %v1035 = vshll.u32 %v840, 16
      %v1037 = vrot.slane %v1035, 5
      %v1038 = vsel %vm870, %v1033, %v1037
      %v1040 = vshrl.u32 %v841, 16
      %v1042 = vrot.slane %v1040, 4
      %v1043 = vshll.u32 %v841, 16
      %v1045 = vrot.slane %v1043, 5
      %v1046 = vor.u32 %v1042, %v1045
      %v1047 = vrot.slane %v1046, 4
      %v1049 = vshll.u32 %v842, 16
      %v1051 = vrot.slane %v1049, 5
      %v1052 = vsel %vm870, %v1047, %v1051
      %v1053 = vshrl.u32 %v842, 16
      %v1055 = vrot.slane %v1053, 4
      %v1056 = vor.u32 %v1055, %v1051
      %v1057 = vrot.slane %v1056, 4
      %v1059 = vshll.u32 %v843, 16
      %v1061 = vrot.slane %v1059, 5
      %v1062 = vsel %vm870, %v1057, %v1061
      %v1064 = vshrl.u32 %v844, 16
      %v1066 = vrot.slane %v1064, 4
      %v1067 = vshll.u32 %v844, 16
      %v1069 = vrot.slane %v1067, 5
      %v1070 = vor.u32 %v1066, %v1069
      %v1071 = vrot.slane %v1070, 4
      %v1073 = vshll.u32 %v845, 16
      %v1075 = vrot.slane %v1073, 5
      %v1076 = vsel %vm870, %v1071, %v1075
      %v1077 = vshrl.u32 %v845, 16
      %v1079 = vrot.slane %v1077, 4
      %v1080 = vor.u32 %v1079, %v1075
      %v1081 = vrot.slane %v1080, 4
      %v1083 = vshll.u32 %v846, 16
      %v1085 = vrot.slane %v1083, 5
      %v1086 = vsel %vm870, %v1081, %v1085
      %v1088 = vshrl.u32 %v847, 16
      %v1090 = vrot.slane %v1088, 4
      %v1091 = vshll.u32 %v847, 16
      %v1093 = vrot.slane %v1091, 5
      %v1094 = vor.u32 %v1090, %v1093
      %v1095 = vrot.slane %v1094, 4
      %v1097 = vshll.u32 %v848, 16
      %v1099 = vrot.slane %v1097, 5
      %v1100 = vsel %vm870, %v1095, %v1099
      %v1101 = vshrl.u32 %v848, 16
      %v1103 = vrot.slane %v1101, 4
      %v1104 = vor.u32 %v1103, %v1099
      %v1105 = vrot.slane %v1104, 4
      %v1107 = vshll.u32 %v849, 16
      %v1109 = vrot.slane %v1107, 5
      %v1110 = vsel %vm870, %v1105, %v1109
      %v1112 = vshrl.u32 %v850, 16
      %v1114 = vrot.slane %v1112, 4
      %v1115 = vshll.u32 %v850, 16
      %v1117 = vrot.slane %v1115, 5
      %v1118 = vor.u32 %v1114, %v1117
      %v1119 = vrot.slane %v1118, 4
      %v1121 = vshll.u32 %v851, 16
      %v1123 = vrot.slane %v1121, 5
      %v1124 = vsel %vm870, %v1119, %v1123
      %v1125 = vshrl.u32 %v851, 16
      %v1127 = vrot.slane %v1125, 4
      %v1128 = vor.u32 %v1127, %v1123
      %v1129 = vrot.slane %v1128, 4
      %v1131 = vshll.u32 %v852, 16
      %v1133 = vrot.slane %v1131, 5
      %v1134 = vsel %vm870, %v1129, %v1133
      %v1136 = vshrl.u32 %v853, 16
      %v1138 = vrot.slane %v1136, 4
      %v1139 = vshll.u32 %v853, 16
      %v1141 = vrot.slane %v1139, 5
      %v1142 = vor.u32 %v1138, %v1141
      %v1143 = vrot.slane %v1142, 4
      %v1145 = vshll.u32 %v854, 16
      %v1147 = vrot.slane %v1145, 5
      %v1148 = vsel %vm870, %v1143, %v1147
      %v1149 = vshrl.u32 %v854, 16
      %v1151 = vrot.slane %v1149, 4
      %v1152 = vor.u32 %v1151, %v1147
      %v1153 = vrot.slane %v1152, 4
      %v1155 = vshll.u32 %v855, 16
      %v1157 = vrot.slane %v1155, 5
      %v1158 = vsel %vm870, %v1153, %v1157
      %v1160 = vshrl.u32 %v856, 16
      %v1162 = vrot.slane %v1160, 4
      %v1163 = vshll.u32 %v856, 16
      %v1165 = vrot.slane %v1163, 5
      %v1166 = vor.u32 %v1162, %v1165
      %v1167 = vrot.slane %v1166, 4
      %v1169 = vshll.u32 %v857, 16
      %v1171 = vrot.slane %v1169, 5
      %v1172 = vsel %vm870, %v1167, %v1171
      %v1173 = vshrl.u32 %v857, 16
      %v1175 = vrot.slane %v1173, 4
      %v1176 = vor.u32 %v1175, %v1171
      %v1177 = vrot.slane %v1176, 4
      %v1179 = vshll.u32 %v858, 16
      %v1181 = vrot.slane %v1179, 5
      %v1182 = vsel %vm870, %v1177, %v1181
      %v1184 = vshrl.u32 %v859, 16
      %v1186 = vrot.slane %v1184, 4
      %v1187 = vshll.u32 %v859, 16
      %v1189 = vrot.slane %v1187, 5
      %v1190 = vor.u32 %v1186, %v1189
      %v1191 = vrot.slane %v1190, 4
      %v1193 = vshll.u32 %v860, 16
      %v1195 = vrot.slane %v1193, 5
      %v1196 = vsel %vm870, %v1191, %v1195
      %v1197 = vshrl.u32 %v860, 16
      %v1199 = vrot.slane %v1197, 4
      %v1200 = vor.u32 %v1199, %v1195
      %v1201 = vrot.slane %v1200, 4
      %v1203 = vshll.u32 %v861, 16
      %v1205 = vrot.slane %v1203, 5
      %v1206 = vsel %vm870, %v1201, %v1205
      %v1208 = vshrl.u32 %v862, 16
      %v1210 = vrot.slane %v1208, 4
      %v1211 = vshll.u32 %v862, 16
      %v1213 = vrot.slane %v1211, 5
      %v1214 = vor.u32 %v1210, %v1213
      %v1215 = vrot.slane %v1214, 4
      %v1217 = vshll.u32 %v863, 16
      %v1219 = vrot.slane %v1217, 5
      %v1220 = vsel %vm870, %v1215, %v1219
      %v1221 = vshrl.u32 %v863, 16
      %v1223 = vrot.slane %v1221, 4
      %v1224 = vor.u32 %v1223, %v1219
      %v1225 = vrot.slane %v1224, 4
      %v1227 = vshll.u32 %v864, 16
      %v1229 = vrot.slane %v1227, 5
      %v1230 = vsel %vm870, %v1225, %v1229
      %v1232 = vshrl.u32 %v865, 16
      %v1234 = vrot.slane %v1232, 4
      %v1235 = vshll.u32 %v865, 16
      %v1237 = vrot.slane %v1235, 5
      %v1238 = vor.u32 %v1234, %v1237
      %v1239 = vrot.slane %v1238, 4
      %v1241 = vshll.u32 %v866, 16
      %v1243 = vrot.slane %v1241, 5
      %v1244 = vsel %vm870, %v1239, %v1243
      %v1245 = vshrl.u32 %v866, 16
      %v1247 = vrot.slane %v1245, 4
      %v1248 = vor.u32 %v1247, %v1243
      %v1249 = vrot.slane %v1248, 4
      %v1251 = vshll.u32 %v867, 16
      %v1253 = vrot.slane %v1251, 5
      %v1254 = vsel %vm870, %v1249, %v1253
      %vm1287 = vcmask 60416
      %1288 = vst.msk [vmem:[%s266] sm:$0xf] %vm1287, %v884
      %1289 = vst.msk [vmem:[%s266 + $0x4] sm:$0xf] %vm1287, %v894
      %1290 = vst.msk [vmem:[%s266 + $0x8] sm:$0xf] %vm1287, %v908
      %1291 = vst.msk [vmem:[%s266 + $0xc] sm:$0xf] %vm1287, %v918
      %1292 = vst.msk [vmem:[%s266 + $0x10] sm:$0xf] %vm1287, %v932
      %1293 = vst.msk [vmem:[%s266 + $0x14] sm:$0xf] %vm1287, %v942
      %1294 = vst.msk [vmem:[%s266 + $0x18] sm:$0xf] %vm1287, %v956
      %1295 = vst.msk [vmem:[%s266 + $0x1c] sm:$0xf] %vm1287, %v966
      %1296 = vst.msk [vmem:[%s266 + $0x20] sm:$0xf] %vm1287, %v980
      %1297 = vst.msk [vmem:[%s266 + $0x24] sm:$0xf] %vm1287, %v990
      %1298 = vst.msk [vmem:[%s266 + $0x28] sm:$0xf] %vm1287, %v1004
      %1299 = vst.msk [vmem:[%s266 + $0x2c] sm:$0xf] %vm1287, %v1014
      %1300 = vst.msk [vmem:[%s266 + $0x30] sm:$0xf] %vm1287, %v1028
      %1301 = vst.msk [vmem:[%s266 + $0x34] sm:$0xf] %vm1287, %v1038
      %1302 = vst.msk [vmem:[%s266 + $0x38] sm:$0xf] %vm1287, %v1052
      %1303 = vst.msk [vmem:[%s266 + $0x3c] sm:$0xf] %vm1287, %v1062
      %1304 = vst.msk [vmem:[%s266 + $0x40] sm:$0xf] %vm1287, %v1076
      %1305 = vst.msk [vmem:[%s266 + $0x44] sm:$0xf] %vm1287, %v1086
      %1306 = vst.msk [vmem:[%s266 + $0x48] sm:$0xf] %vm1287, %v1100
      %1307 = vst.msk [vmem:[%s266 + $0x4c] sm:$0xf] %vm1287, %v1110
      %1308 = vst.msk [vmem:[%s266 + $0x50] sm:$0xf] %vm1287, %v1124
      %1309 = vst.msk [vmem:[%s266 + $0x54] sm:$0xf] %vm1287, %v1134
      %1310 = vst.msk [vmem:[%s266 + $0x58] sm:$0xf] %vm1287, %v1148
      %1311 = vst.msk [vmem:[%s266 + $0x5c] sm:$0xf] %vm1287, %v1158
      %1312 = vst.msk [vmem:[%s266 + $0x60] sm:$0xf] %vm1287, %v1172
      %1313 = vst.msk [vmem:[%s266 + $0x64] sm:$0xf] %vm1287, %v1182
      %1314 = vst.msk [vmem:[%s266 + $0x68] sm:$0xf] %vm1287, %v1196
      %1315 = vst.msk [vmem:[%s266 + $0x6c] sm:$0xf] %vm1287, %v1206
      %1316 = vst.msk [vmem:[%s266 + $0x70] sm:$0xf] %vm1287, %v1220
      %1317 = vst.msk [vmem:[%s266 + $0x74] sm:$0xf] %vm1287, %v1230
      %1318 = vst.msk [vmem:[%s266 + $0x78] sm:$0xf] %vm1287, %v1244
      %1319 = vst.msk [vmem:[%s266 + $0x7c] sm:$0xf] %vm1287, %v1254
      %s1320 = smul.u32 16, %s19
      %p1321 = scmp.lt.s32.totalorder %s18, 1
      %s1322 = scalar_select %p1321, %s18, 1
      %p1323 = scmp.lt.s32.totalorder %s1320, 15
      %s1324 = scalar_select %p1323, %s1320, 15
      %s1325 = smul.addr %s1324, 2
      %s1326 = smul.addr %s1322, 32
      %s1327 = sadd.s32 %s1325, %s1326
      %s1328 = smul.addr %s1327, 4
      %s1329 = scalar_lea.vmem %s3, %s1328
      // Predicated region
      $region33: #{se_bottleneck_forward.5} parent=31 // pred_check
        %p1330 = pneg %p128
      $region34: #{se_bottleneck_forward.5} parent=31 // pred_check_branch
        %1332 = sbr.rel (%p1330) target = $region36
      $region35: #{se_bottleneck_forward.5} parent=31 // pred_region
        %s1333 = smul.u32 16, %s19
      $region36: #{se_bottleneck_forward.5} parent=31 // pred_fallthru
        _
    $region32: #{se_bottleneck_forward.5} parent=5 // pred_fallthru
      _
    %p1334 = scmp.le.s32.totalorder 2, %s9
    // Predicated region
    $region37: #{se_bottleneck_forward.5} parent=5 // pred_check
      %p1335 = pneg %p1334
    $region38: #{se_bottleneck_forward.5} parent=5 // pred_check_branch
      %1337 = sbr.rel (%p1335) target = $region40
    $region39: #{se_bottleneck_forward.5} parent=5 // pred_region
      %s1338 = ssub.s32 %s9, 2
      // Predicated region
      $region41: #{se_bottleneck_forward.5} parent=39 // pred_check
        %p1339 = pneg %p134
      $region42: #{se_bottleneck_forward.5} parent=39 // pred_check_branch
        %1341 = sbr.rel (%p1339) target = $region44
      $region43: #{se_bottleneck_forward.5} parent=39 // pred_region
        %s1342 = smul.u32 16, %s21
        %p1343 = scmp.lt.s32.totalorder %s20, 1
        %s1344 = scalar_select %p1343, %s20, 1
        %p1345 = scmp.lt.s32.totalorder %s1342, 15
        %s1346 = scalar_select %p1345, %s1342, 15
        %s1347 = smul.addr %s1346, 2
        %s1348 = smul.addr %s1344, 32
        %s1349 = sadd.s32 %s1347, %s1348
        %s1350 = smul.addr %s1349, 4
        %s1351 = scalar_lea.vmem %s3, %s1350
      $region44: #{se_bottleneck_forward.5} parent=39 // pred_fallthru
        _
    $region40: #{se_bottleneck_forward.5} parent=5 // pred_fallthru
      _
  $region6: #{se_bottleneck_forward.5} parent=0 // loop_footer
    %s13 = sadd.s32 1, %s9
  $region7: #{se_bottleneck_forward.5} parent=0 // loop_footer_branch
    %8 = sbr.rel target = $region3
  $region8: #{se_bottleneck_forward.5} parent=0 // loop_exit
    _

// kernel: se_bottleneck_forward.4
$region0: #{se_bottleneck_forward.4}
  #allocation0 [shape = 'u32[]', space=smem, size = 0x4, offset = 0x4, fixed_abs, tag = 'smem constant byte address 0x4 - core index']
  #allocation1 [shape = 'u32[144,128]{1,0:T(1,128)}', space=vmem, size = 0x12000, scoped, tag = 'internal scratch']
  #allocation2 [shape = 'f32[384,4]{1,0:T(8,128)}', space=vmem, size = 0x30000, scoped, tag = 'scratch operand']
  %s0 = inlined_call_operand.vmem [shape: bf16[2,432,4], index: 0, kind: input, shape index: {}]
  %s1 = inlined_call_operand.vmem [shape: bf16[9,4,4], index: 1, kind: input, shape index: {}]
  %s2 = inlined_call_operand.vmem [shape: f32[1,4], index: 2, kind: input, shape index: {}]
  %s3 = inlined_call_operand.vmem [shape: bf16[4,8], index: 3, kind: input, shape index: {}]
  %s4 = inlined_call_operand.vmem [shape: f32[1,8], index: 4, kind: input, shape index: {}]
  %s5 = inlined_call_operand.vmem [shape: bf16[2,384,8], index: 5, kind: output, shape index: {}]
  %s6 = sld [smem:[#allocation0]]
  $region53: #{se_bottleneck_forward.4} parent=0
    _
  %s8 = ssub.s32 1, %s6
  %s9 = scalar_select 0, %s8, %s6
  loop: start=0, step=1, limit=4
  $region2: #{se_bottleneck_forward.4} parent=0 // loop_pre_header
    _
  $region3: #{se_bottleneck_forward.4} parent=0 // loop_header
    %s11 = sphi 0, %s15
    %p12 = scmp.ge.s32.totalorder %s11, 4
    %s18 = sphi 0, %s30
    %s19 = sphi 0, %s26
    %s20 = sphi 0, %s18
    %s21 = sphi 0, %s19
    %s22 = sphi 0, %s20
    %s23 = sphi 0, %s21
    %s33 = sphi 0, %s35
    %s36 = sphi 0, %s33
    %s37 = sphi 0, %s36
    %s53 = sphi 0, %s37
    %s57 = sphi 0, %s57
    %s59 = sphi 0, %s57
    %s60 = sphi 0, %s59
    %s74 = sphi 0, %s60
    %s78 = sphi 0, %s78
    %s80 = sphi 0, %s78
    %s81 = sphi 0, %s80
    %s95 = sphi 0, %s81
    %s99 = sphi 0, %s99
    %s101 = sphi 0, %s99
    %s102 = sphi 0, %s101
    %s116 = sphi 0, %s102
    %s120 = sphi 0, %s120
    %s122 = sphi 0, %s120
    %s123 = sphi 0, %s122
    %s137 = sphi 0, %s123
    %s145 = sphi 0, %s147
    %s148 = sphi 0, %s145
    %s149 = sphi 0, %s148
    %s165 = sphi 0, %s149
  $region4: #{se_bottleneck_forward.4} parent=0 // loop_header_branch
    %14 = sbr.rel (%p12) target = $region8
  $region5: #{se_bottleneck_forward.4} parent=0 // loop_body
    %s16 = ssub.s32 %s11, 1
    %s17 = ssub.s32 %s11, 2
    %s24 = sadd.s32 1, %s19
    %p25 = scmp.ge.s32.totalorder %s24, 1
    %s26 = scalar_select %p25, 0, %s24
    %s27 = sadd.s32 1, %s18
    %s28 = scalar_select %p25, %s27, %s18
    %p29 = scmp.ge.s32.totalorder %s28, 2
    %s30 = scalar_select %p29, 0, %s28
    %s31 = ssub.s32 %s18, %s30
    %p32 = scmp.eq.s32.totalorder %s31, 0
    %s34 = sadd.s32 %s33, 1
    %s35 = scalar_select %p32, %s33, %s34
    %p38 = pneg %p32
    %p39 = scmp.eq.s32.totalorder %s11, 1
    %p40 = por %p38, %p39
    %p41 = scmp.ne.s32.totalorder %s33, %s36
    %p42 = scmp.eq.s32.totalorder %s11, 0
    %p43 = por %p41, %p42
    %p44 = scmp.ne.s32.totalorder %s33, %s36
    %p45 = scmp.eq.s32.totalorder %s16, 1
    %p46 = por %p44, %p45
    %p47 = scmp.ne.s32.totalorder %s36, %s37
    %p48 = scmp.eq.s32.totalorder %s16, 0
    %p49 = por %p47, %p48
    %p50 = scmp.ne.s32.totalorder %s36, %s37
    %p51 = scmp.eq.s32.totalorder %s17, 1
    %p52 = por %p50, %p51
    %p54 = scmp.ne.s32.totalorder %s37, %s53
    %p55 = scmp.eq.s32.totalorder %s17, 0
    %p56 = por %p54, %p55
    %s58 = sadd.s32 %s57, 1
    %p61 = scmp.eq.s32.totalorder %s11, 1
    %p62 = scmp.ne.s32.totalorder %s57, %s59
    %p63 = scmp.eq.s32.totalorder %s11, 0
    %p64 = por %p62, %p63
    %p65 = scmp.ne.s32.totalorder %s57, %s59
    %p66 = scmp.eq.s32.totalorder %s16, 1
    %p67 = por %p65, %p66
    %p68 = scmp.ne.s32.totalorder %s59, %s60
    %p69 = scmp.eq.s32.totalorder %s16, 0
    %p70 = por %p68, %p69
    %p71 = scmp.ne.s32.totalorder %s59, %s60
    %p72 = scmp.eq.s32.totalorder %s17, 1
    %p73 = por %p71, %p72
    %p75 = scmp.ne.s32.totalorder %s60, %s74
    %p76 = scmp.eq.s32.totalorder %s17, 0
    %p77 = por %p75, %p76
    %s79 = sadd.s32 %s78, 1
    %p82 = scmp.eq.s32.totalorder %s11, 1
    %p83 = scmp.ne.s32.totalorder %s78, %s80
    %p84 = scmp.eq.s32.totalorder %s11, 0
    %p85 = por %p83, %p84
    %p86 = scmp.ne.s32.totalorder %s78, %s80
    %p87 = scmp.eq.s32.totalorder %s16, 1
    %p88 = por %p86, %p87
    %p89 = scmp.ne.s32.totalorder %s80, %s81
    %p90 = scmp.eq.s32.totalorder %s16, 0
    %p91 = por %p89, %p90
    %p92 = scmp.ne.s32.totalorder %s80, %s81
    %p93 = scmp.eq.s32.totalorder %s17, 1
    %p94 = por %p92, %p93
    %p96 = scmp.ne.s32.totalorder %s81, %s95
    %p97 = scmp.eq.s32.totalorder %s17, 0
    %p98 = por %p96, %p97
    %s100 = sadd.s32 %s99, 1
    %p103 = scmp.eq.s32.totalorder %s11, 1
    %p104 = scmp.ne.s32.totalorder %s99, %s101
    %p105 = scmp.eq.s32.totalorder %s11, 0
    %p106 = por %p104, %p105
    %p107 = scmp.ne.s32.totalorder %s99, %s101
    %p108 = scmp.eq.s32.totalorder %s16, 1
    %p109 = por %p107, %p108
    %p110 = scmp.ne.s32.totalorder %s101, %s102
    %p111 = scmp.eq.s32.totalorder %s16, 0
    %p112 = por %p110, %p111
    %p113 = scmp.ne.s32.totalorder %s101, %s102
    %p114 = scmp.eq.s32.totalorder %s17, 1
    %p115 = por %p113, %p114
    %p117 = scmp.ne.s32.totalorder %s102, %s116
    %p118 = scmp.eq.s32.totalorder %s17, 0
    %p119 = por %p117, %p118
    %s121 = sadd.s32 %s120, 1
    %p124 = scmp.eq.s32.totalorder %s11, 1
    %p125 = scmp.ne.s32.totalorder %s120, %s122
    %p126 = scmp.eq.s32.totalorder %s11, 0
    %p127 = por %p125, %p126
    %p128 = scmp.ne.s32.totalorder %s120, %s122
    %p129 = scmp.eq.s32.totalorder %s16, 1
    %p130 = por %p128, %p129
    %p131 = scmp.ne.s32.totalorder %s122, %s123
    %p132 = scmp.eq.s32.totalorder %s16, 0
    %p133 = por %p131, %p132
    %p134 = scmp.ne.s32.totalorder %s122, %s123
    %p135 = scmp.eq.s32.totalorder %s17, 1
    %p136 = por %p134, %p135
    %p138 = scmp.ne.s32.totalorder %s123, %s137
    %p139 = scmp.eq.s32.totalorder %s17, 0
    %p140 = por %p138, %p139
    %s141 = ssub.s32 %s18, %s30
    %s142 = ssub.s32 %s19, %s26
    %s143 = sor.u32 %s141, %s142
    %p144 = scmp.eq.s32.totalorder %s143, 0
    %s146 = sadd.s32 %s145, 1
    %s147 = scalar_select %p144, %s145, %s146
    %p150 = pneg %p144
    %p151 = scmp.eq.s32.totalorder %s11, 1
    %p152 = por %p150, %p151
    %p153 = scmp.ne.s32.totalorder %s145, %s148
    %p154 = scmp.eq.s32.totalorder %s11, 0
    %p155 = por %p153, %p154
    %p156 = scmp.ne.s32.totalorder %s145, %s148
    %p157 = scmp.eq.s32.totalorder %s16, 1
    %p158 = por %p156, %p157
    %p159 = scmp.ne.s32.totalorder %s148, %s149
    %p160 = scmp.eq.s32.totalorder %s16, 0
    %p161 = por %p159, %p160
    %p162 = scmp.ne.s32.totalorder %s148, %s149
    %p163 = scmp.eq.s32.totalorder %s17, 1
    %p164 = por %p162, %p163
    %p166 = scmp.ne.s32.totalorder %s149, %s165
    %p167 = scmp.eq.s32.totalorder %s17, 0
    %p168 = por %p166, %p167
    %p169 = scmp.le.s32.totalorder 1, %s11
    %p170 = scmp.lt.s32.totalorder %s11, 3
    %p171 = pnand %p169, %p170
    %p172 = pneg %p171
    // Predicated region
    $region9: #{se_bottleneck_forward.4} parent=5 // pred_check
      _
    $region10: #{se_bottleneck_forward.4} parent=5 // pred_check_branch
      %174 = sbr.rel (%p171) target = $region12
    $region11: #{se_bottleneck_forward.4} parent=5 // pred_region
      %s175 = ssub.s32 %s11, 1
      // Predicated region
      $region13: #{se_bottleneck_forward.4} parent=11 // pred_check
        %p176 = pneg %p70
      $region14: #{se_bottleneck_forward.4} parent=11 // pred_check_branch
        %178 = sbr.rel (%p176) target = $region16
      $region15: #{se_bottleneck_forward.4} parent=11 // pred_region
        _
      $region16: #{se_bottleneck_forward.4} parent=11 // pred_fallthru
        _
      // Predicated region
      $region17: #{se_bottleneck_forward.4} parent=11 // pred_check
        %p179 = pneg %p91
      $region18: #{se_bottleneck_forward.4} parent=11 // pred_check_branch
        %181 = sbr.rel (%p179) target = $region20
      $region19: #{se_bottleneck_forward.4} parent=11 // pred_region
        _
      $region20: #{se_bottleneck_forward.4} parent=11 // pred_fallthru
        _
      // Predicated region
      $region21: #{se_bottleneck_forward.4} parent=11 // pred_check
        %p182 = pneg %p112
      $region22: #{se_bottleneck_forward.4} parent=11 // pred_check_branch
        %184 = sbr.rel (%p182) target = $region24
      $region23: #{se_bottleneck_forward.4} parent=11 // pred_region
        _
      $region24: #{se_bottleneck_forward.4} parent=11 // pred_fallthru
        _
      // Predicated region
      $region25: #{se_bottleneck_forward.4} parent=11 // pred_check
        %p185 = pneg %p133
      $region26: #{se_bottleneck_forward.4} parent=11 // pred_check_branch
        %187 = sbr.rel (%p185) target = $region28
      $region27: #{se_bottleneck_forward.4} parent=11 // pred_region
        _
      $region28: #{se_bottleneck_forward.4} parent=11 // pred_fallthru
        _
    $region12: #{se_bottleneck_forward.4} parent=5 // pred_fallthru
      _
    %p188 = scmp.lt.s32.totalorder %s11, 2
    // Predicated region
    $region29: #{se_bottleneck_forward.4} parent=5 // pred_check
      %p189 = pneg %p188
    $region30: #{se_bottleneck_forward.4} parent=5 // pred_check_branch
      %191 = sbr.rel (%p189) target = $region32
    $region31: #{se_bottleneck_forward.4} parent=5 // pred_region
      // Predicated region
      $region33: #{se_bottleneck_forward.4} parent=31 // pred_check
        %p192 = pneg %p43
      $region34: #{se_bottleneck_forward.4} parent=31 // pred_check_branch
        %194 = sbr.rel (%p192) target = $region36
      $region35: #{se_bottleneck_forward.4} parent=31 // pred_region
        %p195 = scmp.lt.s32.totalorder %s18, 1
        %s196 = scalar_select %p195, %s18, 1
        %s197 = smul.addr %s196, 54
        %s198 = smul.addr %s197, 4
        %s199 = scalar_lea.vmem %s0, %s198
      $region36: #{se_bottleneck_forward.4} parent=31 // pred_fallthru
        _
    $region32: #{se_bottleneck_forward.4} parent=5 // pred_fallthru
      _
    %p200 = scmp.le.s32.totalorder 1, %s11
    %p201 = scmp.lt.s32.totalorder %s11, 3
    %p202 = pnand %p200, %p201
    %p203 = pneg %p202
    // Predicated region
    $region37: #{se_bottleneck_forward.4} parent=5 // pred_check
      _
    $region38: #{se_bottleneck_forward.4} parent=5 // pred_check_branch
      %205 = sbr.rel (%p202) target = $region40
    $region39: #{se_bottleneck_forward.4} parent=5 // pred_region
      %s206 = ssub.s32 %s11, 1
      %p207 = scmp.lt.s32.totalorder %s20, 1
      %s208 = scalar_select %p207, %s20, 1
      %s209 = smul.addr %s208, 54
      %s210 = smul.addr %s209, 4
      %s211 = scalar_lea.vmem %s0, %s210
      %p212 = pneg %p49
      %p213 = pneg %p46
      %p214 = pneg %p70
      %p215 = pneg %p67
      %p216 = pneg %p91
      %p217 = pneg %p88
      %p218 = pneg %p112
      %p219 = pneg %p109
      %p220 = pneg %p133
      %p221 = pneg %p130
      %p222 = pneg %p161
      %p223 = pneg %p158
      %s224 = smul.u32 48, %s21
      %p225 = scmp.lt.s32.totalorder %s20, 1
      %s226 = scalar_select %p225, %s20, 1
      %p227 = scmp.lt.s32.totalorder %s224, 47
      %s228 = scalar_select %p227, %s224, 47
      %s229 = smul.addr %s226, 48
      %s230 = sadd.s32 %s228, %s229
      %s231 = smul.addr %s230, 4
      %s232 = scalar_lea.vmem %s5, %s231
      %p233 = scmp.lt.s32.totalorder %s20, 1
      %s234 = scalar_select %p233, %s20, 1
      %s235 = smul.addr %s234, 54
      %s236 = smul.addr %s235, 4
      %s237 = scalar_lea.vmem %s0, %s236
      %s238 = smul.u32 48, %s21
      %p239 = scmp.lt.s32.totalorder %s20, 1
      %s240 = scalar_select %p239, %s20, 1
      %p241 = scmp.lt.s32.totalorder %s238, 47
      %s242 = scalar_select %p241, %s238, 47
      %s243 = smul.addr %s240, 48
      %s244 = sadd.s32 %s242, %s243
      %s245 = smul.addr %s244, 4
      %s246 = scalar_lea.vmem %s5, %s245
      %s247 = smul.u32 48, %s21
      %s249 = smul.u32 %s21, 384
      %s250 = sshra.s32 %s249, 3
      %s251 = sand.u32 %s249, 7
      %s252 = smul.addr %s250, 4
      %s253 = scalar_lea.vmem %s237, %s252
      %v254 = vld [vmem:[%s253] sm:$0xf]
      %v255 = vld [vmem:[%s253 + $0x4] sm:$0xf]
      %v256 = vld [vmem:[%s253 + $0x8] sm:$0xf]
      %v257 = vld [vmem:[%s253 + $0xc] sm:$0xf]
      %v258 = vld [vmem:[%s253 + $0x10] sm:$0xf]
      %v259 = vld [vmem:[%s253 + $0x14] sm:$0xf]
      %v260 = vld [vmem:[%s253 + $0x18] sm:$0xf]
      %v261 = vld [vmem:[%s253 + $0x1c] sm:$0xf]
      %v262 = vld [vmem:[%s253 + $0x20] sm:$0xf]
      %v263 = vld [vmem:[%s253 + $0x24] sm:$0xf]
      %v264 = vld [vmem:[%s253 + $0x28] sm:$0xf]
      %v265 = vld [vmem:[%s253 + $0x2c] sm:$0xf]
      %v266 = vld [vmem:[%s253 + $0x30] sm:$0xf]
      %v267 = vld [vmem:[%s253 + $0x34] sm:$0xf]
      %v268 = vld [vmem:[%s253 + $0x38] sm:$0xf]
      %v269 = vld [vmem:[%s253 + $0x3c] sm:$0xf]
      %v270 = vld [vmem:[%s253 + $0x40] sm:$0xf]
      %v271 = vld [vmem:[%s253 + $0x44] sm:$0xf]
      %v272 = vld [vmem:[%s253 + $0x48] sm:$0xf]
      %v273 = vld [vmem:[%s253 + $0x4c] sm:$0xf]
      %v274 = vld [vmem:[%s253 + $0x50] sm:$0xf]
      %v275 = vld [vmem:[%s253 + $0x54] sm:$0xf]
      %v276 = vld [vmem:[%s253 + $0x58] sm:$0xf]
      %v277 = vld [vmem:[%s253 + $0x5c] sm:$0xf]
      %v278 = vld [vmem:[%s253 + $0x60] sm:$0xf]
      %v279 = vld [vmem:[%s253 + $0x64] sm:$0xf]
      %v280 = vld [vmem:[%s253 + $0x68] sm:$0xf]
      %v281 = vld [vmem:[%s253 + $0x6c] sm:$0xf]
      %v282 = vld [vmem:[%s253 + $0x70] sm:$0xf]
      %v283 = vld [vmem:[%s253 + $0x74] sm:$0xf]
      %v284 = vld [vmem:[%s253 + $0x78] sm:$0xf]
      %v285 = vld [vmem:[%s253 + $0x7c] sm:$0xf]
      %v286 = vld [vmem:[%s253 + $0x80] sm:$0xf]
      %v287 = vld [vmem:[%s253 + $0x84] sm:$0xf]
      %v288 = vld [vmem:[%s253 + $0x88] sm:$0xf]
      %v289 = vld [vmem:[%s253 + $0x8c] sm:$0xf]
      %v290 = vld [vmem:[%s253 + $0x90] sm:$0xf]
      %v291 = vld [vmem:[%s253 + $0x94] sm:$0xf]
      %v292 = vld [vmem:[%s253 + $0x98] sm:$0xf]
      %v293 = vld [vmem:[%s253 + $0x9c] sm:$0xf]
      %v294 = vld [vmem:[%s253 + $0xa0] sm:$0xf]
      %v295 = vld [vmem:[%s253 + $0xa4] sm:$0xf]
      %v296 = vld [vmem:[%s253 + $0xa8] sm:$0xf]
      %v297 = vld [vmem:[%s253 + $0xac] sm:$0xf]
      %v298 = vld [vmem:[%s253 + $0xb0] sm:$0xf]
      %v299 = vld [vmem:[%s253 + $0xb4] sm:$0xf]
      %v300 = vld [vmem:[%s253 + $0xb8] sm:$0xf]
      %v301 = vld [vmem:[%s253 + $0xbc] sm:$0xf]
      %v302 = vld [vmem:[%s1] sm:$0x3]
      %v351 = vunpack.c.l.b16 %v254
      %v352 = vunpack.c.l.b16 %v255
      %v353 = vunpack.c.l.b16 %v256
      %v354 = vunpack.c.l.b16 %v257
      %v355 = vunpack.c.l.b16 %v258
      %v356 = vunpack.c.l.b16 %v259
      %v357 = vunpack.c.l.b16 %v260
      %v358 = vunpack.c.l.b16 %v261
      %v359 = vunpack.c.l.b16 %v262
      %v360 = vunpack.c.l.b16 %v263
      %v361 = vunpack.c.l.b16 %v264
      %v362 = vunpack.c.l.b16 %v265
      %v363 = vunpack.c.l.b16 %v266
      %v364 = vunpack.c.l.b16 %v267
      %v365 = vunpack.c.l.b16 %v268
      %v366 = vunpack.c.l.b16 %v269
      %v367 = vunpack.c.l.b16 %v270
      %v368 = vunpack.c.l.b16 %v271
      %v369 = vunpack.c.l.b16 %v272
      %v370 = vunpack.c.l.b16 %v273
      %v371 = vunpack.c.l.b16 %v274
      %v372 = vunpack.c.l.b16 %v275
      %v373 = vunpack.c.l.b16 %v276
      %v374 = vunpack.c.l.b16 %v277
      %v375 = vunpack.c.l.b16 %v278
      %v376 = vunpack.c.l.b16 %v279
      %v377 = vunpack.c.l.b16 %v280
      %v378 = vunpack.c.l.b16 %v281
      %v379 = vunpack.c.l.b16 %v282
      %v380 = vunpack.c.l.b16 %v283
      %v381 = vunpack.c.l.b16 %v284
      %v382 = vunpack.c.l.b16 %v285
      %v383 = vunpack.c.l.b16 %v286
      %v384 = vunpack.c.l.b16 %v287
      %v385 = vunpack.c.l.b16 %v288
      %v386 = vunpack.c.l.b16 %v289
      %v387 = vunpack.c.l.b16 %v290
      %v388 = vunpack.c.l.b16 %v291
      %v389 = vunpack.c.l.b16 %v292
      %v390 = vunpack.c.l.b16 %v293
      %v391 = vunpack.c.l.b16 %v294
      %v392 = vunpack.c.l.b16 %v295
      %v393 = vunpack.c.l.b16 %v296
      %v394 = vunpack.c.l.b16 %v297
      %v395 = vunpack.c.l.b16 %v298
      %v396 = vunpack.c.l.b16 %v299
      %v397 = vunpack.c.l.b16 %v300
      %v398 = vunpack.c.l.b16 %v301
      %v399 = vpack.c.b16 %v352, %v351
      %v400 = vpack.c.b16 %v354, %v353
      %v401 = vpack.c.b16 %v356, %v355
      %v402 = vpack.c.b16 %v358, %v357
      %v403 = vpack.c.b16 %v360, %v359
      %v404 = vpack.c.b16 %v362, %v361
      %v405 = vpack.c.b16 %v364, %v363
      %v406 = vpack.c.b16 %v366, %v365
      %v407 = vpack.c.b16 %v368, %v367
      %v408 = vpack.c.b16 %v370, %v369
      %v409 = vpack.c.b16 %v372, %v371
      %v410 = vpack.c.b16 %v374, %v373
      %v411 = vpack.c.b16 %v376, %v375
      %v412 = vpack.c.b16 %v378, %v377
      %v413 = vpack.c.b16 %v380, %v379
      %v414 = vpack.c.b16 %v382, %v381
      %v415 = vpack.c.b16 %v384, %v383
      %v416 = vpack.c.b16 %v386, %v385
      %v417 = vpack.c.b16 %v388, %v387
      %v418 = vpack.c.b16 %v390, %v389
      %v419 = vpack.c.b16 %v392, %v391
      %v420 = vpack.c.b16 %v394, %v393
      %v421 = vpack.c.b16 %v396, %v395
      %v422 = vpack.c.b16 %v398, %v397
      %vm423 = vcmask 31744
      %v425 = vsel %vm423, %v399, 0
      %v428 = vsel %vm423, %v400, 0
      %v431 = vsel %vm423, %v401, 0
      %v434 = vsel %vm423, %v402, 0
      %v437 = vsel %vm423, %v403, 0
      %v440 = vsel %vm423, %v404, 0
      %v443 = vsel %vm423, %v405, 0
      %v446 = vsel %vm423, %v406, 0
      %v449 = vsel %vm423, %v407, 0
      %v452 = vsel %vm423, %v408, 0
      %v455 = vsel %vm423, %v409, 0
      %v458 = vsel %vm423, %v410, 0
      %v461 = vsel %vm423, %v411, 0
      %v464 = vsel %vm423, %v412, 0
      %v467 = vsel %vm423, %v413, 0
      %v470 = vsel %vm423, %v414, 0
      %v473 = vsel %vm423, %v415, 0
      %v476 = vsel %vm423, %v416, 0
      %v479 = vsel %vm423, %v417, 0
      %v482 = vsel %vm423, %v418, 0
      %v485 = vsel %vm423, %v419, 0
      %v488 = vsel %vm423, %v420, 0
      %v491 = vsel %vm423, %v421, 0
      %v494 = vsel %vm423, %v422, 0
      %vm496 = vcmask 1041408
      %v498 = vsel %vm496, %v302, 0
      %500 = vmatprep.subr.bf16.mxu0 0
      %501 = vmatpush1.bf16.msra.mxu0 0
      %502 = vmatprep.subr.bf16.mxu0 0
      %503 = vmatpush1.bf16.msra.mxu0 0
      %504 = vmatprep.subr.bf16.mxu0 0
      %505 = vmatpush1.bf16.msra.mxu0 0
      %506 = vmatprep.subr.bf16.mxu0 0
      %507 = vmatpush1.bf16.msra.mxu0 0
      %508 = vmatprep.subr.bf16.mxu0 0
      %509 = vmatpush1.bf16.msra.mxu0 0
      %510 = vmatprep.subr.bf16.mxu0 0
      %511 = vmatpush1.bf16.msra.mxu0 0
      %512 = vmatprep.subr.bf16.mxu0 0
      %513 = vmatpush1.bf16.msra.mxu0 0
      %514 = vmatprep.subr.bf16.mxu0 0
      %515 = vmatpush1.bf16.msra.mxu0 %v498
      %516 = vmatprep.subr.bf16.mxu0 0
      %517 = vmatpush2.bf16.msra.mxu0 0
      %518 = vmatprep.subr.bf16.mxu0 0
      %519 = vmatpush2.bf16.msra.mxu0 0
      %520 = vmatprep.subr.bf16.mxu0 0
      %521 = vmatpush2.bf16.msra.mxu0 0
      %522 = vmatprep.subr.bf16.mxu0 0
      %523 = vmatpush2.bf16.msra.mxu0 0
      %524 = vmatprep.subr.bf16.mxu0 0
      %525 = vmatpush2.bf16.msra.mxu0 0
      %526 = vmatprep.subr.bf16.mxu0 0
      %527 = vmatpush2.bf16.msra.mxu0 0
      %528 = vmatprep.subr.bf16.mxu0 0
      %529 = vmatpush2.bf16.msra.mxu0 0
      %530 = vmatprep.subr.bf16.mxu0 0
      %531 = vmatpush2.bf16.msra.mxu0 0
      %532 = vmatprep.mubr.bf16.mxu0 0
      %533 = vmatmul.mubr.bf16.gmra.mxu0 %v425
      %v534 = vpop.f32.mrf.mxu0
      %v535 = vadd.f32 0.0, %v534
      %v536 = vpop.f32.mrf.mxu0
      %v537 = vpop.f32.mrf.mxu0
      %v538 = vadd.f32 0.0, %v537
      %v539 = vpop.f32.mrf.mxu0
      %540 = vmatprep.mubr.bf16.mxu0 0
      %541 = vmatmul.mubr.bf16.gmra.mxu0 %v428
      %v542 = vpop.f32.mrf.mxu0
      %v543 = vadd.f32 0.0, %v542
      %v544 = vpop.f32.mrf.mxu0
      %v545 = vpop.f32.mrf.mxu0
      %v546 = vadd.f32 0.0, %v545
      %v547 = vpop.f32.mrf.mxu0
      %548 = vmatprep.mubr.bf16.mxu0 0
      %549 = vmatmul.mubr.bf16.gmra.mxu0 %v431
      %v550 = vpop.f32.mrf.mxu0
      %v551 = vadd.f32 0.0, %v550
      %v552 = vpop.f32.mrf.mxu0
      %v553 = vpop.f32.mrf.mxu0
      %v554 = vadd.f32 0.0, %v553
      %v555 = vpop.f32.mrf.mxu0
      %556 = vmatprep.mubr.bf16.mxu0 0
      %557 = vmatmul.mubr.bf16.gmra.mxu0 %v434
      %v558 = vpop.f32.mrf.mxu0
      %v559 = vadd.f32 0.0, %v558
      %v560 = vpop.f32.mrf.mxu0
      %v561 = vpop.f32.mrf.mxu0
      %v562 = vadd.f32 0.0, %v561
      %v563 = vpop.f32.mrf.mxu0
      %564 = vmatprep.mubr.bf16.mxu0 0
      %565 = vmatmul.mubr.bf16.gmra.mxu0 %v437
      %v566 = vpop.f32.mrf.mxu0
      %v567 = vadd.f32 0.0, %v566
      %v568 = vpop.f32.mrf.mxu0
      %v569 = vpop.f32.mrf.mxu0
      %v570 = vadd.f32 0.0, %v569
      %v571 = vpop.f32.mrf.mxu0
      %572 = vmatprep.mubr.bf16.mxu0 0
      %573 = vmatmul.mubr.bf16.gmra.mxu0 %v440
      %v574 = vpop.f32.mrf.mxu0
      %v575 = vadd.f32 0.0, %v574
      %v576 = vpop.f32.mrf.mxu0
      %v577 = vpop.f32.mrf.mxu0
      %v578 = vadd.f32 0.0, %v577
      %v579 = vpop.f32.mrf.mxu0
      %580 = vmatprep.mubr.bf16.mxu0 0
      %581 = vmatmul.mubr.bf16.gmra.mxu0 %v443
      %v582 = vpop.f32.mrf.mxu0
      %v583 = vadd.f32 0.0, %v582
      %v584 = vpop.f32.mrf.mxu0
      %v585 = vpop.f32.mrf.mxu0
      %v586 = vadd.f32 0.0, %v585
      %v587 = vpop.f32.mrf.mxu0
      %588 = vmatprep.mubr.bf16.mxu0 0
      %589 = vmatmul.mubr.bf16.gmra.mxu0 %v446
      %v590 = vpop.f32.mrf.mxu0
      %v591 = vadd.f32 0.0, %v590
      %v592 = vpop.f32.mrf.mxu0
      %v593 = vpop.f32.mrf.mxu0
      %v594 = vadd.f32 0.0, %v593
      %v595 = vpop.f32.mrf.mxu0
      %596 = vmatprep.mubr.bf16.mxu0 0
      %597 = vmatmul.mubr.bf16.gmra.mxu0 %v449
      %v598 = vpop.f32.mrf.mxu0
      %v599 = vadd.f32 0.0, %v598
      %v600 = vpop.f32.mrf.mxu0
      %v601 = vpop.f32.mrf.mxu0
      %v602 = vadd.f32 0.0, %v601
      %v603 = vpop.f32.mrf.mxu0
      %604 = vmatprep.mubr.bf16.mxu0 0
      %605 = vmatmul.mubr.bf16.gmra.mxu0 %v452
      %v606 = vpop.f32.mrf.mxu0
      %v607 = vadd.f32 0.0, %v606
      %v608 = vpop.f32.mrf.mxu0
      %v609 = vpop.f32.mrf.mxu0
      %v610 = vadd.f32 0.0, %v609
      %v611 = vpop.f32.mrf.mxu0
      %612 = vmatprep.mubr.bf16.mxu0 0
      %613 = vmatmul.mubr.bf16.gmra.mxu0 %v455
      %v614 = vpop.f32.mrf.mxu0
      %v615 = vadd.f32 0.0, %v614
      %v616 = vpop.f32.mrf.mxu0
      %v617 = vpop.f32.mrf.mxu0
      %v618 = vadd.f32 0.0, %v617
      %v619 = vpop.f32.mrf.mxu0
      %620 = vmatprep.mubr.bf16.mxu0 0
      %621 = vmatmul.mubr.bf16.gmra.mxu0 %v458
      %v622 = vpop.f32.mrf.mxu0
      %v623 = vadd.f32 0.0, %v622
      %v624 = vpop.f32.mrf.mxu0
      %v625 = vpop.f32.mrf.mxu0
      %v626 = vadd.f32 0.0, %v625
      %v627 = vpop.f32.mrf.mxu0
      %628 = vmatprep.mubr.bf16.mxu0 0
      %629 = vmatmul.mubr.bf16.gmra.mxu0 %v461
      %v630 = vpop.f32.mrf.mxu0
      %v631 = vadd.f32 0.0, %v630
      %v632 = vpop.f32.mrf.mxu0
      %v633 = vpop.f32.mrf.mxu0
      %v634 = vadd.f32 0.0, %v633
      %v635 = vpop.f32.mrf.mxu0
      %636 = vmatprep.mubr.bf16.mxu0 0
      %637 = vmatmul.mubr.bf16.gmra.mxu0 %v464
      %v638 = vpop.f32.mrf.mxu0
      %v639 = vadd.f32 0.0, %v638
      %v640 = vpop.f32.mrf.mxu0
      %v641 = vpop.f32.mrf.mxu0
      %v642 = vadd.f32 0.0, %v641
      %v643 = vpop.f32.mrf.mxu0
      %644 = vmatprep.mubr.bf16.mxu0 0
      %645 = vmatmul.mubr.bf16.gmra.mxu0 %v467
      %v646 = vpop.f32.mrf.mxu0
      %v647 = vadd.f32 0.0, %v646
      %v648 = vpop.f32.mrf.mxu0
      %v649 = vpop.f32.mrf.mxu0
      %v650 = vadd.f32 0.0, %v649
      %v651 = vpop.f32.mrf.mxu0
      %652 = vmatprep.mubr.bf16.mxu0 0
      %653 = vmatmul.mubr.bf16.gmra.mxu0 %v470
      %v654 = vpop.f32.mrf.mxu0
      %v655 = vadd.f32 0.0, %v654
      %v656 = vpop.f32.mrf.mxu0
      %v657 = vpop.f32.mrf.mxu0
      %v658 = vadd.f32 0.0, %v657
      %v659 = vpop.f32.mrf.mxu0
      %660 = vmatprep.mubr.bf16.mxu0 0
      %661 = vmatmul.mubr.bf16.gmra.mxu0 %v473
      %v662 = vpop.f32.mrf.mxu0
      %v663 = vadd.f32 0.0, %v662
      %v664 = vpop.f32.mrf.mxu0
      %v665 = vpop.f32.mrf.mxu0
      %v666 = vadd.f32 0.0, %v665
      %v667 = vpop.f32.mrf.mxu0
      %668 = vmatprep.mubr.bf16.mxu0 0
      %669 = vmatmul.mubr.bf16.gmra.mxu0 %v476
      %v670 = vpop.f32.mrf.mxu0
      %v671 = vadd.f32 0.0, %v670
      %v672 = vpop.f32.mrf.mxu0
      %v673 = vpop.f32.mrf.mxu0
      %v674 = vadd.f32 0.0, %v673
      %v675 = vpop.f32.mrf.mxu0
      %676 = vmatprep.mubr.bf16.mxu0 0
      %677 = vmatmul.mubr.bf16.gmra.mxu0 %v479
      %v678 = vpop.f32.mrf.mxu0
      %v679 = vadd.f32 0.0, %v678
      %v680 = vpop.f32.mrf.mxu0
      %v681 = vpop.f32.mrf.mxu0
      %v682 = vadd.f32 0.0, %v681
      %v683 = vpop.f32.mrf.mxu0
      %684 = vmatprep.mubr.bf16.mxu0 0
      %685 = vmatmul.mubr.bf16.gmra.mxu0 %v482
      %v686 = vpop.f32.mrf.mxu0
      %v687 = vadd.f32 0.0, %v686
      %v688 = vpop.f32.mrf.mxu0
      %v689 = vpop.f32.mrf.mxu0
      %v690 = vadd.f32 0.0, %v689
      %v691 = vpop.f32.mrf.mxu0
      %692 = vmatprep.mubr.bf16.mxu0 0
      %693 = vmatmul.mubr.bf16.gmra.mxu0 %v485
      %v694 = vpop.f32.mrf.mxu0
      %v695 = vadd.f32 0.0, %v694
      %v696 = vpop.f32.mrf.mxu0
      %v697 = vpop.f32.mrf.mxu0
      %v698 = vadd.f32 0.0, %v697
      %v699 = vpop.f32.mrf.mxu0
      %700 = vmatprep.mubr.bf16.mxu0 0
      %701 = vmatmul.mubr.bf16.gmra.mxu0 %v488
      %v702 = vpop.f32.mrf.mxu0
      %v703 = vadd.f32 0.0, %v702
      %v704 = vpop.f32.mrf.mxu0
      %v705 = vpop.f32.mrf.mxu0
      %v706 = vadd.f32 0.0, %v705
      %v707 = vpop.f32.mrf.mxu0
      %708 = vmatprep.mubr.bf16.mxu0 0
      %709 = vmatmul.mubr.bf16.gmra.mxu0 %v491
      %v710 = vpop.f32.mrf.mxu0
      %v711 = vadd.f32 0.0, %v710
      %v712 = vpop.f32.mrf.mxu0
      %v713 = vpop.f32.mrf.mxu0
      %v714 = vadd.f32 0.0, %v713
      %v715 = vpop.f32.mrf.mxu0
      %716 = vmatprep.mubr.bf16.mxu0 0
      %717 = vmatmul.mubr.bf16.gmra.mxu0 %v494
      %v718 = vpop.f32.mrf.mxu0
      %v719 = vadd.f32 0.0, %v718
      %v720 = vpop.f32.mrf.mxu0
      %v721 = vpop.f32.mrf.mxu0
      %v722 = vadd.f32 0.0, %v721
      %v723 = vpop.f32.mrf.mxu0
      %724 = vdwg.mxu0
      %s725 = scalar_lea.vmem %s1, 2
      %v726 = vld [vmem:[%s725] sm:$0x3]
      %v728 = vsel %vm496, %v726, 0
      %730 = vmatprep.subr.bf16.mxu0 0
      %731 = vmatpush1.bf16.msra.mxu0 0
      %732 = vmatprep.subr.bf16.mxu0 0
      %733 = vmatpush1.bf16.msra.mxu0 0
      %734 = vmatprep.subr.bf16.mxu0 0
      %735 = vmatpush1.bf16.msra.mxu0 0
      %736 = vmatprep.subr.bf16.mxu0 0
      %737 = vmatpush1.bf16.msra.mxu0 0
      %738 = vmatprep.subr.bf16.mxu0 0
      %739 = vmatpush1.bf16.msra.mxu0 0
      %740 = vmatprep.subr.bf16.mxu0 0
      %741 = vmatpush1.bf16.msra.mxu0 0
      %742 = vmatprep.subr.bf16.mxu0 0
      %743 = vmatpush1.bf16.msra.mxu0 0
      %744 = vmatprep.subr.bf16.mxu0 0
      %745 = vmatpush1.bf16.msra.mxu0 %v728
      %746 = vmatprep.subr.bf16.mxu0 0
      %747 = vmatpush2.bf16.msra.mxu0 0
      %748 = vmatprep.subr.bf16.mxu0 0
      %749 = vmatpush2.bf16.msra.mxu0 0
      %750 = vmatprep.subr.bf16.mxu0 0
      %751 = vmatpush2.bf16.msra.mxu0 0
      %752 = vmatprep.subr.bf16.mxu0 0
      %753 = vmatpush2.bf16.msra.mxu0 0
      %754 = vmatprep.subr.bf16.mxu0 0
      %755 = vmatpush2.bf16.msra.mxu0 0
      %756 = vmatprep.subr.bf16.mxu0 0
      %757 = vmatpush2.bf16.msra.mxu0 0
      %758 = vmatprep.subr.bf16.mxu0 0
      %759 = vmatpush2.bf16.msra.mxu0 0
      %760 = vmatprep.subr.bf16.mxu0 0
      %761 = vmatpush2.bf16.msra.mxu0 0
      %762 = vmatprep.mubr.bf16.mxu0 0
      %763 = vmatmul.mubr.bf16.gmra.mxu0 %v425
      %v764 = vpop.f32.mrf.mxu0
      %v765 = vadd.f32 0.0, %v764
      %v766 = vpop.f32.mrf.mxu0
      %v767 = vpop.f32.mrf.mxu0
      %v768 = vadd.f32 0.0, %v767
      %v769 = vpop.f32.mrf.mxu0
      %770 = vmatprep.mubr.bf16.mxu0 0
      %771 = vmatmul.mubr.bf16.gmra.mxu0 %v428
      %v772 = vpop.f32.mrf.mxu0
      %v773 = vadd.f32 0.0, %v772
      %v774 = vpop.f32.mrf.mxu0
      %v775 = vpop.f32.mrf.mxu0
      %v776 = vadd.f32 0.0, %v775
      %v777 = vpop.f32.mrf.mxu0
      %778 = vmatprep.mubr.bf16.mxu0 0
      %779 = vmatmul.mubr.bf16.gmra.mxu0 %v431
      %v780 = vpop.f32.mrf.mxu0
      %v781 = vadd.f32 0.0, %v780
      %v782 = vpop.f32.mrf.mxu0
      %v783 = vpop.f32.mrf.mxu0
      %v784 = vadd.f32 0.0, %v783
      %v785 = vpop.f32.mrf.mxu0
      %786 = vmatprep.mubr.bf16.mxu0 0
      %787 = vmatmul.mubr.bf16.gmra.mxu0 %v434
      %v788 = vpop.f32.mrf.mxu0
      %v789 = vadd.f32 0.0, %v788
      %v790 = vpop.f32.mrf.mxu0
      %v791 = vpop.f32.mrf.mxu0
      %v792 = vadd.f32 0.0, %v791
      %v793 = vpop.f32.mrf.mxu0
      %794 = vmatprep.mubr.bf16.mxu0 0
      %795 = vmatmul.mubr.bf16.gmra.mxu0 %v437
      %v796 = vpop.f32.mrf.mxu0
      %v797 = vadd.f32 0.0, %v796
      %v798 = vpop.f32.mrf.mxu0
      %v799 = vpop.f32.mrf.mxu0
      %v800 = vadd.f32 0.0, %v799
      %v801 = vpop.f32.mrf.mxu0
      %802 = vmatprep.mubr.bf16.mxu0 0
      %803 = vmatmul.mubr.bf16.gmra.mxu0 %v440
      %v804 = vpop.f32.mrf.mxu0
      %v805 = vadd.f32 0.0, %v804
      %v806 = vpop.f32.mrf.mxu0
      %v807 = vpop.f32.mrf.mxu0
      %v808 = vadd.f32 0.0, %v807
      %v809 = vpop.f32.mrf.mxu0
      %810 = vmatprep.mubr.bf16.mxu0 0
      %811 = vmatmul.mubr.bf16.gmra.mxu0 %v443
      %v812 = vpop.f32.mrf.mxu0
      %v813 = vadd.f32 0.0, %v812
      %v814 = vpop.f32.mrf.mxu0
      %v815 = vpop.f32.mrf.mxu0
      %v816 = vadd.f32 0.0, %v815
      %v817 = vpop.f32.mrf.mxu0
      %818 = vmatprep.mubr.bf16.mxu0 0
      %819 = vmatmul.mubr.bf16.gmra.mxu0 %v446
      %v820 = vpop.f32.mrf.mxu0
      %v821 = vadd.f32 0.0, %v820
      %v822 = vpop.f32.mrf.mxu0
      %v823 = vpop.f32.mrf.mxu0
      %v824 = vadd.f32 0.0, %v823
      %v825 = vpop.f32.mrf.mxu0
      %826 = vmatprep.mubr.bf16.mxu0 0
      %827 = vmatmul.mubr.bf16.gmra.mxu0 %v449
      %v828 = vpop.f32.mrf.mxu0
      %v829 = vadd.f32 0.0, %v828
      %v830 = vpop.f32.mrf.mxu0
      %v831 = vpop.f32.mrf.mxu0
      %v832 = vadd.f32 0.0, %v831
      %v833 = vpop.f32.mrf.mxu0
      %834 = vmatprep.mubr.bf16.mxu0 0
      %835 = vmatmul.mubr.bf16.gmra.mxu0 %v452
      %v836 = vpop.f32.mrf.mxu0
      %v837 = vadd.f32 0.0, %v836
      %v838 = vpop.f32.mrf.mxu0
      %v839 = vpop.f32.mrf.mxu0
      %v840 = vadd.f32 0.0, %v839
      %v841 = vpop.f32.mrf.mxu0
      %842 = vmatprep.mubr.bf16.mxu0 0
      %843 = vmatmul.mubr.bf16.gmra.mxu0 %v455
      %v844 = vpop.f32.mrf.mxu0
      %v845 = vadd.f32 0.0, %v844
      %v846 = vpop.f32.mrf.mxu0
      %v847 = vpop.f32.mrf.mxu0
      %v848 = vadd.f32 0.0, %v847
      %v849 = vpop.f32.mrf.mxu0
      %850 = vmatprep.mubr.bf16.mxu0 0
      %851 = vmatmul.mubr.bf16.gmra.mxu0 %v458
      %v852 = vpop.f32.mrf.mxu0
      %v853 = vadd.f32 0.0, %v852
      %v854 = vpop.f32.mrf.mxu0
      %v855 = vpop.f32.mrf.mxu0
      %v856 = vadd.f32 0.0, %v855
      %v857 = vpop.f32.mrf.mxu0
      %858 = vmatprep.mubr.bf16.mxu0 0
      %859 = vmatmul.mubr.bf16.gmra.mxu0 %v461
      %v860 = vpop.f32.mrf.mxu0
      %v861 = vadd.f32 0.0, %v860
      %v862 = vpop.f32.mrf.mxu0
      %v863 = vpop.f32.mrf.mxu0
      %v864 = vadd.f32 0.0, %v863
      %v865 = vpop.f32.mrf.mxu0
      %866 = vmatprep.mubr.bf16.mxu0 0
      %867 = vmatmul.mubr.bf16.gmra.mxu0 %v464
      %v868 = vpop.f32.mrf.mxu0
      %v869 = vadd.f32 0.0, %v868
      %v870 = vpop.f32.mrf.mxu0
      %v871 = vpop.f32.mrf.mxu0
      %v872 = vadd.f32 0.0, %v871
      %v873 = vpop.f32.mrf.mxu0
      %874 = vmatprep.mubr.bf16.mxu0 0
      %875 = vmatmul.mubr.bf16.gmra.mxu0 %v467
      %v876 = vpop.f32.mrf.mxu0
      %v877 = vadd.f32 0.0, %v876
      %v878 = vpop.f32.mrf.mxu0
      %v879 = vpop.f32.mrf.mxu0
      %v880 = vadd.f32 0.0, %v879
      %v881 = vpop.f32.mrf.mxu0
      %882 = vmatprep.mubr.bf16.mxu0 0
      %883 = vmatmul.mubr.bf16.gmra.mxu0 %v470
      %v884 = vpop.f32.mrf.mxu0
      %v885 = vadd.f32 0.0, %v884
      %v886 = vpop.f32.mrf.mxu0
      %v887 = vpop.f32.mrf.mxu0
      %v888 = vadd.f32 0.0, %v887
      %v889 = vpop.f32.mrf.mxu0
      %890 = vmatprep.mubr.bf16.mxu0 0
      %891 = vmatmul.mubr.bf16.gmra.mxu0 %v473
      %v892 = vpop.f32.mrf.mxu0
      %v893 = vadd.f32 0.0, %v892
      %v894 = vpop.f32.mrf.mxu0
      %v895 = vpop.f32.mrf.mxu0
      %v896 = vadd.f32 0.0, %v895
      %v897 = vpop.f32.mrf.mxu0
      %898 = vmatprep.mubr.bf16.mxu0 0
      %899 = vmatmul.mubr.bf16.gmra.mxu0 %v476
      %v900 = vpop.f32.mrf.mxu0
      %v901 = vadd.f32 0.0, %v900
      %v902 = vpop.f32.mrf.mxu0
      %v903 = vpop.f32.mrf.mxu0
      %v904 = vadd.f32 0.0, %v903
      %v905 = vpop.f32.mrf.mxu0
      %906 = vmatprep.mubr.bf16.mxu0 0
      %907 = vmatmul.mubr.bf16.gmra.mxu0 %v479
      %v908 = vpop.f32.mrf.mxu0
      %v909 = vadd.f32 0.0, %v908
      %v910 = vpop.f32.mrf.mxu0
      %v911 = vpop.f32.mrf.mxu0
      %v912 = vadd.f32 0.0, %v911
      %v913 = vpop.f32.mrf.mxu0
      %914 = vmatprep.mubr.bf16.mxu0 0
      %915 = vmatmul.mubr.bf16.gmra.mxu0 %v482
      %v916 = vpop.f32.mrf.mxu0
      %v917 = vadd.f32 0.0, %v916
      %v918 = vpop.f32.mrf.mxu0
      %v919 = vpop.f32.mrf.mxu0
      %v920 = vadd.f32 0.0, %v919
      %v921 = vpop.f32.mrf.mxu0
      %922 = vmatprep.mubr.bf16.mxu0 0
      %923 = vmatmul.mubr.bf16.gmra.mxu0 %v485
      %v924 = vpop.f32.mrf.mxu0
      %v925 = vadd.f32 0.0, %v924
      %v926 = vpop.f32.mrf.mxu0
      %v927 = vpop.f32.mrf.mxu0
      %v928 = vadd.f32 0.0, %v927
      %v929 = vpop.f32.mrf.mxu0
      %930 = vmatprep.mubr.bf16.mxu0 0
      %931 = vmatmul.mubr.bf16.gmra.mxu0 %v488
      %v932 = vpop.f32.mrf.mxu0
      %v933 = vadd.f32 0.0, %v932
      %v934 = vpop.f32.mrf.mxu0
      %v935 = vpop.f32.mrf.mxu0
      %v936 = vadd.f32 0.0, %v935
      %v937 = vpop.f32.mrf.mxu0
      %938 = vmatprep.mubr.bf16.mxu0 0
      %939 = vmatmul.mubr.bf16.gmra.mxu0 %v491
      %v940 = vpop.f32.mrf.mxu0
      %v941 = vadd.f32 0.0, %v940
      %v942 = vpop.f32.mrf.mxu0
      %v943 = vpop.f32.mrf.mxu0
      %v944 = vadd.f32 0.0, %v943
      %v945 = vpop.f32.mrf.mxu0
      %946 = vmatprep.mubr.bf16.mxu0 0
      %947 = vmatmul.mubr.bf16.gmra.mxu0 %v494
      %v948 = vpop.f32.mrf.mxu0
      %v949 = vadd.f32 0.0, %v948
      %v950 = vpop.f32.mrf.mxu0
      %v951 = vpop.f32.mrf.mxu0
      %v952 = vadd.f32 0.0, %v951
      %v953 = vpop.f32.mrf.mxu0
      %954 = vdwg.mxu0
      %s955 = scalar_lea.vmem %s1, 4
      %v956 = vld [vmem:[%s955] sm:$0x3]
      %v958 = vsel %vm496, %v956, 0
      %960 = vmatprep.subr.bf16.mxu0 0
      %961 = vmatpush1.bf16.msra.mxu0 0
      %962 = vmatprep.subr.bf16.mxu0 0
      %963 = vmatpush1.bf16.msra.mxu0 0
      %964 = vmatprep.subr.bf16.mxu0 0
      %965 = vmatpush1.bf16.msra.mxu0 0
      %966 = vmatprep.subr.bf16.mxu0 0
      %967 = vmatpush1.bf16.msra.mxu0 0
      %968 = vmatprep.subr.bf16.mxu0 0
      %969 = vmatpush1.bf16.msra.mxu0 0
      %970 = vmatprep.subr.bf16.mxu0 0
      %971 = vmatpush1.bf16.msra.mxu0 0
      %972 = vmatprep.subr.bf16.mxu0 0
      %973 = vmatpush1.bf16.msra.mxu0 0
      %974 = vmatprep.subr.bf16.mxu0 0
      %975 = vmatpush1.bf16.msra.mxu0 %v958
      %976 = vmatprep.subr.bf16.mxu0 0
      %977 = vmatpush2.bf16.msra.mxu0 0
      %978 = vmatprep.subr.bf16.mxu0 0
      %979 = vmatpush2.bf16.msra.mxu0 0
      %980 = vmatprep.subr.bf16.mxu0 0
      %981 = vmatpush2.bf16.msra.mxu0 0
      %982 = vmatprep.subr.bf16.mxu0 0
      %983 = vmatpush2.bf16.msra.mxu0 0
      %984 = vmatprep.subr.bf16.mxu0 0
      %985 = vmatpush2.bf16.msra.mxu0 0
      %986 = vmatprep.subr.bf16.mxu0 0
      %987 = vmatpush2.bf16.msra.mxu0 0
      %988 = vmatprep.subr.bf16.mxu0 0
      %989 = vmatpush2.bf16.msra.mxu0 0
      %990 = vmatprep.subr.bf16.mxu0 0
      %991 = vmatpush2.bf16.msra.mxu0 0
      %992 = vmatprep.mubr.bf16.mxu0 0
      %993 = vmatmul.mubr.bf16.gmra.mxu0 %v425
      %v994 = vpop.f32.mrf.mxu0
      %v995 = vadd.f32 0.0, %v994
      %v996 = vpop.f32.mrf.mxu0
      %v997 = vpop.f32.mrf.mxu0
      %v998 = vadd.f32 0.0, %v997
      %v999 = vpop.f32.mrf.mxu0
      %1000 = vmatprep.mubr.bf16.mxu0 0
      %1001 = vmatmul.mubr.bf16.gmra.mxu0 %v428
      %v1002 = vpop.f32.mrf.mxu0
      %v1003 = vadd.f32 0.0, %v1002
      %v1004 = vpop.f32.mrf.mxu0
      %v1005 = vpop.f32.mrf.mxu0
      %v1006 = vadd.f32 0.0, %v1005
      %v1007 = vpop.f32.mrf.mxu0
      %1008 = vmatprep.mubr.bf16.mxu0 0
      %1009 = vmatmul.mubr.bf16.gmra.mxu0 %v431
      %v1010 = vpop.f32.mrf.mxu0
      %v1011 = vadd.f32 0.0, %v1010
      %v1012 = vpop.f32.mrf.mxu0
      %v1013 = vpop.f32.mrf.mxu0
      %v1014 = vadd.f32 0.0, %v1013
      %v1015 = vpop.f32.mrf.mxu0
      %1016 = vmatprep.mubr.bf16.mxu0 0
      %1017 = vmatmul.mubr.bf16.gmra.mxu0 %v434
      %v1018 = vpop.f32.mrf.mxu0
      %v1019 = vadd.f32 0.0, %v1018
      %v1020 = vpop.f32.mrf.mxu0
      %v1021 = vpop.f32.mrf.mxu0
      %v1022 = vadd.f32 0.0, %v1021
      %v1023 = vpop.f32.mrf.mxu0
      %1024 = vmatprep.mubr.bf16.mxu0 0
      %1025 = vmatmul.mubr.bf16.gmra.mxu0 %v437
      %v1026 = vpop.f32.mrf.mxu0
      %v1027 = vadd.f32 0.0, %v1026
      %v1028 = vpop.f32.mrf.mxu0
      %v1029 = vpop.f32.mrf.mxu0
      %v1030 = vadd.f32 0.0, %v1029
      %v1031 = vpop.f32.mrf.mxu0
      %1032 = vmatprep.mubr.bf16.mxu0 0
      %1033 = vmatmul.mubr.bf16.gmra.mxu0 %v440
      %v1034 = vpop.f32.mrf.mxu0
      %v1035 = vadd.f32 0.0, %v1034
      %v1036 = vpop.f32.mrf.mxu0
      %v1037 = vpop.f32.mrf.mxu0
      %v1038 = vadd.f32 0.0, %v1037
      %v1039 = vpop.f32.mrf.mxu0
      %1040 = vmatprep.mubr.bf16.mxu0 0
      %1041 = vmatmul.mubr.bf16.gmra.mxu0 %v443
      %v1042 = vpop.f32.mrf.mxu0
      %v1043 = vadd.f32 0.0, %v1042
      %v1044 = vpop.f32.mrf.mxu0
      %v1045 = vpop.f32.mrf.mxu0
      %v1046 = vadd.f32 0.0, %v1045
      %v1047 = vpop.f32.mrf.mxu0
      %1048 = vmatprep.mubr.bf16.mxu0 0
      %1049 = vmatmul.mubr.bf16.gmra.mxu0 %v446
      %v1050 = vpop.f32.mrf.mxu0
      %v1051 = vadd.f32 0.0, %v1050
      %v1052 = vpop.f32.mrf.mxu0
      %v1053 = vpop.f32.mrf.mxu0
      %v1054 = vadd.f32 0.0, %v1053
      %v1055 = vpop.f32.mrf.mxu0
      %1056 = vmatprep.mubr.bf16.mxu0 0
      %1057 = vmatmul.mubr.bf16.gmra.mxu0 %v449
      %v1058 = vpop.f32.mrf.mxu0
      %v1059 = vadd.f32 0.0, %v1058
      %v1060 = vpop.f32.mrf.mxu0
      %v1061 = vpop.f32.mrf.mxu0
      %v1062 = vadd.f32 0.0, %v1061
      %v1063 = vpop.f32.mrf.mxu0
      %1064 = vmatprep.mubr.bf16.mxu0 0
      %1065 = vmatmul.mubr.bf16.gmra.mxu0 %v452
      %v1066 = vpop.f32.mrf.mxu0
      %v1067 = vadd.f32 0.0, %v1066
      %v1068 = vpop.f32.mrf.mxu0
      %v1069 = vpop.f32.mrf.mxu0
      %v1070 = vadd.f32 0.0, %v1069
      %v1071 = vpop.f32.mrf.mxu0
      %1072 = vmatprep.mubr.bf16.mxu0 0
      %1073 = vmatmul.mubr.bf16.gmra.mxu0 %v455
      %v1074 = vpop.f32.mrf.mxu0
      %v1075 = vadd.f32 0.0, %v1074
      %v1076 = vpop.f32.mrf.mxu0
      %v1077 = vpop.f32.mrf.mxu0
      %v1078 = vadd.f32 0.0, %v1077
      %v1079 = vpop.f32.mrf.mxu0
      %1080 = vmatprep.mubr.bf16.mxu0 0
      %1081 = vmatmul.mubr.bf16.gmra.mxu0 %v458
      %v1082 = vpop.f32.mrf.mxu0
      %v1083 = vadd.f32 0.0, %v1082
      %v1084 = vpop.f32.mrf.mxu0
      %v1085 = vpop.f32.mrf.mxu0
      %v1086 = vadd.f32 0.0, %v1085
      %v1087 = vpop.f32.mrf.mxu0
      %1088 = vmatprep.mubr.bf16.mxu0 0
      %1089 = vmatmul.mubr.bf16.gmra.mxu0 %v461
      %v1090 = vpop.f32.mrf.mxu0
      %v1091 = vadd.f32 0.0, %v1090
      %v1092 = vpop.f32.mrf.mxu0
      %v1093 = vpop.f32.mrf.mxu0
      %v1094 = vadd.f32 0.0, %v1093
      %v1095 = vpop.f32.mrf.mxu0
      %1096 = vmatprep.mubr.bf16.mxu0 0
      %1097 = vmatmul.mubr.bf16.gmra.mxu0 %v464
      %v1098 = vpop.f32.mrf.mxu0
      %v1099 = vadd.f32 0.0, %v1098
      %v1100 = vpop.f32.mrf.mxu0
      %v1101 = vpop.f32.mrf.mxu0
      %v1102 = vadd.f32 0.0, %v1101
      %v1103 = vpop.f32.mrf.mxu0
      %1104 = vmatprep.mubr.bf16.mxu0 0
      %1105 = vmatmul.mubr.bf16.gmra.mxu0 %v467
      %v1106 = vpop.f32.mrf.mxu0
      %v1107 = vadd.f32 0.0, %v1106
      %v1108 = vpop.f32.mrf.mxu0
      %v1109 = vpop.f32.mrf.mxu0
      %v1110 = vadd.f32 0.0, %v1109
      %v1111 = vpop.f32.mrf.mxu0
      %1112 = vmatprep.mubr.bf16.mxu0 0
      %1113 = vmatmul.mubr.bf16.gmra.mxu0 %v470
      %v1114 = vpop.f32.mrf.mxu0
      %v1115 = vadd.f32 0.0, %v1114
      %v1116 = vpop.f32.mrf.mxu0
      %v1117 = vpop.f32.mrf.mxu0
      %v1118 = vadd.f32 0.0, %v1117
      %v1119 = vpop.f32.mrf.mxu0
      %1120 = vmatprep.mubr.bf16.mxu0 0
      %1121 = vmatmul.mubr.bf16.gmra.mxu0 %v473
      %v1122 = vpop.f32.mrf.mxu0
      %v1123 = vadd.f32 0.0, %v1122
      %v1124 = vpop.f32.mrf.mxu0
      %v1125 = vpop.f32.mrf.mxu0
      %v1126 = vadd.f32 0.0, %v1125
      %v1127 = vpop.f32.mrf.mxu0
      %1128 = vmatprep.mubr.bf16.mxu0 0
      %1129 = vmatmul.mubr.bf16.gmra.mxu0 %v476
      %v1130 = vpop.f32.mrf.mxu0
      %v1131 = vadd.f32 0.0, %v1130
      %v1132 = vpop.f32.mrf.mxu0
      %v1133 = vpop.f32.mrf.mxu0
      %v1134 = vadd.f32 0.0, %v1133
      %v1135 = vpop.f32.mrf.mxu0
      %1136 = vmatprep.mubr.bf16.mxu0 0
      %1137 = vmatmul.mubr.bf16.gmra.mxu0 %v479
      %v1138 = vpop.f32.mrf.mxu0
      %v1139 = vadd.f32 0.0, %v1138
      %v1140 = vpop.f32.mrf.mxu0
      %v1141 = vpop.f32.mrf.mxu0
      %v1142 = vadd.f32 0.0, %v1141
      %v1143 = vpop.f32.mrf.mxu0
      %1144 = vmatprep.mubr.bf16.mxu0 0
      %1145 = vmatmul.mubr.bf16.gmra.mxu0 %v482
      %v1146 = vpop.f32.mrf.mxu0
      %v1147 = vadd.f32 0.0, %v1146
      %v1148 = vpop.f32.mrf.mxu0
      %v1149 = vpop.f32.mrf.mxu0
      %v1150 = vadd.f32 0.0, %v1149
      %v1151 = vpop.f32.mrf.mxu0
      %1152 = vmatprep.mubr.bf16.mxu0 0
      %1153 = vmatmul.mubr.bf16.gmra.mxu0 %v485
      %v1154 = vpop.f32.mrf.mxu0
      %v1155 = vadd.f32 0.0, %v1154
      %v1156 = vpop.f32.mrf.mxu0
      %v1157 = vpop.f32.mrf.mxu0
      %v1158 = vadd.f32 0.0, %v1157
      %v1159 = vpop.f32.mrf.mxu0
      %1160 = vmatprep.mubr.bf16.mxu0 0
      %1161 = vmatmul.mubr.bf16.gmra.mxu0 %v488
      %v1162 = vpop.f32.mrf.mxu0
      %v1163 = vadd.f32 0.0, %v1162
      %v1164 = vpop.f32.mrf.mxu0
      %v1165 = vpop.f32.mrf.mxu0
      %v1166 = vadd.f32 0.0, %v1165
      %v1167 = vpop.f32.mrf.mxu0
      %1168 = vmatprep.mubr.bf16.mxu0 0
      %1169 = vmatmul.mubr.bf16.gmra.mxu0 %v491
      %v1170 = vpop.f32.mrf.mxu0
      %v1171 = vadd.f32 0.0, %v1170
      %v1172 = vpop.f32.mrf.mxu0
      %v1173 = vpop.f32.mrf.mxu0
      %v1174 = vadd.f32 0.0, %v1173
      %v1175 = vpop.f32.mrf.mxu0
      %1176 = vmatprep.mubr.bf16.mxu0 0
      %1177 = vmatmul.mubr.bf16.gmra.mxu0 %v494
      %v1178 = vpop.f32.mrf.mxu0
      %v1179 = vadd.f32 0.0, %v1178
      %v1180 = vpop.f32.mrf.mxu0
      %v1181 = vpop.f32.mrf.mxu0
      %v1182 = vadd.f32 0.0, %v1181
      %v1183 = vpop.f32.mrf.mxu0
      %1184 = vdwg.mxu0
      %v1185 = vrot.slane %v535, 7
      %v1186 = vrot.slane %v538, 7
      %v1187 = vrot.slane %v543, 7
      %v1188 = vrot.slane %v546, 7
      %v1189 = vrot.slane %v551, 7
      %v1190 = vrot.slane %v554, 7
      %v1191 = vrot.slane %v559, 7
      %v1192 = vrot.slane %v562, 7
      %v1193 = vrot.slane %v567, 7
      %v1194 = vrot.slane %v570, 7
      %v1195 = vrot.slane %v575, 7
      %v1196 = vrot.slane %v578, 7
      %v1197 = vrot.slane %v583, 7
      %v1198 = vrot.slane %v586, 7
      %v1199 = vrot.slane %v591, 7
      %v1200 = vrot.slane %v594, 7
      %v1201 = vrot.slane %v599, 7
      %v1202 = vrot.slane %v602, 7
      %v1203 = vrot.slane %v607, 7
      %v1204 = vrot.slane %v610, 7
      %v1205 = vrot.slane %v615, 7
      %v1206 = vrot.slane %v618, 7
      %v1207 = vrot.slane %v623, 7
      %v1208 = vrot.slane %v626, 7
      %v1209 = vrot.slane %v631, 7
      %v1210 = vrot.slane %v634, 7
      %v1211 = vrot.slane %v639, 7
      %v1212 = vrot.slane %v642, 7
      %v1213 = vrot.slane %v647, 7
      %v1214 = vrot.slane %v650, 7
      %v1215 = vrot.slane %v655, 7
      %v1216 = vrot.slane %v658, 7
      %v1217 = vrot.slane %v663, 7
      %v1218 = vrot.slane %v666, 7
      %v1219 = vrot.slane %v671, 7
      %v1220 = vrot.slane %v674, 7
      %v1221 = vrot.slane %v679, 7
      %v1222 = vrot.slane %v682, 7
      %v1223 = vrot.slane %v687, 7
      %v1224 = vrot.slane %v690, 7
      %v1225 = vrot.slane %v695, 7
      %v1226 = vrot.slane %v698, 7
      %v1227 = vrot.slane %v703, 7
      %v1228 = vrot.slane %v706, 7
      %v1229 = vrot.slane %v711, 7
      %v1230 = vrot.slane %v714, 7
      %v1231 = vrot.slane %v719, 7
      %v1232 = vrot.slane %v722, 7
      %v1233 = vlaneseq
      %v1234 = vshrl.u32 %v1233, 7
      %vm1235 = vcmp.lt.s32.totalorder %v1234, 1
      %v1236 = vsel %vm1235, %v1231, %v1232
      %v1237 = vsel %vm1235, %v1230, %v1231
      %v1238 = vsel %vm1235, %v1229, %v1230
      %v1239 = vsel %vm1235, %v1228, %v1229
      %v1240 = vsel %vm1235, %v1227, %v1228
      %v1241 = vsel %vm1235, %v1226, %v1227
      %v1242 = vsel %vm1235, %v1225, %v1226
      %v1243 = vsel %vm1235, %v1224, %v1225
      %v1244 = vsel %vm1235, %v1223, %v1224
      %v1245 = vsel %vm1235, %v1222, %v1223
      %v1246 = vsel %vm1235, %v1221, %v1222
      %v1247 = vsel %vm1235, %v1220, %v1221
      %v1248 = vsel %vm1235, %v1219, %v1220
      %v1249 = vsel %vm1235, %v1218, %v1219
      %v1250 = vsel %vm1235, %v1217, %v1218
      %v1251 = vsel %vm1235, %v1216, %v1217
      %v1252 = vsel %vm1235, %v1215, %v1216
      %v1253 = vsel %vm1235, %v1214, %v1215
      %v1254 = vsel %vm1235, %v1213, %v1214
      %v1255 = vsel %vm1235, %v1212, %v1213
      %v1256 = vsel %vm1235, %v1211, %v1212
      %v1257 = vsel %vm1235, %v1210, %v1211
      %v1258 = vsel %vm1235, %v1209, %v1210
      %v1259 = vsel %vm1235, %v1208, %v1209
      %v1260 = vsel %vm1235, %v1207, %v1208
      %v1261 = vsel %vm1235, %v1206, %v1207
      %v1262 = vsel %vm1235, %v1205, %v1206
      %v1263 = vsel %vm1235, %v1204, %v1205
      %v1264 = vsel %vm1235, %v1203, %v1204
      %v1265 = vsel %vm1235, %v1202, %v1203
      %v1266 = vsel %vm1235, %v1201, %v1202
      %v1267 = vsel %vm1235, %v1200, %v1201
      %v1268 = vsel %vm1235, %v1199, %v1200
      %v1269 = vsel %vm1235, %v1198, %v1199
      %v1270 = vsel %vm1235, %v1197, %v1198
      %v1271 = vsel %vm1235, %v1196, %v1197
      %v1272 = vsel %vm1235, %v1195, %v1196
      %v1273 = vsel %vm1235, %v1194, %v1195
      %v1274 = vsel %vm1235, %v1193, %v1194
      %v1275 = vsel %vm1235, %v1192, %v1193
      %v1276 = vsel %vm1235, %v1191, %v1192
      %v1277 = vsel %vm1235, %v1190, %v1191
      %v1278 = vsel %vm1235, %v1189, %v1190
      %v1279 = vsel %vm1235, %v1188, %v1189
      %v1280 = vsel %vm1235, %v1187, %v1188
      %v1281 = vsel %vm1235, %v1186, %v1187
      %v1282 = vsel %vm1235, %v1185, %v1186
      %v1283 = vsel %vm1235, %v1232, %v1185
      %v1284 = vadd.f32 %v1283, %v765
      %v1285 = vadd.f32 %v1282, %v768
      %v1286 = vadd.f32 %v1281, %v773
      %v1287 = vadd.f32 %v1280, %v776
      %v1288 = vadd.f32 %v1279, %v781
      %v1289 = vadd.f32 %v1278, %v784
      %v1290 = vadd.f32 %v1277, %v789
      %v1291 = vadd.f32 %v1276, %v792
      %v1292 = vadd.f32 %v1275, %v797
      %v1293 = vadd.f32 %v1274, %v800
      %v1294 = vadd.f32 %v1273, %v805
      %v1295 = vadd.f32 %v1272, %v808
      %v1296 = vadd.f32 %v1271, %v813
      %v1297 = vadd.f32 %v1270, %v816
      %v1298 = vadd.f32 %v1269, %v821
      %v1299 = vadd.f32 %v1268, %v824
      %v1300 = vadd.f32 %v1267, %v829
      %v1301 = vadd.f32 %v1266, %v832
      %v1302 = vadd.f32 %v1265, %v837
      %v1303 = vadd.f32 %v1264, %v840
      %v1304 = vadd.f32 %v1263, %v845
      %v1305 = vadd.f32 %v1262, %v848
      %v1306 = vadd.f32 %v1261, %v853
      %v1307 = vadd.f32 %v1260, %v856
      %v1308 = vadd.f32 %v1259, %v861
      %v1309 = vadd.f32 %v1258, %v864
      %v1310 = vadd.f32 %v1257, %v869
      %v1311 = vadd.f32 %v1256, %v872
      %v1312 = vadd.f32 %v1255, %v877
      %v1313 = vadd.f32 %v1254, %v880
      %v1314 = vadd.f32 %v1253, %v885
      %v1315 = vadd.f32 %v1252, %v888
      %v1316 = vadd.f32 %v1251, %v893
      %v1317 = vadd.f32 %v1250, %v896
      %v1318 = vadd.f32 %v1249, %v901
      %v1319 = vadd.f32 %v1248, %v904
      %v1320 = vadd.f32 %v1247, %v909
      %v1321 = vadd.f32 %v1246, %v912
      %v1322 = vadd.f32 %v1245, %v917
      %v1323 = vadd.f32 %v1244, %v920
      %v1324 = vadd.f32 %v1243, %v925
      %v1325 = vadd.f32 %v1242, %v928
      %v1326 = vadd.f32 %v1241, %v933
      %v1327 = vadd.f32 %v1240, %v936
      %v1328 = vadd.f32 %v1239, %v941
      %v1329 = vadd.f32 %v1238, %v944
      %v1330 = vadd.f32 %v1237, %v949
      %v1331 = vadd.f32 %v1236, %v952
      %v1332 = vrot.slane %v995, 1
      %v1333 = vrot.slane %v998, 1
      %v1334 = vrot.slane %v1003, 1
      %v1335 = vrot.slane %v1006, 1
      %v1336 = vrot.slane %v1011, 1
      %v1337 = vrot.slane %v1014, 1
      %v1338 = vrot.slane %v1019, 1
      %v1339 = vrot.slane %v1022, 1
      %v1340 = vrot.slane %v1027, 1
      %v1341 = vrot.slane %v1030, 1
      %v1342 = vrot.slane %v1035, 1
      %v1343 = vrot.slane %v1038, 1
      %v1344 = vrot.slane %v1043, 1
      %v1345 = vrot.slane %v1046, 1
      %v1346 = vrot.slane %v1051, 1
      %v1347 = vrot.slane %v1054, 1
      %v1348 = vrot.slane %v1059, 1
      %v1349 = vrot.slane %v1062, 1
      %v1350 = vrot.slane %v1067, 1
      %v1351 = vrot.slane %v1070, 1
      %v1352 = vrot.slane %v1075, 1
      %v1353 = vrot.slane %v1078, 1
      %v1354 = vrot.slane %v1083, 1
      %v1355 = vrot.slane %v1086, 1
      %v1356 = vrot.slane %v1091, 1
      %v1357 = vrot.slane %v1094, 1
      %v1358 = vrot.slane %v1099, 1
      %v1359 = vrot.slane %v1102, 1
      %v1360 = vrot.slane %v1107, 1
      %v1361 = vrot.slane %v1110, 1
      %v1362 = vrot.slane %v1115, 1
      %v1363 = vrot.slane %v1118, 1
      %v1364 = vrot.slane %v1123, 1
      %v1365 = vrot.slane %v1126, 1
      %v1366 = vrot.slane %v1131, 1
      %v1367 = vrot.slane %v1134, 1
      %v1368 = vrot.slane %v1139, 1
      %v1369 = vrot.slane %v1142, 1
      %v1370 = vrot.slane %v1147, 1
      %v1371 = vrot.slane %v1150, 1
      %v1372 = vrot.slane %v1155, 1
      %v1373 = vrot.slane %v1158, 1
      %v1374 = vrot.slane %v1163, 1
      %v1375 = vrot.slane %v1166, 1
      %v1376 = vrot.slane %v1171, 1
      %v1377 = vrot.slane %v1174, 1
      %v1378 = vrot.slane %v1179, 1
      %v1379 = vrot.slane %v1182, 1
      %vm1380 = vcmp.lt.s32.totalorder %v1234, 7
      %v1381 = vsel %vm1380, %v1378, %v1379
      %v1382 = vsel %vm1380, %v1377, %v1378
      %v1383 = vsel %vm1380, %v1376, %v1377
      %v1384 = vsel %vm1380, %v1375, %v1376
      %v1385 = vsel %vm1380, %v1374, %v1375
      %v1386 = vsel %vm1380, %v1373, %v1374
      %v1387 = vsel %vm1380, %v1372, %v1373
      %v1388 = vsel %vm1380, %v1371, %v1372
      %v1389 = vsel %vm1380, %v1370, %v1371
      %v1390 = vsel %vm1380, %v1369, %v1370
      %v1391 = vsel %vm1380, %v1368, %v1369
      %v1392 = vsel %vm1380, %v1367, %v1368
      %v1393 = vsel %vm1380, %v1366, %v1367
      %v1394 = vsel %vm1380, %v1365, %v1366
      %v1395 = vsel %vm1380, %v1364, %v1365
      %v1396 = vsel %vm1380, %v1363, %v1364
      %v1397 = vsel %vm1380, %v1362, %v1363
      %v1398 = vsel %vm1380, %v1361, %v1362
      %v1399 = vsel %vm1380, %v1360, %v1361
      %v1400 = vsel %vm1380, %v1359, %v1360
      %v1401 = vsel %vm1380, %v1358, %v1359
      %v1402 = vsel %vm1380, %v1357, %v1358
      %v1403 = vsel %vm1380, %v1356, %v1357
      %v1404 = vsel %vm1380, %v1355, %v1356
      %v1405 = vsel %vm1380, %v1354, %v1355
      %v1406 = vsel %vm1380, %v1353, %v1354
      %v1407 = vsel %vm1380, %v1352, %v1353
      %v1408 = vsel %vm1380, %v1351, %v1352
      %v1409 = vsel %vm1380, %v1350, %v1351
      %v1410 = vsel %vm1380, %v1349, %v1350
      %v1411 = vsel %vm1380, %v1348, %v1349
      %v1412 = vsel %vm1380, %v1347, %v1348
      %v1413 = vsel %vm1380, %v1346, %v1347
      %v1414 = vsel %vm1380, %v1345, %v1346
      %v1415 = vsel %vm1380, %v1344, %v1345
      %v1416 = vsel %vm1380, %v1343, %v1344
      %v1417 = vsel %vm1380, %v1342, %v1343
      %v1418 = vsel %vm1380, %v1341, %v1342
      %v1419 = vsel %vm1380, %v1340, %v1341
      %v1420 = vsel %vm1380, %v1339, %v1340
      %v1421 = vsel %vm1380, %v1338, %v1339
      %v1422 = vsel %vm1380, %v1337, %v1338
      %v1423 = vsel %vm1380, %v1336, %v1337
      %v1424 = vsel %vm1380, %v1335, %v1336
      %v1425 = vsel %vm1380, %v1334, %v1335
      %v1426 = vsel %vm1380, %v1333, %v1334
      %v1427 = vsel %vm1380, %v1332, %v1333
      %v1428 = vsel %vm1380, %v1379, %v1332
      %v1429 = vadd.f32 %v1284, %v1427
      %v1430 = vadd.f32 %v1285, %v1426
      %v1431 = vadd.f32 %v1286, %v1425
      %v1432 = vadd.f32 %v1287, %v1424
      %v1433 = vadd.f32 %v1288, %v1423
      %v1434 = vadd.f32 %v1289, %v1422
      %v1435 = vadd.f32 %v1290, %v1421
      %v1436 = vadd.f32 %v1291, %v1420
      %v1437 = vadd.f32 %v1292, %v1419
      %v1438 = vadd.f32 %v1293, %v1418
      %v1439 = vadd.f32 %v1294, %v1417
      %v1440 = vadd.f32 %v1295, %v1416
      %v1441 = vadd.f32 %v1296, %v1415
      %v1442 = vadd.f32 %v1297, %v1414
      %v1443 = vadd.f32 %v1298, %v1413
      %v1444 = vadd.f32 %v1299, %v1412
      %v1445 = vadd.f32 %v1300, %v1411
      %v1446 = vadd.f32 %v1301, %v1410
      %v1447 = vadd.f32 %v1302, %v1409
      %v1448 = vadd.f32 %v1303, %v1408
      %v1449 = vadd.f32 %v1304, %v1407
      %v1450 = vadd.f32 %v1305, %v1406
      %v1451 = vadd.f32 %v1306, %v1405
      %v1452 = vadd.f32 %v1307, %v1404
      %v1453 = vadd.f32 %v1308, %v1403
      %v1454 = vadd.f32 %v1309, %v1402
      %v1455 = vadd.f32 %v1310, %v1401
      %v1456 = vadd.f32 %v1311, %v1400
      %v1457 = vadd.f32 %v1312, %v1399
      %v1458 = vadd.f32 %v1313, %v1398
      %v1459 = vadd.f32 %v1314, %v1397
      %v1460 = vadd.f32 %v1315, %v1396
      %v1461 = vadd.f32 %v1316, %v1395
      %v1462 = vadd.f32 %v1317, %v1394
      %v1463 = vadd.f32 %v1318, %v1393
      %v1464 = vadd.f32 %v1319, %v1392
      %v1465 = vadd.f32 %v1320, %v1391
      %v1466 = vadd.f32 %v1321, %v1390
      %v1467 = vadd.f32 %v1322, %v1389
      %v1468 = vadd.f32 %v1323, %v1388
      %v1469 = vadd.f32 %v1324, %v1387
      %v1470 = vadd.f32 %v1325, %v1386
      %v1471 = vadd.f32 %v1326, %v1385
      %v1472 = vadd.f32 %v1327, %v1384
      %v1473 = vadd.f32 %v1328, %v1383
      %v1474 = vadd.f32 %v1329, %v1382
      %v1475 = vadd.f32 %v1330, %v1381
      %v1476 = vadd.f32 %v1331, %v1428
      %1477 = vst.msk [vmem:[#allocation2] sm:$0xff] %vm423, %v1429
      %1478 = vst.msk [vmem:[#allocation2 + $0x8] sm:$0xff] %vm423, %v1430
      %1479 = vst.msk [vmem:[#allocation2 + $0x10] sm:$0xff] %vm423, %v1431
      %1480 = vst.msk [vmem:[#allocation2 + $0x18] sm:$0xff] %vm423, %v1432
      %1481 = vst.msk [vmem:[#allocation2 + $0x20] sm:$0xff] %vm423, %v1433
      %1482 = vst.msk [vmem:[#allocation2 + $0x28] sm:$0xff] %vm423, %v1434
      %1483 = vst.msk [vmem:[#allocation2 + $0x30] sm:$0xff] %vm423, %v1435
      %1484 = vst.msk [vmem:[#allocation2 + $0x38] sm:$0xff] %vm423, %v1436
      %1485 = vst.msk [vmem:[#allocation2 + $0x40] sm:$0xff] %vm423, %v1437
      %1486 = vst.msk [vmem:[#allocation2 + $0x48] sm:$0xff] %vm423, %v1438
      %1487 = vst.msk [vmem:[#allocation2 + $0x50] sm:$0xff] %vm423, %v1439
      %1488 = vst.msk [vmem:[#allocation2 + $0x58] sm:$0xff] %vm423, %v1440
      %1489 = vst.msk [vmem:[#allocation2 + $0x60] sm:$0xff] %vm423, %v1441
      %1490 = vst.msk [vmem:[#allocation2 + $0x68] sm:$0xff] %vm423, %v1442
      %1491 = vst.msk [vmem:[#allocation2 + $0x70] sm:$0xff] %vm423, %v1443
      %1492 = vst.msk [vmem:[#allocation2 + $0x78] sm:$0xff] %vm423, %v1444
      %1493 = vst.msk [vmem:[#allocation2 + $0x80] sm:$0xff] %vm423, %v1445
      %1494 = vst.msk [vmem:[#allocation2 + $0x88] sm:$0xff] %vm423, %v1446
      %1495 = vst.msk [vmem:[#allocation2 + $0x90] sm:$0xff] %vm423, %v1447
      %1496 = vst.msk [vmem:[#allocation2 + $0x98] sm:$0xff] %vm423, %v1448
      %1497 = vst.msk [vmem:[#allocation2 + $0xa0] sm:$0xff] %vm423, %v1449
      %1498 = vst.msk [vmem:[#allocation2 + $0xa8] sm:$0xff] %vm423, %v1450
      %1499 = vst.msk [vmem:[#allocation2 + $0xb0] sm:$0xff] %vm423, %v1451
      %1500 = vst.msk [vmem:[#allocation2 + $0xb8] sm:$0xff] %vm423, %v1452
      %1501 = vst.msk [vmem:[#allocation2 + $0xc0] sm:$0xff] %vm423, %v1453
      %1502 = vst.msk [vmem:[#allocation2 + $0xc8] sm:$0xff] %vm423, %v1454
      %1503 = vst.msk [vmem:[#allocation2 + $0xd0] sm:$0xff] %vm423, %v1455
      %1504 = vst.msk [vmem:[#allocation2 + $0xd8] sm:$0xff] %vm423, %v1456
      %1505 = vst.msk [vmem:[#allocation2 + $0xe0] sm:$0xff] %vm423, %v1457
      %1506 = vst.msk [vmem:[#allocation2 + $0xe8] sm:$0xff] %vm423, %v1458
      %1507 = vst.msk [vmem:[#allocation2 + $0xf0] sm:$0xff] %vm423, %v1459
      %1508 = vst.msk [vmem:[#allocation2 + $0xf8] sm:$0xff] %vm423, %v1460
      %1509 = vst.msk [vmem:[#allocation2 + $0x100] sm:$0xff] %vm423, %v1461
      %1510 = vst.msk [vmem:[#allocation2 + $0x108] sm:$0xff] %vm423, %v1462
      %1511 = vst.msk [vmem:[#allocation2 + $0x110] sm:$0xff] %vm423, %v1463
      %1512 = vst.msk [vmem:[#allocation2 + $0x118] sm:$0xff] %vm423, %v1464
      %1513 = vst.msk [vmem:[#allocation2 + $0x120] sm:$0xff] %vm423, %v1465
      %1514 = vst.msk [vmem:[#allocation2 + $0x128] sm:$0xff] %vm423, %v1466
      %1515 = vst.msk [vmem:[#allocation2 + $0x130] sm:$0xff] %vm423, %v1467
      %1516 = vst.msk [vmem:[#allocation2 + $0x138] sm:$0xff] %vm423, %v1468
      %1517 = vst.msk [vmem:[#allocation2 + $0x140] sm:$0xff] %vm423, %v1469
      %1518 = vst.msk [vmem:[#allocation2 + $0x148] sm:$0xff] %vm423, %v1470
      %1519 = vst.msk [vmem:[#allocation2 + $0x150] sm:$0xff] %vm423, %v1471
      %1520 = vst.msk [vmem:[#allocation2 + $0x158] sm:$0xff] %vm423, %v1472
      %1521 = vst.msk [vmem:[#allocation2 + $0x160] sm:$0xff] %vm423, %v1473
      %1522 = vst.msk [vmem:[#allocation2 + $0x168] sm:$0xff] %vm423, %v1474
      %1523 = vst.msk [vmem:[#allocation2 + $0x170] sm:$0xff] %vm423, %v1475
      %1524 = vst.msk [vmem:[#allocation2 + $0x178] sm:$0xff] %vm423, %v1476
      %s1525 = sadd.s32 %s249, 24
      %s1526 = sshra.s32 %s1525, 3
      %s1527 = sand.u32 %s1525, 7
      %s1528 = smul.addr %s1526, 4
      %s1529 = scalar_lea.vmem %s237, %s1528
      %v1530 = vld [vmem:[%s1529] sm:$0xf]
      %v1531 = vld [vmem:[%s1529 + $0x4] sm:$0xf]
      %v1532 = vld [vmem:[%s1529 + $0x8] sm:$0xf]
      %v1533 = vld [vmem:[%s1529 + $0xc] sm:$0xf]
      %v1534 = vld [vmem:[%s1529 + $0x10] sm:$0xf]
      %v1535 = vld [vmem:[%s1529 + $0x14] sm:$0xf]
      %v1536 = vld [vmem:[%s1529 + $0x18] sm:$0xf]
      %v1537 = vld [vmem:[%s1529 + $0x1c] sm:$0xf]
      %v1538 = vld [vmem:[%s1529 + $0x20] sm:$0xf]
      %v1539 = vld [vmem:[%s1529 + $0x24] sm:$0xf]
      %v1540 = vld [vmem:[%s1529 + $0x28] sm:$0xf]
      %v1541 = vld [vmem:[%s1529 + $0x2c] sm:$0xf]
      %v1542 = vld [vmem:[%s1529 + $0x30] sm:$0xf]
      %v1543 = vld [vmem:[%s1529 + $0x34] sm:$0xf]
      %v1544 = vld [vmem:[%s1529 + $0x38] sm:$0xf]
      %v1545 = vld [vmem:[%s1529 + $0x3c] sm:$0xf]
      %v1546 = vld [vmem:[%s1529 + $0x40] sm:$0xf]
      %v1547 = vld [vmem:[%s1529 + $0x44] sm:$0xf]
      %v1548 = vld [vmem:[%s1529 + $0x48] sm:$0xf]
      %v1549 = vld [vmem:[%s1529 + $0x4c] sm:$0xf]
      %v1550 = vld [vmem:[%s1529 + $0x50] sm:$0xf]
      %v1551 = vld [vmem:[%s1529 + $0x54] sm:$0xf]
      %v1552 = vld [vmem:[%s1529 + $0x58] sm:$0xf]
      %v1553 = vld [vmem:[%s1529 + $0x5c] sm:$0xf]
      %v1554 = vld [vmem:[%s1529 + $0x60] sm:$0xf]
      %v1555 = vld [vmem:[%s1529 + $0x64] sm:$0xf]
      %v1556 = vld [vmem:[%s1529 + $0x68] sm:$0xf]
      %v1557 = vld [vmem:[%s1529 + $0x6c] sm:$0xf]
      %v1558 = vld [vmem:[%s1529 + $0x70] sm:$0xf]
      %v1559 = vld [vmem:[%s1529 + $0x74] sm:$0xf]
      %v1560 = vld [vmem:[%s1529 + $0x78] sm:$0xf]
      %v1561 = vld [vmem:[%s1529 + $0x7c] sm:$0xf]
      %v1562 = vld [vmem:[%s1529 + $0x80] sm:$0xf]
      %v1563 = vld [vmem:[%s1529 + $0x84] sm:$0xf]
      %v1564 = vld [vmem:[%s1529 + $0x88] sm:$0xf]
      %v1565 = vld [vmem:[%s1529 + $0x8c] sm:$0xf]
      %v1566 = vld [vmem:[%s1529 + $0x90] sm:$0xf]
      %v1567 = vld [vmem:[%s1529 + $0x94] sm:$0xf]
      %v1568 = vld [vmem:[%s1529 + $0x98] sm:$0xf]
      %v1569 = vld [vmem:[%s1529 + $0x9c] sm:$0xf]
      %v1570 = vld [vmem:[%s1529 + $0xa0] sm:$0xf]
      %v1571 = vld [vmem:[%s1529 + $0xa4] sm:$0xf]
      %v1572 = vld [vmem:[%s1529 + $0xa8] sm:$0xf]
      %v1573 = vld [vmem:[%s1529 + $0xac] sm:$0xf]
      %v1574 = vld [vmem:[%s1529 + $0xb0] sm:$0xf]
      %v1575 = vld [vmem:[%s1529 + $0xb4] sm:$0xf]
      %v1576 = vld [vmem:[%s1529 + $0xb8] sm:$0xf]
      %v1577 = vld [vmem:[%s1529 + $0xbc] sm:$0xf]
      %s1578 = scalar_lea.vmem %s1, 6
      %v1579 = vld [vmem:[%s1578] sm:$0x3]
      %v1628 = vunpack.c.l.b16 %v1530
      %v1629 = vunpack.c.l.b16 %v1531
      %v1630 = vunpack.c.l.b16 %v1532
      %v1631 = vunpack.c.l.b16 %v1533
      %v1632 = vunpack.c.l.b16 %v1534
      %v1633 = vunpack.c.l.b16 %v1535
      %v1634 = vunpack.c.l.b16 %v1536
      %v1635 = vunpack.c.l.b16 %v1537
      %v1636 = vunpack.c.l.b16 %v1538
      %v1637 = vunpack.c.l.b16 %v1539
      %v1638 = vunpack.c.l.b16 %v1540
      %v1639 = vunpack.c.l.b16 %v1541
      %v1640 = vunpack.c.l.b16 %v1542
      %v1641 = vunpack.c.l.b16 %v1543
      %v1642 = vunpack.c.l.b16 %v1544
      %v1643 = vunpack.c.l.b16 %v1545
      %v1644 = vunpack.c.l.b16 %v1546
      %v1645 = vunpack.c.l.b16 %v1547
      %v1646 = vunpack.c.l.b16 %v1548
      %v1647 = vunpack.c.l.b16 %v1549
      %v1648 = vunpack.c.l.b16 %v1550
      %v1649 = vunpack.c.l.b16 %v1551
      %v1650 = vunpack.c.l.b16 %v1552
      %v1651 = vunpack.c.l.b16 %v1553
      %v1652 = vunpack.c.l.b16 %v1554
      %v1653 = vunpack.c.l.b16 %v1555
      %v1654 = vunpack.c.l.b16 %v1556
      %v1655 = vunpack.c.l.b16 %v1557
      %v1656 = vunpack.c.l.b16 %v1558
      %v1657 = vunpack.c.l.b16 %v1559
      %v1658 = vunpack.c.l.b16 %v1560
      %v1659 = vunpack.c.l.b16 %v1561
      %v1660 = vunpack.c.l.b16 %v1562
      %v1661 = vunpack.c.l.b16 %v1563
      %v1662 = vunpack.c.l.b16 %v1564
      %v1663 = vunpack.c.l.b16 %v1565
      %v1664 = vunpack.c.l.b16 %v1566
      %v1665 = vunpack.c.l.b16 %v1567
      %v1666 = vunpack.c.l.b16 %v1568
      %v1667 = vunpack.c.l.b16 %v1569
      %v1668 = vunpack.c.l.b16 %v1570
      %v1669 = vunpack.c.l.b16 %v1571
      %v1670 = vunpack.c.l.b16 %v1572
      %v1671 = vunpack.c.l.b16 %v1573
      %v1672 = vunpack.c.l.b16 %v1574
      %v1673 = vunpack.c.l.b16 %v1575
      %v1674 = vunpack.c.l.b16 %v1576
      %v1675 = vunpack.c.l.b16 %v1577
      %v1676 = vpack.c.b16 %v1629, %v1628
      %v1677 = vpack.c.b16 %v1631, %v1630
      %v1678 = vpack.c.b16 %v1633, %v1632
      %v1679 = vpack.c.b16 %v1635, %v1634
      %v1680 = vpack.c.b16 %v1637, %v1636
      %v1681 = vpack.c.b16 %v1639, %v1638
      %v1682 = vpack.c.b16 %v1641, %v1640
      %v1683 = vpack.c.b16 %v1643, %v1642
      %v1684 = vpack.c.b16 %v1645, %v1644
      %v1685 = vpack.c.b16 %v1647, %v1646
      %v1686 = vpack.c.b16 %v1649, %v1648
      %v1687 = vpack.c.b16 %v1651, %v1650
      %v1688 = vpack.c.b16 %v1653, %v1652
      %v1689 = vpack.c.b16 %v1655, %v1654
      %v1690 = vpack.c.b16 %v1657, %v1656
      %v1691 = vpack.c.b16 %v1659, %v1658
      %v1692 = vpack.c.b16 %v1661, %v1660
      %v1693 = vpack.c.b16 %v1663, %v1662
      %v1694 = vpack.c.b16 %v1665, %v1664
      %v1695 = vpack.c.b16 %v1667, %v1666
      %v1696 = vpack.c.b16 %v1669, %v1668
      %v1697 = vpack.c.b16 %v1671, %v1670
      %v1698 = vpack.c.b16 %v1673, %v1672
      %v1699 = vpack.c.b16 %v1675, %v1674
      %v1701 = vsel %vm423, %v1676, 0
      %v1704 = vsel %vm423, %v1677, 0
      %v1707 = vsel %vm423, %v1678, 0
      %v1710 = vsel %vm423, %v1679, 0
      %v1713 = vsel %vm423, %v1680, 0
      %v1716 = vsel %vm423, %v1681, 0
      %v1719 = vsel %vm423, %v1682, 0
      %v1722 = vsel %vm423, %v1683, 0
      %v1725 = vsel %vm423, %v1684, 0
      %v1728 = vsel %vm423, %v1685, 0
      %v1731 = vsel %vm423, %v1686, 0
      %v1734 = vsel %vm423, %v1687, 0
      %v1737 = vsel %vm423, %v1688, 0
      %v1740 = vsel %vm423, %v1689, 0
      %v1743 = vsel %vm423, %v1690, 0
      %v1746 = vsel %vm423, %v1691, 0
      %v1749 = vsel %vm423, %v1692, 0
      %v1752 = vsel %vm423, %v1693, 0
      %v1755 = vsel %vm423, %v1694, 0
      %v1758 = vsel %vm423, %v1695, 0
      %v1761 = vsel %vm423, %v1696, 0
      %v1764 = vsel %vm423, %v1697, 0
      %v1767 = vsel %vm423, %v1698, 0
      %v1770 = vsel %vm423, %v1699, 0
      %v1773 = vsel %vm496, %v1579, 0
      %1775 = vmatprep.subr.bf16.mxu0 0
      %1776 = vmatpush1.bf16.msra.mxu0 0
      %1777 = vmatprep.subr.bf16.mxu0 0
      %1778 = vmatpush1.bf16.msra.mxu0 0
      %1779 = vmatprep.subr.bf16.mxu0 0
      %1780 = vmatpush1.bf16.msra.mxu0 0
      %1781 = vmatprep.subr.bf16.mxu0 0
      %1782 = vmatpush1.bf16.msra.mxu0 0
      %1783 = vmatprep.subr.bf16.mxu0 0
      %1784 = vmatpush1.bf16.msra.mxu0 0
      %1785 = vmatprep.subr.bf16.mxu0 0
      %1786 = vmatpush1.bf16.msra.mxu0 0
      %1787 = vmatprep.subr.bf16.mxu0 0
      %1788 = vmatpush1.bf16.msra.mxu0 0
      %1789 = vmatprep.subr.bf16.mxu0 0
      %1790 = vmatpush1.bf16.msra.mxu0 %v1773
      %1791 = vmatprep.subr.bf16.mxu0 0
      %1792 = vmatpush2.bf16.msra.mxu0 0
      %1793 = vmatprep.subr.bf16.mxu0 0
      %1794 = vmatpush2.bf16.msra.mxu0 0
      %1795 = vmatprep.subr.bf16.mxu0 0
      %1796 = vmatpush2.bf16.msra.mxu0 0
      %1797 = vmatprep.subr.bf16.mxu0 0
      %1798 = vmatpush2.bf16.msra.mxu0 0
      %1799 = vmatprep.subr.bf16.mxu0 0
      %1800 = vmatpush2.bf16.msra.mxu0 0
      %1801 = vmatprep.subr.bf16.mxu0 0
      %1802 = vmatpush2.bf16.msra.mxu0 0
      %1803 = vmatprep.subr.bf16.mxu0 0
      %1804 = vmatpush2.bf16.msra.mxu0 0
      %1805 = vmatprep.subr.bf16.mxu0 0
      %1806 = vmatpush2.bf16.msra.mxu0 0
      %1807 = vmatprep.mubr.bf16.mxu0 0
      %1808 = vmatmul.mubr.bf16.gmra.mxu0 %v1701
      %v1809 = vpop.f32.mrf.mxu0
      %v1810 = vadd.f32 0.0, %v1809
      %v1811 = vpop.f32.mrf.mxu0
      %v1812 = vpop.f32.mrf.mxu0
      %v1813 = vadd.f32 0.0, %v1812
      %v1814 = vpop.f32.mrf.mxu0
      %1815 = vmatprep.mubr.bf16.mxu0 0
      %1816 = vmatmul.mubr.bf16.gmra.mxu0 %v1704
      %v1817 = vpop.f32.mrf.mxu0
      %v1818 = vadd.f32 0.0, %v1817
      %v1819 = vpop.f32.mrf.mxu0
      %v1820 = vpop.f32.mrf.mxu0
      %v1821 = vadd.f32 0.0, %v1820
      %v1822 = vpop.f32.mrf.mxu0
      %1823 = vmatprep.mubr.bf16.mxu0 0
      %1824 = vmatmul.mubr.bf16.gmra.mxu0 %v1707
      %v1825 = vpop.f32.mrf.mxu0
      %v1826 = vadd.f32 0.0, %v1825
      %v1827 = vpop.f32.mrf.mxu0
      %v1828 = vpop.f32.mrf.mxu0
      %v1829 = vadd.f32 0.0, %v1828
      %v1830 = vpop.f32.mrf.mxu0
      %1831 = vmatprep.mubr.bf16.mxu0 0
      %1832 = vmatmul.mubr.bf16.gmra.mxu0 %v1710
      %v1833 = vpop.f32.mrf.mxu0
      %v1834 = vadd.f32 0.0, %v1833
      %v1835 = vpop.f32.mrf.mxu0
      %v1836 = vpop.f32.mrf.mxu0
      %v1837 = vadd.f32 0.0, %v1836
      %v1838 = vpop.f32.mrf.mxu0
      %1839 = vmatprep.mubr.bf16.mxu0 0
      %1840 = vmatmul.mubr.bf16.gmra.mxu0 %v1713
      %v1841 = vpop.f32.mrf.mxu0
      %v1842 = vadd.f32 0.0, %v1841
      %v1843 = vpop.f32.mrf.mxu0
      %v1844 = vpop.f32.mrf.mxu0
      %v1845 = vadd.f32 0.0, %v1844
      %v1846 = vpop.f32.mrf.mxu0
      %1847 = vmatprep.mubr.bf16.mxu0 0
      %1848 = vmatmul.mubr.bf16.gmra.mxu0 %v1716
      %v1849 = vpop.f32.mrf.mxu0
      %v1850 = vadd.f32 0.0, %v1849
      %v1851 = vpop.f32.mrf.mxu0
      %v1852 = vpop.f32.mrf.mxu0
      %v1853 = vadd.f32 0.0, %v1852
      %v1854 = vpop.f32.mrf.mxu0
      %1855 = vmatprep.mubr.bf16.mxu0 0
      %1856 = vmatmul.mubr.bf16.gmra.mxu0 %v1719
      %v1857 = vpop.f32.mrf.mxu0
      %v1858 = vadd.f32 0.0, %v1857
      %v1859 = vpop.f32.mrf.mxu0
      %v1860 = vpop.f32.mrf.mxu0
      %v1861 = vadd.f32 0.0, %v1860
      %v1862 = vpop.f32.mrf.mxu0
      %1863 = vmatprep.mubr.bf16.mxu0 0
      %1864 = vmatmul.mubr.bf16.gmra.mxu0 %v1722
      %v1865 = vpop.f32.mrf.mxu0
      %v1866 = vadd.f32 0.0, %v1865
      %v1867 = vpop.f32.mrf.mxu0
      %v1868 = vpop.f32.mrf.mxu0
      %v1869 = vadd.f32 0.0, %v1868
      %v1870 = vpop.f32.mrf.mxu0
      %1871 = vmatprep.mubr.bf16.mxu0 0
      %1872 = vmatmul.mubr.bf16.gmra.mxu0 %v1725
      %v1873 = vpop.f32.mrf.mxu0
      %v1874 = vadd.f32 0.0, %v1873
      %v1875 = vpop.f32.mrf.mxu0
      %v1876 = vpop.f32.mrf.mxu0
      %v1877 = vadd.f32 0.0, %v1876
      %v1878 = vpop.f32.mrf.mxu0
      %1879 = vmatprep.mubr.bf16.mxu0 0
      %1880 = vmatmul.mubr.bf16.gmra.mxu0 %v1728
      %v1881 = vpop.f32.mrf.mxu0
      %v1882 = vadd.f32 0.0, %v1881
      %v1883 = vpop.f32.mrf.mxu0
      %v1884 = vpop.f32.mrf.mxu0
      %v1885 = vadd.f32 0.0, %v1884
      %v1886 = vpop.f32.mrf.mxu0
      %1887 = vmatprep.mubr.bf16.mxu0 0
      %1888 = vmatmul.mubr.bf16.gmra.mxu0 %v1731
      %v1889 = vpop.f32.mrf.mxu0
      %v1890 = vadd.f32 0.0, %v1889
      %v1891 = vpop.f32.mrf.mxu0
      %v1892 = vpop.f32.mrf.mxu0
      %v1893 = vadd.f32 0.0, %v1892
      %v1894 = vpop.f32.mrf.mxu0
      %1895 = vmatprep.mubr.bf16.mxu0 0
      %1896 = vmatmul.mubr.bf16.gmra.mxu0 %v1734
      %v1897 = vpop.f32.mrf.mxu0
      %v1898 = vadd.f32 0.0, %v1897
      %v1899 = vpop.f32.mrf.mxu0
      %v1900 = vpop.f32.mrf.mxu0
      %v1901 = vadd.f32 0.0, %v1900
      %v1902 = vpop.f32.mrf.mxu0
      %1903 = vmatprep.mubr.bf16.mxu0 0
      %1904 = vmatmul.mubr.bf16.gmra.mxu0 %v1737
      %v1905 = vpop.f32.mrf.mxu0
      %v1906 = vadd.f32 0.0, %v1905
      %v1907 = vpop.f32.mrf.mxu0
      %v1908 = vpop.f32.mrf.mxu0
      %v1909 = vadd.f32 0.0, %v1908
      %v1910 = vpop.f32.mrf.mxu0
      %1911 = vmatprep.mubr.bf16.mxu0 0
      %1912 = vmatmul.mubr.bf16.gmra.mxu0 %v1740
      %v1913 = vpop.f32.mrf.mxu0
      %v1914 = vadd.f32 0.0, %v1913
      %v1915 = vpop.f32.mrf.mxu0
      %v1916 = vpop.f32.mrf.mxu0
      %v1917 = vadd.f32 0.0, %v1916
      %v1918 = vpop.f32.mrf.mxu0
      %1919 = vmatprep.mubr.bf16.mxu0 0
      %1920 = vmatmul.mubr.bf16.gmra.mxu0 %v1743
      %v1921 = vpop.f32.mrf.mxu0
      %v1922 = vadd.f32 0.0, %v1921
      %v1923 = vpop.f32.mrf.mxu0
      %v1924 = vpop.f32.mrf.mxu0
      %v1925 = vadd.f32 0.0, %v1924
      %v1926 = vpop.f32.mrf.mxu0
      %1927 = vmatprep.mubr.bf16.mxu0 0
      %1928 = vmatmul.mubr.bf16.gmra.mxu0 %v1746
      %v1929 = vpop.f32.mrf.mxu0
      %v1930 = vadd.f32 0.0, %v1929
      %v1931 = vpop.f32.mrf.mxu0
      %v1932 = vpop.f32.mrf.mxu0
      %v1933 = vadd.f32 0.0, %v1932
      %v1934 = vpop.f32.mrf.mxu0
      %1935 = vmatprep.mubr.bf16.mxu0 0
      %1936 = vmatmul.mubr.bf16.gmra.mxu0 %v1749
      %v1937 = vpop.f32.mrf.mxu0
      %v1938 = vadd.f32 0.0, %v1937
      %v1939 = vpop.f32.mrf.mxu0
      %v1940 = vpop.f32.mrf.mxu0
      %v1941 = vadd.f32 0.0, %v1940
      %v1942 = vpop.f32.mrf.mxu0
      %1943 = vmatprep.mubr.bf16.mxu0 0
      %1944 = vmatmul.mubr.bf16.gmra.mxu0 %v1752
      %v1945 = vpop.f32.mrf.mxu0
      %v1946 = vadd.f32 0.0, %v1945
      %v1947 = vpop.f32.mrf.mxu0
      %v1948 = vpop.f32.mrf.mxu0
      %v1949 = vadd.f32 0.0, %v1948
      %v1950 = vpop.f32.mrf.mxu0
      %1951 = vmatprep.mubr.bf16.mxu0 0
      %1952 = vmatmul.mubr.bf16.gmra.mxu0 %v1755
      %v1953 = vpop.f32.mrf.mxu0
      %v1954 = vadd.f32 0.0, %v1953
      %v1955 = vpop.f32.mrf.mxu0
      %v1956 = vpop.f32.mrf.mxu0
      %v1957 = vadd.f32 0.0, %v1956
      %v1958 = vpop.f32.mrf.mxu0
      %1959 = vmatprep.mubr.bf16.mxu0 0
      %1960 = vmatmul.mubr.bf16.gmra.mxu0 %v1758
      %v1961 = vpop.f32.mrf.mxu0
      %v1962 = vadd.f32 0.0, %v1961
      %v1963 = vpop.f32.mrf.mxu0
      %v1964 = vpop.f32.mrf.mxu0
      %v1965 = vadd.f32 0.0, %v1964
      %v1966 = vpop.f32.mrf.mxu0
      %1967 = vmatprep.mubr.bf16.mxu0 0
      %1968 = vmatmul.mubr.bf16.gmra.mxu0 %v1761
      %v1969 = vpop.f32.mrf.mxu0
      %v1970 = vadd.f32 0.0, %v1969
      %v1971 = vpop.f32.mrf.mxu0
      %v1972 = vpop.f32.mrf.mxu0
      %v1973 = vadd.f32 0.0, %v1972
      %v1974 = vpop.f32.mrf.mxu0
      %1975 = vmatprep.mubr.bf16.mxu0 0
      %1976 = vmatmul.mubr.bf16.gmra.mxu0 %v1764
      %v1977 = vpop.f32.mrf.mxu0
      %v1978 = vadd.f32 0.0, %v1977
      %v1979 = vpop.f32.mrf.mxu0
      %v1980 = vpop.f32.mrf.mxu0
      %v1981 = vadd.f32 0.0, %v1980
      %v1982 = vpop.f32.mrf.mxu0
      %1983 = vmatprep.mubr.bf16.mxu0 0
      %1984 = vmatmul.mubr.bf16.gmra.mxu0 %v1767
      %v1985 = vpop.f32.mrf.mxu0
      %v1986 = vadd.f32 0.0, %v1985
      %v1987 = vpop.f32.mrf.mxu0
      %v1988 = vpop.f32.mrf.mxu0
      %v1989 = vadd.f32 0.0, %v1988
      %v1990 = vpop.f32.mrf.mxu0
      %1991 = vmatprep.mubr.bf16.mxu0 0
      %1992 = vmatmul.mubr.bf16.gmra.mxu0 %v1770
      %v1993 = vpop.f32.mrf.mxu0
      %v1994 = vadd.f32 0.0, %v1993
      %v1995 = vpop.f32.mrf.mxu0
      %v1996 = vpop.f32.mrf.mxu0
      %v1997 = vadd.f32 0.0, %v1996
      %v1998 = vpop.f32.mrf.mxu0
      %1999 = vdwg.mxu0
      %s2000 = scalar_lea.vmem %s1, 8
      %v2001 = vld [vmem:[%s2000] sm:$0x3]
      %v2003 = vsel %vm496, %v2001, 0
      %2005 = vmatprep.subr.bf16.mxu0 0
      %2006 = vmatpush1.bf16.msra.mxu0 0
      %2007 = vmatprep.subr.bf16.mxu0 0
      %2008 = vmatpush1.bf16.msra.mxu0 0
      %2009 = vmatprep.subr.bf16.mxu0 0
      %2010 = vmatpush1.bf16.msra.mxu0 0
      %2011 = vmatprep.subr.bf16.mxu0 0
      %2012 = vmatpush1.bf16.msra.mxu0 0
      %2013 = vmatprep.subr.bf16.mxu0 0
      %2014 = vmatpush1.bf16.msra.mxu0 0
      %2015 = vmatprep.subr.bf16.mxu0 0
      %2016 = vmatpush1.bf16.msra.mxu0 0
      %2017 = vmatprep.subr.bf16.mxu0 0
      %2018 = vmatpush1.bf16.msra.mxu0 0
      %2019 = vmatprep.subr.bf16.mxu0 0
      %2020 = vmatpush1.bf16.msra.mxu0 %v2003
      %2021 = vmatprep.subr.bf16.mxu0 0
      %2022 = vmatpush2.bf16.msra.mxu0 0
      %2023 = vmatprep.subr.bf16.mxu0 0
      %2024 = vmatpush2.bf16.msra.mxu0 0
      %2025 = vmatprep.subr.bf16.mxu0 0
      %2026 = vmatpush2.bf16.msra.mxu0 0
      %2027 = vmatprep.subr.bf16.mxu0 0
      %2028 = vmatpush2.bf16.msra.mxu0 0
      %2029 = vmatprep.subr.bf16.mxu0 0
      %2030 = vmatpush2.bf16.msra.mxu0 0
      %2031 = vmatprep.subr.bf16.mxu0 0
      %2032 = vmatpush2.bf16.msra.mxu0 0
      %2033 = vmatprep.subr.bf16.mxu0 0
      %2034 = vmatpush2.bf16.msra.mxu0 0
      %2035 = vmatprep.subr.bf16.mxu0 0
      %2036 = vmatpush2.bf16.msra.mxu0 0
      %2037 = vmatprep.mubr.bf16.mxu0 0
      %2038 = vmatmul.mubr.bf16.gmra.mxu0 %v1701
      %v2039 = vpop.f32.mrf.mxu0
      %v2040 = vadd.f32 0.0, %v2039
      %v2041 = vpop.f32.mrf.mxu0
      %v2042 = vpop.f32.mrf.mxu0
      %v2043 = vadd.f32 0.0, %v2042
      %v2044 = vpop.f32.mrf.mxu0
      %2045 = vmatprep.mubr.bf16.mxu0 0
      %2046 = vmatmul.mubr.bf16.gmra.mxu0 %v1704
      %v2047 = vpop.f32.mrf.mxu0
      %v2048 = vadd.f32 0.0, %v2047
      %v2049 = vpop.f32.mrf.mxu0
      %v2050 = vpop.f32.mrf.mxu0
      %v2051 = vadd.f32 0.0, %v2050
      %v2052 = vpop.f32.mrf.mxu0
      %2053 = vmatprep.mubr.bf16.mxu0 0
      %2054 = vmatmul.mubr.bf16.gmra.mxu0 %v1707
      %v2055 = vpop.f32.mrf.mxu0
      %v2056 = vadd.f32 0.0, %v2055
      %v2057 = vpop.f32.mrf.mxu0
      %v2058 = vpop.f32.mrf.mxu0
      %v2059 = vadd.f32 0.0, %v2058
      %v2060 = vpop.f32.mrf.mxu0
      %2061 = vmatprep.mubr.bf16.mxu0 0
      %2062 = vmatmul.mubr.bf16.gmra.mxu0 %v1710
      %v2063 = vpop.f32.mrf.mxu0
      %v2064 = vadd.f32 0.0, %v2063
      %v2065 = vpop.f32.mrf.mxu0
      %v2066 = vpop.f32.mrf.mxu0
      %v2067 = vadd.f32 0.0, %v2066
      %v2068 = vpop.f32.mrf.mxu0
      %2069 = vmatprep.mubr.bf16.mxu0 0
      %2070 = vmatmul.mubr.bf16.gmra.mxu0 %v1713
      %v2071 = vpop.f32.mrf.mxu0
      %v2072 = vadd.f32 0.0, %v2071
      %v2073 = vpop.f32.mrf.mxu0
      %v2074 = vpop.f32.mrf.mxu0
      %v2075 = vadd.f32 0.0, %v2074
      %v2076 = vpop.f32.mrf.mxu0
      %2077 = vmatprep.mubr.bf16.mxu0 0
      %2078 = vmatmul.mubr.bf16.gmra.mxu0 %v1716
      %v2079 = vpop.f32.mrf.mxu0
      %v2080 = vadd.f32 0.0, %v2079
      %v2081 = vpop.f32.mrf.mxu0
      %v2082 = vpop.f32.mrf.mxu0
      %v2083 = vadd.f32 0.0, %v2082
      %v2084 = vpop.f32.mrf.mxu0
      %2085 = vmatprep.mubr.bf16.mxu0 0
      %2086 = vmatmul.mubr.bf16.gmra.mxu0 %v1719
      %v2087 = vpop.f32.mrf.mxu0
      %v2088 = vadd.f32 0.0, %v2087
      %v2089 = vpop.f32.mrf.mxu0
      %v2090 = vpop.f32.mrf.mxu0
      %v2091 = vadd.f32 0.0, %v2090
      %v2092 = vpop.f32.mrf.mxu0
      %2093 = vmatprep.mubr.bf16.mxu0 0
      %2094 = vmatmul.mubr.bf16.gmra.mxu0 %v1722
      %v2095 = vpop.f32.mrf.mxu0
      %v2096 = vadd.f32 0.0, %v2095
      %v2097 = vpop.f32.mrf.mxu0
      %v2098 = vpop.f32.mrf.mxu0
      %v2099 = vadd.f32 0.0, %v2098
      %v2100 = vpop.f32.mrf.mxu0
      %2101 = vmatprep.mubr.bf16.mxu0 0
      %2102 = vmatmul.mubr.bf16.gmra.mxu0 %v1725
      %v2103 = vpop.f32.mrf.mxu0
      %v2104 = vadd.f32 0.0, %v2103
      %v2105 = vpop.f32.mrf.mxu0
      %v2106 = vpop.f32.mrf.mxu0
      %v2107 = vadd.f32 0.0, %v2106
      %v2108 = vpop.f32.mrf.mxu0
      %2109 = vmatprep.mubr.bf16.mxu0 0
      %2110 = vmatmul.mubr.bf16.gmra.mxu0 %v1728
      %v2111 = vpop.f32.mrf.mxu0
      %v2112 = vadd.f32 0.0, %v2111
      %v2113 = vpop.f32.mrf.mxu0
      %v2114 = vpop.f32.mrf.mxu0
      %v2115 = vadd.f32 0.0, %v2114
      %v2116 = vpop.f32.mrf.mxu0
      %2117 = vmatprep.mubr.bf16.mxu0 0
      %2118 = vmatmul.mubr.bf16.gmra.mxu0 %v1731
      %v2119 = vpop.f32.mrf.mxu0
      %v2120 = vadd.f32 0.0, %v2119
      %v2121 = vpop.f32.mrf.mxu0
      %v2122 = vpop.f32.mrf.mxu0
      %v2123 = vadd.f32 0.0, %v2122
      %v2124 = vpop.f32.mrf.mxu0
      %2125 = vmatprep.mubr.bf16.mxu0 0
      %2126 = vmatmul.mubr.bf16.gmra.mxu0 %v1734
      %v2127 = vpop.f32.mrf.mxu0
      %v2128 = vadd.f32 0.0, %v2127
      %v2129 = vpop.f32.mrf.mxu0
      %v2130 = vpop.f32.mrf.mxu0
      %v2131 = vadd.f32 0.0, %v2130
      %v2132 = vpop.f32.mrf.mxu0
      %2133 = vmatprep.mubr.bf16.mxu0 0
      %2134 = vmatmul.mubr.bf16.gmra.mxu0 %v1737
      %v2135 = vpop.f32.mrf.mxu0
      %v2136 = vadd.f32 0.0, %v2135
      %v2137 = vpop.f32.mrf.mxu0
      %v2138 = vpop.f32.mrf.mxu0
      %v2139 = vadd.f32 0.0, %v2138
      %v2140 = vpop.f32.mrf.mxu0
      %2141 = vmatprep.mubr.bf16.mxu0 0
      %2142 = vmatmul.mubr.bf16.gmra.mxu0 %v1740
      %v2143 = vpop.f32.mrf.mxu0
      %v2144 = vadd.f32 0.0, %v2143
      %v2145 = vpop.f32.mrf.mxu0
      %v2146 = vpop.f32.mrf.mxu0
      %v2147 = vadd.f32 0.0, %v2146
      %v2148 = vpop.f32.mrf.mxu0
      %2149 = vmatprep.mubr.bf16.mxu0 0
      %2150 = vmatmul.mubr.bf16.gmra.mxu0 %v1743
      %v2151 = vpop.f32.mrf.mxu0
      %v2152 = vadd.f32 0.0, %v2151
      %v2153 = vpop.f32.mrf.mxu0
      %v2154 = vpop.f32.mrf.mxu0
      %v2155 = vadd.f32 0.0, %v2154
      %v2156 = vpop.f32.mrf.mxu0
      %2157 = vmatprep.mubr.bf16.mxu0 0
      %2158 = vmatmul.mubr.bf16.gmra.mxu0 %v1746
      %v2159 = vpop.f32.mrf.mxu0
      %v2160 = vadd.f32 0.0, %v2159
      %v2161 = vpop.f32.mrf.mxu0
      %v2162 = vpop.f32.mrf.mxu0
      %v2163 = vadd.f32 0.0, %v2162
      %v2164 = vpop.f32.mrf.mxu0
      %2165 = vmatprep.mubr.bf16.mxu0 0
      %2166 = vmatmul.mubr.bf16.gmra.mxu0 %v1749
      %v2167 = vpop.f32.mrf.mxu0
      %v2168 = vadd.f32 0.0, %v2167
      %v2169 = vpop.f32.mrf.mxu0
      %v2170 = vpop.f32.mrf.mxu0
      %v2171 = vadd.f32 0.0, %v2170
      %v2172 = vpop.f32.mrf.mxu0
      %2173 = vmatprep.mubr.bf16.mxu0 0
      %2174 = vmatmul.mubr.bf16.gmra.mxu0 %v1752
      %v2175 = vpop.f32.mrf.mxu0
      %v2176 = vadd.f32 0.0, %v2175
      %v2177 = vpop.f32.mrf.mxu0
      %v2178 = vpop.f32.mrf.mxu0
      %v2179 = vadd.f32 0.0, %v2178
      %v2180 = vpop.f32.mrf.mxu0
      %2181 = vmatprep.mubr.bf16.mxu0 0
      %2182 = vmatmul.mubr.bf16.gmra.mxu0 %v1755
      %v2183 = vpop.f32.mrf.mxu0
      %v2184 = vadd.f32 0.0, %v2183
      %v2185 = vpop.f32.mrf.mxu0
      %v2186 = vpop.f32.mrf.mxu0
      %v2187 = vadd.f32 0.0, %v2186
      %v2188 = vpop.f32.mrf.mxu0
      %2189 = vmatprep.mubr.bf16.mxu0 0
      %2190 = vmatmul.mubr.bf16.gmra.mxu0 %v1758
      %v2191 = vpop.f32.mrf.mxu0
      %v2192 = vadd.f32 0.0, %v2191
      %v2193 = vpop.f32.mrf.mxu0
      %v2194 = vpop.f32.mrf.mxu0
      %v2195 = vadd.f32 0.0, %v2194
      %v2196 = vpop.f32.mrf.mxu0
      %2197 = vmatprep.mubr.bf16.mxu0 0
      %2198 = vmatmul.mubr.bf16.gmra.mxu0 %v1761
      %v2199 = vpop.f32.mrf.mxu0
      %v2200 = vadd.f32 0.0, %v2199
      %v2201 = vpop.f32.mrf.mxu0
      %v2202 = vpop.f32.mrf.mxu0
      %v2203 = vadd.f32 0.0, %v2202
      %v2204 = vpop.f32.mrf.mxu0
      %2205 = vmatprep.mubr.bf16.mxu0 0
      %2206 = vmatmul.mubr.bf16.gmra.mxu0 %v1764
      %v2207 = vpop.f32.mrf.mxu0
      %v2208 = vadd.f32 0.0, %v2207
      %v2209 = vpop.f32.mrf.mxu0
      %v2210 = vpop.f32.mrf.mxu0
      %v2211 = vadd.f32 0.0, %v2210
      %v2212 = vpop.f32.mrf.mxu0
      %2213 = vmatprep.mubr.bf16.mxu0 0
      %2214 = vmatmul.mubr.bf16.gmra.mxu0 %v1767
      %v2215 = vpop.f32.mrf.mxu0
      %v2216 = vadd.f32 0.0, %v2215
      %v2217 = vpop.f32.mrf.mxu0
      %v2218 = vpop.f32.mrf.mxu0
      %v2219 = vadd.f32 0.0, %v2218
      %v2220 = vpop.f32.mrf.mxu0
      %2221 = vmatprep.mubr.bf16.mxu0 0
      %2222 = vmatmul.mubr.bf16.gmra.mxu0 %v1770
      %v2223 = vpop.f32.mrf.mxu0
      %v2224 = vadd.f32 0.0, %v2223
      %v2225 = vpop.f32.mrf.mxu0
      %v2226 = vpop.f32.mrf.mxu0
      %v2227 = vadd.f32 0.0, %v2226
      %v2228 = vpop.f32.mrf.mxu0
      %2229 = vdwg.mxu0
      %s2230 = scalar_lea.vmem %s1, 10
      %v2231 = vld [vmem:[%s2230] sm:$0x3]
      %v2233 = vsel %vm496, %v2231, 0
      %2235 = vmatprep.subr.bf16.mxu0 0
      %2236 = vmatpush1.bf16.msra.mxu0 0
      %2237 = vmatprep.subr.bf16.mxu0 0
      %2238 = vmatpush1.bf16.msra.mxu0 0
      %2239 = vmatprep.subr.bf16.mxu0 0
      %2240 = vmatpush1.bf16.msra.mxu0 0
      %2241 = vmatprep.subr.bf16.mxu0 0
      %2242 = vmatpush1.bf16.msra.mxu0 0
      %2243 = vmatprep.subr.bf16.mxu0 0
      %2244 = vmatpush1.bf16.msra.mxu0 0
      %2245 = vmatprep.subr.bf16.mxu0 0
      %2246 = vmatpush1.bf16.msra.mxu0 0
      %2247 = vmatprep.subr.bf16.mxu0 0
      %2248 = vmatpush1.bf16.msra.mxu0 0
      %2249 = vmatprep.subr.bf16.mxu0 0
      %2250 = vmatpush1.bf16.msra.mxu0 %v2233
      %2251 = vmatprep.subr.bf16.mxu0 0
      %2252 = vmatpush2.bf16.msra.mxu0 0
      %2253 = vmatprep.subr.bf16.mxu0 0
      %2254 = vmatpush2.bf16.msra.mxu0 0
      %2255 = vmatprep.subr.bf16.mxu0 0
      %2256 = vmatpush2.bf16.msra.mxu0 0
      %2257 = vmatprep.subr.bf16.mxu0 0
      %2258 = vmatpush2.bf16.msra.mxu0 0
      %2259 = vmatprep.subr.bf16.mxu0 0
      %2260 = vmatpush2.bf16.msra.mxu0 0
      %2261 = vmatprep.subr.bf16.mxu0 0
      %2262 = vmatpush2.bf16.msra.mxu0 0
      %2263 = vmatprep.subr.bf16.mxu0 0
      %2264 = vmatpush2.bf16.msra.mxu0 0
      %2265 = vmatprep.subr.bf16.mxu0 0
      %2266 = vmatpush2.bf16.msra.mxu0 0
      %2267 = vmatprep.mubr.bf16.mxu0 0
      %2268 = vmatmul.mubr.bf16.gmra.mxu0 %v1701
      %v2269 = vpop.f32.mrf.mxu0
      %v2270 = vadd.f32 0.0, %v2269
      %v2271 = vpop.f32.mrf.mxu0
      %v2272 = vpop.f32.mrf.mxu0
      %v2273 = vadd.f32 0.0, %v2272
      %v2274 = vpop.f32.mrf.mxu0
      %2275 = vmatprep.mubr.bf16.mxu0 0
      %2276 = vmatmul.mubr.bf16.gmra.mxu0 %v1704
      %v2277 = vpop.f32.mrf.mxu0
      %v2278 = vadd.f32 0.0, %v2277
      %v2279 = vpop.f32.mrf.mxu0
      %v2280 = vpop.f32.mrf.mxu0
      %v2281 = vadd.f32 0.0, %v2280
      %v2282 = vpop.f32.mrf.mxu0
      %2283 = vmatprep.mubr.bf16.mxu0 0
      %2284 = vmatmul.mubr.bf16.gmra.mxu0 %v1707
      %v2285 = vpop.f32.mrf.mxu0
      %v2286 = vadd.f32 0.0, %v2285
      %v2287 = vpop.f32.mrf.mxu0
      %v2288 = vpop.f32.mrf.mxu0
      %v2289 = vadd.f32 0.0, %v2288
      %v2290 = vpop.f32.mrf.mxu0
      %2291 = vmatprep.mubr.bf16.mxu0 0
      %2292 = vmatmul.mubr.bf16.gmra.mxu0 %v1710
      %v2293 = vpop.f32.mrf.mxu0
      %v2294 = vadd.f32 0.0, %v2293
      %v2295 = vpop.f32.mrf.mxu0
      %v2296 = vpop.f32.mrf.mxu0
      %v2297 = vadd.f32 0.0, %v2296
      %v2298 = vpop.f32.mrf.mxu0
      %2299 = vmatprep.mubr.bf16.mxu0 0
      %2300 = vmatmul.mubr.bf16.gmra.mxu0 %v1713
      %v2301 = vpop.f32.mrf.mxu0
      %v2302 = vadd.f32 0.0, %v2301
      %v2303 = vpop.f32.mrf.mxu0
      %v2304 = vpop.f32.mrf.mxu0
      %v2305 = vadd.f32 0.0, %v2304
      %v2306 = vpop.f32.mrf.mxu0
      %2307 = vmatprep.mubr.bf16.mxu0 0
      %2308 = vmatmul.mubr.bf16.gmra.mxu0 %v1716
      %v2309 = vpop.f32.mrf.mxu0
      %v2310 = vadd.f32 0.0, %v2309
      %v2311 = vpop.f32.mrf.mxu0
      %v2312 = vpop.f32.mrf.mxu0
      %v2313 = vadd.f32 0.0, %v2312
      %v2314 = vpop.f32.mrf.mxu0
      %2315 = vmatprep.mubr.bf16.mxu0 0
      %2316 = vmatmul.mubr.bf16.gmra.mxu0 %v1719
      %v2317 = vpop.f32.mrf.mxu0
      %v2318 = vadd.f32 0.0, %v2317
      %v2319 = vpop.f32.mrf.mxu0
      %v2320 = vpop.f32.mrf.mxu0
      %v2321 = vadd.f32 0.0, %v2320
      %v2322 = vpop.f32.mrf.mxu0
      %2323 = vmatprep.mubr.bf16.mxu0 0
      %2324 = vmatmul.mubr.bf16.gmra.mxu0 %v1722
      %v2325 = vpop.f32.mrf.mxu0
      %v2326 = vadd.f32 0.0, %v2325
      %v2327 = vpop.f32.mrf.mxu0
      %v2328 = vpop.f32.mrf.mxu0
      %v2329 = vadd.f32 0.0, %v2328
      %v2330 = vpop.f32.mrf.mxu0
      %2331 = vmatprep.mubr.bf16.mxu0 0
      %2332 = vmatmul.mubr.bf16.gmra.mxu0 %v1725
      %v2333 = vpop.f32.mrf.mxu0
      %v2334 = vadd.f32 0.0, %v2333
      %v2335 = vpop.f32.mrf.mxu0
      %v2336 = vpop.f32.mrf.mxu0
      %v2337 = vadd.f32 0.0, %v2336
      %v2338 = vpop.f32.mrf.mxu0
      %2339 = vmatprep.mubr.bf16.mxu0 0
      %2340 = vmatmul.mubr.bf16.gmra.mxu0 %v1728
      %v2341 = vpop.f32.mrf.mxu0
      %v2342 = vadd.f32 0.0, %v2341
      %v2343 = vpop.f32.mrf.mxu0
      %v2344 = vpop.f32.mrf.mxu0
      %v2345 = vadd.f32 0.0, %v2344
      %v2346 = vpop.f32.mrf.mxu0
      %2347 = vmatprep.mubr.bf16.mxu0 0
      %2348 = vmatmul.mubr.bf16.gmra.mxu0 %v1731
      %v2349 = vpop.f32.mrf.mxu0
      %v2350 = vadd.f32 0.0, %v2349
      %v2351 = vpop.f32.mrf.mxu0
      %v2352 = vpop.f32.mrf.mxu0
      %v2353 = vadd.f32 0.0, %v2352
      %v2354 = vpop.f32.mrf.mxu0
      %2355 = vmatprep.mubr.bf16.mxu0 0
      %2356 = vmatmul.mubr.bf16.gmra.mxu0 %v1734
      %v2357 = vpop.f32.mrf.mxu0
      %v2358 = vadd.f32 0.0, %v2357
      %v2359 = vpop.f32.mrf.mxu0
      %v2360 = vpop.f32.mrf.mxu0
      %v2361 = vadd.f32 0.0, %v2360
      %v2362 = vpop.f32.mrf.mxu0
      %2363 = vmatprep.mubr.bf16.mxu0 0
      %2364 = vmatmul.mubr.bf16.gmra.mxu0 %v1737
      %v2365 = vpop.f32.mrf.mxu0
      %v2366 = vadd.f32 0.0, %v2365
      %v2367 = vpop.f32.mrf.mxu0
      %v2368 = vpop.f32.mrf.mxu0
      %v2369 = vadd.f32 0.0, %v2368
      %v2370 = vpop.f32.mrf.mxu0
      %2371 = vmatprep.mubr.bf16.mxu0 0
      %2372 = vmatmul.mubr.bf16.gmra.mxu0 %v1740
      %v2373 = vpop.f32.mrf.mxu0
      %v2374 = vadd.f32 0.0, %v2373
      %v2375 = vpop.f32.mrf.mxu0
      %v2376 = vpop.f32.mrf.mxu0
      %v2377 = vadd.f32 0.0, %v2376
      %v2378 = vpop.f32.mrf.mxu0
      %2379 = vmatprep.mubr.bf16.mxu0 0
      %2380 = vmatmul.mubr.bf16.gmra.mxu0 %v1743
      %v2381 = vpop.f32.mrf.mxu0
      %v2382 = vadd.f32 0.0, %v2381
      %v2383 = vpop.f32.mrf.mxu0
      %v2384 = vpop.f32.mrf.mxu0
      %v2385 = vadd.f32 0.0, %v2384
      %v2386 = vpop.f32.mrf.mxu0
      %2387 = vmatprep.mubr.bf16.mxu0 0
      %2388 = vmatmul.mubr.bf16.gmra.mxu0 %v1746
      %v2389 = vpop.f32.mrf.mxu0
      %v2390 = vadd.f32 0.0, %v2389
      %v2391 = vpop.f32.mrf.mxu0
      %v2392 = vpop.f32.mrf.mxu0
      %v2393 = vadd.f32 0.0, %v2392
      %v2394 = vpop.f32.mrf.mxu0
      %2395 = vmatprep.mubr.bf16.mxu0 0
      %2396 = vmatmul.mubr.bf16.gmra.mxu0 %v1749
      %v2397 = vpop.f32.mrf.mxu0
      %v2398 = vadd.f32 0.0, %v2397
      %v2399 = vpop.f32.mrf.mxu0
      %v2400 = vpop.f32.mrf.mxu0
      %v2401 = vadd.f32 0.0, %v2400
      %v2402 = vpop.f32.mrf.mxu0
      %2403 = vmatprep.mubr.bf16.mxu0 0
      %2404 = vmatmul.mubr.bf16.gmra.mxu0 %v1752
      %v2405 = vpop.f32.mrf.mxu0
      %v2406 = vadd.f32 0.0, %v2405
      %v2407 = vpop.f32.mrf.mxu0
      %v2408 = vpop.f32.mrf.mxu0
      %v2409 = vadd.f32 0.0, %v2408
      %v2410 = vpop.f32.mrf.mxu0
      %2411 = vmatprep.mubr.bf16.mxu0 0
      %2412 = vmatmul.mubr.bf16.gmra.mxu0 %v1755
      %v2413 = vpop.f32.mrf.mxu0
      %v2414 = vadd.f32 0.0, %v2413
      %v2415 = vpop.f32.mrf.mxu0
      %v2416 = vpop.f32.mrf.mxu0
      %v2417 = vadd.f32 0.0, %v2416
      %v2418 = vpop.f32.mrf.mxu0
      %2419 = vmatprep.mubr.bf16.mxu0 0
      %2420 = vmatmul.mubr.bf16.gmra.mxu0 %v1758
      %v2421 = vpop.f32.mrf.mxu0
      %v2422 = vadd.f32 0.0, %v2421
      %v2423 = vpop.f32.mrf.mxu0
      %v2424 = vpop.f32.mrf.mxu0
      %v2425 = vadd.f32 0.0, %v2424
      %v2426 = vpop.f32.mrf.mxu0
      %2427 = vmatprep.mubr.bf16.mxu0 0
      %2428 = vmatmul.mubr.bf16.gmra.mxu0 %v1761
      %v2429 = vpop.f32.mrf.mxu0
      %v2430 = vadd.f32 0.0, %v2429
      %v2431 = vpop.f32.mrf.mxu0
      %v2432 = vpop.f32.mrf.mxu0
      %v2433 = vadd.f32 0.0, %v2432
      %v2434 = vpop.f32.mrf.mxu0
      %2435 = vmatprep.mubr.bf16.mxu0 0
      %2436 = vmatmul.mubr.bf16.gmra.mxu0 %v1764
      %v2437 = vpop.f32.mrf.mxu0
      %v2438 = vadd.f32 0.0, %v2437
      %v2439 = vpop.f32.mrf.mxu0
      %v2440 = vpop.f32.mrf.mxu0
      %v2441 = vadd.f32 0.0, %v2440
      %v2442 = vpop.f32.mrf.mxu0
      %2443 = vmatprep.mubr.bf16.mxu0 0
      %2444 = vmatmul.mubr.bf16.gmra.mxu0 %v1767
      %v2445 = vpop.f32.mrf.mxu0
      %v2446 = vadd.f32 0.0, %v2445
      %v2447 = vpop.f32.mrf.mxu0
      %v2448 = vpop.f32.mrf.mxu0
      %v2449 = vadd.f32 0.0, %v2448
      %v2450 = vpop.f32.mrf.mxu0
      %2451 = vmatprep.mubr.bf16.mxu0 0
      %2452 = vmatmul.mubr.bf16.gmra.mxu0 %v1770
      %v2453 = vpop.f32.mrf.mxu0
      %v2454 = vadd.f32 0.0, %v2453
      %v2455 = vpop.f32.mrf.mxu0
      %v2456 = vpop.f32.mrf.mxu0
      %v2457 = vadd.f32 0.0, %v2456
      %v2458 = vpop.f32.mrf.mxu0
      %2459 = vdwg.mxu0
      %v2460 = vrot.slane %v1810, 7
      %v2461 = vrot.slane %v1813, 7
      %v2462 = vrot.slane %v1818, 7
      %v2463 = vrot.slane %v1821, 7
      %v2464 = vrot.slane %v1826, 7
      %v2465 = vrot.slane %v1829, 7
      %v2466 = vrot.slane %v1834, 7
      %v2467 = vrot.slane %v1837, 7
      %v2468 = vrot.slane %v1842, 7
      %v2469 = vrot.slane %v1845, 7
      %v2470 = vrot.slane %v1850, 7
      %v2471 = vrot.slane %v1853, 7
      %v2472 = vrot.slane %v1858, 7
      %v2473 = vrot.slane %v1861, 7
      %v2474 = vrot.slane %v1866, 7
      %v2475 = vrot.slane %v1869, 7
      %v2476 = vrot.slane %v1874, 7
      %v2477 = vrot.slane %v1877, 7
      %v2478 = vrot.slane %v1882, 7
      %v2479 = vrot.slane %v1885, 7
      %v2480 = vrot.slane %v1890, 7
      %v2481 = vrot.slane %v1893, 7
      %v2482 = vrot.slane %v1898, 7
      %v2483 = vrot.slane %v1901, 7
      %v2484 = vrot.slane %v1906, 7
      %v2485 = vrot.slane %v1909, 7
      %v2486 = vrot.slane %v1914, 7
      %v2487 = vrot.slane %v1917, 7
      %v2488 = vrot.slane %v1922, 7
      %v2489 = vrot.slane %v1925, 7
      %v2490 = vrot.slane %v1930, 7
      %v2491 = vrot.slane %v1933, 7
      %v2492 = vrot.slane %v1938, 7
      %v2493 = vrot.slane %v1941, 7
      %v2494 = vrot.slane %v1946, 7
      %v2495 = vrot.slane %v1949, 7
      %v2496 = vrot.slane %v1954, 7
      %v2497 = vrot.slane %v1957, 7
      %v2498 = vrot.slane %v1962, 7
      %v2499 = vrot.slane %v1965, 7
      %v2500 = vrot.slane %v1970, 7
      %v2501 = vrot.slane %v1973, 7
      %v2502 = vrot.slane %v1978, 7
      %v2503 = vrot.slane %v1981, 7
      %v2504 = vrot.slane %v1986, 7
      %v2505 = vrot.slane %v1989, 7
      %v2506 = vrot.slane %v1994, 7
      %v2507 = vrot.slane %v1997, 7
      %v2508 = vsel %vm1235, %v2506, %v2507
      %v2509 = vsel %vm1235, %v2505, %v2506
      %v2510 = vsel %vm1235, %v2504, %v2505
      %v2511 = vsel %vm1235, %v2503, %v2504
      %v2512 = vsel %vm1235, %v2502, %v2503
      %v2513 = vsel %vm1235, %v2501, %v2502
      %v2514 = vsel %vm1235, %v2500, %v2501
      %v2515 = vsel %vm1235, %v2499, %v2500
      %v2516 = vsel %vm1235, %v2498, %v2499
      %v2517 = vsel %vm1235, %v2497, %v2498
      %v2518 = vsel %vm1235, %v2496, %v2497
      %v2519 = vsel %vm1235, %v2495, %v2496
      %v2520 = vsel %vm1235, %v2494, %v2495
      %v2521 = vsel %vm1235, %v2493, %v2494
      %v2522 = vsel %vm1235, %v2492, %v2493
      %v2523 = vsel %vm1235, %v2491, %v2492
      %v2524 = vsel %vm1235, %v2490, %v2491
      %v2525 = vsel %vm1235, %v2489, %v2490
      %v2526 = vsel %vm1235, %v2488, %v2489
      %v2527 = vsel %vm1235, %v2487, %v2488
      %v2528 = vsel %vm1235, %v2486, %v2487
      %v2529 = vsel %vm1235, %v2485, %v2486
      %v2530 = vsel %vm1235, %v2484, %v2485
      %v2531 = vsel %vm1235, %v2483, %v2484
      %v2532 = vsel %vm1235, %v2482, %v2483
      %v2533 = vsel %vm1235, %v2481, %v2482
      %v2534 = vsel %vm1235, %v2480, %v2481
      %v2535 = vsel %vm1235, %v2479, %v2480
      %v2536 = vsel %vm1235, %v2478, %v2479
      %v2537 = vsel %vm1235, %v2477, %v2478
      %v2538 = vsel %vm1235, %v2476, %v2477
      %v2539 = vsel %vm1235, %v2475, %v2476
      %v2540 = vsel %vm1235, %v2474, %v2475
      %v2541 = vsel %vm1235, %v2473, %v2474
      %v2542 = vsel %vm1235, %v2472, %v2473
      %v2543 = vsel %vm1235, %v2471, %v2472
      %v2544 = vsel %vm1235, %v2470, %v2471
      %v2545 = vsel %vm1235, %v2469, %v2470
      %v2546 = vsel %vm1235, %v2468, %v2469
      %v2547 = vsel %vm1235, %v2467, %v2468
      %v2548 = vsel %vm1235, %v2466, %v2467
      %v2549 = vsel %vm1235, %v2465, %v2466
      %v2550 = vsel %vm1235, %v2464, %v2465
      %v2551 = vsel %vm1235, %v2463, %v2464
      %v2552 = vsel %vm1235, %v2462, %v2463
      %v2553 = vsel %vm1235, %v2461, %v2462
      %v2554 = vsel %vm1235, %v2460, %v2461
      %v2555 = vsel %vm1235, %v2507, %v2460
      %v2556 = vadd.f32 %v2555, %v2040
      %v2557 = vadd.f32 %v2554, %v2043
      %v2558 = vadd.f32 %v2553, %v2048
      %v2559 = vadd.f32 %v2552, %v2051
      %v2560 = vadd.f32 %v2551, %v2056
      %v2561 = vadd.f32 %v2550, %v2059
      %v2562 = vadd.f32 %v2549, %v2064
      %v2563 = vadd.f32 %v2548, %v2067
      %v2564 = vadd.f32 %v2547, %v2072
      %v2565 = vadd.f32 %v2546, %v2075
      %v2566 = vadd.f32 %v2545, %v2080
      %v2567 = vadd.f32 %v2544, %v2083
      %v2568 = vadd.f32 %v2543, %v2088
      %v2569 = vadd.f32 %v2542, %v2091
      %v2570 = vadd.f32 %v2541, %v2096
      %v2571 = vadd.f32 %v2540, %v2099
      %v2572 = vadd.f32 %v2539, %v2104
      %v2573 = vadd.f32 %v2538, %v2107
      %v2574 = vadd.f32 %v2537, %v2112
      %v2575 = vadd.f32 %v2536, %v2115
      %v2576 = vadd.f32 %v2535, %v2120
      %v2577 = vadd.f32 %v2534, %v2123
      %v2578 = vadd.f32 %v2533, %v2128
      %v2579 = vadd.f32 %v2532, %v2131
      %v2580 = vadd.f32 %v2531, %v2136
      %v2581 = vadd.f32 %v2530, %v2139
      %v2582 = vadd.f32 %v2529, %v2144
      %v2583 = vadd.f32 %v2528, %v2147
      %v2584 = vadd.f32 %v2527, %v2152
      %v2585 = vadd.f32 %v2526, %v2155
      %v2586 = vadd.f32 %v2525, %v2160
      %v2587 = vadd.f32 %v2524, %v2163
      %v2588 = vadd.f32 %v2523, %v2168
      %v2589 = vadd.f32 %v2522, %v2171
      %v2590 = vadd.f32 %v2521, %v2176
      %v2591 = vadd.f32 %v2520, %v2179
      %v2592 = vadd.f32 %v2519, %v2184
      %v2593 = vadd.f32 %v2518, %v2187
      %v2594 = vadd.f32 %v2517, %v2192
      %v2595 = vadd.f32 %v2516, %v2195
      %v2596 = vadd.f32 %v2515, %v2200
      %v2597 = vadd.f32 %v2514, %v2203
      %v2598 = vadd.f32 %v2513, %v2208
      %v2599 = vadd.f32 %v2512, %v2211
      %v2600 = vadd.f32 %v2511, %v2216
      %v2601 = vadd.f32 %v2510, %v2219
      %v2602 = vadd.f32 %v2509, %v2224
      %v2603 = vadd.f32 %v2508, %v2227
      %v2604 = vrot.slane %v2270, 1
      %v2605 = vrot.slane %v2273, 1
      %v2606 = vrot.slane %v2278, 1
      %v2607 = vrot.slane %v2281, 1
      %v2608 = vrot.slane %v2286, 1
      %v2609 = vrot.slane %v2289, 1
      %v2610 = vrot.slane %v2294, 1
      %v2611 = vrot.slane %v2297, 1
      %v2612 = vrot.slane %v2302, 1
      %v2613 = vrot.slane %v2305, 1
      %v2614 = vrot.slane %v2310, 1
      %v2615 = vrot.slane %v2313, 1
      %v2616 = vrot.slane %v2318, 1
      %v2617 = vrot.slane %v2321, 1
      %v2618 = vrot.slane %v2326, 1
      %v2619 = vrot.slane %v2329, 1
      %v2620 = vrot.slane %v2334, 1
      %v2621 = vrot.slane %v2337, 1
      %v2622 = vrot.slane %v2342, 1
      %v2623 = vrot.slane %v2345, 1
      %v2624 = vrot.slane %v2350, 1
      %v2625 = vrot.slane %v2353, 1
      %v2626 = vrot.slane %v2358, 1
      %v2627 = vrot.slane %v2361, 1
      %v2628 = vrot.slane %v2366, 1
      %v2629 = vrot.slane %v2369, 1
      %v2630 = vrot.slane %v2374, 1
      %v2631 = vrot.slane %v2377, 1
      %v2632 = vrot.slane %v2382, 1
      %v2633 = vrot.slane %v2385, 1
      %v2634 = vrot.slane %v2390, 1
      %v2635 = vrot.slane %v2393, 1
      %v2636 = vrot.slane %v2398, 1
      %v2637 = vrot.slane %v2401, 1
      %v2638 = vrot.slane %v2406, 1
      %v2639 = vrot.slane %v2409, 1
      %v2640 = vrot.slane %v2414, 1
      %v2641 = vrot.slane %v2417, 1
      %v2642 = vrot.slane %v2422, 1
      %v2643 = vrot.slane %v2425, 1
      %v2644 = vrot.slane %v2430, 1
      %v2645 = vrot.slane %v2433, 1
      %v2646 = vrot.slane %v2438, 1
      %v2647 = vrot.slane %v2441, 1
      %v2648 = vrot.slane %v2446, 1
      %v2649 = vrot.slane %v2449, 1
      %v2650 = vrot.slane %v2454, 1
      %v2651 = vrot.slane %v2457, 1
      %v2652 = vsel %vm1380, %v2650, %v2651
      %v2653 = vsel %vm1380, %v2649, %v2650
      %v2654 = vsel %vm1380, %v2648, %v2649
      %v2655 = vsel %vm1380, %v2647, %v2648
      %v2656 = vsel %vm1380, %v2646, %v2647
      %v2657 = vsel %vm1380, %v2645, %v2646
      %v2658 = vsel %vm1380, %v2644, %v2645
      %v2659 = vsel %vm1380, %v2643, %v2644
      %v2660 = vsel %vm1380, %v2642, %v2643
      %v2661 = vsel %vm1380, %v2641, %v2642
      %v2662 = vsel %vm1380, %v2640, %v2641
      %v2663 = vsel %vm1380, %v2639, %v2640
      %v2664 = vsel %vm1380, %v2638, %v2639
      %v2665 = vsel %vm1380, %v2637, %v2638
      %v2666 = vsel %vm1380, %v2636, %v2637
      %v2667 = vsel %vm1380, %v2635, %v2636
      %v2668 = vsel %vm1380, %v2634, %v2635
      %v2669 = vsel %vm1380, %v2633, %v2634
      %v2670 = vsel %vm1380, %v2632, %v2633
      %v2671 = vsel %vm1380, %v2631, %v2632
      %v2672 = vsel %vm1380, %v2630, %v2631
      %v2673 = vsel %vm1380, %v2629, %v2630
      %v2674 = vsel %vm1380, %v2628, %v2629
      %v2675 = vsel %vm1380, %v2627, %v2628
      %v2676 = vsel %vm1380, %v2626, %v2627
      %v2677 = vsel %vm1380, %v2625, %v2626
      %v2678 = vsel %vm1380, %v2624, %v2625
      %v2679 = vsel %vm1380, %v2623, %v2624
      %v2680 = vsel %vm1380, %v2622, %v2623
      %v2681 = vsel %vm1380, %v2621, %v2622
      %v2682 = vsel %vm1380, %v2620, %v2621
      %v2683 = vsel %vm1380, %v2619, %v2620
      %v2684 = vsel %vm1380, %v2618, %v2619
      %v2685 = vsel %vm1380, %v2617, %v2618
      %v2686 = vsel %vm1380, %v2616, %v2617
      %v2687 = vsel %vm1380, %v2615, %v2616
      %v2688 = vsel %vm1380, %v2614, %v2615
      %v2689 = vsel %vm1380, %v2613, %v2614
      %v2690 = vsel %vm1380, %v2612, %v2613
      %v2691 = vsel %vm1380, %v2611, %v2612
      %v2692 = vsel %vm1380, %v2610, %v2611
      %v2693 = vsel %vm1380, %v2609, %v2610
      %v2694 = vsel %vm1380, %v2608, %v2609
      %v2695 = vsel %vm1380, %v2607, %v2608
      %v2696 = vsel %vm1380, %v2606, %v2607
      %v2697 = vsel %vm1380, %v2605, %v2606
      %v2698 = vsel %vm1380, %v2604, %v2605
      %v2699 = vsel %vm1380, %v2651, %v2604
      %v2700 = vadd.f32 %v2556, %v2698
      %v2701 = vadd.f32 %v2557, %v2697
      %v2702 = vadd.f32 %v2558, %v2696
      %v2703 = vadd.f32 %v2559, %v2695
      %v2704 = vadd.f32 %v2560, %v2694
      %v2705 = vadd.f32 %v2561, %v2693
      %v2706 = vadd.f32 %v2562, %v2692
      %v2707 = vadd.f32 %v2563, %v2691
      %v2708 = vadd.f32 %v2564, %v2690
      %v2709 = vadd.f32 %v2565, %v2689
      %v2710 = vadd.f32 %v2566, %v2688
      %v2711 = vadd.f32 %v2567, %v2687
      %v2712 = vadd.f32 %v2568, %v2686
      %v2713 = vadd.f32 %v2569, %v2685
      %v2714 = vadd.f32 %v2570, %v2684
      %v2715 = vadd.f32 %v2571, %v2683
      %v2716 = vadd.f32 %v2572, %v2682
      %v2717 = vadd.f32 %v2573, %v2681
      %v2718 = vadd.f32 %v2574, %v2680
      %v2719 = vadd.f32 %v2575, %v2679
      %v2720 = vadd.f32 %v2576, %v2678
      %v2721 = vadd.f32 %v2577, %v2677
      %v2722 = vadd.f32 %v2578, %v2676
      %v2723 = vadd.f32 %v2579, %v2675
      %v2724 = vadd.f32 %v2580, %v2674
      %v2725 = vadd.f32 %v2581, %v2673
      %v2726 = vadd.f32 %v2582, %v2672
      %v2727 = vadd.f32 %v2583, %v2671
      %v2728 = vadd.f32 %v2584, %v2670
      %v2729 = vadd.f32 %v2585, %v2669
      %v2730 = vadd.f32 %v2586, %v2668
      %v2731 = vadd.f32 %v2587, %v2667
      %v2732 = vadd.f32 %v2588, %v2666
      %v2733 = vadd.f32 %v2589, %v2665
      %v2734 = vadd.f32 %v2590, %v2664
      %v2735 = vadd.f32 %v2591, %v2663
      %v2736 = vadd.f32 %v2592, %v2662
      %v2737 = vadd.f32 %v2593, %v2661
      %v2738 = vadd.f32 %v2594, %v2660
      %v2739 = vadd.f32 %v2595, %v2659
      %v2740 = vadd.f32 %v2596, %v2658
      %v2741 = vadd.f32 %v2597, %v2657
      %v2742 = vadd.f32 %v2598, %v2656
      %v2743 = vadd.f32 %v2599, %v2655
      %v2744 = vadd.f32 %v2600, %v2654
      %v2745 = vadd.f32 %v2601, %v2653
      %v2746 = vadd.f32 %v2602, %v2652
      %v2747 = vadd.f32 %v2603, %v2699
      %v2748 = vld [vmem:[#allocation2] sm:$0xff]
      %v2749 = vld [vmem:[#allocation2 + $0x8] sm:$0xff]
      %v2750 = vld [vmem:[#allocation2 + $0x10] sm:$0xff]
      %v2751 = vld [vmem:[#allocation2 + $0x18] sm:$0xff]
      %v2752 = vld [vmem:[#allocation2 + $0x20] sm:$0xff]
      %v2753 = vld [vmem:[#allocation2 + $0x28] sm:$0xff]
      %v2754 = vld [vmem:[#allocation2 + $0x30] sm:$0xff]
      %v2755 = vld [vmem:[#allocation2 + $0x38] sm:$0xff]
      %v2756 = vld [vmem:[#allocation2 + $0x40] sm:$0xff]
      %v2757 = vld [vmem:[#allocation2 + $0x48] sm:$0xff]
      %v2758 = vld [vmem:[#allocation2 + $0x50] sm:$0xff]
      %v2759 = vld [vmem:[#allocation2 + $0x58] sm:$0xff]
      %v2760 = vld [vmem:[#allocation2 + $0x60] sm:$0xff]
      %v2761 = vld [vmem:[#allocation2 + $0x68] sm:$0xff]
      %v2762 = vld [vmem:[#allocation2 + $0x70] sm:$0xff]
      %v2763 = vld [vmem:[#allocation2 + $0x78] sm:$0xff]
      %v2764 = vld [vmem:[#allocation2 + $0x80] sm:$0xff]
      %v2765 = vld [vmem:[#allocation2 + $0x88] sm:$0xff]
      %v2766 = vld [vmem:[#allocation2 + $0x90] sm:$0xff]
      %v2767 = vld [vmem:[#allocation2 + $0x98] sm:$0xff]
      %v2768 = vld [vmem:[#allocation2 + $0xa0] sm:$0xff]
      %v2769 = vld [vmem:[#allocation2 + $0xa8] sm:$0xff]
      %v2770 = vld [vmem:[#allocation2 + $0xb0] sm:$0xff]
      %v2771 = vld [vmem:[#allocation2 + $0xb8] sm:$0xff]
      %v2772 = vld [vmem:[#allocation2 + $0xc0] sm:$0xff]
      %v2773 = vld [vmem:[#allocation2 + $0xc8] sm:$0xff]
      %v2774 = vld [vmem:[#allocation2 + $0xd0] sm:$0xff]
      %v2775 = vld [vmem:[#allocation2 + $0xd8] sm:$0xff]
      %v2776 = vld [vmem:[#allocation2 + $0xe0] sm:$0xff]
      %v2777 = vld [vmem:[#allocation2 + $0xe8] sm:$0xff]
      %v2778 = vld [vmem:[#allocation2 + $0xf0] sm:$0xff]
      %v2779 = vld [vmem:[#allocation2 + $0xf8] sm:$0xff]
      %v2780 = vld [vmem:[#allocation2 + $0x100] sm:$0xff]
      %v2781 = vld [vmem:[#allocation2 + $0x108] sm:$0xff]
      %v2782 = vld [vmem:[#allocation2 + $0x110] sm:$0xff]
      %v2783 = vld [vmem:[#allocation2 + $0x118] sm:$0xff]
      %v2784 = vld [vmem:[#allocation2 + $0x120] sm:$0xff]
      %v2785 = vld [vmem:[#allocation2 + $0x128] sm:$0xff]
      %v2786 = vld [vmem:[#allocation2 + $0x130] sm:$0xff]
      %v2787 = vld [vmem:[#allocation2 + $0x138] sm:$0xff]
      %v2788 = vld [vmem:[#allocation2 + $0x140] sm:$0xff]
      %v2789 = vld [vmem:[#allocation2 + $0x148] sm:$0xff]
      %v2790 = vld [vmem:[#allocation2 + $0x150] sm:$0xff]
      %v2791 = vld [vmem:[#allocation2 + $0x158] sm:$0xff]
      %v2792 = vld [vmem:[#allocation2 + $0x160] sm:$0xff]
      %v2793 = vld [vmem:[#allocation2 + $0x168] sm:$0xff]
      %v2794 = vld [vmem:[#allocation2 + $0x170] sm:$0xff]
      %v2795 = vld [vmem:[#allocation2 + $0x178] sm:$0xff]
      %v2796 = vadd.f32 %v2748, %v2700
      %v2797 = vadd.f32 %v2749, %v2701
      %v2798 = vadd.f32 %v2750, %v2702
      %v2799 = vadd.f32 %v2751, %v2703
      %v2800 = vadd.f32 %v2752, %v2704
      %v2801 = vadd.f32 %v2753, %v2705
      %v2802 = vadd.f32 %v2754, %v2706
      %v2803 = vadd.f32 %v2755, %v2707
      %v2804 = vadd.f32 %v2756, %v2708
      %v2805 = vadd.f32 %v2757, %v2709
      %v2806 = vadd.f32 %v2758, %v2710
      %v2807 = vadd.f32 %v2759, %v2711
      %v2808 = vadd.f32 %v2760, %v2712
      %v2809 = vadd.f32 %v2761, %v2713
      %v2810 = vadd.f32 %v2762, %v2714
      %v2811 = vadd.f32 %v2763, %v2715
      %v2812 = vadd.f32 %v2764, %v2716
      %v2813 = vadd.f32 %v2765, %v2717
      %v2814 = vadd.f32 %v2766, %v2718
      %v2815 = vadd.f32 %v2767, %v2719
      %v2816 = vadd.f32 %v2768, %v2720
      %v2817 = vadd.f32 %v2769, %v2721
      %v2818 = vadd.f32 %v2770, %v2722
      %v2819 = vadd.f32 %v2771, %v2723
      %v2820 = vadd.f32 %v2772, %v2724
      %v2821 = vadd.f32 %v2773, %v2725
      %v2822 = vadd.f32 %v2774, %v2726
      %v2823 = vadd.f32 %v2775, %v2727
      %v2824 = vadd.f32 %v2776, %v2728
      %v2825 = vadd.f32 %v2777, %v2729
      %v2826 = vadd.f32 %v2778, %v2730
      %v2827 = vadd.f32 %v2779, %v2731
      %v2828 = vadd.f32 %v2780, %v2732
      %v2829 = vadd.f32 %v2781, %v2733
      %v2830 = vadd.f32 %v2782, %v2734
      %v2831 = vadd.f32 %v2783, %v2735
      %v2832 = vadd.f32 %v2784, %v2736
      %v2833 = vadd.f32 %v2785, %v2737
      %v2834 = vadd.f32 %v2786, %v2738
      %v2835 = vadd.f32 %v2787, %v2739
      %v2836 = vadd.f32 %v2788, %v2740
      %v2837 = vadd.f32 %v2789, %v2741
      %v2838 = vadd.f32 %v2790, %v2742
      %v2839 = vadd.f32 %v2791, %v2743
      %v2840 = vadd.f32 %v2792, %v2744
      %v2841 = vadd.f32 %v2793, %v2745
      %v2842 = vadd.f32 %v2794, %v2746
      %v2843 = vadd.f32 %v2795, %v2747
      %2844 = vst.msk [vmem:[#allocation2] sm:$0xff] %vm423, %v2796
      %2845 = vst.msk [vmem:[#allocation2 + $0x8] sm:$0xff] %vm423, %v2797
      %2846 = vst.msk [vmem:[#allocation2 + $0x10] sm:$0xff] %vm423, %v2798
      %2847 = vst.msk [vmem:[#allocation2 + $0x18] sm:$0xff] %vm423, %v2799
      %2848 = vst.msk [vmem:[#allocation2 + $0x20] sm:$0xff] %vm423, %v2800
      %2849 = vst.msk [vmem:[#allocation2 + $0x28] sm:$0xff] %vm423, %v2801
      %2850 = vst.msk [vmem:[#allocation2 + $0x30] sm:$0xff] %vm423, %v2802
      %2851 = vst.msk [vmem:[#allocation2 + $0x38] sm:$0xff] %vm423, %v2803
      %2852 = vst.msk [vmem:[#allocation2 + $0x40] sm:$0xff] %vm423, %v2804
      %2853 = vst.msk [vmem:[#allocation2 + $0x48] sm:$0xff] %vm423, %v2805
      %2854 = vst.msk [vmem:[#allocation2 + $0x50] sm:$0xff] %vm423, %v2806
      %2855 = vst.msk [vmem:[#allocation2 + $0x58] sm:$0xff] %vm423, %v2807
      %2856 = vst.msk [vmem:[#allocation2 + $0x60] sm:$0xff] %vm423, %v2808
      %2857 = vst.msk [vmem:[#allocation2 + $0x68] sm:$0xff] %vm423, %v2809
      %2858 = vst.msk [vmem:[#allocation2 + $0x70] sm:$0xff] %vm423, %v2810
      %2859 = vst.msk [vmem:[#allocation2 + $0x78] sm:$0xff] %vm423, %v2811
      %2860 = vst.msk [vmem:[#allocation2 + $0x80] sm:$0xff] %vm423, %v2812
      %2861 = vst.msk [vmem:[#allocation2 + $0x88] sm:$0xff] %vm423, %v2813
      %2862 = vst.msk [vmem:[#allocation2 + $0x90] sm:$0xff] %vm423, %v2814
      %2863 = vst.msk [vmem:[#allocation2 + $0x98] sm:$0xff] %vm423, %v2815
      %2864 = vst.msk [vmem:[#allocation2 + $0xa0] sm:$0xff] %vm423, %v2816
      %2865 = vst.msk [vmem:[#allocation2 + $0xa8] sm:$0xff] %vm423, %v2817
      %2866 = vst.msk [vmem:[#allocation2 + $0xb0] sm:$0xff] %vm423, %v2818
      %2867 = vst.msk [vmem:[#allocation2 + $0xb8] sm:$0xff] %vm423, %v2819
      %2868 = vst.msk [vmem:[#allocation2 + $0xc0] sm:$0xff] %vm423, %v2820
      %2869 = vst.msk [vmem:[#allocation2 + $0xc8] sm:$0xff] %vm423, %v2821
      %2870 = vst.msk [vmem:[#allocation2 + $0xd0] sm:$0xff] %vm423, %v2822
      %2871 = vst.msk [vmem:[#allocation2 + $0xd8] sm:$0xff] %vm423, %v2823
      %2872 = vst.msk [vmem:[#allocation2 + $0xe0] sm:$0xff] %vm423, %v2824
      %2873 = vst.msk [vmem:[#allocation2 + $0xe8] sm:$0xff] %vm423, %v2825
      %2874 = vst.msk [vmem:[#allocation2 + $0xf0] sm:$0xff] %vm423, %v2826
      %2875 = vst.msk [vmem:[#allocation2 + $0xf8] sm:$0xff] %vm423, %v2827
      %2876 = vst.msk [vmem:[#allocation2 + $0x100] sm:$0xff] %vm423, %v2828
      %2877 = vst.msk [vmem:[#allocation2 + $0x108] sm:$0xff] %vm423, %v2829
      %2878 = vst.msk [vmem:[#allocation2 + $0x110] sm:$0xff] %vm423, %v2830
      %2879 = vst.msk [vmem:[#allocation2 + $0x118] sm:$0xff] %vm423, %v2831
      %2880 = vst.msk [vmem:[#allocation2 + $0x120] sm:$0xff] %vm423, %v2832
      %2881 = vst.msk [vmem:[#allocation2 + $0x128] sm:$0xff] %vm423, %v2833
      %2882 = vst.msk [vmem:[#allocation2 + $0x130] sm:$0xff] %vm423, %v2834
      %2883 = vst.msk [vmem:[#allocation2 + $0x138] sm:$0xff] %vm423, %v2835
      %2884 = vst.msk [vmem:[#allocation2 + $0x140] sm:$0xff] %vm423, %v2836
      %2885 = vst.msk [vmem:[#allocation2 + $0x148] sm:$0xff] %vm423, %v2837
      %2886 = vst.msk [vmem:[#allocation2 + $0x150] sm:$0xff] %vm423, %v2838
      %2887 = vst.msk [vmem:[#allocation2 + $0x158] sm:$0xff] %vm423, %v2839
      %2888 = vst.msk [vmem:[#allocation2 + $0x160] sm:$0xff] %vm423, %v2840
      %2889 = vst.msk [vmem:[#allocation2 + $0x168] sm:$0xff] %vm423, %v2841
      %2890 = vst.msk [vmem:[#allocation2 + $0x170] sm:$0xff] %vm423, %v2842
      %2891 = vst.msk [vmem:[#allocation2 + $0x178] sm:$0xff] %vm423, %v2843
      %s2892 = sadd.s32 %s249, 48
      %s2893 = sshra.s32 %s2892, 3
      %s2894 = sand.u32 %s2892, 7
      %s2895 = smul.addr %s2893, 4
      %s2896 = scalar_lea.vmem %s237, %s2895
      %v2897 = vld [vmem:[%s2896] sm:$0xf]
      %v2898 = vld [vmem:[%s2896 + $0x4] sm:$0xf]
      %v2899 = vld [vmem:[%s2896 + $0x8] sm:$0xf]
      %v2900 = vld [vmem:[%s2896 + $0xc] sm:$0xf]
      %v2901 = vld [vmem:[%s2896 + $0x10] sm:$0xf]
      %v2902 = vld [vmem:[%s2896 + $0x14] sm:$0xf]
      %v2903 = vld [vmem:[%s2896 + $0x18] sm:$0xf]
      %v2904 = vld [vmem:[%s2896 + $0x1c] sm:$0xf]
      %v2905 = vld [vmem:[%s2896 + $0x20] sm:$0xf]
      %v2906 = vld [vmem:[%s2896 + $0x24] sm:$0xf]
      %v2907 = vld [vmem:[%s2896 + $0x28] sm:$0xf]
      %v2908 = vld [vmem:[%s2896 + $0x2c] sm:$0xf]
      %v2909 = vld [vmem:[%s2896 + $0x30] sm:$0xf]
      %v2910 = vld [vmem:[%s2896 + $0x34] sm:$0xf]
      %v2911 = vld [vmem:[%s2896 + $0x38] sm:$0xf]
      %v2912 = vld [vmem:[%s2896 + $0x3c] sm:$0xf]
      %v2913 = vld [vmem:[%s2896 + $0x40] sm:$0xf]
      %v2914 = vld [vmem:[%s2896 + $0x44] sm:$0xf]
      %v2915 = vld [vmem:[%s2896 + $0x48] sm:$0xf]
      %v2916 = vld [vmem:[%s2896 + $0x4c] sm:$0xf]
      %v2917 = vld [vmem:[%s2896 + $0x50] sm:$0xf]
      %v2918 = vld [vmem:[%s2896 + $0x54] sm:$0xf]
      %v2919 = vld [vmem:[%s2896 + $0x58] sm:$0xf]
      %v2920 = vld [vmem:[%s2896 + $0x5c] sm:$0xf]
      %v2921 = vld [vmem:[%s2896 + $0x60] sm:$0xf]
      %v2922 = vld [vmem:[%s2896 + $0x64] sm:$0xf]
      %v2923 = vld [vmem:[%s2896 + $0x68] sm:$0xf]
      %v2924 = vld [vmem:[%s2896 + $0x6c] sm:$0xf]
      %v2925 = vld [vmem:[%s2896 + $0x70] sm:$0xf]
      %v2926 = vld [vmem:[%s2896 + $0x74] sm:$0xf]
      %v2927 = vld [vmem:[%s2896 + $0x78] sm:$0xf]
      %v2928 = vld [vmem:[%s2896 + $0x7c] sm:$0xf]
      %v2929 = vld [vmem:[%s2896 + $0x80] sm:$0xf]
      %v2930 = vld [vmem:[%s2896 + $0x84] sm:$0xf]
      %v2931 = vld [vmem:[%s2896 + $0x88] sm:$0xf]
      %v2932 = vld [vmem:[%s2896 + $0x8c] sm:$0xf]
      %v2933 = vld [vmem:[%s2896 + $0x90] sm:$0xf]
      %v2934 = vld [vmem:[%s2896 + $0x94] sm:$0xf]
      %v2935 = vld [vmem:[%s2896 + $0x98] sm:$0xf]
      %v2936 = vld [vmem:[%s2896 + $0x9c] sm:$0xf]
      %v2937 = vld [vmem:[%s2896 + $0xa0] sm:$0xf]
      %v2938 = vld [vmem:[%s2896 + $0xa4] sm:$0xf]
      %v2939 = vld [vmem:[%s2896 + $0xa8] sm:$0xf]
      %v2940 = vld [vmem:[%s2896 + $0xac] sm:$0xf]
      %v2941 = vld [vmem:[%s2896 + $0xb0] sm:$0xf]
      %v2942 = vld [vmem:[%s2896 + $0xb4] sm:$0xf]
      %v2943 = vld [vmem:[%s2896 + $0xb8] sm:$0xf]
      %v2944 = vld [vmem:[%s2896 + $0xbc] sm:$0xf]
      %s2945 = scalar_lea.vmem %s1, 12
      %v2946 = vld [vmem:[%s2945] sm:$0x3]
      %v2995 = vunpack.c.l.b16 %v2897
      %v2996 = vunpack.c.l.b16 %v2898
      %v2997 = vunpack.c.l.b16 %v2899
      %v2998 = vunpack.c.l.b16 %v2900
      %v2999 = vunpack.c.l.b16 %v2901
      %v3000 = vunpack.c.l.b16 %v2902
      %v3001 = vunpack.c.l.b16 %v2903
      %v3002 = vunpack.c.l.b16 %v2904
      %v3003 = vunpack.c.l.b16 %v2905
      %v3004 = vunpack.c.l.b16 %v2906
      %v3005 = vunpack.c.l.b16 %v2907
      %v3006 = vunpack.c.l.b16 %v2908
      %v3007 = vunpack.c.l.b16 %v2909
      %v3008 = vunpack.c.l.b16 %v2910
      %v3009 = vunpack.c.l.b16 %v2911
      %v3010 = vunpack.c.l.b16 %v2912
      %v3011 = vunpack.c.l.b16 %v2913
      %v3012 = vunpack.c.l.b16 %v2914
      %v3013 = vunpack.c.l.b16 %v2915
      %v3014 = vunpack.c.l.b16 %v2916
      %v3015 = vunpack.c.l.b16 %v2917
      %v3016 = vunpack.c.l.b16 %v2918
      %v3017 = vunpack.c.l.b16 %v2919
      %v3018 = vunpack.c.l.b16 %v2920
      %v3019 = vunpack.c.l.b16 %v2921
      %v3020 = vunpack.c.l.b16 %v2922
      %v3021 = vunpack.c.l.b16 %v2923
      %v3022 = vunpack.c.l.b16 %v2924
      %v3023 = vunpack.c.l.b16 %v2925
      %v3024 = vunpack.c.l.b16 %v2926
      %v3025 = vunpack.c.l.b16 %v2927
      %v3026 = vunpack.c.l.b16 %v2928
      %v3027 = vunpack.c.l.b16 %v2929
      %v3028 = vunpack.c.l.b16 %v2930
      %v3029 = vunpack.c.l.b16 %v2931
      %v3030 = vunpack.c.l.b16 %v2932
      %v3031 = vunpack.c.l.b16 %v2933
      %v3032 = vunpack.c.l.b16 %v2934
      %v3033 = vunpack.c.l.b16 %v2935
      %v3034 = vunpack.c.l.b16 %v2936
      %v3035 = vunpack.c.l.b16 %v2937
      %v3036 = vunpack.c.l.b16 %v2938
      %v3037 = vunpack.c.l.b16 %v2939
      %v3038 = vunpack.c.l.b16 %v2940
      %v3039 = vunpack.c.l.b16 %v2941
      %v3040 = vunpack.c.l.b16 %v2942
      %v3041 = vunpack.c.l.b16 %v2943
      %v3042 = vunpack.c.l.b16 %v2944
      %v3043 = vpack.c.b16 %v2996, %v2995
      %v3044 = vpack.c.b16 %v2998, %v2997
      %v3045 = vpack.c.b16 %v3000, %v2999
      %v3046 = vpack.c.b16 %v3002, %v3001
      %v3047 = vpack.c.b16 %v3004, %v3003
      %v3048 = vpack.c.b16 %v3006, %v3005
      %v3049 = vpack.c.b16 %v3008, %v3007
      %v3050 = vpack.c.b16 %v3010, %v3009
      %v3051 = vpack.c.b16 %v3012, %v3011
      %v3052 = vpack.c.b16 %v3014, %v3013
      %v3053 = vpack.c.b16 %v3016, %v3015
      %v3054 = vpack.c.b16 %v3018, %v3017
      %v3055 = vpack.c.b16 %v3020, %v3019
      %v3056 = vpack.c.b16 %v3022, %v3021
      %v3057 = vpack.c.b16 %v3024, %v3023
      %v3058 = vpack.c.b16 %v3026, %v3025
      %v3059 = vpack.c.b16 %v3028, %v3027
      %v3060 = vpack.c.b16 %v3030, %v3029
      %v3061 = vpack.c.b16 %v3032, %v3031
      %v3062 = vpack.c.b16 %v3034, %v3033
      %v3063 = vpack.c.b16 %v3036, %v3035
      %v3064 = vpack.c.b16 %v3038, %v3037
      %v3065 = vpack.c.b16 %v3040, %v3039
      %v3066 = vpack.c.b16 %v3042, %v3041
      %v3068 = vsel %vm423, %v3043, 0
      %v3071 = vsel %vm423, %v3044, 0
      %v3074 = vsel %vm423, %v3045, 0
      %v3077 = vsel %vm423, %v3046, 0
      %v3080 = vsel %vm423, %v3047, 0
      %v3083 = vsel %vm423, %v3048, 0
      %v3086 = vsel %vm423, %v3049, 0
      %v3089 = vsel %vm423, %v3050, 0
      %v3092 = vsel %vm423, %v3051, 0
      %v3095 = vsel %vm423, %v3052, 0
      %v3098 = vsel %vm423, %v3053, 0
      %v3101 = vsel %vm423, %v3054, 0
      %v3104 = vsel %vm423, %v3055, 0
      %v3107 = vsel %vm423, %v3056, 0
      %v3110 = vsel %vm423, %v3057, 0
      %v3113 = vsel %vm423, %v3058, 0
      %v3116 = vsel %vm423, %v3059, 0
      %v3119 = vsel %vm423, %v3060, 0
      %v3122 = vsel %vm423, %v3061, 0
      %v3125 = vsel %vm423, %v3062, 0
      %v3128 = vsel %vm423, %v3063, 0
      %v3131 = vsel %vm423, %v3064, 0
      %v3134 = vsel %vm423, %v3065, 0
      %v3137 = vsel %vm423, %v3066, 0
      %v3140 = vsel %vm496, %v2946, 0
      %3142 = vmatprep.subr.bf16.mxu0 0
      %3143 = vmatpush1.bf16.msra.mxu0 0
      %3144 = vmatprep.subr.bf16.mxu0 0
      %3145 = vmatpush1.bf16.msra.mxu0 0
      %3146 = vmatprep.subr.bf16.mxu0 0
      %3147 = vmatpush1.bf16.msra.mxu0 0
      %3148 = vmatprep.subr.bf16.mxu0 0
      %3149 = vmatpush1.bf16.msra.mxu0 0
      %3150 = vmatprep.subr.bf16.mxu0 0
      %3151 = vmatpush1.bf16.msra.mxu0 0
      %3152 = vmatprep.subr.bf16.mxu0 0
      %3153 = vmatpush1.bf16.msra.mxu0 0
      %3154 = vmatprep.subr.bf16.mxu0 0
      %3155 = vmatpush1.bf16.msra.mxu0 0
      %3156 = vmatprep.subr.bf16.mxu0 0
      %3157 = vmatpush1.bf16.msra.mxu0 %v3140
      %3158 = vmatprep.subr.bf16.mxu0 0
      %3159 = vmatpush2.bf16.msra.mxu0 0
      %3160 = vmatprep.subr.bf16.mxu0 0
      %3161 = vmatpush2.bf16.msra.mxu0 0
      %3162 = vmatprep.subr.bf16.mxu0 0
      %3163 = vmatpush2.bf16.msra.mxu0 0
      %3164 = vmatprep.subr.bf16.mxu0 0
      %3165 = vmatpush2.bf16.msra.mxu0 0
      %3166 = vmatprep.subr.bf16.mxu0 0
      %3167 = vmatpush2.bf16.msra.mxu0 0
      %3168 = vmatprep.subr.bf16.mxu0 0
      %3169 = vmatpush2.bf16.msra.mxu0 0
      %3170 = vmatprep.subr.bf16.mxu0 0
      %3171 = vmatpush2.bf16.msra.mxu0 0
      %3172 = vmatprep.subr.bf16.mxu0 0
      %3173 = vmatpush2.bf16.msra.mxu0 0
      %3174 = vmatprep.mubr.bf16.mxu0 0
      %3175 = vmatmul.mubr.bf16.gmra.mxu0 %v3068
      %v3176 = vpop.f32.mrf.mxu0
      %v3177 = vadd.f32 0.0, %v3176
      %v3178 = vpop.f32.mrf.mxu0
      %v3179 = vpop.f32.mrf.mxu0
      %v3180 = vadd.f32 0.0, %v3179
      %v3181 = vpop.f32.mrf.mxu0
      %3182 = vmatprep.mubr.bf16.mxu0 0
      %3183 = vmatmul.mubr.bf16.gmra.mxu0 %v3071
      %v3184 = vpop.f32.mrf.mxu0
      %v3185 = vadd.f32 0.0, %v3184
      %v3186 = vpop.f32.mrf.mxu0
      %v3187 = vpop.f32.mrf.mxu0
      %v3188 = vadd.f32 0.0, %v3187
      %v3189 = vpop.f32.mrf.mxu0
      %3190 = vmatprep.mubr.bf16.mxu0 0
      %3191 = vmatmul.mubr.bf16.gmra.mxu0 %v3074
      %v3192 = vpop.f32.mrf.mxu0
      %v3193 = vadd.f32 0.0, %v3192
      %v3194 = vpop.f32.mrf.mxu0
      %v3195 = vpop.f32.mrf.mxu0
      %v3196 = vadd.f32 0.0, %v3195
      %v3197 = vpop.f32.mrf.mxu0
      %3198 = vmatprep.mubr.bf16.mxu0 0
      %3199 = vmatmul.mubr.bf16.gmra.mxu0 %v3077
      %v3200 = vpop.f32.mrf.mxu0
      %v3201 = vadd.f32 0.0, %v3200
      %v3202 = vpop.f32.mrf.mxu0
      %v3203 = vpop.f32.mrf.mxu0
      %v3204 = vadd.f32 0.0, %v3203
      %v3205 = vpop.f32.mrf.mxu0
      %3206 = vmatprep.mubr.bf16.mxu0 0
      %3207 = vmatmul.mubr.bf16.gmra.mxu0 %v3080
      %v3208 = vpop.f32.mrf.mxu0
      %v3209 = vadd.f32 0.0, %v3208
      %v3210 = vpop.f32.mrf.mxu0
      %v3211 = vpop.f32.mrf.mxu0
      %v3212 = vadd.f32 0.0, %v3211
      %v3213 = vpop.f32.mrf.mxu0
      %3214 = vmatprep.mubr.bf16.mxu0 0
      %3215 = vmatmul.mubr.bf16.gmra.mxu0 %v3083
      %v3216 = vpop.f32.mrf.mxu0
      %v3217 = vadd.f32 0.0, %v3216
      %v3218 = vpop.f32.mrf.mxu0
      %v3219 = vpop.f32.mrf.mxu0
      %v3220 = vadd.f32 0.0, %v3219
      %v3221 = vpop.f32.mrf.mxu0
      %3222 = vmatprep.mubr.bf16.mxu0 0
      %3223 = vmatmul.mubr.bf16.gmra.mxu0 %v3086
      %v3224 = vpop.f32.mrf.mxu0
      %v3225 = vadd.f32 0.0, %v3224
      %v3226 = vpop.f32.mrf.mxu0
      %v3227 = vpop.f32.mrf.mxu0
      %v3228 = vadd.f32 0.0, %v3227
      %v3229 = vpop.f32.mrf.mxu0
      %3230 = vmatprep.mubr.bf16.mxu0 0
      %3231 = vmatmul.mubr.bf16.gmra.mxu0 %v3089
      %v3232 = vpop.f32.mrf.mxu0
      %v3233 = vadd.f32 0.0, %v3232
      %v3234 = vpop.f32.mrf.mxu0
      %v3235 = vpop.f32.mrf.mxu0
      %v3236 = vadd.f32 0.0, %v3235
      %v3237 = vpop.f32.mrf.mxu0
      %3238 = vmatprep.mubr.bf16.mxu0 0
      %3239 = vmatmul.mubr.bf16.gmra.mxu0 %v3092
      %v3240 = vpop.f32.mrf.mxu0
      %v3241 = vadd.f32 0.0, %v3240
      %v3242 = vpop.f32.mrf.mxu0
      %v3243 = vpop.f32.mrf.mxu0
      %v3244 = vadd.f32 0.0, %v3243
      %v3245 = vpop.f32.mrf.mxu0
      %3246 = vmatprep.mubr.bf16.mxu0 0
      %3247 = vmatmul.mubr.bf16.gmra.mxu0 %v3095
      %v3248 = vpop.f32.mrf.mxu0
      %v3249 = vadd.f32 0.0, %v3248
      %v3250 = vpop.f32.mrf.mxu0
      %v3251 = vpop.f32.mrf.mxu0
      %v3252 = vadd.f32 0.0, %v3251
      %v3253 = vpop.f32.mrf.mxu0
      %3254 = vmatprep.mubr.bf16.mxu0 0
      %3255 = vmatmul.mubr.bf16.gmra.mxu0 %v3098
      %v3256 = vpop.f32.mrf.mxu0
      %v3257 = vadd.f32 0.0, %v3256
      %v3258 = vpop.f32.mrf.mxu0
      %v3259 = vpop.f32.mrf.mxu0
      %v3260 = vadd.f32 0.0, %v3259
      %v3261 = vpop.f32.mrf.mxu0
      %3262 = vmatprep.mubr.bf16.mxu0 0
      %3263 = vmatmul.mubr.bf16.gmra.mxu0 %v3101
      %v3264 = vpop.f32.mrf.mxu0
      %v3265 = vadd.f32 0.0, %v3264
      %v3266 = vpop.f32.mrf.mxu0
      %v3267 = vpop.f32.mrf.mxu0
      %v3268 = vadd.f32 0.0, %v3267
      %v3269 = vpop.f32.mrf.mxu0
      %3270 = vmatprep.mubr.bf16.mxu0 0
      %3271 = vmatmul.mubr.bf16.gmra.mxu0 %v3104
      %v3272 = vpop.f32.mrf.mxu0
      %v3273 = vadd.f32 0.0, %v3272
      %v3274 = vpop.f32.mrf.mxu0
      %v3275 = vpop.f32.mrf.mxu0
      %v3276 = vadd.f32 0.0, %v3275
      %v3277 = vpop.f32.mrf.mxu0
      %3278 = vmatprep.mubr.bf16.mxu0 0
      %3279 = vmatmul.mubr.bf16.gmra.mxu0 %v3107
      %v3280 = vpop.f32.mrf.mxu0
      %v3281 = vadd.f32 0.0, %v3280
      %v3282 = vpop.f32.mrf.mxu0
      %v3283 = vpop.f32.mrf.mxu0
      %v3284 = vadd.f32 0.0, %v3283
      %v3285 = vpop.f32.mrf.mxu0
      %3286 = vmatprep.mubr.bf16.mxu0 0
      %3287 = vmatmul.mubr.bf16.gmra.mxu0 %v3110
      %v3288 = vpop.f32.mrf.mxu0
      %v3289 = vadd.f32 0.0, %v3288
      %v3290 = vpop.f32.mrf.mxu0
      %v3291 = vpop.f32.mrf.mxu0
      %v3292 = vadd.f32 0.0, %v3291
      %v3293 = vpop.f32.mrf.mxu0
      %3294 = vmatprep.mubr.bf16.mxu0 0
      %3295 = vmatmul.mubr.bf16.gmra.mxu0 %v3113
      %v3296 = vpop.f32.mrf.mxu0
      %v3297 = vadd.f32 0.0, %v3296
      %v3298 = vpop.f32.mrf.mxu0
      %v3299 = vpop.f32.mrf.mxu0
      %v3300 = vadd.f32 0.0, %v3299
      %v3301 = vpop.f32.mrf.mxu0
      %3302 = vmatprep.mubr.bf16.mxu0 0
      %3303 = vmatmul.mubr.bf16.gmra.mxu0 %v3116
      %v3304 = vpop.f32.mrf.mxu0
      %v3305 = vadd.f32 0.0, %v3304
      %v3306 = vpop.f32.mrf.mxu0
      %v3307 = vpop.f32.mrf.mxu0
      %v3308 = vadd.f32 0.0, %v3307
      %v3309 = vpop.f32.mrf.mxu0
      %3310 = vmatprep.mubr.bf16.mxu0 0
      %3311 = vmatmul.mubr.bf16.gmra.mxu0 %v3119
      %v3312 = vpop.f32.mrf.mxu0
      %v3313 = vadd.f32 0.0, %v3312
      %v3314 = vpop.f32.mrf.mxu0
      %v3315 = vpop.f32.mrf.mxu0
      %v3316 = vadd.f32 0.0, %v3315
      %v3317 = vpop.f32.mrf.mxu0
      %3318 = vmatprep.mubr.bf16.mxu0 0
      %3319 = vmatmul.mubr.bf16.gmra.mxu0 %v3122
      %v3320 = vpop.f32.mrf.mxu0
      %v3321 = vadd.f32 0.0, %v3320
      %v3322 = vpop.f32.mrf.mxu0
      %v3323 = vpop.f32.mrf.mxu0
      %v3324 = vadd.f32 0.0, %v3323
      %v3325 = vpop.f32.mrf.mxu0
      %3326 = vmatprep.mubr.bf16.mxu0 0
      %3327 = vmatmul.mubr.bf16.gmra.mxu0 %v3125
      %v3328 = vpop.f32.mrf.mxu0
      %v3329 = vadd.f32 0.0, %v3328
      %v3330 = vpop.f32.mrf.mxu0
      %v3331 = vpop.f32.mrf.mxu0
      %v3332 = vadd.f32 0.0, %v3331
      %v3333 = vpop.f32.mrf.mxu0
      %3334 = vmatprep.mubr.bf16.mxu0 0
      %3335 = vmatmul.mubr.bf16.gmra.mxu0 %v3128
      %v3336 = vpop.f32.mrf.mxu0
      %v3337 = vadd.f32 0.0, %v3336
      %v3338 = vpop.f32.mrf.mxu0
      %v3339 = vpop.f32.mrf.mxu0
      %v3340 = vadd.f32 0.0, %v3339
      %v3341 = vpop.f32.mrf.mxu0
      %3342 = vmatprep.mubr.bf16.mxu0 0
      %3343 = vmatmul.mubr.bf16.gmra.mxu0 %v3131
      %v3344 = vpop.f32.mrf.mxu0
      %v3345 = vadd.f32 0.0, %v3344
      %v3346 = vpop.f32.mrf.mxu0
      %v3347 = vpop.f32.mrf.mxu0
      %v3348 = vadd.f32 0.0, %v3347
      %v3349 = vpop.f32.mrf.mxu0
      %3350 = vmatprep.mubr.bf16.mxu0 0
      %3351 = vmatmul.mubr.bf16.gmra.mxu0 %v3134
      %v3352 = vpop.f32.mrf.mxu0
      %v3353 = vadd.f32 0.0, %v3352
      %v3354 = vpop.f32.mrf.mxu0
      %v3355 = vpop.f32.mrf.mxu0
      %v3356 = vadd.f32 0.0, %v3355
      %v3357 = vpop.f32.mrf.mxu0
      %3358 = vmatprep.mubr.bf16.mxu0 0
      %3359 = vmatmul.mubr.bf16.gmra.mxu0 %v3137
      %v3360 = vpop.f32.mrf.mxu0
      %v3361 = vadd.f32 0.0, %v3360
      %v3362 = vpop.f32.mrf.mxu0
      %v3363 = vpop.f32.mrf.mxu0
      %v3364 = vadd.f32 0.0, %v3363
      %v3365 = vpop.f32.mrf.mxu0
      %3366 = vdwg.mxu0
      %s3367 = scalar_lea.vmem %s1, 14
      %v3368 = vld [vmem:[%s3367] sm:$0x3]
      %v3370 = vsel %vm496, %v3368, 0
      %3372 = vmatprep.subr.bf16.mxu0 0
      %3373 = vmatpush1.bf16.msra.mxu0 0
      %3374 = vmatprep.subr.bf16.mxu0 0
      %3375 = vmatpush1.bf16.msra.mxu0 0
      %3376 = vmatprep.subr.bf16.mxu0 0
      %3377 = vmatpush1.bf16.msra.mxu0 0
      %3378 = vmatprep.subr.bf16.mxu0 0
      %3379 = vmatpush1.bf16.msra.mxu0 0
      %3380 = vmatprep.subr.bf16.mxu0 0
      %3381 = vmatpush1.bf16.msra.mxu0 0
      %3382 = vmatprep.subr.bf16.mxu0 0
      %3383 = vmatpush1.bf16.msra.mxu0 0
      %3384 = vmatprep.subr.bf16.mxu0 0
      %3385 = vmatpush1.bf16.msra.mxu0 0
      %3386 = vmatprep.subr.bf16.mxu0 0
      %3387 = vmatpush1.bf16.msra.mxu0 %v3370
      %3388 = vmatprep.subr.bf16.mxu0 0
      %3389 = vmatpush2.bf16.msra.mxu0 0
      %3390 = vmatprep.subr.bf16.mxu0 0
      %3391 = vmatpush2.bf16.msra.mxu0 0
      %3392 = vmatprep.subr.bf16.mxu0 0
      %3393 = vmatpush2.bf16.msra.mxu0 0
      %3394 = vmatprep.subr.bf16.mxu0 0
      %3395 = vmatpush2.bf16.msra.mxu0 0
      %3396 = vmatprep.subr.bf16.mxu0 0
      %3397 = vmatpush2.bf16.msra.mxu0 0
      %3398 = vmatprep.subr.bf16.mxu0 0
      %3399 = vmatpush2.bf16.msra.mxu0 0
      %3400 = vmatprep.subr.bf16.mxu0 0
      %3401 = vmatpush2.bf16.msra.mxu0 0
      %3402 = vmatprep.subr.bf16.mxu0 0
      %3403 = vmatpush2.bf16.msra.mxu0 0
      %3404 = vmatprep.mubr.bf16.mxu0 0
      %3405 = vmatmul.mubr.bf16.gmra.mxu0 %v3068
      %v3406 = vpop.f32.mrf.mxu0
      %v3407 = vadd.f32 0.0, %v3406
      %v3408 = vpop.f32.mrf.mxu0
      %v3409 = vpop.f32.mrf.mxu0
      %v3410 = vadd.f32 0.0, %v3409
      %v3411 = vpop.f32.mrf.mxu0
      %3412 = vmatprep.mubr.bf16.mxu0 0
      %3413 = vmatmul.mubr.bf16.gmra.mxu0 %v3071
      %v3414 = vpop.f32.mrf.mxu0
      %v3415 = vadd.f32 0.0, %v3414
      %v3416 = vpop.f32.mrf.mxu0
      %v3417 = vpop.f32.mrf.mxu0
      %v3418 = vadd.f32 0.0, %v3417
      %v3419 = vpop.f32.mrf.mxu0
      %3420 = vmatprep.mubr.bf16.mxu0 0
      %3421 = vmatmul.mubr.bf16.gmra.mxu0 %v3074
      %v3422 = vpop.f32.mrf.mxu0
      %v3423 = vadd.f32 0.0, %v3422
      %v3424 = vpop.f32.mrf.mxu0
      %v3425 = vpop.f32.mrf.mxu0
      %v3426 = vadd.f32 0.0, %v3425
      %v3427 = vpop.f32.mrf.mxu0
      %3428 = vmatprep.mubr.bf16.mxu0 0
      %3429 = vmatmul.mubr.bf16.gmra.mxu0 %v3077
      %v3430 = vpop.f32.mrf.mxu0
      %v3431 = vadd.f32 0.0, %v3430
      %v3432 = vpop.f32.mrf.mxu0
      %v3433 = vpop.f32.mrf.mxu0
      %v3434 = vadd.f32 0.0, %v3433
      %v3435 = vpop.f32.mrf.mxu0
      %3436 = vmatprep.mubr.bf16.mxu0 0
      %3437 = vmatmul.mubr.bf16.gmra.mxu0 %v3080
      %v3438 = vpop.f32.mrf.mxu0
      %v3439 = vadd.f32 0.0, %v3438
      %v3440 = vpop.f32.mrf.mxu0
      %v3441 = vpop.f32.mrf.mxu0
      %v3442 = vadd.f32 0.0, %v3441
      %v3443 = vpop.f32.mrf.mxu0
      %3444 = vmatprep.mubr.bf16.mxu0 0
      %3445 = vmatmul.mubr.bf16.gmra.mxu0 %v3083
      %v3446 = vpop.f32.mrf.mxu0
      %v3447 = vadd.f32 0.0, %v3446
      %v3448 = vpop.f32.mrf.mxu0
      %v3449 = vpop.f32.mrf.mxu0
      %v3450 = vadd.f32 0.0, %v3449
      %v3451 = vpop.f32.mrf.mxu0
      %3452 = vmatprep.mubr.bf16.mxu0 0
      %3453 = vmatmul.mubr.bf16.gmra.mxu0 %v3086
      %v3454 = vpop.f32.mrf.mxu0
      %v3455 = vadd.f32 0.0, %v3454
      %v3456 = vpop.f32.mrf.mxu0
      %v3457 = vpop.f32.mrf.mxu0
      %v3458 = vadd.f32 0.0, %v3457
      %v3459 = vpop.f32.mrf.mxu0
      %3460 = vmatprep.mubr.bf16.mxu0 0
      %3461 = vmatmul.mubr.bf16.gmra.mxu0 %v3089
      %v3462 = vpop.f32.mrf.mxu0
      %v3463 = vadd.f32 0.0, %v3462
      %v3464 = vpop.f32.mrf.mxu0
      %v3465 = vpop.f32.mrf.mxu0
      %v3466 = vadd.f32 0.0, %v3465
      %v3467 = vpop.f32.mrf.mxu0
      %3468 = vmatprep.mubr.bf16.mxu0 0
      %3469 = vmatmul.mubr.bf16.gmra.mxu0 %v3092
      %v3470 = vpop.f32.mrf.mxu0
      %v3471 = vadd.f32 0.0, %v3470
      %v3472 = vpop.f32.mrf.mxu0
      %v3473 = vpop.f32.mrf.mxu0
      %v3474 = vadd.f32 0.0, %v3473
      %v3475 = vpop.f32.mrf.mxu0
      %3476 = vmatprep.mubr.bf16.mxu0 0
      %3477 = vmatmul.mubr.bf16.gmra.mxu0 %v3095
      %v3478 = vpop.f32.mrf.mxu0
      %v3479 = vadd.f32 0.0, %v3478
      %v3480 = vpop.f32.mrf.mxu0
      %v3481 = vpop.f32.mrf.mxu0
      %v3482 = vadd.f32 0.0, %v3481
      %v3483 = vpop.f32.mrf.mxu0
      %3484 = vmatprep.mubr.bf16.mxu0 0
      %3485 = vmatmul.mubr.bf16.gmra.mxu0 %v3098
      %v3486 = vpop.f32.mrf.mxu0
      %v3487 = vadd.f32 0.0, %v3486
      %v3488 = vpop.f32.mrf.mxu0
      %v3489 = vpop.f32.mrf.mxu0
      %v3490 = vadd.f32 0.0, %v3489
      %v3491 = vpop.f32.mrf.mxu0
      %3492 = vmatprep.mubr.bf16.mxu0 0
      %3493 = vmatmul.mubr.bf16.gmra.mxu0 %v3101
      %v3494 = vpop.f32.mrf.mxu0
      %v3495 = vadd.f32 0.0, %v3494
      %v3496 = vpop.f32.mrf.mxu0
      %v3497 = vpop.f32.mrf.mxu0
      %v3498 = vadd.f32 0.0, %v3497
      %v3499 = vpop.f32.mrf.mxu0
      %3500 = vmatprep.mubr.bf16.mxu0 0
      %3501 = vmatmul.mubr.bf16.gmra.mxu0 %v3104
      %v3502 = vpop.f32.mrf.mxu0
      %v3503 = vadd.f32 0.0, %v3502
      %v3504 = vpop.f32.mrf.mxu0
      %v3505 = vpop.f32.mrf.mxu0
      %v3506 = vadd.f32 0.0, %v3505
      %v3507 = vpop.f32.mrf.mxu0
      %3508 = vmatprep.mubr.bf16.mxu0 0
      %3509 = vmatmul.mubr.bf16.gmra.mxu0 %v3107
      %v3510 = vpop.f32.mrf.mxu0
      %v3511 = vadd.f32 0.0, %v3510
      %v3512 = vpop.f32.mrf.mxu0
      %v3513 = vpop.f32.mrf.mxu0
      %v3514 = vadd.f32 0.0, %v3513
      %v3515 = vpop.f32.mrf.mxu0
      %3516 = vmatprep.mubr.bf16.mxu0 0
      %3517 = vmatmul.mubr.bf16.gmra.mxu0 %v3110
      %v3518 = vpop.f32.mrf.mxu0
      %v3519 = vadd.f32 0.0, %v3518
      %v3520 = vpop.f32.mrf.mxu0
      %v3521 = vpop.f32.mrf.mxu0
      %v3522 = vadd.f32 0.0, %v3521
      %v3523 = vpop.f32.mrf.mxu0
      %3524 = vmatprep.mubr.bf16.mxu0 0
      %3525 = vmatmul.mubr.bf16.gmra.mxu0 %v3113
      %v3526 = vpop.f32.mrf.mxu0
      %v3527 = vadd.f32 0.0, %v3526
      %v3528 = vpop.f32.mrf.mxu0
      %v3529 = vpop.f32.mrf.mxu0
      %v3530 = vadd.f32 0.0, %v3529
      %v3531 = vpop.f32.mrf.mxu0
      %3532 = vmatprep.mubr.bf16.mxu0 0
      %3533 = vmatmul.mubr.bf16.gmra.mxu0 %v3116
      %v3534 = vpop.f32.mrf.mxu0
      %v3535 = vadd.f32 0.0, %v3534
      %v3536 = vpop.f32.mrf.mxu0
      %v3537 = vpop.f32.mrf.mxu0
      %v3538 = vadd.f32 0.0, %v3537
      %v3539 = vpop.f32.mrf.mxu0
      %3540 = vmatprep.mubr.bf16.mxu0 0
      %3541 = vmatmul.mubr.bf16.gmra.mxu0 %v3119
      %v3542 = vpop.f32.mrf.mxu0
      %v3543 = vadd.f32 0.0, %v3542
      %v3544 = vpop.f32.mrf.mxu0
      %v3545 = vpop.f32.mrf.mxu0
      %v3546 = vadd.f32 0.0, %v3545
      %v3547 = vpop.f32.mrf.mxu0
      %3548 = vmatprep.mubr.bf16.mxu0 0
      %3549 = vmatmul.mubr.bf16.gmra.mxu0 %v3122
      %v3550 = vpop.f32.mrf.mxu0
      %v3551 = vadd.f32 0.0, %v3550
      %v3552 = vpop.f32.mrf.mxu0
      %v3553 = vpop.f32.mrf.mxu0
      %v3554 = vadd.f32 0.0, %v3553
      %v3555 = vpop.f32.mrf.mxu0
      %3556 = vmatprep.mubr.bf16.mxu0 0
      %3557 = vmatmul.mubr.bf16.gmra.mxu0 %v3125
      %v3558 = vpop.f32.mrf.mxu0
      %v3559 = vadd.f32 0.0, %v3558
      %v3560 = vpop.f32.mrf.mxu0
      %v3561 = vpop.f32.mrf.mxu0
      %v3562 = vadd.f32 0.0, %v3561
      %v3563 = vpop.f32.mrf.mxu0
      %3564 = vmatprep.mubr.bf16.mxu0 0
      %3565 = vmatmul.mubr.bf16.gmra.mxu0 %v3128
      %v3566 = vpop.f32.mrf.mxu0
      %v3567 = vadd.f32 0.0, %v3566
      %v3568 = vpop.f32.mrf.mxu0
      %v3569 = vpop.f32.mrf.mxu0
      %v3570 = vadd.f32 0.0, %v3569
      %v3571 = vpop.f32.mrf.mxu0
      %3572 = vmatprep.mubr.bf16.mxu0 0
      %3573 = vmatmul.mubr.bf16.gmra.mxu0 %v3131
      %v3574 = vpop.f32.mrf.mxu0
      %v3575 = vadd.f32 0.0, %v3574
      %v3576 = vpop.f32.mrf.mxu0
      %v3577 = vpop.f32.mrf.mxu0
      %v3578 = vadd.f32 0.0, %v3577
      %v3579 = vpop.f32.mrf.mxu0
      %3580 = vmatprep.mubr.bf16.mxu0 0
      %3581 = vmatmul.mubr.bf16.gmra.mxu0 %v3134
      %v3582 = vpop.f32.mrf.mxu0
      %v3583 = vadd.f32 0.0, %v3582
      %v3584 = vpop.f32.mrf.mxu0
      %v3585 = vpop.f32.mrf.mxu0
      %v3586 = vadd.f32 0.0, %v3585
      %v3587 = vpop.f32.mrf.mxu0
      %3588 = vmatprep.mubr.bf16.mxu0 0
      %3589 = vmatmul.mubr.bf16.gmra.mxu0 %v3137
      %v3590 = vpop.f32.mrf.mxu0
      %v3591 = vadd.f32 0.0, %v3590
      %v3592 = vpop.f32.mrf.mxu0
      %v3593 = vpop.f32.mrf.mxu0
      %v3594 = vadd.f32 0.0, %v3593
      %v3595 = vpop.f32.mrf.mxu0
      %3596 = vdwg.mxu0
      %s3597 = scalar_lea.vmem %s1, 16
      %v3598 = vld [vmem:[%s3597] sm:$0x3]
      %v3600 = vsel %vm496, %v3598, 0
      %3602 = vmatprep.subr.bf16.mxu0 0
      %3603 = vmatpush1.bf16.msra.mxu0 0
      %3604 = vmatprep.subr.bf16.mxu0 0
      %3605 = vmatpush1.bf16.msra.mxu0 0
      %3606 = vmatprep.subr.bf16.mxu0 0
      %3607 = vmatpush1.bf16.msra.mxu0 0
      %3608 = vmatprep.subr.bf16.mxu0 0
      %3609 = vmatpush1.bf16.msra.mxu0 0
      %3610 = vmatprep.subr.bf16.mxu0 0
      %3611 = vmatpush1.bf16.msra.mxu0 0
      %3612 = vmatprep.subr.bf16.mxu0 0
      %3613 = vmatpush1.bf16.msra.mxu0 0
      %3614 = vmatprep.subr.bf16.mxu0 0
      %3615 = vmatpush1.bf16.msra.mxu0 0
      %3616 = vmatprep.subr.bf16.mxu0 0
      %3617 = vmatpush1.bf16.msra.mxu0 %v3600
      %3618 = vmatprep.subr.bf16.mxu0 0
      %3619 = vmatpush2.bf16.msra.mxu0 0
      %3620 = vmatprep.subr.bf16.mxu0 0
      %3621 = vmatpush2.bf16.msra.mxu0 0
      %3622 = vmatprep.subr.bf16.mxu0 0
      %3623 = vmatpush2.bf16.msra.mxu0 0
      %3624 = vmatprep.subr.bf16.mxu0 0
      %3625 = vmatpush2.bf16.msra.mxu0 0
      %3626 = vmatprep.subr.bf16.mxu0 0
      %3627 = vmatpush2.bf16.msra.mxu0 0
      %3628 = vmatprep.subr.bf16.mxu0 0
      %3629 = vmatpush2.bf16.msra.mxu0 0
      %3630 = vmatprep.subr.bf16.mxu0 0
      %3631 = vmatpush2.bf16.msra.mxu0 0
      %3632 = vmatprep.subr.bf16.mxu0 0
      %3633 = vmatpush2.bf16.msra.mxu0 0
      %3634 = vmatprep.mubr.bf16.mxu0 0
      %3635 = vmatmul.mubr.bf16.gmra.mxu0 %v3068
      %v3636 = vpop.f32.mrf.mxu0
      %v3637 = vadd.f32 0.0, %v3636
      %v3638 = vpop.f32.mrf.mxu0
      %v3639 = vpop.f32.mrf.mxu0
      %v3640 = vadd.f32 0.0, %v3639
      %v3641 = vpop.f32.mrf.mxu0
      %3642 = vmatprep.mubr.bf16.mxu0 0
      %3643 = vmatmul.mubr.bf16.gmra.mxu0 %v3071
      %v3644 = vpop.f32.mrf.mxu0
      %v3645 = vadd.f32 0.0, %v3644
      %v3646 = vpop.f32.mrf.mxu0
      %v3647 = vpop.f32.mrf.mxu0
      %v3648 = vadd.f32 0.0, %v3647
      %v3649 = vpop.f32.mrf.mxu0
      %3650 = vmatprep.mubr.bf16.mxu0 0
      %3651 = vmatmul.mubr.bf16.gmra.mxu0 %v3074
      %v3652 = vpop.f32.mrf.mxu0
      %v3653 = vadd.f32 0.0, %v3652
      %v3654 = vpop.f32.mrf.mxu0
      %v3655 = vpop.f32.mrf.mxu0
      %v3656 = vadd.f32 0.0, %v3655
      %v3657 = vpop.f32.mrf.mxu0
      %3658 = vmatprep.mubr.bf16.mxu0 0
      %3659 = vmatmul.mubr.bf16.gmra.mxu0 %v3077
      %v3660 = vpop.f32.mrf.mxu0
      %v3661 = vadd.f32 0.0, %v3660
      %v3662 = vpop.f32.mrf.mxu0
      %v3663 = vpop.f32.mrf.mxu0
      %v3664 = vadd.f32 0.0, %v3663
      %v3665 = vpop.f32.mrf.mxu0
      %3666 = vmatprep.mubr.bf16.mxu0 0
      %3667 = vmatmul.mubr.bf16.gmra.mxu0 %v3080
      %v3668 = vpop.f32.mrf.mxu0
      %v3669 = vadd.f32 0.0, %v3668
      %v3670 = vpop.f32.mrf.mxu0
      %v3671 = vpop.f32.mrf.mxu0
      %v3672 = vadd.f32 0.0, %v3671
      %v3673 = vpop.f32.mrf.mxu0
      %3674 = vmatprep.mubr.bf16.mxu0 0
      %3675 = vmatmul.mubr.bf16.gmra.mxu0 %v3083
      %v3676 = vpop.f32.mrf.mxu0
      %v3677 = vadd.f32 0.0, %v3676
      %v3678 = vpop.f32.mrf.mxu0
      %v3679 = vpop.f32.mrf.mxu0
      %v3680 = vadd.f32 0.0, %v3679
      %v3681 = vpop.f32.mrf.mxu0
      %3682 = vmatprep.mubr.bf16.mxu0 0
      %3683 = vmatmul.mubr.bf16.gmra.mxu0 %v3086
      %v3684 = vpop.f32.mrf.mxu0
      %v3685 = vadd.f32 0.0, %v3684
      %v3686 = vpop.f32.mrf.mxu0
      %v3687 = vpop.f32.mrf.mxu0
      %v3688 = vadd.f32 0.0, %v3687
      %v3689 = vpop.f32.mrf.mxu0
      %3690 = vmatprep.mubr.bf16.mxu0 0
      %3691 = vmatmul.mubr.bf16.gmra.mxu0 %v3089
      %v3692 = vpop.f32.mrf.mxu0
      %v3693 = vadd.f32 0.0, %v3692
      %v3694 = vpop.f32.mrf.mxu0
      %v3695 = vpop.f32.mrf.mxu0
      %v3696 = vadd.f32 0.0, %v3695
      %v3697 = vpop.f32.mrf.mxu0
      %3698 = vmatprep.mubr.bf16.mxu0 0
      %3699 = vmatmul.mubr.bf16.gmra.mxu0 %v3092
      %v3700 = vpop.f32.mrf.mxu0
      %v3701 = vadd.f32 0.0, %v3700
      %v3702 = vpop.f32.mrf.mxu0
      %v3703 = vpop.f32.mrf.mxu0
      %v3704 = vadd.f32 0.0, %v3703
      %v3705 = vpop.f32.mrf.mxu0
      %3706 = vmatprep.mubr.bf16.mxu0 0
      %3707 = vmatmul.mubr.bf16.gmra.mxu0 %v3095
      %v3708 = vpop.f32.mrf.mxu0
      %v3709 = vadd.f32 0.0, %v3708
      %v3710 = vpop.f32.mrf.mxu0
      %v3711 = vpop.f32.mrf.mxu0
      %v3712 = vadd.f32 0.0, %v3711
      %v3713 = vpop.f32.mrf.mxu0
      %3714 = vmatprep.mubr.bf16.mxu0 0
      %3715 = vmatmul.mubr.bf16.gmra.mxu0 %v3098
      %v3716 = vpop.f32.mrf.mxu0
      %v3717 = vadd.f32 0.0, %v3716
      %v3718 = vpop.f32.mrf.mxu0
      %v3719 = vpop.f32.mrf.mxu0
      %v3720 = vadd.f32 0.0, %v3719
      %v3721 = vpop.f32.mrf.mxu0
      %3722 = vmatprep.mubr.bf16.mxu0 0
      %3723 = vmatmul.mubr.bf16.gmra.mxu0 %v3101
      %v3724 = vpop.f32.mrf.mxu0
      %v3725 = vadd.f32 0.0, %v3724
      %v3726 = vpop.f32.mrf.mxu0
      %v3727 = vpop.f32.mrf.mxu0
      %v3728 = vadd.f32 0.0, %v3727
      %v3729 = vpop.f32.mrf.mxu0
      %3730 = vmatprep.mubr.bf16.mxu0 0
      %3731 = vmatmul.mubr.bf16.gmra.mxu0 %v3104
      %v3732 = vpop.f32.mrf.mxu0
      %v3733 = vadd.f32 0.0, %v3732
      %v3734 = vpop.f32.mrf.mxu0
      %v3735 = vpop.f32.mrf.mxu0
      %v3736 = vadd.f32 0.0, %v3735
      %v3737 = vpop.f32.mrf.mxu0
      %3738 = vmatprep.mubr.bf16.mxu0 0
      %3739 = vmatmul.mubr.bf16.gmra.mxu0 %v3107
      %v3740 = vpop.f32.mrf.mxu0
      %v3741 = vadd.f32 0.0, %v3740
      %v3742 = vpop.f32.mrf.mxu0
      %v3743 = vpop.f32.mrf.mxu0
      %v3744 = vadd.f32 0.0, %v3743
      %v3745 = vpop.f32.mrf.mxu0
      %3746 = vmatprep.mubr.bf16.mxu0 0
      %3747 = vmatmul.mubr.bf16.gmra.mxu0 %v3110
      %v3748 = vpop.f32.mrf.mxu0
      %v3749 = vadd.f32 0.0, %v3748
      %v3750 = vpop.f32.mrf.mxu0
      %v3751 = vpop.f32.mrf.mxu0
      %v3752 = vadd.f32 0.0, %v3751
      %v3753 = vpop.f32.mrf.mxu0
      %3754 = vmatprep.mubr.bf16.mxu0 0
      %3755 = vmatmul.mubr.bf16.gmra.mxu0 %v3113
      %v3756 = vpop.f32.mrf.mxu0
      %v3757 = vadd.f32 0.0, %v3756
      %v3758 = vpop.f32.mrf.mxu0
      %v3759 = vpop.f32.mrf.mxu0
      %v3760 = vadd.f32 0.0, %v3759
      %v3761 = vpop.f32.mrf.mxu0
      %3762 = vmatprep.mubr.bf16.mxu0 0
      %3763 = vmatmul.mubr.bf16.gmra.mxu0 %v3116
      %v3764 = vpop.f32.mrf.mxu0
      %v3765 = vadd.f32 0.0, %v3764
      %v3766 = vpop.f32.mrf.mxu0
      %v3767 = vpop.f32.mrf.mxu0
      %v3768 = vadd.f32 0.0, %v3767
      %v3769 = vpop.f32.mrf.mxu0
      %3770 = vmatprep.mubr.bf16.mxu0 0
      %3771 = vmatmul.mubr.bf16.gmra.mxu0 %v3119
      %v3772 = vpop.f32.mrf.mxu0
      %v3773 = vadd.f32 0.0, %v3772
      %v3774 = vpop.f32.mrf.mxu0
      %v3775 = vpop.f32.mrf.mxu0
      %v3776 = vadd.f32 0.0, %v3775
      %v3777 = vpop.f32.mrf.mxu0
      %3778 = vmatprep.mubr.bf16.mxu0 0
      %3779 = vmatmul.mubr.bf16.gmra.mxu0 %v3122
      %v3780 = vpop.f32.mrf.mxu0
      %v3781 = vadd.f32 0.0, %v3780
      %v3782 = vpop.f32.mrf.mxu0
      %v3783 = vpop.f32.mrf.mxu0
      %v3784 = vadd.f32 0.0, %v3783
      %v3785 = vpop.f32.mrf.mxu0
      %3786 = vmatprep.mubr.bf16.mxu0 0
      %3787 = vmatmul.mubr.bf16.gmra.mxu0 %v3125
      %v3788 = vpop.f32.mrf.mxu0
      %v3789 = vadd.f32 0.0, %v3788
      %v3790 = vpop.f32.mrf.mxu0
      %v3791 = vpop.f32.mrf.mxu0
      %v3792 = vadd.f32 0.0, %v3791
      %v3793 = vpop.f32.mrf.mxu0
      %3794 = vmatprep.mubr.bf16.mxu0 0
      %3795 = vmatmul.mubr.bf16.gmra.mxu0 %v3128
      %v3796 = vpop.f32.mrf.mxu0
      %v3797 = vadd.f32 0.0, %v3796
      %v3798 = vpop.f32.mrf.mxu0
      %v3799 = vpop.f32.mrf.mxu0
      %v3800 = vadd.f32 0.0, %v3799
      %v3801 = vpop.f32.mrf.mxu0
      %3802 = vmatprep.mubr.bf16.mxu0 0
      %3803 = vmatmul.mubr.bf16.gmra.mxu0 %v3131
      %v3804 = vpop.f32.mrf.mxu0
      %v3805 = vadd.f32 0.0, %v3804
      %v3806 = vpop.f32.mrf.mxu0
      %v3807 = vpop.f32.mrf.mxu0
      %v3808 = vadd.f32 0.0, %v3807
      %v3809 = vpop.f32.mrf.mxu0
      %3810 = vmatprep.mubr.bf16.mxu0 0
      %3811 = vmatmul.mubr.bf16.gmra.mxu0 %v3134
      %v3812 = vpop.f32.mrf.mxu0
      %v3813 = vadd.f32 0.0, %v3812
      %v3814 = vpop.f32.mrf.mxu0
      %v3815 = vpop.f32.mrf.mxu0
      %v3816 = vadd.f32 0.0, %v3815
      %v3817 = vpop.f32.mrf.mxu0
      %3818 = vmatprep.mubr.bf16.mxu0 0
      %3819 = vmatmul.mubr.bf16.gmra.mxu0 %v3137
      %v3820 = vpop.f32.mrf.mxu0
      %v3821 = vadd.f32 0.0, %v3820
      %v3822 = vpop.f32.mrf.mxu0
      %v3823 = vpop.f32.mrf.mxu0
      %v3824 = vadd.f32 0.0, %v3823
      %v3825 = vpop.f32.mrf.mxu0
      %3826 = vdwg.mxu0
      %v3827 = vrot.slane %v3177, 7
      %v3828 = vrot.slane %v3180, 7
      %v3829 = vrot.slane %v3185, 7
      %v3830 = vrot.slane %v3188, 7
      %v3831 = vrot.slane %v3193, 7
      %v3832 = vrot.slane %v3196, 7
      %v3833 = vrot.slane %v3201, 7
      %v3834 = vrot.slane %v3204, 7
      %v3835 = vrot.slane %v3209, 7
      %v3836 = vrot.slane %v3212, 7
      %v3837 = vrot.slane %v3217, 7
      %v3838 = vrot.slane %v3220, 7
      %v3839 = vrot.slane %v3225, 7
      %v3840 = vrot.slane %v3228, 7
      %v3841 = vrot.slane %v3233, 7
      %v3842 = vrot.slane %v3236, 7
      %v3843 = vrot.slane %v3241, 7
      %v3844 = vrot.slane %v3244, 7
      %v3845 = vrot.slane %v3249, 7
      %v3846 = vrot.slane %v3252, 7
      %v3847 = vrot.slane %v3257, 7
      %v3848 = vrot.slane %v3260, 7
      %v3849 = vrot.slane %v3265, 7
      %v3850 = vrot.slane %v3268, 7
      %v3851 = vrot.slane %v3273, 7
      %v3852 = vrot.slane %v3276, 7
      %v3853 = vrot.slane %v3281, 7
      %v3854 = vrot.slane %v3284, 7
      %v3855 = vrot.slane %v3289, 7
      %v3856 = vrot.slane %v3292, 7
      %v3857 = vrot.slane %v3297, 7
      %v3858 = vrot.slane %v3300, 7
      %v3859 = vrot.slane %v3305, 7
      %v3860 = vrot.slane %v3308, 7
      %v3861 = vrot.slane %v3313, 7
      %v3862 = vrot.slane %v3316, 7
      %v3863 = vrot.slane %v3321, 7
      %v3864 = vrot.slane %v3324, 7
      %v3865 = vrot.slane %v3329, 7
      %v3866 = vrot.slane %v3332, 7
      %v3867 = vrot.slane %v3337, 7
      %v3868 = vrot.slane %v3340, 7
      %v3869 = vrot.slane %v3345, 7
      %v3870 = vrot.slane %v3348, 7
      %v3871 = vrot.slane %v3353, 7
      %v3872 = vrot.slane %v3356, 7
      %v3873 = vrot.slane %v3361, 7
      %v3874 = vrot.slane %v3364, 7
      %v3875 = vsel %vm1235, %v3873, %v3874
      %v3876 = vsel %vm1235, %v3872, %v3873
      %v3877 = vsel %vm1235, %v3871, %v3872
      %v3878 = vsel %vm1235, %v3870, %v3871
      %v3879 = vsel %vm1235, %v3869, %v3870
      %v3880 = vsel %vm1235, %v3868, %v3869
      %v3881 = vsel %vm1235, %v3867, %v3868
      %v3882 = vsel %vm1235, %v3866, %v3867
      %v3883 = vsel %vm1235, %v3865, %v3866
      %v3884 = vsel %vm1235, %v3864, %v3865
      %v3885 = vsel %vm1235, %v3863, %v3864
      %v3886 = vsel %vm1235, %v3862, %v3863
      %v3887 = vsel %vm1235, %v3861, %v3862
      %v3888 = vsel %vm1235, %v3860, %v3861
      %v3889 = vsel %vm1235, %v3859, %v3860
      %v3890 = vsel %vm1235, %v3858, %v3859
      %v3891 = vsel %vm1235, %v3857, %v3858
      %v3892 = vsel %vm1235, %v3856, %v3857
      %v3893 = vsel %vm1235, %v3855, %v3856
      %v3894 = vsel %vm1235, %v3854, %v3855
      %v3895 = vsel %vm1235, %v3853, %v3854
      %v3896 = vsel %vm1235, %v3852, %v3853
      %v3897 = vsel %vm1235, %v3851, %v3852
      %v3898 = vsel %vm1235, %v3850, %v3851
      %v3899 = vsel %vm1235, %v3849, %v3850
      %v3900 = vsel %vm1235, %v3848, %v3849
      %v3901 = vsel %vm1235, %v3847, %v3848
      %v3902 = vsel %vm1235, %v3846, %v3847
      %v3903 = vsel %vm1235, %v3845, %v3846
      %v3904 = vsel %vm1235, %v3844, %v3845
      %v3905 = vsel %vm1235, %v3843, %v3844
      %v3906 = vsel %vm1235, %v3842, %v3843
      %v3907 = vsel %vm1235, %v3841, %v3842
      %v3908 = vsel %vm1235, %v3840, %v3841
      %v3909 = vsel %vm1235, %v3839, %v3840
      %v3910 = vsel %vm1235, %v3838, %v3839
      %v3911 = vsel %vm1235, %v3837, %v3838
      %v3912 = vsel %vm1235, %v3836, %v3837
      %v3913 = vsel %vm1235, %v3835, %v3836
      %v3914 = vsel %vm1235, %v3834, %v3835
      %v3915 = vsel %vm1235, %v3833, %v3834
      %v3916 = vsel %vm1235, %v3832, %v3833
      %v3917 = vsel %vm1235, %v3831, %v3832
      %v3918 = vsel %vm1235, %v3830, %v3831
      %v3919 = vsel %vm1235, %v3829, %v3830
      %v3920 = vsel %vm1235, %v3828, %v3829
      %v3921 = vsel %vm1235, %v3827, %v3828
      %v3922 = vsel %vm1235, %v3874, %v3827
      %v3923 = vadd.f32 %v3922, %v3407
      %v3924 = vadd.f32 %v3921, %v3410
      %v3925 = vadd.f32 %v3920, %v3415
      %v3926 = vadd.f32 %v3919, %v3418
      %v3927 = vadd.f32 %v3918, %v3423
      %v3928 = vadd.f32 %v3917, %v3426
      %v3929 = vadd.f32 %v3916, %v3431
      %v3930 = vadd.f32 %v3915, %v3434
      %v3931 = vadd.f32 %v3914, %v3439
      %v3932 = vadd.f32 %v3913, %v3442
      %v3933 = vadd.f32 %v3912, %v3447
      %v3934 = vadd.f32 %v3911, %v3450
      %v3935 = vadd.f32 %v3910, %v3455
      %v3936 = vadd.f32 %v3909, %v3458
      %v3937 = vadd.f32 %v3908, %v3463
      %v3938 = vadd.f32 %v3907, %v3466
      %v3939 = vadd.f32 %v3906, %v3471
      %v3940 = vadd.f32 %v3905, %v3474
      %v3941 = vadd.f32 %v3904, %v3479
      %v3942 = vadd.f32 %v3903, %v3482
      %v3943 = vadd.f32 %v3902, %v3487
      %v3944 = vadd.f32 %v3901, %v3490
      %v3945 = vadd.f32 %v3900, %v3495
      %v3946 = vadd.f32 %v3899, %v3498
      %v3947 = vadd.f32 %v3898, %v3503
      %v3948 = vadd.f32 %v3897, %v3506
      %v3949 = vadd.f32 %v3896, %v3511
      %v3950 = vadd.f32 %v3895, %v3514
      %v3951 = vadd.f32 %v3894, %v3519
      %v3952 = vadd.f32 %v3893, %v3522
      %v3953 = vadd.f32 %v3892, %v3527
      %v3954 = vadd.f32 %v3891, %v3530
      %v3955 = vadd.f32 %v3890, %v3535
      %v3956 = vadd.f32 %v3889, %v3538
      %v3957 = vadd.f32 %v3888, %v3543
      %v3958 = vadd.f32 %v3887, %v3546
      %v3959 = vadd.f32 %v3886, %v3551
      %v3960 = vadd.f32 %v3885, %v3554
      %v3961 = vadd.f32 %v3884, %v3559
      %v3962 = vadd.f32 %v3883, %v3562
      %v3963 = vadd.f32 %v3882, %v3567
      %v3964 = vadd.f32 %v3881, %v3570
      %v3965 = vadd.f32 %v3880, %v3575
      %v3966 = vadd.f32 %v3879, %v3578
      %v3967 = vadd.f32 %v3878, %v3583
      %v3968 = vadd.f32 %v3877, %v3586
      %v3969 = vadd.f32 %v3876, %v3591
      %v3970 = vadd.f32 %v3875, %v3594
      %v3971 = vrot.slane %v3637, 1
      %v3972 = vrot.slane %v3640, 1
      %v3973 = vrot.slane %v3645, 1
      %v3974 = vrot.slane %v3648, 1
      %v3975 = vrot.slane %v3653, 1
      %v3976 = vrot.slane %v3656, 1
      %v3977 = vrot.slane %v3661, 1
      %v3978 = vrot.slane %v3664, 1
      %v3979 = vrot.slane %v3669, 1
      %v3980 = vrot.slane %v3672, 1
      %v3981 = vrot.slane %v3677, 1
      %v3982 = vrot.slane %v3680, 1
      %v3983 = vrot.slane %v3685, 1
      %v3984 = vrot.slane %v3688, 1
      %v3985 = vrot.slane %v3693, 1
      %v3986 = vrot.slane %v3696, 1
      %v3987 = vrot.slane %v3701, 1
      %v3988 = vrot.slane %v3704, 1
      %v3989 = vrot.slane %v3709, 1
      %v3990 = vrot.slane %v3712, 1
      %v3991 = vrot.slane %v3717, 1
      %v3992 = vrot.slane %v3720, 1
      %v3993 = vrot.slane %v3725, 1
      %v3994 = vrot.slane %v3728, 1
      %v3995 = vrot.slane %v3733, 1
      %v3996 = vrot.slane %v3736, 1
      %v3997 = vrot.slane %v3741, 1
      %v3998 = vrot.slane %v3744, 1
      %v3999 = vrot.slane %v3749, 1
      %v4000 = vrot.slane %v3752, 1
      %v4001 = vrot.slane %v3757, 1
      %v4002 = vrot.slane %v3760, 1
      %v4003 = vrot.slane %v3765, 1
      %v4004 = vrot.slane %v3768, 1
      %v4005 = vrot.slane %v3773, 1
      %v4006 = vrot.slane %v3776, 1
      %v4007 = vrot.slane %v3781, 1
      %v4008 = vrot.slane %v3784, 1
      %v4009 = vrot.slane %v3789, 1
      %v4010 = vrot.slane %v3792, 1
      %v4011 = vrot.slane %v3797, 1
      %v4012 = vrot.slane %v3800, 1
      %v4013 = vrot.slane %v3805, 1
      %v4014 = vrot.slane %v3808, 1
      %v4015 = vrot.slane %v3813, 1
      %v4016 = vrot.slane %v3816, 1
      %v4017 = vrot.slane %v3821, 1
      %v4018 = vrot.slane %v3824, 1
      %v4019 = vsel %vm1380, %v4017, %v4018
      %v4020 = vsel %vm1380, %v4016, %v4017
      %v4021 = vsel %vm1380, %v4015, %v4016
      %v4022 = vsel %vm1380, %v4014, %v4015
      %v4023 = vsel %vm1380, %v4013, %v4014
      %v4024 = vsel %vm1380, %v4012, %v4013
      %v4025 = vsel %vm1380, %v4011, %v4012
      %v4026 = vsel %vm1380, %v4010, %v4011
      %v4027 = vsel %vm1380, %v4009, %v4010
      %v4028 = vsel %vm1380, %v4008, %v4009
      %v4029 = vsel %vm1380, %v4007, %v4008
      %v4030 = vsel %vm1380, %v4006, %v4007
      %v4031 = vsel %vm1380, %v4005, %v4006
      %v4032 = vsel %vm1380, %v4004, %v4005
      %v4033 = vsel %vm1380, %v4003, %v4004
      %v4034 = vsel %vm1380, %v4002, %v4003
      %v4035 = vsel %vm1380, %v4001, %v4002
      %v4036 = vsel %vm1380, %v4000, %v4001
      %v4037 = vsel %vm1380, %v3999, %v4000
      %v4038 = vsel %vm1380, %v3998, %v3999
      %v4039 = vsel %vm1380, %v3997, %v3998
      %v4040 = vsel %vm1380, %v3996, %v3997
      %v4041 = vsel %vm1380, %v3995, %v3996
      %v4042 = vsel %vm1380, %v3994, %v3995
      %v4043 = vsel %vm1380, %v3993, %v3994
      %v4044 = vsel %vm1380, %v3992, %v3993
      %v4045 = vsel %vm1380, %v3991, %v3992
      %v4046 = vsel %vm1380, %v3990, %v3991
      %v4047 = vsel %vm1380, %v3989, %v3990
      %v4048 = vsel %vm1380, %v3988, %v3989
      %v4049 = vsel %vm1380, %v3987, %v3988
      %v4050 = vsel %vm1380, %v3986, %v3987
      %v4051 = vsel %vm1380, %v3985, %v3986
      %v4052 = vsel %vm1380, %v3984, %v3985
      %v4053 = vsel %vm1380, %v3983, %v3984
      %v4054 = vsel %vm1380, %v3982, %v3983
      %v4055 = vsel %vm1380, %v3981, %v3982
      %v4056 = vsel %vm1380, %v3980, %v3981
      %v4057 = vsel %vm1380, %v3979, %v3980
      %v4058 = vsel %vm1380, %v3978, %v3979
      %v4059 = vsel %vm1380, %v3977, %v3978
      %v4060 = vsel %vm1380, %v3976, %v3977
      %v4061 = vsel %vm1380, %v3975, %v3976
      %v4062 = vsel %vm1380, %v3974, %v3975
      %v4063 = vsel %vm1380, %v3973, %v3974
      %v4064 = vsel %vm1380, %v3972, %v3973
      %v4065 = vsel %vm1380, %v3971, %v3972
      %v4066 = vsel %vm1380, %v4018, %v3971
      %v4067 = vadd.f32 %v3923, %v4065
      %v4068 = vadd.f32 %v3924, %v4064
      %v4069 = vadd.f32 %v3925, %v4063
      %v4070 = vadd.f32 %v3926, %v4062
      %v4071 = vadd.f32 %v3927, %v4061
      %v4072 = vadd.f32 %v3928, %v4060
      %v4073 = vadd.f32 %v3929, %v4059
      %v4074 = vadd.f32 %v3930, %v4058
      %v4075 = vadd.f32 %v3931, %v4057
      %v4076 = vadd.f32 %v3932, %v4056
      %v4077 = vadd.f32 %v3933, %v4055
      %v4078 = vadd.f32 %v3934, %v4054
      %v4079 = vadd.f32 %v3935, %v4053
      %v4080 = vadd.f32 %v3936, %v4052
      %v4081 = vadd.f32 %v3937, %v4051
      %v4082 = vadd.f32 %v3938, %v4050
      %v4083 = vadd.f32 %v3939, %v4049
      %v4084 = vadd.f32 %v3940, %v4048
      %v4085 = vadd.f32 %v3941, %v4047
      %v4086 = vadd.f32 %v3942, %v4046
      %v4087 = vadd.f32 %v3943, %v4045
      %v4088 = vadd.f32 %v3944, %v4044
      %v4089 = vadd.f32 %v3945, %v4043
      %v4090 = vadd.f32 %v3946, %v4042
      %v4091 = vadd.f32 %v3947, %v4041
      %v4092 = vadd.f32 %v3948, %v4040
      %v4093 = vadd.f32 %v3949, %v4039
      %v4094 = vadd.f32 %v3950, %v4038
      %v4095 = vadd.f32 %v3951, %v4037
      %v4096 = vadd.f32 %v3952, %v4036
      %v4097 = vadd.f32 %v3953, %v4035
      %v4098 = vadd.f32 %v3954, %v4034
      %v4099 = vadd.f32 %v3955, %v4033
      %v4100 = vadd.f32 %v3956, %v4032
      %v4101 = vadd.f32 %v3957, %v4031
      %v4102 = vadd.f32 %v3958, %v4030
      %v4103 = vadd.f32 %v3959, %v4029
      %v4104 = vadd.f32 %v3960, %v4028
      %v4105 = vadd.f32 %v3961, %v4027
      %v4106 = vadd.f32 %v3962, %v4026
      %v4107 = vadd.f32 %v3963, %v4025
      %v4108 = vadd.f32 %v3964, %v4024
      %v4109 = vadd.f32 %v3965, %v4023
      %v4110 = vadd.f32 %v3966, %v4022
      %v4111 = vadd.f32 %v3967, %v4021
      %v4112 = vadd.f32 %v3968, %v4020
      %v4113 = vadd.f32 %v3969, %v4019
      %v4114 = vadd.f32 %v3970, %v4066
      %v4115 = vld [vmem:[#allocation2] sm:$0xff]
      %v4116 = vld [vmem:[#allocation2 + $0x8] sm:$0xff]
      %v4117 = vld [vmem:[#allocation2 + $0x10] sm:$0xff]
      %v4118 = vld [vmem:[#allocation2 + $0x18] sm:$0xff]
      %v4119 = vld [vmem:[#allocation2 + $0x20] sm:$0xff]
      %v4120 = vld [vmem:[#allocation2 + $0x28] sm:$0xff]
      %v4121 = vld [vmem:[#allocation2 + $0x30] sm:$0xff]
      %v4122 = vld [vmem:[#allocation2 + $0x38] sm:$0xff]
      %v4123 = vld [vmem:[#allocation2 + $0x40] sm:$0xff]
      %v4124 = vld [vmem:[#allocation2 + $0x48] sm:$0xff]
      %v4125 = vld [vmem:[#allocation2 + $0x50] sm:$0xff]
      %v4126 = vld [vmem:[#allocation2 + $0x58] sm:$0xff]
      %v4127 = vld [vmem:[#allocation2 + $0x60] sm:$0xff]
      %v4128 = vld [vmem:[#allocation2 + $0x68] sm:$0xff]
      %v4129 = vld [vmem:[#allocation2 + $0x70] sm:$0xff]
      %v4130 = vld [vmem:[#allocation2 + $0x78] sm:$0xff]
      %v4131 = vld [vmem:[#allocation2 + $0x80] sm:$0xff]
      %v4132 = vld [vmem:[#allocation2 + $0x88] sm:$0xff]
      %v4133 = vld [vmem:[#allocation2 + $0x90] sm:$0xff]
      %v4134 = vld [vmem:[#allocation2 + $0x98] sm:$0xff]
      %v4135 = vld [vmem:[#allocation2 + $0xa0] sm:$0xff]
      %v4136 = vld [vmem:[#allocation2 + $0xa8] sm:$0xff]
      %v4137 = vld [vmem:[#allocation2 + $0xb0] sm:$0xff]
      %v4138 = vld [vmem:[#allocation2 + $0xb8] sm:$0xff]
      %v4139 = vld [vmem:[#allocation2 + $0xc0] sm:$0xff]
      %v4140 = vld [vmem:[#allocation2 + $0xc8] sm:$0xff]
      %v4141 = vld [vmem:[#allocation2 + $0xd0] sm:$0xff]
      %v4142 = vld [vmem:[#allocation2 + $0xd8] sm:$0xff]
      %v4143 = vld [vmem:[#allocation2 + $0xe0] sm:$0xff]
      %v4144 = vld [vmem:[#allocation2 + $0xe8] sm:$0xff]
      %v4145 = vld [vmem:[#allocation2 + $0xf0] sm:$0xff]
      %v4146 = vld [vmem:[#allocation2 + $0xf8] sm:$0xff]
      %v4147 = vld [vmem:[#allocation2 + $0x100] sm:$0xff]
      %v4148 = vld [vmem:[#allocation2 + $0x108] sm:$0xff]
      %v4149 = vld [vmem:[#allocation2 + $0x110] sm:$0xff]
      %v4150 = vld [vmem:[#allocation2 + $0x118] sm:$0xff]
      %v4151 = vld [vmem:[#allocation2 + $0x120] sm:$0xff]
      %v4152 = vld [vmem:[#allocation2 + $0x128] sm:$0xff]
      %v4153 = vld [vmem:[#allocation2 + $0x130] sm:$0xff]
      %v4154 = vld [vmem:[#allocation2 + $0x138] sm:$0xff]
      %v4155 = vld [vmem:[#allocation2 + $0x140] sm:$0xff]
      %v4156 = vld [vmem:[#allocation2 + $0x148] sm:$0xff]
      %v4157 = vld [vmem:[#allocation2 + $0x150] sm:$0xff]
      %v4158 = vld [vmem:[#allocation2 + $0x158] sm:$0xff]
      %v4159 = vld [vmem:[#allocation2 + $0x160] sm:$0xff]
      %v4160 = vld [vmem:[#allocation2 + $0x168] sm:$0xff]
      %v4161 = vld [vmem:[#allocation2 + $0x170] sm:$0xff]
      %v4162 = vld [vmem:[#allocation2 + $0x178] sm:$0xff]
      %v4163 = vadd.f32 %v4115, %v4067
      %v4164 = vadd.f32 %v4116, %v4068
      %v4165 = vadd.f32 %v4117, %v4069
      %v4166 = vadd.f32 %v4118, %v4070
      %v4167 = vadd.f32 %v4119, %v4071
      %v4168 = vadd.f32 %v4120, %v4072
      %v4169 = vadd.f32 %v4121, %v4073
      %v4170 = vadd.f32 %v4122, %v4074
      %v4171 = vadd.f32 %v4123, %v4075
      %v4172 = vadd.f32 %v4124, %v4076
      %v4173 = vadd.f32 %v4125, %v4077
      %v4174 = vadd.f32 %v4126, %v4078
      %v4175 = vadd.f32 %v4127, %v4079
      %v4176 = vadd.f32 %v4128, %v4080
      %v4177 = vadd.f32 %v4129, %v4081
      %v4178 = vadd.f32 %v4130, %v4082
      %v4179 = vadd.f32 %v4131, %v4083
      %v4180 = vadd.f32 %v4132, %v4084
      %v4181 = vadd.f32 %v4133, %v4085
      %v4182 = vadd.f32 %v4134, %v4086
      %v4183 = vadd.f32 %v4135, %v4087
      %v4184 = vadd.f32 %v4136, %v4088
      %v4185 = vadd.f32 %v4137, %v4089
      %v4186 = vadd.f32 %v4138, %v4090
      %v4187 = vadd.f32 %v4139, %v4091
      %v4188 = vadd.f32 %v4140, %v4092
      %v4189 = vadd.f32 %v4141, %v4093
      %v4190 = vadd.f32 %v4142, %v4094
      %v4191 = vadd.f32 %v4143, %v4095
      %v4192 = vadd.f32 %v4144, %v4096
      %v4193 = vadd.f32 %v4145, %v4097
      %v4194 = vadd.f32 %v4146, %v4098
      %v4195 = vadd.f32 %v4147, %v4099
      %v4196 = vadd.f32 %v4148, %v4100
      %v4197 = vadd.f32 %v4149, %v4101
      %v4198 = vadd.f32 %v4150, %v4102
      %v4199 = vadd.f32 %v4151, %v4103
      %v4200 = vadd.f32 %v4152, %v4104
      %v4201 = vadd.f32 %v4153, %v4105
      %v4202 = vadd.f32 %v4154, %v4106
      %v4203 = vadd.f32 %v4155, %v4107
      %v4204 = vadd.f32 %v4156, %v4108
      %v4205 = vadd.f32 %v4157, %v4109
      %v4206 = vadd.f32 %v4158, %v4110
      %v4207 = vadd.f32 %v4159, %v4111
      %v4208 = vadd.f32 %v4160, %v4112
      %v4209 = vadd.f32 %v4161, %v4113
      %v4210 = vadd.f32 %v4162, %v4114
      %4211 = vst.msk [vmem:[#allocation2] sm:$0xff] %vm423, %v4163
      %4212 = vst.msk [vmem:[#allocation2 + $0x8] sm:$0xff] %vm423, %v4164
      %4213 = vst.msk [vmem:[#allocation2 + $0x10] sm:$0xff] %vm423, %v4165
      %4214 = vst.msk [vmem:[#allocation2 + $0x18] sm:$0xff] %vm423, %v4166
      %4215 = vst.msk [vmem:[#allocation2 + $0x20] sm:$0xff] %vm423, %v4167
      %4216 = vst.msk [vmem:[#allocation2 + $0x28] sm:$0xff] %vm423, %v4168
      %4217 = vst.msk [vmem:[#allocation2 + $0x30] sm:$0xff] %vm423, %v4169
      %4218 = vst.msk [vmem:[#allocation2 + $0x38] sm:$0xff] %vm423, %v4170
      %4219 = vst.msk [vmem:[#allocation2 + $0x40] sm:$0xff] %vm423, %v4171
      %4220 = vst.msk [vmem:[#allocation2 + $0x48] sm:$0xff] %vm423, %v4172
      %4221 = vst.msk [vmem:[#allocation2 + $0x50] sm:$0xff] %vm423, %v4173
      %4222 = vst.msk [vmem:[#allocation2 + $0x58] sm:$0xff] %vm423, %v4174
      %4223 = vst.msk [vmem:[#allocation2 + $0x60] sm:$0xff] %vm423, %v4175
      %4224 = vst.msk [vmem:[#allocation2 + $0x68] sm:$0xff] %vm423, %v4176
      %4225 = vst.msk [vmem:[#allocation2 + $0x70] sm:$0xff] %vm423, %v4177
      %4226 = vst.msk [vmem:[#allocation2 + $0x78] sm:$0xff] %vm423, %v4178
      %4227 = vst.msk [vmem:[#allocation2 + $0x80] sm:$0xff] %vm423, %v4179
      %4228 = vst.msk [vmem:[#allocation2 + $0x88] sm:$0xff] %vm423, %v4180
      %4229 = vst.msk [vmem:[#allocation2 + $0x90] sm:$0xff] %vm423, %v4181
      %4230 = vst.msk [vmem:[#allocation2 + $0x98] sm:$0xff] %vm423, %v4182
      %4231 = vst.msk [vmem:[#allocation2 + $0xa0] sm:$0xff] %vm423, %v4183
      %4232 = vst.msk [vmem:[#allocation2 + $0xa8] sm:$0xff] %vm423, %v4184
      %4233 = vst.msk [vmem:[#allocation2 + $0xb0] sm:$0xff] %vm423, %v4185
      %4234 = vst.msk [vmem:[#allocation2 + $0xb8] sm:$0xff] %vm423, %v4186
      %4235 = vst.msk [vmem:[#allocation2 + $0xc0] sm:$0xff] %vm423, %v4187
      %4236 = vst.msk [vmem:[#allocation2 + $0xc8] sm:$0xff] %vm423, %v4188
      %4237 = vst.msk [vmem:[#allocation2 + $0xd0] sm:$0xff] %vm423, %v4189
      %4238 = vst.msk [vmem:[#allocation2 + $0xd8] sm:$0xff] %vm423, %v4190
      %4239 = vst.msk [vmem:[#allocation2 + $0xe0] sm:$0xff] %vm423, %v4191
      %4240 = vst.msk [vmem:[#allocation2 + $0xe8] sm:$0xff] %vm423, %v4192
      %4241 = vst.msk [vmem:[#allocation2 + $0xf0] sm:$0xff] %vm423, %v4193
      %4242 = vst.msk [vmem:[#allocation2 + $0xf8] sm:$0xff] %vm423, %v4194
      %4243 = vst.msk [vmem:[#allocation2 + $0x100] sm:$0xff] %vm423, %v4195
      %4244 = vst.msk [vmem:[#allocation2 + $0x108] sm:$0xff] %vm423, %v4196
      %4245 = vst.msk [vmem:[#allocation2 + $0x110] sm:$0xff] %vm423, %v4197
      %4246 = vst.msk [vmem:[#allocation2 + $0x118] sm:$0xff] %vm423, %v4198
      %4247 = vst.msk [vmem:[#allocation2 + $0x120] sm:$0xff] %vm423, %v4199
      %4248 = vst.msk [vmem:[#allocation2 + $0x128] sm:$0xff] %vm423, %v4200
      %4249 = vst.msk [vmem:[#allocation2 + $0x130] sm:$0xff] %vm423, %v4201
      %4250 = vst.msk [vmem:[#allocation2 + $0x138] sm:$0xff] %vm423, %v4202
      %4251 = vst.msk [vmem:[#allocation2 + $0x140] sm:$0xff] %vm423, %v4203
      %4252 = vst.msk [vmem:[#allocation2 + $0x148] sm:$0xff] %vm423, %v4204
      %4253 = vst.msk [vmem:[#allocation2 + $0x150] sm:$0xff] %vm423, %v4205
      %4254 = vst.msk [vmem:[#allocation2 + $0x158] sm:$0xff] %vm423, %v4206
      %4255 = vst.msk [vmem:[#allocation2 + $0x160] sm:$0xff] %vm423, %v4207
      %4256 = vst.msk [vmem:[#allocation2 + $0x168] sm:$0xff] %vm423, %v4208
      %4257 = vst.msk [vmem:[#allocation2 + $0x170] sm:$0xff] %vm423, %v4209
      %4258 = vst.msk [vmem:[#allocation2 + $0x178] sm:$0xff] %vm423, %v4210
      %v4259 = vld [vmem:[#allocation2] sm:$0xff]
      %v4260 = vld [vmem:[#allocation2 + $0x8] sm:$0xff]
      %v4261 = vld [vmem:[#allocation2 + $0x10] sm:$0xff]
      %v4262 = vld [vmem:[#allocation2 + $0x18] sm:$0xff]
      %v4263 = vld [vmem:[#allocation2 + $0x20] sm:$0xff]
      %v4264 = vld [vmem:[#allocation2 + $0x28] sm:$0xff]
      %v4265 = vld [vmem:[#allocation2 + $0x30] sm:$0xff]
      %v4266 = vld [vmem:[#allocation2 + $0x38] sm:$0xff]
      %v4267 = vld [vmem:[#allocation2 + $0x40] sm:$0xff]
      %v4268 = vld [vmem:[#allocation2 + $0x48] sm:$0xff]
      %v4269 = vld [vmem:[#allocation2 + $0x50] sm:$0xff]
      %v4270 = vld [vmem:[#allocation2 + $0x58] sm:$0xff]
      %v4271 = vld [vmem:[#allocation2 + $0x60] sm:$0xff]
      %v4272 = vld [vmem:[#allocation2 + $0x68] sm:$0xff]
      %v4273 = vld [vmem:[#allocation2 + $0x70] sm:$0xff]
      %v4274 = vld [vmem:[#allocation2 + $0x78] sm:$0xff]
      %v4275 = vld [vmem:[#allocation2 + $0x80] sm:$0xff]
      %v4276 = vld [vmem:[#allocation2 + $0x88] sm:$0xff]
      %v4277 = vld [vmem:[#allocation2 + $0x90] sm:$0xff]
      %v4278 = vld [vmem:[#allocation2 + $0x98] sm:$0xff]
      %v4279 = vld [vmem:[#allocation2 + $0xa0] sm:$0xff]
      %v4280 = vld [vmem:[#allocation2 + $0xa8] sm:$0xff]
      %v4281 = vld [vmem:[#allocation2 + $0xb0] sm:$0xff]
      %v4282 = vld [vmem:[#allocation2 + $0xb8] sm:$0xff]
      %v4283 = vld [vmem:[#allocation2 + $0xc0] sm:$0xff]
      %v4284 = vld [vmem:[#allocation2 + $0xc8] sm:$0xff]
      %v4285 = vld [vmem:[#allocation2 + $0xd0] sm:$0xff]
      %v4286 = vld [vmem:[#allocation2 + $0xd8] sm:$0xff]
      %v4287 = vld [vmem:[#allocation2 + $0xe0] sm:$0xff]
      %v4288 = vld [vmem:[#allocation2 + $0xe8] sm:$0xff]
      %v4289 = vld [vmem:[#allocation2 + $0xf0] sm:$0xff]
      %v4290 = vld [vmem:[#allocation2 + $0xf8] sm:$0xff]
      %v4291 = vld [vmem:[#allocation2 + $0x100] sm:$0xff]
      %v4292 = vld [vmem:[#allocation2 + $0x108] sm:$0xff]
      %v4293 = vld [vmem:[#allocation2 + $0x110] sm:$0xff]
      %v4294 = vld [vmem:[#allocation2 + $0x118] sm:$0xff]
      %v4295 = vld [vmem:[#allocation2 + $0x120] sm:$0xff]
      %v4296 = vld [vmem:[#allocation2 + $0x128] sm:$0xff]
      %v4297 = vld [vmem:[#allocation2 + $0x130] sm:$0xff]
      %v4298 = vld [vmem:[#allocation2 + $0x138] sm:$0xff]
      %v4299 = vld [vmem:[#allocation2 + $0x140] sm:$0xff]
      %v4300 = vld [vmem:[#allocation2 + $0x148] sm:$0xff]
      %v4301 = vld [vmem:[#allocation2 + $0x150] sm:$0xff]
      %v4302 = vld [vmem:[#allocation2 + $0x158] sm:$0xff]
      %v4303 = vld [vmem:[#allocation2 + $0x160] sm:$0xff]
      %v4304 = vld [vmem:[#allocation2 + $0x168] sm:$0xff]
      %v4305 = vld [vmem:[#allocation2 + $0x170] sm:$0xff]
      %v4306 = vld [vmem:[#allocation2 + $0x178] sm:$0xff]
      %v4307 = vld [vmem:[%s2] sm:$0x1]
      %v4309 = vlaneseq
      %v4310 = vshrl.u32 %v4309, 7
      %v4311 = vsub.s32 0, %v4310
      %v4312 = vrot.slane %v4307, %v4311
      %v4314 = vadd.f32 %v4259, %v4312
      %v4315 = vadd.f32 %v4260, %v4312
      %v4316 = vadd.f32 %v4261, %v4312
      %v4317 = vadd.f32 %v4262, %v4312
      %v4318 = vadd.f32 %v4263, %v4312
      %v4319 = vadd.f32 %v4264, %v4312
      %v4320 = vadd.f32 %v4265, %v4312
      %v4321 = vadd.f32 %v4266, %v4312
      %v4322 = vadd.f32 %v4267, %v4312
      %v4323 = vadd.f32 %v4268, %v4312
      %v4324 = vadd.f32 %v4269, %v4312
      %v4325 = vadd.f32 %v4270, %v4312
      %v4326 = vadd.f32 %v4271, %v4312
      %v4327 = vadd.f32 %v4272, %v4312
      %v4328 = vadd.f32 %v4273, %v4312
      %v4329 = vadd.f32 %v4274, %v4312
      %v4330 = vadd.f32 %v4275, %v4312
      %v4331 = vadd.f32 %v4276, %v4312
      %v4332 = vadd.f32 %v4277, %v4312
      %v4333 = vadd.f32 %v4278, %v4312
      %v4334 = vadd.f32 %v4279, %v4312
      %v4335 = vadd.f32 %v4280, %v4312
      %v4336 = vadd.f32 %v4281, %v4312
      %v4337 = vadd.f32 %v4282, %v4312
      %v4338 = vadd.f32 %v4283, %v4312
      %v4339 = vadd.f32 %v4284, %v4312
      %v4340 = vadd.f32 %v4285, %v4312
      %v4341 = vadd.f32 %v4286, %v4312
      %v4342 = vadd.f32 %v4287, %v4312
      %v4343 = vadd.f32 %v4288, %v4312
      %v4344 = vadd.f32 %v4289, %v4312
      %v4345 = vadd.f32 %v4290, %v4312
      %v4346 = vadd.f32 %v4291, %v4312
      %v4347 = vadd.f32 %v4292, %v4312
      %v4348 = vadd.f32 %v4293, %v4312
      %v4349 = vadd.f32 %v4294, %v4312
      %v4350 = vadd.f32 %v4295, %v4312
      %v4351 = vadd.f32 %v4296, %v4312
      %v4352 = vadd.f32 %v4297, %v4312
      %v4353 = vadd.f32 %v4298, %v4312
      %v4354 = vadd.f32 %v4299, %v4312
      %v4355 = vadd.f32 %v4300, %v4312
      %v4356 = vadd.f32 %v4301, %v4312
      %v4357 = vadd.f32 %v4302, %v4312
      %v4358 = vadd.f32 %v4303, %v4312
      %v4359 = vadd.f32 %v4304, %v4312
      %v4360 = vadd.f32 %v4305, %v4312
      %v4361 = vadd.f32 %v4306, %v4312
      %v4362 = vmax.f32 %v4314, 0.0
      %v4363 = vmax.f32 %v4315, 0.0
      %v4364 = vmax.f32 %v4316, 0.0
      %v4365 = vmax.f32 %v4317, 0.0
      %v4366 = vmax.f32 %v4318, 0.0
      %v4367 = vmax.f32 %v4319, 0.0
      %v4368 = vmax.f32 %v4320, 0.0
      %v4369 = vmax.f32 %v4321, 0.0
      %v4370 = vmax.f32 %v4322, 0.0
      %v4371 = vmax.f32 %v4323, 0.0
      %v4372 = vmax.f32 %v4324, 0.0
      %v4373 = vmax.f32 %v4325, 0.0
      %v4374 = vmax.f32 %v4326, 0.0
      %v4375 = vmax.f32 %v4327, 0.0
      %v4376 = vmax.f32 %v4328, 0.0
      %v4377 = vmax.f32 %v4329, 0.0
      %v4378 = vmax.f32 %v4330, 0.0
      %v4379 = vmax.f32 %v4331, 0.0
      %v4380 = vmax.f32 %v4332, 0.0
      %v4381 = vmax.f32 %v4333, 0.0
      %v4382 = vmax.f32 %v4334, 0.0
      %v4383 = vmax.f32 %v4335, 0.0
      %v4384 = vmax.f32 %v4336, 0.0
      %v4385 = vmax.f32 %v4337, 0.0
      %v4386 = vmax.f32 %v4338, 0.0
      %v4387 = vmax.f32 %v4339, 0.0
      %v4388 = vmax.f32 %v4340, 0.0
      %v4389 = vmax.f32 %v4341, 0.0
      %v4390 = vmax.f32 %v4342, 0.0
      %v4391 = vmax.f32 %v4343, 0.0
      %v4392 = vmax.f32 %v4344, 0.0
      %v4393 = vmax.f32 %v4345, 0.0
      %v4394 = vmax.f32 %v4346, 0.0
      %v4395 = vmax.f32 %v4347, 0.0
      %v4396 = vmax.f32 %v4348, 0.0
      %v4397 = vmax.f32 %v4349, 0.0
      %v4398 = vmax.f32 %v4350, 0.0
      %v4399 = vmax.f32 %v4351, 0.0
      %v4400 = vmax.f32 %v4352, 0.0
      %v4401 = vmax.f32 %v4353, 0.0
      %v4402 = vmax.f32 %v4354, 0.0
      %v4403 = vmax.f32 %v4355, 0.0
      %v4404 = vmax.f32 %v4356, 0.0
      %v4405 = vmax.f32 %v4357, 0.0
      %v4406 = vmax.f32 %v4358, 0.0
      %v4407 = vmax.f32 %v4359, 0.0
      %v4408 = vmax.f32 %v4360, 0.0
      %v4409 = vmax.f32 %v4361, 0.0
      %v4410 = vpack.c.bf16 %v4363, %v4362
      %v4411 = vpack.c.bf16 %v4365, %v4364
      %v4412 = vpack.c.bf16 %v4367, %v4366
      %v4413 = vpack.c.bf16 %v4369, %v4368
      %v4414 = vpack.c.bf16 %v4371, %v4370
      %v4415 = vpack.c.bf16 %v4373, %v4372
      %v4416 = vpack.c.bf16 %v4375, %v4374
      %v4417 = vpack.c.bf16 %v4377, %v4376
      %v4418 = vpack.c.bf16 %v4379, %v4378
      %v4419 = vpack.c.bf16 %v4381, %v4380
      %v4420 = vpack.c.bf16 %v4383, %v4382
      %v4421 = vpack.c.bf16 %v4385, %v4384
      %v4422 = vpack.c.bf16 %v4387, %v4386
      %v4423 = vpack.c.bf16 %v4389, %v4388
      %v4424 = vpack.c.bf16 %v4391, %v4390
      %v4425 = vpack.c.bf16 %v4393, %v4392
      %v4426 = vpack.c.bf16 %v4395, %v4394
      %v4427 = vpack.c.bf16 %v4397, %v4396
      %v4428 = vpack.c.bf16 %v4399, %v4398
      %v4429 = vpack.c.bf16 %v4401, %v4400
      %v4430 = vpack.c.bf16 %v4403, %v4402
      %v4431 = vpack.c.bf16 %v4405, %v4404
      %v4432 = vpack.c.bf16 %v4407, %v4406
      %v4433 = vpack.c.bf16 %v4409, %v4408
      %v4434 = vld [vmem:[%s3] sm:$0x3]
      %v4435 = vld [vmem:[%s4] sm:$0x1]
      %v4437 = vlaneseq
      %v4438 = vshrl.u32 %v4437, 7
      %v4439 = vsub.s32 0, %v4438
      %v4440 = vrot.slane %v4435, %v4439
      %v4443 = vsel %vm423, %v4410, 0
      %v4446 = vsel %vm423, %v4411, 0
      %v4449 = vsel %vm423, %v4412, 0
      %v4452 = vsel %vm423, %v4413, 0
      %v4455 = vsel %vm423, %v4414, 0
      %v4458 = vsel %vm423, %v4415, 0
      %v4461 = vsel %vm423, %v4416, 0
      %v4464 = vsel %vm423, %v4417, 0
      %v4467 = vsel %vm423, %v4418, 0
      %v4470 = vsel %vm423, %v4419, 0
      %v4473 = vsel %vm423, %v4420, 0
      %v4476 = vsel %vm423, %v4421, 0
      %v4479 = vsel %vm423, %v4422, 0
      %v4482 = vsel %vm423, %v4423, 0
      %v4485 = vsel %vm423, %v4424, 0
      %v4488 = vsel %vm423, %v4425, 0
      %v4491 = vsel %vm423, %v4426, 0
      %v4494 = vsel %vm423, %v4427, 0
      %v4497 = vsel %vm423, %v4428, 0
      %v4500 = vsel %vm423, %v4429, 0
      %v4503 = vsel %vm423, %v4430, 0
      %v4506 = vsel %vm423, %v4431, 0
      %v4509 = vsel %vm423, %v4432, 0
      %v4512 = vsel %vm423, %v4433, 0
      %v4515 = vsel %vm496, %v4434, 0
      %4517 = vmatprep.subr.bf16.mxu0 0
      %4518 = vmatpush1.bf16.msra.mxu0 0
      %4519 = vmatprep.subr.bf16.mxu0 0
      %4520 = vmatpush1.bf16.msra.mxu0 0
      %4521 = vmatprep.subr.bf16.mxu0 0
      %4522 = vmatpush1.bf16.msra.mxu0 0
      %4523 = vmatprep.subr.bf16.mxu0 0
      %4524 = vmatpush1.bf16.msra.mxu0 0
      %4525 = vmatprep.subr.bf16.mxu0 0
      %4526 = vmatpush1.bf16.msra.mxu0 0
      %4527 = vmatprep.subr.bf16.mxu0 0
      %4528 = vmatpush1.bf16.msra.mxu0 0
      %4529 = vmatprep.subr.bf16.mxu0 0
      %4530 = vmatpush1.bf16.msra.mxu0 0
      %4531 = vmatprep.subr.bf16.mxu0 0
      %4532 = vmatpush1.bf16.msra.mxu0 %v4515
      %4533 = vmatprep.subr.bf16.mxu0 0
      %4534 = vmatpush2.bf16.msra.mxu0 0
      %4535 = vmatprep.subr.bf16.mxu0 0
      %4536 = vmatpush2.bf16.msra.mxu0 0
      %4537 = vmatprep.subr.bf16.mxu0 0
      %4538 = vmatpush2.bf16.msra.mxu0 0
      %4539 = vmatprep.subr.bf16.mxu0 0
      %4540 = vmatpush2.bf16.msra.mxu0 0
      %4541 = vmatprep.subr.bf16.mxu0 0
      %4542 = vmatpush2.bf16.msra.mxu0 0
      %4543 = vmatprep.subr.bf16.mxu0 0
      %4544 = vmatpush2.bf16.msra.mxu0 0
      %4545 = vmatprep.subr.bf16.mxu0 0
      %4546 = vmatpush2.bf16.msra.mxu0 0
      %4547 = vmatprep.subr.bf16.mxu0 0
      %4548 = vmatpush2.bf16.msra.mxu0 0
      %4549 = vmatprep.mubr.bf16.mxu0 0
      %4550 = vmatmul.mubr.bf16.gmra.mxu0 %v4443
      %v4551 = vpop.f32.mrf.mxu0
      %v4552 = vadd.f32 %v4440, %v4551
      %v4553 = vpop.f32.mrf.mxu0
      %v4554 = vpop.f32.mrf.mxu0
      %v4555 = vadd.f32 %v4440, %v4554
      %v4556 = vpop.f32.mrf.mxu0
      %4557 = vmatprep.mubr.bf16.mxu0 0
      %4558 = vmatmul.mubr.bf16.gmra.mxu0 %v4446
      %v4559 = vpop.f32.mrf.mxu0
      %v4560 = vadd.f32 %v4440, %v4559
      %v4561 = vpop.f32.mrf.mxu0
      %v4562 = vpop.f32.mrf.mxu0
      %v4563 = vadd.f32 %v4440, %v4562
      %v4564 = vpop.f32.mrf.mxu0
      %4565 = vmatprep.mubr.bf16.mxu0 0
      %4566 = vmatmul.mubr.bf16.gmra.mxu0 %v4449
      %v4567 = vpop.f32.mrf.mxu0
      %v4568 = vadd.f32 %v4440, %v4567
      %v4569 = vpop.f32.mrf.mxu0
      %v4570 = vpop.f32.mrf.mxu0
      %v4571 = vadd.f32 %v4440, %v4570
      %v4572 = vpop.f32.mrf.mxu0
      %4573 = vmatprep.mubr.bf16.mxu0 0
      %4574 = vmatmul.mubr.bf16.gmra.mxu0 %v4452
      %v4575 = vpop.f32.mrf.mxu0
      %v4576 = vadd.f32 %v4440, %v4575
      %v4577 = vpop.f32.mrf.mxu0
      %v4578 = vpop.f32.mrf.mxu0
      %v4579 = vadd.f32 %v4440, %v4578
      %v4580 = vpop.f32.mrf.mxu0
      %4581 = vmatprep.mubr.bf16.mxu0 0
      %4582 = vmatmul.mubr.bf16.gmra.mxu0 %v4455
      %v4583 = vpop.f32.mrf.mxu0
      %v4584 = vadd.f32 %v4440, %v4583
      %v4585 = vpop.f32.mrf.mxu0
      %v4586 = vpop.f32.mrf.mxu0
      %v4587 = vadd.f32 %v4440, %v4586
      %v4588 = vpop.f32.mrf.mxu0
      %4589 = vmatprep.mubr.bf16.mxu0 0
      %4590 = vmatmul.mubr.bf16.gmra.mxu0 %v4458
      %v4591 = vpop.f32.mrf.mxu0
      %v4592 = vadd.f32 %v4440, %v4591
      %v4593 = vpop.f32.mrf.mxu0
      %v4594 = vpop.f32.mrf.mxu0
      %v4595 = vadd.f32 %v4440, %v4594
      %v4596 = vpop.f32.mrf.mxu0
      %4597 = vmatprep.mubr.bf16.mxu0 0
      %4598 = vmatmul.mubr.bf16.gmra.mxu0 %v4461
      %v4599 = vpop.f32.mrf.mxu0
      %v4600 = vadd.f32 %v4440, %v4599
      %v4601 = vpop.f32.mrf.mxu0
      %v4602 = vpop.f32.mrf.mxu0
      %v4603 = vadd.f32 %v4440, %v4602
      %v4604 = vpop.f32.mrf.mxu0
      %4605 = vmatprep.mubr.bf16.mxu0 0
      %4606 = vmatmul.mubr.bf16.gmra.mxu0 %v4464
      %v4607 = vpop.f32.mrf.mxu0
      %v4608 = vadd.f32 %v4440, %v4607
      %v4609 = vpop.f32.mrf.mxu0
      %v4610 = vpop.f32.mrf.mxu0
      %v4611 = vadd.f32 %v4440, %v4610
      %v4612 = vpop.f32.mrf.mxu0
      %4613 = vmatprep.mubr.bf16.mxu0 0
      %4614 = vmatmul.mubr.bf16.gmra.mxu0 %v4467
      %v4615 = vpop.f32.mrf.mxu0
      %v4616 = vadd.f32 %v4440, %v4615
      %v4617 = vpop.f32.mrf.mxu0
      %v4618 = vpop.f32.mrf.mxu0
      %v4619 = vadd.f32 %v4440, %v4618
      %v4620 = vpop.f32.mrf.mxu0
      %4621 = vmatprep.mubr.bf16.mxu0 0
      %4622 = vmatmul.mubr.bf16.gmra.mxu0 %v4470
      %v4623 = vpop.f32.mrf.mxu0
      %v4624 = vadd.f32 %v4440, %v4623
      %v4625 = vpop.f32.mrf.mxu0
      %v4626 = vpop.f32.mrf.mxu0
      %v4627 = vadd.f32 %v4440, %v4626
      %v4628 = vpop.f32.mrf.mxu0
      %4629 = vmatprep.mubr.bf16.mxu0 0
      %4630 = vmatmul.mubr.bf16.gmra.mxu0 %v4473
      %v4631 = vpop.f32.mrf.mxu0
      %v4632 = vadd.f32 %v4440, %v4631
      %v4633 = vpop.f32.mrf.mxu0
      %v4634 = vpop.f32.mrf.mxu0
      %v4635 = vadd.f32 %v4440, %v4634
      %v4636 = vpop.f32.mrf.mxu0
      %4637 = vmatprep.mubr.bf16.mxu0 0
      %4638 = vmatmul.mubr.bf16.gmra.mxu0 %v4476
      %v4639 = vpop.f32.mrf.mxu0
      %v4640 = vadd.f32 %v4440, %v4639
      %v4641 = vpop.f32.mrf.mxu0
      %v4642 = vpop.f32.mrf.mxu0
      %v4643 = vadd.f32 %v4440, %v4642
      %v4644 = vpop.f32.mrf.mxu0
      %4645 = vmatprep.mubr.bf16.mxu0 0
      %4646 = vmatmul.mubr.bf16.gmra.mxu0 %v4479
      %v4647 = vpop.f32.mrf.mxu0
      %v4648 = vadd.f32 %v4440, %v4647
      %v4649 = vpop.f32.mrf.mxu0
      %v4650 = vpop.f32.mrf.mxu0
      %v4651 = vadd.f32 %v4440, %v4650
      %v4652 = vpop.f32.mrf.mxu0
      %4653 = vmatprep.mubr.bf16.mxu0 0
      %4654 = vmatmul.mubr.bf16.gmra.mxu0 %v4482
      %v4655 = vpop.f32.mrf.mxu0
      %v4656 = vadd.f32 %v4440, %v4655
      %v4657 = vpop.f32.mrf.mxu0
      %v4658 = vpop.f32.mrf.mxu0
      %v4659 = vadd.f32 %v4440, %v4658
      %v4660 = vpop.f32.mrf.mxu0
      %4661 = vmatprep.mubr.bf16.mxu0 0
      %4662 = vmatmul.mubr.bf16.gmra.mxu0 %v4485
      %v4663 = vpop.f32.mrf.mxu0
      %v4664 = vadd.f32 %v4440, %v4663
      %v4665 = vpop.f32.mrf.mxu0
      %v4666 = vpop.f32.mrf.mxu0
      %v4667 = vadd.f32 %v4440, %v4666
      %v4668 = vpop.f32.mrf.mxu0
      %4669 = vmatprep.mubr.bf16.mxu0 0
      %4670 = vmatmul.mubr.bf16.gmra.mxu0 %v4488
      %v4671 = vpop.f32.mrf.mxu0
      %v4672 = vadd.f32 %v4440, %v4671
      %v4673 = vpop.f32.mrf.mxu0
      %v4674 = vpop.f32.mrf.mxu0
      %v4675 = vadd.f32 %v4440, %v4674
      %v4676 = vpop.f32.mrf.mxu0
      %4677 = vmatprep.mubr.bf16.mxu0 0
      %4678 = vmatmul.mubr.bf16.gmra.mxu0 %v4491
      %v4679 = vpop.f32.mrf.mxu0
      %v4680 = vadd.f32 %v4440, %v4679
      %v4681 = vpop.f32.mrf.mxu0
      %v4682 = vpop.f32.mrf.mxu0
      %v4683 = vadd.f32 %v4440, %v4682
      %v4684 = vpop.f32.mrf.mxu0
      %4685 = vmatprep.mubr.bf16.mxu0 0
      %4686 = vmatmul.mubr.bf16.gmra.mxu0 %v4494
      %v4687 = vpop.f32.mrf.mxu0
      %v4688 = vadd.f32 %v4440, %v4687
      %v4689 = vpop.f32.mrf.mxu0
      %v4690 = vpop.f32.mrf.mxu0
      %v4691 = vadd.f32 %v4440, %v4690
      %v4692 = vpop.f32.mrf.mxu0
      %4693 = vmatprep.mubr.bf16.mxu0 0
      %4694 = vmatmul.mubr.bf16.gmra.mxu0 %v4497
      %v4695 = vpop.f32.mrf.mxu0
      %v4696 = vadd.f32 %v4440, %v4695
      %v4697 = vpop.f32.mrf.mxu0
      %v4698 = vpop.f32.mrf.mxu0
      %v4699 = vadd.f32 %v4440, %v4698
      %v4700 = vpop.f32.mrf.mxu0
      %4701 = vmatprep.mubr.bf16.mxu0 0
      %4702 = vmatmul.mubr.bf16.gmra.mxu0 %v4500
      %v4703 = vpop.f32.mrf.mxu0
      %v4704 = vadd.f32 %v4440, %v4703
      %v4705 = vpop.f32.mrf.mxu0
      %v4706 = vpop.f32.mrf.mxu0
      %v4707 = vadd.f32 %v4440, %v4706
      %v4708 = vpop.f32.mrf.mxu0
      %4709 = vmatprep.mubr.bf16.mxu0 0
      %4710 = vmatmul.mubr.bf16.gmra.mxu0 %v4503
      %v4711 = vpop.f32.mrf.mxu0
      %v4712 = vadd.f32 %v4440, %v4711
      %v4713 = vpop.f32.mrf.mxu0
      %v4714 = vpop.f32.mrf.mxu0
      %v4715 = vadd.f32 %v4440, %v4714
      %v4716 = vpop.f32.mrf.mxu0
      %4717 = vmatprep.mubr.bf16.mxu0 0
      %4718 = vmatmul.mubr.bf16.gmra.mxu0 %v4506
      %v4719 = vpop.f32.mrf.mxu0
      %v4720 = vadd.f32 %v4440, %v4719
      %v4721 = vpop.f32.mrf.mxu0
      %v4722 = vpop.f32.mrf.mxu0
      %v4723 = vadd.f32 %v4440, %v4722
      %v4724 = vpop.f32.mrf.mxu0
      %4725 = vmatprep.mubr.bf16.mxu0 0
      %4726 = vmatmul.mubr.bf16.gmra.mxu0 %v4509
      %v4727 = vpop.f32.mrf.mxu0
      %v4728 = vadd.f32 %v4440, %v4727
      %v4729 = vpop.f32.mrf.mxu0
      %v4730 = vpop.f32.mrf.mxu0
      %v4731 = vadd.f32 %v4440, %v4730
      %v4732 = vpop.f32.mrf.mxu0
      %4733 = vmatprep.mubr.bf16.mxu0 0
      %4734 = vmatmul.mubr.bf16.gmra.mxu0 %v4512
      %v4735 = vpop.f32.mrf.mxu0
      %v4736 = vadd.f32 %v4440, %v4735
      %v4737 = vpop.f32.mrf.mxu0
      %v4738 = vpop.f32.mrf.mxu0
      %v4739 = vadd.f32 %v4440, %v4738
      %v4740 = vpop.f32.mrf.mxu0
      %4741 = vdwg.mxu0
      %v4742 = vpack.c.bf16 %v4555, %v4552
      %v4743 = vpack.c.bf16 %v4563, %v4560
      %v4744 = vpack.c.bf16 %v4571, %v4568
      %v4745 = vpack.c.bf16 %v4579, %v4576
      %v4746 = vpack.c.bf16 %v4587, %v4584
      %v4747 = vpack.c.bf16 %v4595, %v4592
      %v4748 = vpack.c.bf16 %v4603, %v4600
      %v4749 = vpack.c.bf16 %v4611, %v4608
      %v4750 = vpack.c.bf16 %v4619, %v4616
      %v4751 = vpack.c.bf16 %v4627, %v4624
      %v4752 = vpack.c.bf16 %v4635, %v4632
      %v4753 = vpack.c.bf16 %v4643, %v4640
      %v4754 = vpack.c.bf16 %v4651, %v4648
      %v4755 = vpack.c.bf16 %v4659, %v4656
      %v4756 = vpack.c.bf16 %v4667, %v4664
      %v4757 = vpack.c.bf16 %v4675, %v4672
      %v4758 = vpack.c.bf16 %v4683, %v4680
      %v4759 = vpack.c.bf16 %v4691, %v4688
      %v4760 = vpack.c.bf16 %v4699, %v4696
      %v4761 = vpack.c.bf16 %v4707, %v4704
      %v4762 = vpack.c.bf16 %v4715, %v4712
      %v4763 = vpack.c.bf16 %v4723, %v4720
      %v4764 = vpack.c.bf16 %v4731, %v4728
      %v4765 = vpack.c.bf16 %v4739, %v4736
      %v4790 = vunpack.c.l.b16 %v4742
      %v4791 = vunpack.c.h.b16 %v4742
      %v4792 = vunpack.c.l.b16 %v4743
      %v4793 = vunpack.c.h.b16 %v4743
      %v4794 = vunpack.c.l.b16 %v4744
      %v4795 = vunpack.c.h.b16 %v4744
      %v4796 = vunpack.c.l.b16 %v4745
      %v4797 = vunpack.c.h.b16 %v4745
      %v4798 = vunpack.c.l.b16 %v4746
      %v4799 = vunpack.c.h.b16 %v4746
      %v4800 = vunpack.c.l.b16 %v4747
      %v4801 = vunpack.c.h.b16 %v4747
      %v4802 = vunpack.c.l.b16 %v4748
      %v4803 = vunpack.c.h.b16 %v4748
      %v4804 = vunpack.c.l.b16 %v4749
      %v4805 = vunpack.c.h.b16 %v4749
      %v4806 = vunpack.c.l.b16 %v4750
      %v4807 = vunpack.c.h.b16 %v4750
      %v4808 = vunpack.c.l.b16 %v4751
      %v4809 = vunpack.c.h.b16 %v4751
      %v4810 = vunpack.c.l.b16 %v4752
      %v4811 = vunpack.c.h.b16 %v4752
      %v4812 = vunpack.c.l.b16 %v4753
      %v4813 = vunpack.c.h.b16 %v4753
      %v4814 = vunpack.c.l.b16 %v4754
      %v4815 = vunpack.c.h.b16 %v4754
      %v4816 = vunpack.c.l.b16 %v4755
      %v4817 = vunpack.c.h.b16 %v4755
      %v4818 = vunpack.c.l.b16 %v4756
      %v4819 = vunpack.c.h.b16 %v4756
      %v4820 = vunpack.c.l.b16 %v4757
      %v4821 = vunpack.c.h.b16 %v4757
      %v4822 = vunpack.c.l.b16 %v4758
      %v4823 = vunpack.c.h.b16 %v4758
      %v4824 = vunpack.c.l.b16 %v4759
      %v4825 = vunpack.c.h.b16 %v4759
      %v4826 = vunpack.c.l.b16 %v4760
      %v4827 = vunpack.c.h.b16 %v4760
      %v4828 = vunpack.c.l.b16 %v4761
      %v4829 = vunpack.c.h.b16 %v4761
      %v4830 = vunpack.c.l.b16 %v4762
      %v4831 = vunpack.c.h.b16 %v4762
      %v4832 = vunpack.c.l.b16 %v4763
      %v4833 = vunpack.c.h.b16 %v4763
      %v4834 = vunpack.c.l.b16 %v4764
      %v4835 = vunpack.c.h.b16 %v4764
      %v4836 = vunpack.c.l.b16 %v4765
      %v4837 = vunpack.c.h.b16 %v4765
      %v4838 = vpack.c.b16 %v4790, %v4790
      %v4839 = vpack.c.b16 %v4791, %v4791
      %v4840 = vpack.c.b16 %v4792, %v4792
      %v4841 = vpack.c.b16 %v4793, %v4793
      %v4842 = vpack.c.b16 %v4794, %v4794
      %v4843 = vpack.c.b16 %v4795, %v4795
      %v4844 = vpack.c.b16 %v4796, %v4796
      %v4845 = vpack.c.b16 %v4797, %v4797
      %v4846 = vpack.c.b16 %v4798, %v4798
      %v4847 = vpack.c.b16 %v4799, %v4799
      %v4848 = vpack.c.b16 %v4800, %v4800
      %v4849 = vpack.c.b16 %v4801, %v4801
      %v4850 = vpack.c.b16 %v4802, %v4802
      %v4851 = vpack.c.b16 %v4803, %v4803
      %v4852 = vpack.c.b16 %v4804, %v4804
      %v4853 = vpack.c.b16 %v4805, %v4805
      %v4854 = vpack.c.b16 %v4806, %v4806
      %v4855 = vpack.c.b16 %v4807, %v4807
      %v4856 = vpack.c.b16 %v4808, %v4808
      %v4857 = vpack.c.b16 %v4809, %v4809
      %v4858 = vpack.c.b16 %v4810, %v4810
      %v4859 = vpack.c.b16 %v4811, %v4811
      %v4860 = vpack.c.b16 %v4812, %v4812
      %v4861 = vpack.c.b16 %v4813, %v4813
      %v4862 = vpack.c.b16 %v4814, %v4814
      %v4863 = vpack.c.b16 %v4815, %v4815
      %v4864 = vpack.c.b16 %v4816, %v4816
      %v4865 = vpack.c.b16 %v4817, %v4817
      %v4866 = vpack.c.b16 %v4818, %v4818
      %v4867 = vpack.c.b16 %v4819, %v4819
      %v4868 = vpack.c.b16 %v4820, %v4820
      %v4869 = vpack.c.b16 %v4821, %v4821
      %v4870 = vpack.c.b16 %v4822, %v4822
      %v4871 = vpack.c.b16 %v4823, %v4823
      %v4872 = vpack.c.b16 %v4824, %v4824
      %v4873 = vpack.c.b16 %v4825, %v4825
      %v4874 = vpack.c.b16 %v4826, %v4826
      %v4875 = vpack.c.b16 %v4827, %v4827
      %v4876 = vpack.c.b16 %v4828, %v4828
      %v4877 = vpack.c.b16 %v4829, %v4829
      %v4878 = vpack.c.b16 %v4830, %v4830
      %v4879 = vpack.c.b16 %v4831, %v4831
      %v4880 = vpack.c.b16 %v4832, %v4832
      %v4881 = vpack.c.b16 %v4833, %v4833
      %v4882 = vpack.c.b16 %v4834, %v4834
      %v4883 = vpack.c.b16 %v4835, %v4835
      %v4884 = vpack.c.b16 %v4836, %v4836
      %v4885 = vpack.c.b16 %v4837, %v4837
      %vm4934 = vcmask 60416
      %4935 = vst.msk [vmem:[%s246] sm:$0xf] %vm4934, %v4838
      %4936 = vst.msk [vmem:[%s246 + $0x4] sm:$0xf] %vm4934, %v4839
      %4937 = vst.msk [vmem:[%s246 + $0x8] sm:$0xf] %vm4934, %v4840
      %4938 = vst.msk [vmem:[%s246 + $0xc] sm:$0xf] %vm4934, %v4841
      %4939 = vst.msk [vmem:[%s246 + $0x10] sm:$0xf] %vm4934, %v4842
      %4940 = vst.msk [vmem:[%s246 + $0x14] sm:$0xf] %vm4934, %v4843
      %4941 = vst.msk [vmem:[%s246 + $0x18] sm:$0xf] %vm4934, %v4844
      %4942 = vst.msk [vmem:[%s246 + $0x1c] sm:$0xf] %vm4934, %v4845
      %4943 = vst.msk [vmem:[%s246 + $0x20] sm:$0xf] %vm4934, %v4846
      %4944 = vst.msk [vmem:[%s246 + $0x24] sm:$0xf] %vm4934, %v4847
      %4945 = vst.msk [vmem:[%s246 + $0x28] sm:$0xf] %vm4934, %v4848
      %4946 = vst.msk [vmem:[%s246 + $0x2c] sm:$0xf] %vm4934, %v4849
      %4947 = vst.msk [vmem:[%s246 + $0x30] sm:$0xf] %vm4934, %v4850
      %4948 = vst.msk [vmem:[%s246 + $0x34] sm:$0xf] %vm4934, %v4851
      %4949 = vst.msk [vmem:[%s246 + $0x38] sm:$0xf] %vm4934, %v4852
      %4950 = vst.msk [vmem:[%s246 + $0x3c] sm:$0xf] %vm4934, %v4853
      %4951 = vst.msk [vmem:[%s246 + $0x40] sm:$0xf] %vm4934, %v4854
      %4952 = vst.msk [vmem:[%s246 + $0x44] sm:$0xf] %vm4934, %v4855
      %4953 = vst.msk [vmem:[%s246 + $0x48] sm:$0xf] %vm4934, %v4856
      %4954 = vst.msk [vmem:[%s246 + $0x4c] sm:$0xf] %vm4934, %v4857
      %4955 = vst.msk [vmem:[%s246 + $0x50] sm:$0xf] %vm4934, %v4858
      %4956 = vst.msk [vmem:[%s246 + $0x54] sm:$0xf] %vm4934, %v4859
      %4957 = vst.msk [vmem:[%s246 + $0x58] sm:$0xf] %vm4934, %v4860
      %4958 = vst.msk [vmem:[%s246 + $0x5c] sm:$0xf] %vm4934, %v4861
      %4959 = vst.msk [vmem:[%s246 + $0x60] sm:$0xf] %vm4934, %v4862
      %4960 = vst.msk [vmem:[%s246 + $0x64] sm:$0xf] %vm4934, %v4863
      %4961 = vst.msk [vmem:[%s246 + $0x68] sm:$0xf] %vm4934, %v4864
      %4962 = vst.msk [vmem:[%s246 + $0x6c] sm:$0xf] %vm4934, %v4865
      %4963 = vst.msk [vmem:[%s246 + $0x70] sm:$0xf] %vm4934, %v4866
      %4964 = vst.msk [vmem:[%s246 + $0x74] sm:$0xf] %vm4934, %v4867
      %4965 = vst.msk [vmem:[%s246 + $0x78] sm:$0xf] %vm4934, %v4868
      %4966 = vst.msk [vmem:[%s246 + $0x7c] sm:$0xf] %vm4934, %v4869
      %4967 = vst.msk [vmem:[%s246 + $0x80] sm:$0xf] %vm4934, %v4870
      %4968 = vst.msk [vmem:[%s246 + $0x84] sm:$0xf] %vm4934, %v4871
      %4969 = vst.msk [vmem:[%s246 + $0x88] sm:$0xf] %vm4934, %v4872
      %4970 = vst.msk [vmem:[%s246 + $0x8c] sm:$0xf] %vm4934, %v4873
      %4971 = vst.msk [vmem:[%s246 + $0x90] sm:$0xf] %vm4934, %v4874
      %4972 = vst.msk [vmem:[%s246 + $0x94] sm:$0xf] %vm4934, %v4875
      %4973 = vst.msk [vmem:[%s246 + $0x98] sm:$0xf] %vm4934, %v4876
      %4974 = vst.msk [vmem:[%s246 + $0x9c] sm:$0xf] %vm4934, %v4877
      %4975 = vst.msk [vmem:[%s246 + $0xa0] sm:$0xf] %vm4934, %v4878
      %4976 = vst.msk [vmem:[%s246 + $0xa4] sm:$0xf] %vm4934, %v4879
      %4977 = vst.msk [vmem:[%s246 + $0xa8] sm:$0xf] %vm4934, %v4880
      %4978 = vst.msk [vmem:[%s246 + $0xac] sm:$0xf] %vm4934, %v4881
      %4979 = vst.msk [vmem:[%s246 + $0xb0] sm:$0xf] %vm4934, %v4882
      %4980 = vst.msk [vmem:[%s246 + $0xb4] sm:$0xf] %vm4934, %v4883
      %4981 = vst.msk [vmem:[%s246 + $0xb8] sm:$0xf] %vm4934, %v4884
      %4982 = vst.msk [vmem:[%s246 + $0xbc] sm:$0xf] %vm4934, %v4885
      %s4983 = smul.u32 48, %s21
      %p4984 = scmp.lt.s32.totalorder %s20, 1
      %s4985 = scalar_select %p4984, %s20, 1
      %p4986 = scmp.lt.s32.totalorder %s4983, 47
      %s4987 = scalar_select %p4986, %s4983, 47
      %s4988 = smul.addr %s4985, 48
      %s4989 = sadd.s32 %s4987, %s4988
      %s4990 = smul.addr %s4989, 4
      %s4991 = scalar_lea.vmem %s5, %s4990
      // Predicated region
      $region41: #{se_bottleneck_forward.4} parent=39 // pred_check
        %p4992 = pneg %p158
      $region42: #{se_bottleneck_forward.4} parent=39 // pred_check_branch
        %4994 = sbr.rel (%p4992) target = $region44
      $region43: #{se_bottleneck_forward.4} parent=39 // pred_region
        %s4995 = smul.u32 48, %s21
      $region44: #{se_bottleneck_forward.4} parent=39 // pred_fallthru
        _
    $region40: #{se_bottleneck_forward.4} parent=5 // pred_fallthru
      _
    %p4996 = scmp.le.s32.totalorder 2, %s11
    // Predicated region
    $region45: #{se_bottleneck_forward.4} parent=5 // pred_check
      %p4997 = pneg %p4996
    $region46: #{se_bottleneck_forward.4} parent=5 // pred_check_branch
      %4999 = sbr.rel (%p4997) target = $region48
    $region47: #{se_bottleneck_forward.4} parent=5 // pred_region
      %s5000 = ssub.s32 %s11, 2
      // Predicated region
      $region49: #{se_bottleneck_forward.4} parent=47 // pred_check
        %p5001 = pneg %p164
      $region50: #{se_bottleneck_forward.4} parent=47 // pred_check_branch
        %5003 = sbr.rel (%p5001) target = $region52
      $region51: #{se_bottleneck_forward.4} parent=47 // pred_region
        %s5004 = smul.u32 48, %s23
        %p5005 = scmp.lt.s32.totalorder %s22, 1
        %s5006 = scalar_select %p5005, %s22, 1
        %p5007 = scmp.lt.s32.totalorder %s5004, 47
        %s5008 = scalar_select %p5007, %s5004, 47
        %s5009 = smul.addr %s5006, 48
        %s5010 = sadd.s32 %s5008, %s5009
        %s5011 = smul.addr %s5010, 4
        %s5012 = scalar_lea.vmem %s5, %s5011
      $region52: #{se_bottleneck_forward.4} parent=47 // pred_fallthru
        _
    $region48: #{se_bottleneck_forward.4} parent=5 // pred_fallthru
      _
  $region6: #{se_bottleneck_forward.4} parent=0 // loop_footer
    %s15 = sadd.s32 1, %s11
  $region7: #{se_bottleneck_forward.4} parent=0 // loop_footer_branch
    %10 = sbr.rel target = $region3
  $region8: #{se_bottleneck_forward.4} parent=0 // loop_exit
    _

</llo_original>
